<compile_context>
chip_gen: v6e
topology: v6e:2x2x1
jax: 0.10.0
libtpu: 0.0.40
codegen_flags: <defaults>
</compile_context>

<pallas_src>
import functools

import jax
import jax.numpy as jnp
from jax import lax
from jax.experimental import pallas as pl
from jax.experimental.pallas import tpu as pltpu

_LANE = 128        # lane-dense padded width of the fc3 output
_ROW_PAD = 128     # extra allocated (never written/zeroed) rows so shifted reads stay in-bounds
_MM_CHUNK = 64     # M-chunk for the wide conv matmul pass
_PS_CHUNK = 128    # M-chunk for the tap shift-add / bias / relu pass
_POOL_CHUNK = 256  # M-chunk for the 2x2 max pool


# ------------------------------ kernel helpers ------------------------------ #

def _conv3x3(src_ref, wp_ref, b_ref, y_ref, dst_ref, *, rows, img_w, step):
    """3x3 valid conv + bias + ReLU in the flat row-slab geometry.

    Pass 1: one wide bf16 MXU matmul per M-chunk against the tap-packed
            weights (Cin, 9*Cout); tap t = dy*3+dx occupies lanes
            [t*Cout, (t+1)*Cout) of the f32 tap slab Y.
    Pass 2: 9 row-shifted lane-slice adds + bias + ReLU, chunked over M.
    Tap (dy, dx) of output row r is Y[r + step*(dy*img_w + dx)].  Rows outside
    the valid region compute garbage that is never consumed downstream.
    """
    cout = b_ref.shape[1]
    ncols = 9 * cout

    # pass 1: wide matmul, streamed to the Y scratch slab
    for r0 in range(0, rows, _MM_CHUNK):
        y_ref[pl.ds(r0, _MM_CHUNK), pl.ds(0, ncols)] = jnp.dot(
            src_ref[pl.ds(r0, _MM_CHUNK), :].astype(jnp.bfloat16),
            wp_ref[...],
            preferred_element_type=jnp.float32)

    # pass 2: shifted tap accumulation (VPU/XLU) + bias + relu
    bias = jnp.broadcast_to(b_ref[...], (_PS_CHUNK, cout)).astype(jnp.float32)
    for r0 in range(0, rows, _PS_CHUNK):
        acc = bias
        for t in range(9):
            dy, dx = divmod(t, 3)
            shift = step * (dy * img_w + dx)
            acc = acc + y_ref[pl.ds(r0 + shift, _PS_CHUNK), pl.ds(t * cout, cout)]
        dst_ref[pl.ds(r0, _PS_CHUNK), :] = jnp.maximum(acc, 0.0).astype(dst_ref.dtype)


def _maxpool2x2(src_ref, dst_ref, *, rows, img_w, step):
    """2x2 / stride-2 max pool kept in the row-slab geometry (next conv doubles
    its row shifts instead of compacting)."""
    o1, o2, o3 = step, step * img_w, step * (img_w + 1)
    for r0 in range(0, rows, _POOL_CHUNK):
        a = jnp.maximum(src_ref[pl.ds(r0, _POOL_CHUNK), :],
                        src_ref[pl.ds(r0 + o1, _POOL_CHUNK), :])
        b = jnp.maximum(src_ref[pl.ds(r0 + o2, _POOL_CHUNK), :],
                        src_ref[pl.ds(r0 + o3, _POOL_CHUNK), :])
        dst_ref[pl.ds(r0, _POOL_CHUNK), :] = jnp.maximum(a, b)


# ------------------------------ fused kernel ------------------------------- #

def _qnet_fused_kernel(x_ref,
                       wp1_ref, b1_ref, wp2_ref, b2_ref, wp3_ref, b3_ref,
                       wf1_ref, bf1_ref, wf2_ref, bf2_ref, wf3_ref, bf3_ref,
                       out_ref,
                       a1_ref, a2_ref, p1_ref, a3_ref, p2_ref, y_ref, flat_ref,
                       *, img_w, nrows_img, imgs, out_h, out_w):
    """One grid program = `imgs` images folded into M; everything stays in VMEM."""
    rows = imgs * nrows_img
    x2 = x_ref.at[0]                                       # (rows, Cin) f32 view

    _conv3x3(x2, wp1_ref, b1_ref, y_ref, a1_ref, rows=rows, img_w=img_w, step=1)
    _conv3x3(a1_ref, wp2_ref, b2_ref, y_ref, a2_ref, rows=rows, img_w=img_w, step=1)
    _maxpool2x2(a2_ref, p1_ref, rows=rows, img_w=img_w, step=1)
    _conv3x3(p1_ref, wp3_ref, b3_ref, y_ref, a3_ref, rows=rows, img_w=img_w, step=2)
    _maxpool2x2(a3_ref, p2_ref, rows=rows, img_w=img_w, step=2)

    # flatten: gather the H3*W3 valid pooled rows of each image into one
    # contiguous (imgs, H3*W3*C3) bf16 tile (the torch NCHW flatten permutation
    # is folded into wf1 at pack time), then fc1/fc2/fc3 as three dots.
    c3 = p2_ref.shape[1]
    for i in range(imgs):
        for p in range(out_h * out_w):
            hp, wp = divmod(p, out_w)
            row = i * nrows_img + 4 * hp * img_w + 4 * wp  # pooled-twice position
            flat_ref[pl.ds(i, 1), pl.ds(p * c3, c3)] = p2_ref[pl.ds(row, 1), :]

    xf = flat_ref[...]                                     # (imgs, 64) bf16
    h1 = jnp.maximum(
        jnp.dot(xf, wf1_ref[...], preferred_element_type=jnp.float32)
        + bf1_ref[...], 0.0)                               # (imgs, 128)
    h2 = jnp.maximum(
        jnp.dot(h1.astype(jnp.bfloat16), wf2_ref[...],
                preferred_element_type=jnp.float32) + bf2_ref[...], 0.0)
    logits = (jnp.dot(h2.astype(jnp.bfloat16), wf3_ref[...],
                      preferred_element_type=jnp.float32)
              + bf3_ref[...])                              # (imgs, 128) lane-dense
    out_ref[0, :, :] = logits


# ------------------------------ host wrappers ------------------------------ #

def _rep_spec(shape):
    zeros = (0,) * len(shape)
    return pl.BlockSpec(shape, lambda g: zeros)


@functools.partial(jax.jit, static_argnames=("action_size", "groups"))
def qnetwork_forward(packed, x_nchw, action_size, groups=None):
    """Fused Pallas forward.  x_nchw: (B, C, H, W) f32 -> (B, action_size)."""
    B, C, H, W = x_nchw.shape
    if groups is None:
        # grid=(2,) keeps both v7x TensorCores busy; on single-TC v5e/v6e pass
        # groups=1 to fold the whole batch into one program's M dimension.
        groups = 2 if (B % 2 == 0 and B >= 2) else 1
    assert B % groups == 0
    imgs = B // groups
    nrows_img = H * W
    rows = imgs * nrows_img
    slab_rows = rows + _ROW_PAD

    H3 = ((H - 4) // 2 - 2) // 2
    W3 = ((W - 4) // 2 - 2) // 2
    assert H3 >= 1 and W3 >= 1
    assert 2 * (2 * W + 2) <= _ROW_PAD, "row pad too small for conv/pool shifts"
    assert rows % _MM_CHUNK == 0 and rows % _PS_CHUNK == 0 and rows % _POOL_CHUNK == 0

    c1 = packed["wp1"].shape[1] // 9
    c2 = packed["wp2"].shape[1] // 9
    c3 = packed["wp3"].shape[1] // 9
    assert packed["wf1"].shape[0] == H3 * W3 * c3

    # NCHW -> per-group channels-last row slab (tiny relayout, no padding copy:
    # shifted reads are bounded inside the kernel's scratch slabs instead).
    x = jnp.transpose(x_nchw, (0, 2, 3, 1)).reshape(groups, rows, C)

    kernel = functools.partial(_qnet_fused_kernel, img_w=W, nrows_img=nrows_img,
                               imgs=imgs, out_h=H3, out_w=W3)
    order = ("wp1", "b1", "wp2", "b2", "wp3", "b3",
             "wf1", "bf1", "wf2", "bf2", "wf3", "bf3")
    out = pl.pallas_call(
        kernel,
        out_shape=jax.ShapeDtypeStruct((groups, imgs, _LANE), jnp.float32),
        grid=(groups,),
        in_specs=[pl.BlockSpec((1, rows, C), lambda g: (g, 0, 0))]
                 + [_rep_spec(packed[k].shape) for k in order],
        out_specs=pl.BlockSpec((1, imgs, _LANE), lambda g: (g, 0, 0)),
        scratch_shapes=[
            pltpu.VMEM((rows, c1), jnp.bfloat16),                        # conv1 out
            pltpu.VMEM((slab_rows, c2), jnp.bfloat16),                   # conv2 out (pool1 src)
            pltpu.VMEM((rows, c2), jnp.bfloat16),                        # pool1 out
            pltpu.VMEM((slab_rows, c3), jnp.bfloat16),                   # conv3 out (pool2 src)
            pltpu.VMEM((rows, c3), jnp.bfloat16),                        # pool2 out
            pltpu.VMEM((slab_rows, 9 * max(c1, c2, c3)), jnp.float32),   # tap slab Y (reused)
            pltpu.VMEM((imgs, H3 * W3 * c3), jnp.bfloat16),              # flatten tile
        ],
        compiler_params=pltpu.CompilerParams(
            dimension_semantics=("parallel",)),
    )(x, *[packed[k] for k in order])
    return out.reshape(B, _LANE)[:, :action_size]


def pack_params(params, height, width, action_size):
    """One-time repack of canonical params into the kernel's layout (bf16 weights)."""
    H3 = ((height - 4) // 2 - 2) // 2
    W3 = ((width - 4) // 2 - 2) // 2

    def conv(wb):
        w, b = wb                                          # (3,3,cin,cout) HWIO
        cin, cout = w.shape[2], w.shape[3]
        # (cin, 9*cout), tap t=dy*3+dx occupies columns [t*cout, (t+1)*cout)
        wp = jnp.transpose(w, (2, 0, 1, 3)).reshape(cin, 9 * cout)
        return wp.astype(jnp.bfloat16), b.reshape(1, -1).astype(jnp.float32)

    wp1, b1 = conv(params["cl1"])
    wp2, b2 = conv(params["cl2"])
    wp3, b3 = conv(params["cl3"])

    c3 = params["cl3"][0].shape[3]                         # 16
    wf1, bf1 = params["fc1"]                               # (c3*H3*W3, 128), NCHW-flatten rows
    # fold the torch NCHW flatten into fc1 and flatten to the kernel's
    # (spatial-major, channel-minor) gather order
    wf1 = wf1.reshape(c3, H3, W3, -1).transpose(1, 2, 0, 3).reshape(H3 * W3 * c3, -1)

    wf2, bf2 = params["fc2"]
    wf3, bf3 = params["fc3"]                               # (64, action), (action,)
    wf3 = jnp.pad(wf3, ((0, 0), (0, _LANE - action_size)))
    bf3 = jnp.pad(bf3, (0, _LANE - action_size))

    return dict(
        wp1=wp1, b1=b1, wp2=wp2, b2=b2, wp3=wp3, b3=b3,
        wf1=wf1.astype(jnp.bfloat16), bf1=bf1.reshape(1, -1).astype(jnp.float32),
        wf2=wf2.astype(jnp.bfloat16), bf2=bf2.reshape(1, -1).astype(jnp.float32),
        wf3=wf3.astype(jnp.bfloat16), bf3=bf3.reshape(1, -1).astype(jnp.float32))


# ------------------------------- parameters -------------------------------- #

def _nn_dimension(x, y, channel_in, channel_out, kernel_size, padding, stride,
                  pooling=True):
    new_x = (x + 2 * padding - kernel_size) // stride + 1
    new_y = (y + 2 * padding - kernel_size) // stride + 1
    if pooling:
        new_x //= 2
        new_y //= 2
    return new_x, new_y, channel_out


def init_qnetwork_params(key, height, width, channels, action_size):
    keys = jax.random.split(key, 12)

    def conv_init(kw_, kb_, kh, kw, cin, cout):
        fan_in = cin * kh * kw
        bound = 1.0 / float(fan_in) ** 0.5
        w = jax.random.uniform(kw_, (kh, kw, cin, cout), jnp.float32, -bound, bound)
        b = jax.random.uniform(kb_, (cout,), jnp.float32, -bound, bound)
        return w, b

    def fc_init(kw_, kb_, fin, fout):
        bound = 1.0 / float(fin) ** 0.5
        w = jax.random.uniform(kw_, (fin, fout), jnp.float32, -bound, bound)
        b = jax.random.uniform(kb_, (fout,), jnp.float32, -bound, bound)
        return w, b

    x, y, cin = height, width, channels
    params = {}
    params["cl1"] = conv_init(keys[0], keys[1], 3, 3, channels, 32)
    x, y, cin = _nn_dimension(x, y, channels, 32, 3, 0, 1, pooling=False)
    params["cl2"] = conv_init(keys[2], keys[3], 3, 3, 32, 32)
    x, y, cin = _nn_dimension(x, y, 32, 32, 3, 0, 1)
    params["cl3"] = conv_init(keys[4], keys[5], 3, 3, 32, 16)
    x, y, cin = _nn_dimension(x, y, 32, 16, 3, 0, 1)
    temp = int(x * y * cin)
    params["fc1"] = fc_init(keys[6], keys[7], temp, 128)
    params["fc2"] = fc_init(keys[8], keys[9], 128, 64)
    params["fc3"] = fc_init(keys[10], keys[11], 64, action_size)
    return params


# ---------------------------- pure-JAX reference ---------------------------- #

def qnetwork_ref(params, x_nchw):
    x = jnp.transpose(x_nchw, (0, 2, 3, 1))

    def conv(x, w, b):
        y = lax.conv_general_dilated(
            x, w, (1, 1), "VALID", dimension_numbers=("NHWC", "HWIO", "NHWC"))
        return jnp.maximum(y + b, 0.0)

    def pool(x):
        return lax.reduce_window(x, -jnp.inf, lax.max,
                                 (1, 2, 2, 1), (1, 2, 2, 1), "VALID")

    x = conv(x, *params["cl1"])
    x = pool(conv(x, *params["cl2"]))
    x = pool(conv(x, *params["cl3"]))
    B = x.shape[0]
    x = jnp.transpose(x, (0, 3, 1, 2)).reshape(B, -1)
    w, b = params["fc1"]; x = jnp.maximum(x @ w + b, 0.0)
    w, b = params["fc2"]; x = jnp.maximum(x @ w + b, 0.0)
    w, b = params["fc3"]; x = x @ w + b
    return x


# ----------------------------------- main ----------------------------------- #

if __name__ == "__main__":
    B, C, H, W = 2, 4, 16, 16
    action_size = 5

    key = jax.random.PRNGKey(0)
    kx, kp = jax.random.split(key)
    x = jax.random.normal(kx, (B, C, H, W), dtype=jnp.float32)
    params = init_qnetwork_params(kp, H, W, C, action_size)
    packed = pack_params(params, H, W, action_size)

    groups = 2 if B % 2 == 0 else 1   # both TCs on v7x; use groups=1 on v5e/v6e
    out = jax.block_until_ready(
        qnetwork_forward(packed, x, action_size=action_size, groups=groups))
    ref = jax.block_until_ready(qnetwork_ref(params, x))

    assert out.shape == (B, action_size), out.shape
    assert jnp.allclose(out, ref, rtol=1e-2, atol=1e-2), (
        f"max abs err {jnp.max(jnp.abs(out - ref))}")

    print("KERNEL_OK")
</pallas_src>

<mosaic_0001>
module attributes {stable_mosaic.version = 11 : i64} {
  func.func @_qnet_fused_kernel(%arg0: i32, %arg1: memref<1x256x4xf32, #tpu.memory_space<vmem>>, %arg2: memref<4x288xbf16, #tpu.memory_space<vmem>>, %arg3: memref<1x32xf32, #tpu.memory_space<vmem>>, %arg4: memref<32x288xbf16, #tpu.memory_space<vmem>>, %arg5: memref<1x32xf32, #tpu.memory_space<vmem>>, %arg6: memref<32x144xbf16, #tpu.memory_space<vmem>>, %arg7: memref<1x16xf32, #tpu.memory_space<vmem>>, %arg8: memref<64x128xbf16, #tpu.memory_space<vmem>>, %arg9: memref<1x128xf32, #tpu.memory_space<vmem>>, %arg10: memref<128x64xbf16, #tpu.memory_space<vmem>>, %arg11: memref<1x64xf32, #tpu.memory_space<vmem>>, %arg12: memref<64x128xbf16, #tpu.memory_space<vmem>>, %arg13: memref<1x128xf32, #tpu.memory_space<vmem>>, %arg14: memref<1x1x128xf32, #tpu.memory_space<vmem>>, %arg15: memref<256x32xbf16, #tpu.memory_space<vmem>>, %arg16: memref<384x32xbf16, #tpu.memory_space<vmem>>, %arg17: memref<256x32xbf16, #tpu.memory_space<vmem>>, %arg18: memref<384x16xbf16, #tpu.memory_space<vmem>>, %arg19: memref<256x16xbf16, #tpu.memory_space<vmem>>, %arg20: memref<384x288xf32, #tpu.memory_space<vmem>>, %arg21: memref<1x64xbf16, #tpu.memory_space<vmem>>) attributes {dimension_semantics = [#tpu.dimension_semantics<parallel>], iteration_bounds = array<i64: 2>, scalar_prefetch = 0 : i64, scratch_operands = 7 : i64, tpu.core_type = #tpu.core_type<tc>, window_params = [{transform_indices = @transform_0, window_bounds = array<i64: 1, 256, 4>}, {pipeline_mode = #tpu.pipeline_mode<synchronous>, transform_indices = @transform_1, window_bounds = array<i64: 4, 288>}, {pipeline_mode = #tpu.pipeline_mode<synchronous>, transform_indices = @transform_2, window_bounds = array<i64: 1, 32>}, {pipeline_mode = #tpu.pipeline_mode<synchronous>, transform_indices = @transform_3, window_bounds = array<i64: 32, 288>}, {pipeline_mode = #tpu.pipeline_mode<synchronous>, transform_indices = @transform_4, window_bounds = array<i64: 1, 32>}, {pipeline_mode = #tpu.pipeline_mode<synchronous>, transform_indices = @transform_5, window_bounds = array<i64: 32, 144>}, {pipeline_mode = #tpu.pipeline_mode<synchronous>, transform_indices = @transform_6, window_bounds = array<i64: 1, 16>}, {pipeline_mode = #tpu.pipeline_mode<synchronous>, transform_indices = @transform_7, window_bounds = array<i64: 64, 128>}, {pipeline_mode = #tpu.pipeline_mode<synchronous>, transform_indices = @transform_8, window_bounds = array<i64: 1, 128>}, {pipeline_mode = #tpu.pipeline_mode<synchronous>, transform_indices = @transform_9, window_bounds = array<i64: 128, 64>}, {pipeline_mode = #tpu.pipeline_mode<synchronous>, transform_indices = @transform_10, window_bounds = array<i64: 1, 64>}, {pipeline_mode = #tpu.pipeline_mode<synchronous>, transform_indices = @transform_11, window_bounds = array<i64: 64, 128>}, {pipeline_mode = #tpu.pipeline_mode<synchronous>, transform_indices = @transform_12, window_bounds = array<i64: 1, 128>}, {transform_indices = @transform_13, window_bounds = array<i64: 1, 1, 128>}]} {
    %c0_i32 = arith.constant 0 : i32
    %c0_i32_0 = arith.constant 0 : i32
    %c0_i32_1 = arith.constant 0 : i32
    %0 = tpu.memref_slice %arg1[%c0_i32, %c0_i32_0, %c0_i32_1] : memref<1x256x4xf32, #tpu.memory_space<vmem>> -> memref<1x256x4xf32, #tpu.memory_space<vmem>>
    %1 = tpu.memref_squeeze %0 : memref<1x256x4xf32, #tpu.memory_space<vmem>> -> memref<256x4xf32, #tpu.memory_space<vmem>>
    %c0 = arith.constant 0 : index
    %c0_2 = arith.constant 0 : index
    %2 = vector.load %1[%c0, %c0_2] : memref<256x4xf32, #tpu.memory_space<vmem>>, vector<64x4xf32>
    %3 = arith.truncf %2 : vector<64x4xf32> to vector<64x4xbf16>
    %c0_3 = arith.constant 0 : index
    %c0_4 = arith.constant 0 : index
    %4 = vector.load %arg2[%c0_3, %c0_4] : memref<4x288xbf16, #tpu.memory_space<vmem>>, vector<4x288xbf16>
    %cst = arith.constant dense<0.000000e+00> : vector<64x288xf32>
    %5 = tpu.matmul %3, %4, %cst {dimension_numbers = #tpu.dot_dimension_numbers<[1], [0], [0], [1], [0, 0, 1, 1], [], []>} : vector<64x4xbf16>, vector<4x288xbf16>, vector<64x288xf32> -> vector<64x288xf32>
    %c0_5 = arith.constant 0 : index
    %c0_6 = arith.constant 0 : index
    %6 = vector.load %arg20[%c0_5, %c0_6] : memref<384x288xf32, #tpu.memory_space<vmem>>, vector<64x288xf32>
    tpu.vector_store %arg20[%c0_5, %c0_6], %5 {strides = array<i32>} : memref<384x288xf32, #tpu.memory_space<vmem>>, vector<64x288xf32>,
    %c0_i32_7 = arith.constant 0 : i32
    %c0_i32_8 = arith.constant 0 : i32
    %c0_i32_9 = arith.constant 0 : i32
    %7 = tpu.memref_slice %arg1[%c0_i32_7, %c0_i32_8, %c0_i32_9] : memref<1x256x4xf32, #tpu.memory_space<vmem>> -> memref<1x256x4xf32, #tpu.memory_space<vmem>>
    %8 = tpu.memref_squeeze %7 : memref<1x256x4xf32, #tpu.memory_space<vmem>> -> memref<256x4xf32, #tpu.memory_space<vmem>>
    %c64 = arith.constant 64 : index
    %c0_10 = arith.constant 0 : index
    %9 = vector.load %8[%c64, %c0_10] : memref<256x4xf32, #tpu.memory_space<vmem>>, vector<64x4xf32>
    %10 = arith.truncf %9 : vector<64x4xf32> to vector<64x4xbf16>
    %c0_11 = arith.constant 0 : index
    %c0_12 = arith.constant 0 : index
    %11 = vector.load %arg2[%c0_11, %c0_12] : memref<4x288xbf16, #tpu.memory_space<vmem>>, vector<4x288xbf16>
    %cst_13 = arith.constant dense<0.000000e+00> : vector<64x288xf32>
    %12 = tpu.matmul %10, %11, %cst_13 {dimension_numbers = #tpu.dot_dimension_numbers<[1], [0], [0], [1], [0, 0, 1, 1], [], []>} : vector<64x4xbf16>, vector<4x288xbf16>, vector<64x288xf32> -> vector<64x288xf32>
    %c64_14 = arith.constant 64 : index
    %c0_15 = arith.constant 0 : index
    %13 = vector.load %arg20[%c64_14, %c0_15] : memref<384x288xf32, #tpu.memory_space<vmem>>, vector<64x288xf32>
    tpu.vector_store %arg20[%c64_14, %c0_15], %12 {strides = array<i32>} : memref<384x288xf32, #tpu.memory_space<vmem>>, vector<64x288xf32>,
    %c0_i32_16 = arith.constant 0 : i32
    %c0_i32_17 = arith.constant 0 : i32
    %c0_i32_18 = arith.constant 0 : i32
    %14 = tpu.memref_slice %arg1[%c0_i32_16, %c0_i32_17, %c0_i32_18] : memref<1x256x4xf32, #tpu.memory_space<vmem>> -> memref<1x256x4xf32, #tpu.memory_space<vmem>>
    %15 = tpu.memref_squeeze %14 : memref<1x256x4xf32, #tpu.memory_space<vmem>> -> memref<256x4xf32, #tpu.memory_space<vmem>>
    %c128 = arith.constant 128 : index
    %c0_19 = arith.constant 0 : index
    %16 = vector.load %15[%c128, %c0_19] : memref<256x4xf32, #tpu.memory_space<vmem>>, vector<64x4xf32>
    %17 = arith.truncf %16 : vector<64x4xf32> to vector<64x4xbf16>
    %c0_20 = arith.constant 0 : index
    %c0_21 = arith.constant 0 : index
    %18 = vector.load %arg2[%c0_20, %c0_21] : memref<4x288xbf16, #tpu.memory_space<vmem>>, vector<4x288xbf16>
    %cst_22 = arith.constant dense<0.000000e+00> : vector<64x288xf32>
    %19 = tpu.matmul %17, %18, %cst_22 {dimension_numbers = #tpu.dot_dimension_numbers<[1], [0], [0], [1], [0, 0, 1, 1], [], []>} : vector<64x4xbf16>, vector<4x288xbf16>, vector<64x288xf32> -> vector<64x288xf32>
    %c128_23 = arith.constant 128 : index
    %c0_24 = arith.constant 0 : index
    %20 = vector.load %arg20[%c128_23, %c0_24] : memref<384x288xf32, #tpu.memory_space<vmem>>, vector<64x288xf32>
    tpu.vector_store %arg20[%c128_23, %c0_24], %19 {strides = array<i32>} : memref<384x288xf32, #tpu.memory_space<vmem>>, vector<64x288xf32>,
    %c0_i32_25 = arith.constant 0 : i32
    %c0_i32_26 = arith.constant 0 : i32
    %c0_i32_27 = arith.constant 0 : i32
    %21 = tpu.memref_slice %arg1[%c0_i32_25, %c0_i32_26, %c0_i32_27] : memref<1x256x4xf32, #tpu.memory_space<vmem>> -> memref<1x256x4xf32, #tpu.memory_space<vmem>>
    %22 = tpu.memref_squeeze %21 : memref<1x256x4xf32, #tpu.memory_space<vmem>> -> memref<256x4xf32, #tpu.memory_space<vmem>>
    %c192 = arith.constant 192 : index
    %c0_28 = arith.constant 0 : index
    %23 = vector.load %22[%c192, %c0_28] : memref<256x4xf32, #tpu.memory_space<vmem>>, vector<64x4xf32>
    %24 = arith.truncf %23 : vector<64x4xf32> to vector<64x4xbf16>
    %c0_29 = arith.constant 0 : index
    %c0_30 = arith.constant 0 : index
    %25 = vector.load %arg2[%c0_29, %c0_30] : memref<4x288xbf16, #tpu.memory_space<vmem>>, vector<4x288xbf16>
    %cst_31 = arith.constant dense<0.000000e+00> : vector<64x288xf32>
    %26 = tpu.matmul %24, %25, %cst_31 {dimension_numbers = #tpu.dot_dimension_numbers<[1], [0], [0], [1], [0, 0, 1, 1], [], []>} : vector<64x4xbf16>, vector<4x288xbf16>, vector<64x288xf32> -> vector<64x288xf32>
    %c192_32 = arith.constant 192 : index
    %c0_33 = arith.constant 0 : index
    %27 = vector.load %arg20[%c192_32, %c0_33] : memref<384x288xf32, #tpu.memory_space<vmem>>, vector<64x288xf32>
    tpu.vector_store %arg20[%c192_32, %c0_33], %26 {strides = array<i32>} : memref<384x288xf32, #tpu.memory_space<vmem>>, vector<64x288xf32>,
    %c0_34 = arith.constant 0 : index
    %c0_35 = arith.constant 0 : index
    %28 = vector.load %arg3[%c0_34, %c0_35] : memref<1x32xf32, #tpu.memory_space<vmem>>, vector<1x32xf32>
    %29 = vector.shape_cast %28 : vector<1x32xf32> to vector<1x32xf32>
    %30 = vector.broadcast %29 : vector<1x32xf32> to vector<128x32xf32>
    %c0_36 = arith.constant 0 : index
    %c0_37 = arith.constant 0 : index
    %31 = vector.load %arg20[%c0_36, %c0_37] : memref<384x288xf32, #tpu.memory_space<vmem>>, vector<128x32xf32>
    %32 = arith.addf %30, %31 : vector<128x32xf32>
    %c1 = arith.constant 1 : index
    %c32 = arith.constant 32 : index
    %33 = vector.load %arg20[%c1, %c32] : memref<384x288xf32, #tpu.memory_space<vmem>>, vector<128x32xf32>
    %34 = arith.addf %32, %33 : vector<128x32xf32>
    %c2 = arith.constant 2 : index
    %c64_38 = arith.constant 64 : index
    %35 = vector.load %arg20[%c2, %c64_38] : memref<384x288xf32, #tpu.memory_space<vmem>>, vector<128x32xf32>
    %36 = arith.addf %34, %35 : vector<128x32xf32>
    %c16 = arith.constant 16 : index
    %c96 = arith.constant 96 : index
    %37 = vector.load %arg20[%c16, %c96] : memref<384x288xf32, #tpu.memory_space<vmem>>, vector<128x32xf32>
    %38 = arith.addf %36, %37 : vector<128x32xf32>
    %c17 = arith.constant 17 : index
    %c128_39 = arith.constant 128 : index
    %39 = vector.load %arg20[%c17, %c128_39] : memref<384x288xf32, #tpu.memory_space<vmem>>, vector<128x32xf32>
    %40 = arith.addf %38, %39 : vector<128x32xf32>
    %c18 = arith.constant 18 : index
    %c160 = arith.constant 160 : index
    %41 = vector.load %arg20[%c18, %c160] : memref<384x288xf32, #tpu.memory_space<vmem>>, vector<128x32xf32>
    %42 = arith.addf %40, %41 : vector<128x32xf32>
    %c32_40 = arith.constant 32 : index
    %c192_41 = arith.constant 192 : index
    %43 = vector.load %arg20[%c32_40, %c192_41] : memref<384x288xf32, #tpu.memory_space<vmem>>, vector<128x32xf32>
    %44 = arith.addf %42, %43 : vector<128x32xf32>
    %c33 = arith.constant 33 : index
    %c224 = arith.constant 224 : index
    %45 = vector.load %arg20[%c33, %c224] : memref<384x288xf32, #tpu.memory_space<vmem>>, vector<128x32xf32>
    %46 = arith.addf %44, %45 : vector<128x32xf32>
    %c34 = arith.constant 34 : index
    %c256 = arith.constant 256 : index
    %47 = vector.load %arg20[%c34, %c256] : memref<384x288xf32, #tpu.memory_space<vmem>>, vector<128x32xf32>
    %48 = arith.addf %46, %47 : vector<128x32xf32>
    %cst_42 = arith.constant 0.000000e+00 : f32
    %49 = vector.broadcast %cst_42 : f32 to vector<128x32xf32>
    %50 = arith.maximumf %48, %49 : vector<128x32xf32>
    %51 = arith.truncf %50 : vector<128x32xf32> to vector<128x32xbf16>
    %c0_43 = arith.constant 0 : index
    %c0_44 = arith.constant 0 : index
    %52 = vector.load %arg15[%c0_43, %c0_44] : memref<256x32xbf16, #tpu.memory_space<vmem>>, vector<128x32xbf16>
    tpu.vector_store %arg15[%c0_43, %c0_44], %51 {strides = array<i32>} : memref<256x32xbf16, #tpu.memory_space<vmem>>, vector<128x32xbf16>,
    %c128_45 = arith.constant 128 : index
    %c0_46 = arith.constant 0 : index
    %53 = vector.load %arg20[%c128_45, %c0_46] : memref<384x288xf32, #tpu.memory_space<vmem>>, vector<128x32xf32>
    %54 = arith.addf %30, %53 : vector<128x32xf32>
    %c129 = arith.constant 129 : index
    %c32_47 = arith.constant 32 : index
    %55 = vector.load %arg20[%c129, %c32_47] : memref<384x288xf32, #tpu.memory_space<vmem>>, vector<128x32xf32>
    %56 = arith.addf %54, %55 : vector<128x32xf32>
    %c130 = arith.constant 130 : index
    %c64_48 = arith.constant 64 : index
    %57 = vector.load %arg20[%c130, %c64_48] : memref<384x288xf32, #tpu.memory_space<vmem>>, vector<128x32xf32>
    %58 = arith.addf %56, %57 : vector<128x32xf32>
    %c144 = arith.constant 144 : index
    %c96_49 = arith.constant 96 : index
    %59 = vector.load %arg20[%c144, %c96_49] : memref<384x288xf32, #tpu.memory_space<vmem>>, vector<128x32xf32>
    %60 = arith.addf %58, %59 : vector<128x32xf32>
    %c145 = arith.constant 145 : index
    %c128_50 = arith.constant 128 : index
    %61 = vector.load %arg20[%c145, %c128_50] : memref<384x288xf32, #tpu.memory_space<vmem>>, vector<128x32xf32>
    %62 = arith.addf %60, %61 : vector<128x32xf32>
    %c146 = arith.constant 146 : index
    %c160_51 = arith.constant 160 : index
    %63 = vector.load %arg20[%c146, %c160_51] : memref<384x288xf32, #tpu.memory_space<vmem>>, vector<128x32xf32>
    %64 = arith.addf %62, %63 : vector<128x32xf32>
    %c160_52 = arith.constant 160 : index
    %c192_53 = arith.constant 192 : index
    %65 = vector.load %arg20[%c160_52, %c192_53] : memref<384x288xf32, #tpu.memory_space<vmem>>, vector<128x32xf32>
    %66 = arith.addf %64, %65 : vector<128x32xf32>
    %c161 = arith.constant 161 : index
    %c224_54 = arith.constant 224 : index
    %67 = vector.load %arg20[%c161, %c224_54] : memref<384x288xf32, #tpu.memory_space<vmem>>, vector<128x32xf32>
    %68 = arith.addf %66, %67 : vector<128x32xf32>
    %c162 = arith.constant 162 : index
    %c256_55 = arith.constant 256 : index
    %69 = vector.load %arg20[%c162, %c256_55] : memref<384x288xf32, #tpu.memory_space<vmem>>, vector<128x32xf32>
    %70 = arith.addf %68, %69 : vector<128x32xf32>
    %cst_56 = arith.constant 0.000000e+00 : f32
    %71 = vector.broadcast %cst_56 : f32 to vector<128x32xf32>
    %72 = arith.maximumf %70, %71 : vector<128x32xf32>
    %73 = arith.truncf %72 : vector<128x32xf32> to vector<128x32xbf16>
    %c128_57 = arith.constant 128 : index
    %c0_58 = arith.constant 0 : index
    %74 = vector.load %arg15[%c128_57, %c0_58] : memref<256x32xbf16, #tpu.memory_space<vmem>>, vector<128x32xbf16>
    tpu.vector_store %arg15[%c128_57, %c0_58], %73 {strides = array<i32>} : memref<256x32xbf16, #tpu.memory_space<vmem>>, vector<128x32xbf16>,
    %c0_59 = arith.constant 0 : index
    %c0_60 = arith.constant 0 : index
    %75 = vector.load %arg15[%c0_59, %c0_60] : memref<256x32xbf16, #tpu.memory_space<vmem>>, vector<64x32xbf16>
    %c0_61 = arith.constant 0 : index
    %c0_62 = arith.constant 0 : index
    %76 = vector.load %arg4[%c0_61, %c0_62] : memref<32x288xbf16, #tpu.memory_space<vmem>>, vector<32x288xbf16>
    %cst_63 = arith.constant dense<0.000000e+00> : vector<64x288xf32>
    %77 = tpu.matmul %75, %76, %cst_63 {dimension_numbers = #tpu.dot_dimension_numbers<[1], [0], [0], [1], [0, 0, 1, 1], [], []>} : vector<64x32xbf16>, vector<32x288xbf16>, vector<64x288xf32> -> vector<64x288xf32>
    %c0_64 = arith.constant 0 : index
    %c0_65 = arith.constant 0 : index
    %78 = vector.load %arg20[%c0_64, %c0_65] : memref<384x288xf32, #tpu.memory_space<vmem>>, vector<64x288xf32>
    tpu.vector_store %arg20[%c0_64, %c0_65], %77 {strides = array<i32>} : memref<384x288xf32, #tpu.memory_space<vmem>>, vector<64x288xf32>,
    %c64_66 = arith.constant 64 : index
    %c0_67 = arith.constant 0 : index
    %79 = vector.load %arg15[%c64_66, %c0_67] : memref<256x32xbf16, #tpu.memory_space<vmem>>, vector<64x32xbf16>
    %c0_68 = arith.constant 0 : index
    %c0_69 = arith.constant 0 : index
    %80 = vector.load %arg4[%c0_68, %c0_69] : memref<32x288xbf16, #tpu.memory_space<vmem>>, vector<32x288xbf16>
    %cst_70 = arith.constant dense<0.000000e+00> : vector<64x288xf32>
    %81 = tpu.matmul %79, %80, %cst_70 {dimension_numbers = #tpu.dot_dimension_numbers<[1], [0], [0], [1], [0, 0, 1, 1], [], []>} : vector<64x32xbf16>, vector<32x288xbf16>, vector<64x288xf32> -> vector<64x288xf32>
    %c64_71 = arith.constant 64 : index
    %c0_72 = arith.constant 0 : index
    %82 = vector.load %arg20[%c64_71, %c0_72] : memref<384x288xf32, #tpu.memory_space<vmem>>, vector<64x288xf32>
    tpu.vector_store %arg20[%c64_71, %c0_72], %81 {strides = array<i32>} : memref<384x288xf32, #tpu.memory_space<vmem>>, vector<64x288xf32>,
    %c128_73 = arith.constant 128 : index
    %c0_74 = arith.constant 0 : index
    %83 = vector.load %arg15[%c128_73, %c0_74] : memref<256x32xbf16, #tpu.memory_space<vmem>>, vector<64x32xbf16>
    %c0_75 = arith.constant 0 : index
    %c0_76 = arith.constant 0 : index
    %84 = vector.load %arg4[%c0_75, %c0_76] : memref<32x288xbf16, #tpu.memory_space<vmem>>, vector<32x288xbf16>
    %cst_77 = arith.constant dense<0.000000e+00> : vector<64x288xf32>
    %85 = tpu.matmul %83, %84, %cst_77 {dimension_numbers = #tpu.dot_dimension_numbers<[1], [0], [0], [1], [0, 0, 1, 1], [], []>} : vector<64x32xbf16>, vector<32x288xbf16>, vector<64x288xf32> -> vector<64x288xf32>
    %c128_78 = arith.constant 128 : index
    %c0_79 = arith.constant 0 : index
    %86 = vector.load %arg20[%c128_78, %c0_79] : memref<384x288xf32, #tpu.memory_space<vmem>>, vector<64x288xf32>
    tpu.vector_store %arg20[%c128_78, %c0_79], %85 {strides = array<i32>} : memref<384x288xf32, #tpu.memory_space<vmem>>, vector<64x288xf32>,
    %c192_80 = arith.constant 192 : index
    %c0_81 = arith.constant 0 : index
    %87 = vector.load %arg15[%c192_80, %c0_81] : memref<256x32xbf16, #tpu.memory_space<vmem>>, vector<64x32xbf16>
    %c0_82 = arith.constant 0 : index
    %c0_83 = arith.constant 0 : index
    %88 = vector.load %arg4[%c0_82, %c0_83] : memref<32x288xbf16, #tpu.memory_space<vmem>>, vector<32x288xbf16>
    %cst_84 = arith.constant dense<0.000000e+00> : vector<64x288xf32>
    %89 = tpu.matmul %87, %88, %cst_84 {dimension_numbers = #tpu.dot_dimension_numbers<[1], [0], [0], [1], [0, 0, 1, 1], [], []>} : vector<64x32xbf16>, vector<32x288xbf16>, vector<64x288xf32> -> vector<64x288xf32>
    %c192_85 = arith.constant 192 : index
    %c0_86 = arith.constant 0 : index
    %90 = vector.load %arg20[%c192_85, %c0_86] : memref<384x288xf32, #tpu.memory_space<vmem>>, vector<64x288xf32>
    tpu.vector_store %arg20[%c192_85, %c0_86], %89 {strides = array<i32>} : memref<384x288xf32, #tpu.memory_space<vmem>>, vector<64x288xf32>,
    %c0_87 = arith.constant 0 : index
    %c0_88 = arith.constant 0 : index
    %91 = vector.load %arg5[%c0_87, %c0_88] : memref<1x32xf32, #tpu.memory_space<vmem>>, vector<1x32xf32>
    %92 = vector.shape_cast %91 : vector<1x32xf32> to vector<1x32xf32>
    %93 = vector.broadcast %92 : vector<1x32xf32> to vector<128x32xf32>
    %c0_89 = arith.constant 0 : index
    %c0_90 = arith.constant 0 : index
    %94 = vector.load %arg20[%c0_89, %c0_90] : memref<384x288xf32, #tpu.memory_space<vmem>>, vector<128x32xf32>
    %95 = arith.addf %93, %94 : vector<128x32xf32>
    %c1_91 = arith.constant 1 : index
    %c32_92 = arith.constant 32 : index
    %96 = vector.load %arg20[%c1_91, %c32_92] : memref<384x288xf32, #tpu.memory_space<vmem>>, vector<128x32xf32>
    %97 = arith.addf %95, %96 : vector<128x32xf32>
    %c2_93 = arith.constant 2 : index
    %c64_94 = arith.constant 64 : index
    %98 = vector.load %arg20[%c2_93, %c64_94] : memref<384x288xf32, #tpu.memory_space<vmem>>, vector<128x32xf32>
    %99 = arith.addf %97, %98 : vector<128x32xf32>
    %c16_95 = arith.constant 16 : index
    %c96_96 = arith.constant 96 : index
    %100 = vector.load %arg20[%c16_95, %c96_96] : memref<384x288xf32, #tpu.memory_space<vmem>>, vector<128x32xf32>
    %101 = arith.addf %99, %100 : vector<128x32xf32>
    %c17_97 = arith.constant 17 : index
    %c128_98 = arith.constant 128 : index
    %102 = vector.load %arg20[%c17_97, %c128_98] : memref<384x288xf32, #tpu.memory_space<vmem>>, vector<128x32xf32>
    %103 = arith.addf %101, %102 : vector<128x32xf32>
    %c18_99 = arith.constant 18 : index
    %c160_100 = arith.constant 160 : index
    %104 = vector.load %arg20[%c18_99, %c160_100] : memref<384x288xf32, #tpu.memory_space<vmem>>, vector<128x32xf32>
    %105 = arith.addf %103, %104 : vector<128x32xf32>
    %c32_101 = arith.constant 32 : index
    %c192_102 = arith.constant 192 : index
    %106 = vector.load %arg20[%c32_101, %c192_102] : memref<384x288xf32, #tpu.memory_space<vmem>>, vector<128x32xf32>
    %107 = arith.addf %105, %106 : vector<128x32xf32>
    %c33_103 = arith.constant 33 : index
    %c224_104 = arith.constant 224 : index
    %108 = vector.load %arg20[%c33_103, %c224_104] : memref<384x288xf32, #tpu.memory_space<vmem>>, vector<128x32xf32>
    %109 = arith.addf %107, %108 : vector<128x32xf32>
    %c34_105 = arith.constant 34 : index
    %c256_106 = arith.constant 256 : index
    %110 = vector.load %arg20[%c34_105, %c256_106] : memref<384x288xf32, #tpu.memory_space<vmem>>, vector<128x32xf32>
    %111 = arith.addf %109, %110 : vector<128x32xf32>
    %cst_107 = arith.constant 0.000000e+00 : f32
    %112 = vector.broadcast %cst_107 : f32 to vector<128x32xf32>
    %113 = arith.maximumf %111, %112 : vector<128x32xf32>
    %114 = arith.truncf %113 : vector<128x32xf32> to vector<128x32xbf16>
    %c0_108 = arith.constant 0 : index
    %c0_109 = arith.constant 0 : index
    %115 = vector.load %arg16[%c0_108, %c0_109] : memref<384x32xbf16, #tpu.memory_space<vmem>>, vector<128x32xbf16>
    tpu.vector_store %arg16[%c0_108, %c0_109], %114 {strides = array<i32>} : memref<384x32xbf16, #tpu.memory_space<vmem>>, vector<128x32xbf16>,
    %c128_110 = arith.constant 128 : index
    %c0_111 = arith.constant 0 : index
    %116 = vector.load %arg20[%c128_110, %c0_111] : memref<384x288xf32, #tpu.memory_space<vmem>>, vector<128x32xf32>
    %117 = arith.addf %93, %116 : vector<128x32xf32>
    %c129_112 = arith.constant 129 : index
    %c32_113 = arith.constant 32 : index
    %118 = vector.load %arg20[%c129_112, %c32_113] : memref<384x288xf32, #tpu.memory_space<vmem>>, vector<128x32xf32>
    %119 = arith.addf %117, %118 : vector<128x32xf32>
    %c130_114 = arith.constant 130 : index
    %c64_115 = arith.constant 64 : index
    %120 = vector.load %arg20[%c130_114, %c64_115] : memref<384x288xf32, #tpu.memory_space<vmem>>, vector<128x32xf32>
    %121 = arith.addf %119, %120 : vector<128x32xf32>
    %c144_116 = arith.constant 144 : index
    %c96_117 = arith.constant 96 : index
    %122 = vector.load %arg20[%c144_116, %c96_117] : memref<384x288xf32, #tpu.memory_space<vmem>>, vector<128x32xf32>
    %123 = arith.addf %121, %122 : vector<128x32xf32>
    %c145_118 = arith.constant 145 : index
    %c128_119 = arith.constant 128 : index
    %124 = vector.load %arg20[%c145_118, %c128_119] : memref<384x288xf32, #tpu.memory_space<vmem>>, vector<128x32xf32>
    %125 = arith.addf %123, %124 : vector<128x32xf32>
    %c146_120 = arith.constant 146 : index
    %c160_121 = arith.constant 160 : index
    %126 = vector.load %arg20[%c146_120, %c160_121] : memref<384x288xf32, #tpu.memory_space<vmem>>, vector<128x32xf32>
    %127 = arith.addf %125, %126 : vector<128x32xf32>
    %c160_122 = arith.constant 160 : index
    %c192_123 = arith.constant 192 : index
    %128 = vector.load %arg20[%c160_122, %c192_123] : memref<384x288xf32, #tpu.memory_space<vmem>>, vector<128x32xf32>
    %129 = arith.addf %127, %128 : vector<128x32xf32>
    %c161_124 = arith.constant 161 : index
    %c224_125 = arith.constant 224 : index
    %130 = vector.load %arg20[%c161_124, %c224_125] : memref<384x288xf32, #tpu.memory_space<vmem>>, vector<128x32xf32>
    %131 = arith.addf %129, %130 : vector<128x32xf32>
    %c162_126 = arith.constant 162 : index
    %c256_127 = arith.constant 256 : index
    %132 = vector.load %arg20[%c162_126, %c256_127] : memref<384x288xf32, #tpu.memory_space<vmem>>, vector<128x32xf32>
    %133 = arith.addf %131, %132 : vector<128x32xf32>
    %cst_128 = arith.constant 0.000000e+00 : f32
    %134 = vector.broadcast %cst_128 : f32 to vector<128x32xf32>
    %135 = arith.maximumf %133, %134 : vector<128x32xf32>
    %136 = arith.truncf %135 : vector<128x32xf32> to vector<128x32xbf16>
    %c128_129 = arith.constant 128 : index
    %c0_130 = arith.constant 0 : index
    %137 = vector.load %arg16[%c128_129, %c0_130] : memref<384x32xbf16, #tpu.memory_space<vmem>>, vector<128x32xbf16>
    tpu.vector_store %arg16[%c128_129, %c0_130], %136 {strides = array<i32>} : memref<384x32xbf16, #tpu.memory_space<vmem>>, vector<128x32xbf16>,
    %c0_131 = arith.constant 0 : index
    %c0_132 = arith.constant 0 : index
    %138 = vector.load %arg16[%c0_131, %c0_132] : memref<384x32xbf16, #tpu.memory_space<vmem>>, vector<256x32xbf16>
    %c1_133 = arith.constant 1 : index
    %c0_134 = arith.constant 0 : index
    %139 = vector.load %arg16[%c1_133, %c0_134] : memref<384x32xbf16, #tpu.memory_space<vmem>>, vector<256x32xbf16>
    %140 = arith.maximumf %138, %139 : vector<256x32xbf16>
    %c16_135 = arith.constant 16 : index
    %c0_136 = arith.constant 0 : index
    %141 = vector.load %arg16[%c16_135, %c0_136] : memref<384x32xbf16, #tpu.memory_space<vmem>>, vector<256x32xbf16>
    %c17_137 = arith.constant 17 : index
    %c0_138 = arith.constant 0 : index
    %142 = vector.load %arg16[%c17_137, %c0_138] : memref<384x32xbf16, #tpu.memory_space<vmem>>, vector<256x32xbf16>
    %143 = arith.maximumf %141, %142 : vector<256x32xbf16>
    %144 = arith.maximumf %140, %143 : vector<256x32xbf16>
    %c0_139 = arith.constant 0 : index
    %c0_140 = arith.constant 0 : index
    %145 = vector.load %arg17[%c0_139, %c0_140] : memref<256x32xbf16, #tpu.memory_space<vmem>>, vector<256x32xbf16>
    tpu.vector_store %arg17[%c0_139, %c0_140], %144 {strides = array<i32>} : memref<256x32xbf16, #tpu.memory_space<vmem>>, vector<256x32xbf16>,
    %c0_141 = arith.constant 0 : index
    %c0_142 = arith.constant 0 : index
    %146 = vector.load %arg17[%c0_141, %c0_142] : memref<256x32xbf16, #tpu.memory_space<vmem>>, vector<64x32xbf16>
    %c0_143 = arith.constant 0 : index
    %c0_144 = arith.constant 0 : index
    %147 = vector.load %arg6[%c0_143, %c0_144] : memref<32x144xbf16, #tpu.memory_space<vmem>>, vector<32x144xbf16>
    %cst_145 = arith.constant dense<0.000000e+00> : vector<64x144xf32>
    %148 = tpu.matmul %146, %147, %cst_145 {dimension_numbers = #tpu.dot_dimension_numbers<[1], [0], [0], [1], [0, 0, 1, 1], [], []>} : vector<64x32xbf16>, vector<32x144xbf16>, vector<64x144xf32> -> vector<64x144xf32>
    %c0_146 = arith.constant 0 : index
    %c0_147 = arith.constant 0 : index
    %149 = vector.load %arg20[%c0_146, %c0_147] : memref<384x288xf32, #tpu.memory_space<vmem>>, vector<64x144xf32>
    tpu.vector_store %arg20[%c0_146, %c0_147], %148 {strides = array<i32>} : memref<384x288xf32, #tpu.memory_space<vmem>>, vector<64x144xf32>,
    %c64_148 = arith.constant 64 : index
    %c0_149 = arith.constant 0 : index
    %150 = vector.load %arg17[%c64_148, %c0_149] : memref<256x32xbf16, #tpu.memory_space<vmem>>, vector<64x32xbf16>
    %c0_150 = arith.constant 0 : index
    %c0_151 = arith.constant 0 : index
    %151 = vector.load %arg6[%c0_150, %c0_151] : memref<32x144xbf16, #tpu.memory_space<vmem>>, vector<32x144xbf16>
    %cst_152 = arith.constant dense<0.000000e+00> : vector<64x144xf32>
    %152 = tpu.matmul %150, %151, %cst_152 {dimension_numbers = #tpu.dot_dimension_numbers<[1], [0], [0], [1], [0, 0, 1, 1], [], []>} : vector<64x32xbf16>, vector<32x144xbf16>, vector<64x144xf32> -> vector<64x144xf32>
    %c64_153 = arith.constant 64 : index
    %c0_154 = arith.constant 0 : index
    %153 = vector.load %arg20[%c64_153, %c0_154] : memref<384x288xf32, #tpu.memory_space<vmem>>, vector<64x144xf32>
    tpu.vector_store %arg20[%c64_153, %c0_154], %152 {strides = array<i32>} : memref<384x288xf32, #tpu.memory_space<vmem>>, vector<64x144xf32>,
    %c128_155 = arith.constant 128 : index
    %c0_156 = arith.constant 0 : index
    %154 = vector.load %arg17[%c128_155, %c0_156] : memref<256x32xbf16, #tpu.memory_space<vmem>>, vector<64x32xbf16>
    %c0_157 = arith.constant 0 : index
    %c0_158 = arith.constant 0 : index
    %155 = vector.load %arg6[%c0_157, %c0_158] : memref<32x144xbf16, #tpu.memory_space<vmem>>, vector<32x144xbf16>
    %cst_159 = arith.constant dense<0.000000e+00> : vector<64x144xf32>
    %156 = tpu.matmul %154, %155, %cst_159 {dimension_numbers = #tpu.dot_dimension_numbers<[1], [0], [0], [1], [0, 0, 1, 1], [], []>} : vector<64x32xbf16>, vector<32x144xbf16>, vector<64x144xf32> -> vector<64x144xf32>
    %c128_160 = arith.constant 128 : index
    %c0_161 = arith.constant 0 : index
    %157 = vector.load %arg20[%c128_160, %c0_161] : memref<384x288xf32, #tpu.memory_space<vmem>>, vector<64x144xf32>
    tpu.vector_store %arg20[%c128_160, %c0_161], %156 {strides = array<i32>} : memref<384x288xf32, #tpu.memory_space<vmem>>, vector<64x144xf32>,
    %c192_162 = arith.constant 192 : index
    %c0_163 = arith.constant 0 : index
    %158 = vector.load %arg17[%c192_162, %c0_163] : memref<256x32xbf16, #tpu.memory_space<vmem>>, vector<64x32xbf16>
    %c0_164 = arith.constant 0 : index
    %c0_165 = arith.constant 0 : index
    %159 = vector.load %arg6[%c0_164, %c0_165] : memref<32x144xbf16, #tpu.memory_space<vmem>>, vector<32x144xbf16>
    %cst_166 = arith.constant dense<0.000000e+00> : vector<64x144xf32>
    %160 = tpu.matmul %158, %159, %cst_166 {dimension_numbers = #tpu.dot_dimension_numbers<[1], [0], [0], [1], [0, 0, 1, 1], [], []>} : vector<64x32xbf16>, vector<32x144xbf16>, vector<64x144xf32> -> vector<64x144xf32>
    %c192_167 = arith.constant 192 : index
    %c0_168 = arith.constant 0 : index
    %161 = vector.load %arg20[%c192_167, %c0_168] : memref<384x288xf32, #tpu.memory_space<vmem>>, vector<64x144xf32>
    tpu.vector_store %arg20[%c192_167, %c0_168], %160 {strides = array<i32>} : memref<384x288xf32, #tpu.memory_space<vmem>>, vector<64x144xf32>,
    %c0_169 = arith.constant 0 : index
    %c0_170 = arith.constant 0 : index
    %162 = vector.load %arg7[%c0_169, %c0_170] : memref<1x16xf32, #tpu.memory_space<vmem>>, vector<1x16xf32>
    %163 = vector.shape_cast %162 : vector<1x16xf32> to vector<1x16xf32>
    %164 = vector.broadcast %163 : vector<1x16xf32> to vector<128x16xf32>
    %c0_171 = arith.constant 0 : index
    %c0_172 = arith.constant 0 : index
    %165 = vector.load %arg20[%c0_171, %c0_172] : memref<384x288xf32, #tpu.memory_space<vmem>>, vector<128x16xf32>
    %166 = arith.addf %164, %165 : vector<128x16xf32>
    %c2_173 = arith.constant 2 : index
    %c16_174 = arith.constant 16 : index
    %167 = vector.load %arg20[%c2_173, %c16_174] : memref<384x288xf32, #tpu.memory_space<vmem>>, vector<128x16xf32>
    %168 = arith.addf %166, %167 : vector<128x16xf32>
    %c4 = arith.constant 4 : index
    %c32_175 = arith.constant 32 : index
    %169 = vector.load %arg20[%c4, %c32_175] : memref<384x288xf32, #tpu.memory_space<vmem>>, vector<128x16xf32>
    %170 = arith.addf %168, %169 : vector<128x16xf32>
    %c32_176 = arith.constant 32 : index
    %c48 = arith.constant 48 : index
    %171 = vector.load %arg20[%c32_176, %c48] : memref<384x288xf32, #tpu.memory_space<vmem>>, vector<128x16xf32>
    %172 = arith.addf %170, %171 : vector<128x16xf32>
    %c34_177 = arith.constant 34 : index
    %c64_178 = arith.constant 64 : index
    %173 = vector.load %arg20[%c34_177, %c64_178] : memref<384x288xf32, #tpu.memory_space<vmem>>, vector<128x16xf32>
    %174 = arith.addf %172, %173 : vector<128x16xf32>
    %c36 = arith.constant 36 : index
    %c80 = arith.constant 80 : index
    %175 = vector.load %arg20[%c36, %c80] : memref<384x288xf32, #tpu.memory_space<vmem>>, vector<128x16xf32>
    %176 = arith.addf %174, %175 : vector<128x16xf32>
    %c64_179 = arith.constant 64 : index
    %c96_180 = arith.constant 96 : index
    %177 = vector.load %arg20[%c64_179, %c96_180] : memref<384x288xf32, #tpu.memory_space<vmem>>, vector<128x16xf32>
    %178 = arith.addf %176, %177 : vector<128x16xf32>
    %c66 = arith.constant 66 : index
    %c112 = arith.constant 112 : index
    %179 = vector.load %arg20[%c66, %c112] : memref<384x288xf32, #tpu.memory_space<vmem>>, vector<128x16xf32>
    %180 = arith.addf %178, %179 : vector<128x16xf32>
    %c68 = arith.constant 68 : index
    %c128_181 = arith.constant 128 : index
    %181 = vector.load %arg20[%c68, %c128_181] : memref<384x288xf32, #tpu.memory_space<vmem>>, vector<128x16xf32>
    %182 = arith.addf %180, %181 : vector<128x16xf32>
    %cst_182 = arith.constant 0.000000e+00 : f32
    %183 = vector.broadcast %cst_182 : f32 to vector<128x16xf32>
    %184 = arith.maximumf %182, %183 : vector<128x16xf32>
    %185 = arith.truncf %184 : vector<128x16xf32> to vector<128x16xbf16>
    %c0_183 = arith.constant 0 : index
    %c0_184 = arith.constant 0 : index
    %186 = vector.load %arg18[%c0_183, %c0_184] : memref<384x16xbf16, #tpu.memory_space<vmem>>, vector<128x16xbf16>
    tpu.vector_store %arg18[%c0_183, %c0_184], %185 {strides = array<i32>} : memref<384x16xbf16, #tpu.memory_space<vmem>>, vector<128x16xbf16>,
    %c128_185 = arith.constant 128 : index
    %c0_186 = arith.constant 0 : index
    %187 = vector.load %arg20[%c128_185, %c0_186] : memref<384x288xf32, #tpu.memory_space<vmem>>, vector<128x16xf32>
    %188 = arith.addf %164, %187 : vector<128x16xf32>
    %c130_187 = arith.constant 130 : index
    %c16_188 = arith.constant 16 : index
    %189 = vector.load %arg20[%c130_187, %c16_188] : memref<384x288xf32, #tpu.memory_space<vmem>>, vector<128x16xf32>
    %190 = arith.addf %188, %189 : vector<128x16xf32>
    %c132 = arith.constant 132 : index
    %c32_189 = arith.constant 32 : index
    %191 = vector.load %arg20[%c132, %c32_189] : memref<384x288xf32, #tpu.memory_space<vmem>>, vector<128x16xf32>
    %192 = arith.addf %190, %191 : vector<128x16xf32>
    %c160_190 = arith.constant 160 : index
    %c48_191 = arith.constant 48 : index
    %193 = vector.load %arg20[%c160_190, %c48_191] : memref<384x288xf32, #tpu.memory_space<vmem>>, vector<128x16xf32>
    %194 = arith.addf %192, %193 : vector<128x16xf32>
    %c162_192 = arith.constant 162 : index
    %c64_193 = arith.constant 64 : index
    %195 = vector.load %arg20[%c162_192, %c64_193] : memref<384x288xf32, #tpu.memory_space<vmem>>, vector<128x16xf32>
    %196 = arith.addf %194, %195 : vector<128x16xf32>
    %c164 = arith.constant 164 : index
    %c80_194 = arith.constant 80 : index
    %197 = vector.load %arg20[%c164, %c80_194] : memref<384x288xf32, #tpu.memory_space<vmem>>, vector<128x16xf32>
    %198 = arith.addf %196, %197 : vector<128x16xf32>
    %c192_195 = arith.constant 192 : index
    %c96_196 = arith.constant 96 : index
    %199 = vector.load %arg20[%c192_195, %c96_196] : memref<384x288xf32, #tpu.memory_space<vmem>>, vector<128x16xf32>
    %200 = arith.addf %198, %199 : vector<128x16xf32>
    %c194 = arith.constant 194 : index
    %c112_197 = arith.constant 112 : index
    %201 = vector.load %arg20[%c194, %c112_197] : memref<384x288xf32, #tpu.memory_space<vmem>>, vector<128x16xf32>
    %202 = arith.addf %200, %201 : vector<128x16xf32>
    %c196 = arith.constant 196 : index
    %c128_198 = arith.constant 128 : index
    %203 = vector.load %arg20[%c196, %c128_198] : memref<384x288xf32, #tpu.memory_space<vmem>>, vector<128x16xf32>
    %204 = arith.addf %202, %203 : vector<128x16xf32>
    %cst_199 = arith.constant 0.000000e+00 : f32
    %205 = vector.broadcast %cst_199 : f32 to vector<128x16xf32>
    %206 = arith.maximumf %204, %205 : vector<128x16xf32>
    %207 = arith.truncf %206 : vector<128x16xf32> to vector<128x16xbf16>
    %c128_200 = arith.constant 128 : index
    %c0_201 = arith.constant 0 : index
    %208 = vector.load %arg18[%c128_200, %c0_201] : memref<384x16xbf16, #tpu.memory_space<vmem>>, vector<128x16xbf16>
    tpu.vector_store %arg18[%c128_200, %c0_201], %207 {strides = array<i32>} : memref<384x16xbf16, #tpu.memory_space<vmem>>, vector<128x16xbf16>,
    %c0_202 = arith.constant 0 : index
    %c0_203 = arith.constant 0 : index
    %209 = vector.load %arg18[%c0_202, %c0_203] : memref<384x16xbf16, #tpu.memory_space<vmem>>, vector<256x16xbf16>
    %c2_204 = arith.constant 2 : index
    %c0_205 = arith.constant 0 : index
    %210 = vector.load %arg18[%c2_204, %c0_205] : memref<384x16xbf16, #tpu.memory_space<vmem>>, vector<256x16xbf16>
    %211 = arith.maximumf %209, %210 : vector<256x16xbf16>
    %c32_206 = arith.constant 32 : index
    %c0_207 = arith.constant 0 : index
    %212 = vector.load %arg18[%c32_206, %c0_207] : memref<384x16xbf16, #tpu.memory_space<vmem>>, vector<256x16xbf16>
    %c34_208 = arith.constant 34 : index
    %c0_209 = arith.constant 0 : index
    %213 = vector.load %arg18[%c34_208, %c0_209] : memref<384x16xbf16, #tpu.memory_space<vmem>>, vector<256x16xbf16>
    %214 = arith.maximumf %212, %213 : vector<256x16xbf16>
    %215 = arith.maximumf %211, %214 : vector<256x16xbf16>
    %c0_210 = arith.constant 0 : index
    %c0_211 = arith.constant 0 : index
    %216 = vector.load %arg19[%c0_210, %c0_211] : memref<256x16xbf16, #tpu.memory_space<vmem>>, vector<256x16xbf16>
    tpu.vector_store %arg19[%c0_210, %c0_211], %215 {strides = array<i32>} : memref<256x16xbf16, #tpu.memory_space<vmem>>, vector<256x16xbf16>,
    %c0_212 = arith.constant 0 : index
    %c0_213 = arith.constant 0 : index
    %217 = vector.load %arg19[%c0_212, %c0_213] : memref<256x16xbf16, #tpu.memory_space<vmem>>, vector<1x16xbf16>
    %c0_214 = arith.constant 0 : index
    %c0_215 = arith.constant 0 : index
    %218 = vector.load %arg21[%c0_214, %c0_215] : memref<1x64xbf16, #tpu.memory_space<vmem>>, vector<1x16xbf16>
    tpu.vector_store %arg21[%c0_214, %c0_215], %217 {strides = array<i32>} : memref<1x64xbf16, #tpu.memory_space<vmem>>, vector<1x16xbf16>,
    %c4_216 = arith.constant 4 : index
    %c0_217 = arith.constant 0 : index
    %219 = vector.load %arg19[%c4_216, %c0_217] : memref<256x16xbf16, #tpu.memory_space<vmem>>, vector<1x16xbf16>
    %c0_218 = arith.constant 0 : index
    %c16_219 = arith.constant 16 : index
    %220 = vector.load %arg21[%c0_218, %c16_219] : memref<1x64xbf16, #tpu.memory_space<vmem>>, vector<1x16xbf16>
    tpu.vector_store %arg21[%c0_218, %c16_219], %219 {strides = array<i32>} : memref<1x64xbf16, #tpu.memory_space<vmem>>, vector<1x16xbf16>,
    %c64_220 = arith.constant 64 : index
    %c0_221 = arith.constant 0 : index
    %221 = vector.load %arg19[%c64_220, %c0_221] : memref<256x16xbf16, #tpu.memory_space<vmem>>, vector<1x16xbf16>
    %c0_222 = arith.constant 0 : index
    %c32_223 = arith.constant 32 : index
    %222 = vector.load %arg21[%c0_222, %c32_223] : memref<1x64xbf16, #tpu.memory_space<vmem>>, vector<1x16xbf16>
    tpu.vector_store %arg21[%c0_222, %c32_223], %221 {strides = array<i32>} : memref<1x64xbf16, #tpu.memory_space<vmem>>, vector<1x16xbf16>,
    %c68_224 = arith.constant 68 : index
    %c0_225 = arith.constant 0 : index
    %223 = vector.load %arg19[%c68_224, %c0_225] : memref<256x16xbf16, #tpu.memory_space<vmem>>, vector<1x16xbf16>
    %c0_226 = arith.constant 0 : index
    %c48_227 = arith.constant 48 : index
    %224 = vector.load %arg21[%c0_226, %c48_227] : memref<1x64xbf16, #tpu.memory_space<vmem>>, vector<1x16xbf16>
    tpu.vector_store %arg21[%c0_226, %c48_227], %223 {strides = array<i32>} : memref<1x64xbf16, #tpu.memory_space<vmem>>, vector<1x16xbf16>,
    %c0_228 = arith.constant 0 : index
    %c0_229 = arith.constant 0 : index
    %225 = vector.load %arg21[%c0_228, %c0_229] : memref<1x64xbf16, #tpu.memory_space<vmem>>, vector<1x64xbf16>
    %c0_230 = arith.constant 0 : index
    %c0_231 = arith.constant 0 : index
    %226 = vector.load %arg8[%c0_230, %c0_231] : memref<64x128xbf16, #tpu.memory_space<vmem>>, vector<64x128xbf16>
    %cst_232 = arith.constant dense<0.000000e+00> : vector<1x128xf32>
    %227 = tpu.matmul %225, %226, %cst_232 {dimension_numbers = #tpu.dot_dimension_numbers<[1], [0], [0], [1], [0, 0, 1, 1], [], []>} : vector<1x64xbf16>, vector<64x128xbf16>, vector<1x128xf32> -> vector<1x128xf32>
    %c0_233 = arith.constant 0 : index
    %c0_234 = arith.constant 0 : index
    %228 = vector.load %arg9[%c0_233, %c0_234] : memref<1x128xf32, #tpu.memory_space<vmem>>, vector<1x128xf32>
    %229 = arith.addf %227, %228 : vector<1x128xf32>
    %cst_235 = arith.constant 0.000000e+00 : f32
    %230 = vector.broadcast %cst_235 : f32 to vector<1x128xf32>
    %231 = arith.maximumf %229, %230 : vector<1x128xf32>
    %232 = arith.truncf %231 : vector<1x128xf32> to vector<1x128xbf16>
    %c0_236 = arith.constant 0 : index
    %c0_237 = arith.constant 0 : index
    %233 = vector.load %arg10[%c0_236, %c0_237] : memref<128x64xbf16, #tpu.memory_space<vmem>>, vector<128x64xbf16>
    %cst_238 = arith.constant dense<0.000000e+00> : vector<1x64xf32>
    %234 = tpu.matmul %232, %233, %cst_238 {dimension_numbers = #tpu.dot_dimension_numbers<[1], [0], [0], [1], [0, 0, 1, 1], [], []>} : vector<1x128xbf16>, vector<128x64xbf16>, vector<1x64xf32> -> vector<1x64xf32>
    %c0_239 = arith.constant 0 : index
    %c0_240 = arith.constant 0 : index
    %235 = vector.load %arg11[%c0_239, %c0_240] : memref<1x64xf32, #tpu.memory_space<vmem>>, vector<1x64xf32>
    %236 = arith.addf %234, %235 : vector<1x64xf32>
    %cst_241 = arith.constant 0.000000e+00 : f32
    %237 = vector.broadcast %cst_241 : f32 to vector<1x64xf32>
    %238 = arith.maximumf %236, %237 : vector<1x64xf32>
    %239 = arith.truncf %238 : vector<1x64xf32> to vector<1x64xbf16>
    %c0_242 = arith.constant 0 : index
    %c0_243 = arith.constant 0 : index
    %240 = vector.load %arg12[%c0_242, %c0_243] : memref<64x128xbf16, #tpu.memory_space<vmem>>, vector<64x128xbf16>
    %cst_244 = arith.constant dense<0.000000e+00> : vector<1x128xf32>
    %241 = tpu.matmul %239, %240, %cst_244 {dimension_numbers = #tpu.dot_dimension_numbers<[1], [0], [0], [1], [0, 0, 1, 1], [], []>} : vector<1x64xbf16>, vector<64x128xbf16>, vector<1x128xf32> -> vector<1x128xf32>
    %c0_245 = arith.constant 0 : index
    %c0_246 = arith.constant 0 : index
    %242 = vector.load %arg13[%c0_245, %c0_246] : memref<1x128xf32, #tpu.memory_space<vmem>>, vector<1x128xf32>
    %243 = arith.addf %241, %242 : vector<1x128xf32>
    %c0_247 = arith.constant 0 : index
    %c0_248 = arith.constant 0 : index
    %c0_249 = arith.constant 0 : index
    %244 = vector.load %arg14[%c0_247, %c0_248, %c0_249] : memref<1x1x128xf32, #tpu.memory_space<vmem>>, vector<1x1x128xf32>
    %245 = vector.shape_cast %244 : vector<1x1x128xf32> to vector<1x128xf32>
    %246 = vector.shape_cast %243 : vector<1x128xf32> to vector<1x1x128xf32>
    tpu.vector_store %arg14[%c0_247, %c0_248, %c0_249], %246 {strides = array<i32>} : memref<1x1x128xf32, #tpu.memory_space<vmem>>, vector<1x1x128xf32>,
    return
  }
  func.func @transform_0(%arg0: i32) -> (i32, i32, i32) {
    %c0_i32 = arith.constant 0 : i32
    %c0_i32_0 = arith.constant 0 : i32
    %c0_i32_1 = arith.constant 0 : i32
    return %arg0, %c0_i32, %c0_i32_0 : i32, i32, i32
  }
  func.func @transform_1(%arg0: i32) -> (i32, i32) {
    %c0_i32 = arith.constant 0 : i32
    %c0_i32_0 = arith.constant 0 : i32
    %c0_i32_1 = arith.constant 0 : i32
    return %c0_i32, %c0_i32_0 : i32, i32
  }
  func.func @transform_2(%arg0: i32) -> (i32, i32) {
    %c0_i32 = arith.constant 0 : i32
    %c0_i32_0 = arith.constant 0 : i32
    %c0_i32_1 = arith.constant 0 : i32
    return %c0_i32, %c0_i32_0 : i32, i32
  }
  func.func @transform_3(%arg0: i32) -> (i32, i32) {
    %c0_i32 = arith.constant 0 : i32
    %c0_i32_0 = arith.constant 0 : i32
    %c0_i32_1 = arith.constant 0 : i32
    return %c0_i32, %c0_i32_0 : i32, i32
  }
  func.func @transform_4(%arg0: i32) -> (i32, i32) {
    %c0_i32 = arith.constant 0 : i32
    %c0_i32_0 = arith.constant 0 : i32
    %c0_i32_1 = arith.constant 0 : i32
    return %c0_i32, %c0_i32_0 : i32, i32
  }
  func.func @transform_5(%arg0: i32) -> (i32, i32) {
    %c0_i32 = arith.constant 0 : i32
    %c0_i32_0 = arith.constant 0 : i32
    %c0_i32_1 = arith.constant 0 : i32
    return %c0_i32, %c0_i32_0 : i32, i32
  }
  func.func @transform_6(%arg0: i32) -> (i32, i32) {
    %c0_i32 = arith.constant 0 : i32
    %c0_i32_0 = arith.constant 0 : i32
    %c0_i32_1 = arith.constant 0 : i32
    return %c0_i32, %c0_i32_0 : i32, i32
  }
  func.func @transform_7(%arg0: i32) -> (i32, i32) {
    %c0_i32 = arith.constant 0 : i32
    %c0_i32_0 = arith.constant 0 : i32
    %c0_i32_1 = arith.constant 0 : i32
    return %c0_i32, %c0_i32_0 : i32, i32
  }
  func.func @transform_8(%arg0: i32) -> (i32, i32) {
    %c0_i32 = arith.constant 0 : i32
    %c0_i32_0 = arith.constant 0 : i32
    %c0_i32_1 = arith.constant 0 : i32
    return %c0_i32, %c0_i32_0 : i32, i32
  }
  func.func @transform_9(%arg0: i32) -> (i32, i32) {
    %c0_i32 = arith.constant 0 : i32
    %c0_i32_0 = arith.constant 0 : i32
    %c0_i32_1 = arith.constant 0 : i32
    return %c0_i32, %c0_i32_0 : i32, i32
  }
  func.func @transform_10(%arg0: i32) -> (i32, i32) {
    %c0_i32 = arith.constant 0 : i32
    %c0_i32_0 = arith.constant 0 : i32
    %c0_i32_1 = arith.constant 0 : i32
    return %c0_i32, %c0_i32_0 : i32, i32
  }
  func.func @transform_11(%arg0: i32) -> (i32, i32) {
    %c0_i32 = arith.constant 0 : i32
    %c0_i32_0 = arith.constant 0 : i32
    %c0_i32_1 = arith.constant 0 : i32
    return %c0_i32, %c0_i32_0 : i32, i32
  }
  func.func @transform_12(%arg0: i32) -> (i32, i32) {
    %c0_i32 = arith.constant 0 : i32
    %c0_i32_0 = arith.constant 0 : i32
    %c0_i32_1 = arith.constant 0 : i32
    return %c0_i32, %c0_i32_0 : i32, i32
  }
  func.func @transform_13(%arg0: i32) -> (i32, i32, i32) {
    %c0_i32 = arith.constant 0 : i32
    %c0_i32_0 = arith.constant 0 : i32
    %c0_i32_1 = arith.constant 0 : i32
    return %arg0, %c0_i32, %c0_i32_0 : i32, i32, i32
  }
}

</mosaic_0001>

<llo_original>
// kernel: qnetwork_forward.1
$region0: #{qnetwork_forward.1}
  #allocation0 [shape = 'u32[]', space=smem, size = 0x4, offset = 0x4, fixed_abs, tag = 'smem constant byte address 0x4 - core index']
  #allocation1 [shape = 'u32[144,128]{1,0:T(1,128)}', space=vmem, size = 0x12000, scoped, tag = 'internal scratch']
  #allocation2 [shape = 'bf16[256,32]{1,0:T(8,128)(2,1)}', space=vmem, size = 0x10000, scoped, tag = 'scratch operand']
  #allocation3 [shape = 'bf16[384,32]{1,0:T(8,128)(2,1)}', space=vmem, size = 0x18000, scoped, tag = 'scratch operand']
  #allocation4 [shape = 'bf16[256,32]{1,0:T(8,128)(2,1)}', space=vmem, size = 0x10000, scoped, tag = 'scratch operand']
  #allocation5 [shape = 'bf16[384,16]{1,0:T(8,128)(2,1)}', space=vmem, size = 0x18000, scoped, tag = 'scratch operand']
  #allocation6 [shape = 'bf16[256,16]{1,0:T(8,128)(2,1)}', space=vmem, size = 0x10000, scoped, tag = 'scratch operand']
  #allocation7 [shape = 'f32[384,288]{1,0:T(8,128)}', space=vmem, size = 0x90000, scoped, tag = 'scratch operand']
  #allocation8 [shape = 'bf16[1,64]{1,0:T(2,128)(2,1)}', space=vmem, size = 0x200, scoped, tag = 'scratch operand']
  %s0 = inlined_call_operand.vmem [shape: f32[2,256,4], index: 0, kind: input, shape index: {}]
  %s1 = inlined_call_operand.vmem [shape: bf16[4,288], index: 1, kind: input, shape index: {}]
  %s2 = inlined_call_operand.vmem [shape: f32[1,32], index: 2, kind: input, shape index: {}]
  %s3 = inlined_call_operand.vmem [shape: bf16[32,288], index: 3, kind: input, shape index: {}]
  %s4 = inlined_call_operand.vmem [shape: f32[1,32], index: 4, kind: input, shape index: {}]
  %s5 = inlined_call_operand.vmem [shape: bf16[32,144], index: 5, kind: input, shape index: {}]
  %s6 = inlined_call_operand.vmem [shape: f32[1,16], index: 6, kind: input, shape index: {}]
  %s7 = inlined_call_operand.vmem [shape: bf16[64,128], index: 7, kind: input, shape index: {}]
  %s8 = inlined_call_operand.vmem [shape: f32[1,128], index: 8, kind: input, shape index: {}]
  %s9 = inlined_call_operand.vmem [shape: bf16[128,64], index: 9, kind: input, shape index: {}]
  %s10 = inlined_call_operand.vmem [shape: f32[1,64], index: 10, kind: input, shape index: {}]
  %s11 = inlined_call_operand.vmem [shape: bf16[64,128], index: 11, kind: input, shape index: {}]
  %s12 = inlined_call_operand.vmem [shape: f32[1,128], index: 12, kind: input, shape index: {}]
  %s13 = inlined_call_operand.hbm [shape: f32[2,1,128], index: 13, kind: output, shape index: {}]
  %s14 = sld [smem:[#allocation0]]
  $region85: #{qnetwork_forward.1} parent=0
    _
  %s16 = ssub.s32 1, %s14
  %s17 = scalar_select 0, %s16, %s14
  $region1: #{qnetwork_forward.1} parent=0
    #allocation9 [shape = 'u8[1024]{0}', space=vmem, size = 0x400, scoped, tag = 'output window, operand 0']
    #allocation10 [shape = 's32[2]{0}', space=sflag, size = 0x8, scoped, tag = 'scoped memory for qnetwork_forward.1']
    %18 = vsyncpa [#allocation10], 0
    %s19 = scalar_lea.sflag [#allocation10], 1
    %20 = vsyncpa %s19, 0
    loop: start=0, step=1, limit=4
    $region2: #{qnetwork_forward.1} parent=1 // loop_pre_header
      _
    $region3: #{qnetwork_forward.1} parent=1 // loop_header
      %s22 = sphi 0, %s26
      %p23 = scmp.ge.s32.totalorder %s22, 4
      %s32 = sphi 0, %s34
      %s35 = sphi 0, %s32
      %s36 = sphi 0, %s35
      %s52 = sphi 0, %s36
      %s56 = sphi 0, %s56
      %s58 = sphi 0, %s56
      %s59 = sphi 0, %s58
      %s73 = sphi 0, %s59
      %s77 = sphi 0, %s77
      %s79 = sphi 0, %s77
      %s80 = sphi 0, %s79
      %s94 = sphi 0, %s80
      %s98 = sphi 0, %s98
      %s100 = sphi 0, %s98
      %s101 = sphi 0, %s100
      %s115 = sphi 0, %s101
      %s119 = sphi 0, %s119
      %s121 = sphi 0, %s119
      %s122 = sphi 0, %s121
      %s136 = sphi 0, %s122
      %s140 = sphi 0, %s140
      %s142 = sphi 0, %s140
      %s143 = sphi 0, %s142
      %s157 = sphi 0, %s143
      %s161 = sphi 0, %s161
      %s163 = sphi 0, %s161
      %s164 = sphi 0, %s163
      %s178 = sphi 0, %s164
      %s182 = sphi 0, %s182
      %s184 = sphi 0, %s182
      %s185 = sphi 0, %s184
      %s199 = sphi 0, %s185
      %s203 = sphi 0, %s203
      %s205 = sphi 0, %s203
      %s206 = sphi 0, %s205
      %s220 = sphi 0, %s206
      %s224 = sphi 0, %s224
      %s226 = sphi 0, %s224
      %s227 = sphi 0, %s226
      %s241 = sphi 0, %s227
      %s245 = sphi 0, %s245
      %s247 = sphi 0, %s245
      %s248 = sphi 0, %s247
      %s262 = sphi 0, %s248
      %s266 = sphi 0, %s266
      %s268 = sphi 0, %s266
      %s269 = sphi 0, %s268
      %s283 = sphi 0, %s269
      %s287 = sphi 0, %s287
      %s289 = sphi 0, %s287
      %s290 = sphi 0, %s289
      %s304 = sphi 0, %s290
      %s310 = sphi 0, %s312
      %s313 = sphi 0, %s310
      %s314 = sphi 0, %s313
      %s330 = sphi 0, %s314
    $region4: #{qnetwork_forward.1} parent=1 // loop_header_branch
      %25 = sbr.rel (%p23) target = $region8
    $region5: #{qnetwork_forward.1} parent=1 // loop_body
      %s27 = ssub.s32 %s22, 1
      %s28 = ssub.s32 %s22, 2
      %s29 = sadd.s32 %s22, 1
      %s30 = ssub.s32 %s22, %s29
      %p31 = scmp.eq.s32.totalorder %s30, 0
      %s33 = sadd.s32 %s32, 1
      %s34 = scalar_select %p31, %s32, %s33
      %p37 = pneg %p31
      %p38 = scmp.eq.s32.totalorder %s22, 1
      %p39 = por %p37, %p38
      %p40 = scmp.ne.s32.totalorder %s32, %s35
      %p41 = scmp.eq.s32.totalorder %s22, 0
      %p42 = por %p40, %p41
      %p43 = scmp.ne.s32.totalorder %s32, %s35
      %p44 = scmp.eq.s32.totalorder %s27, 1
      %p45 = por %p43, %p44
      %p46 = scmp.ne.s32.totalorder %s35, %s36
      %p47 = scmp.eq.s32.totalorder %s27, 0
      %p48 = por %p46, %p47
      %p49 = scmp.ne.s32.totalorder %s35, %s36
      %p50 = scmp.eq.s32.totalorder %s28, 1
      %p51 = por %p49, %p50
      %p53 = scmp.ne.s32.totalorder %s36, %s52
      %p54 = scmp.eq.s32.totalorder %s28, 0
      %p55 = por %p53, %p54
      %s57 = sadd.s32 %s56, 1
      %p60 = scmp.eq.s32.totalorder %s22, 1
      %p61 = scmp.ne.s32.totalorder %s56, %s58
      %p62 = scmp.eq.s32.totalorder %s22, 0
      %p63 = por %p61, %p62
      %p64 = scmp.ne.s32.totalorder %s56, %s58
      %p65 = scmp.eq.s32.totalorder %s27, 1
      %p66 = por %p64, %p65
      %p67 = scmp.ne.s32.totalorder %s58, %s59
      %p68 = scmp.eq.s32.totalorder %s27, 0
      %p69 = por %p67, %p68
      %p70 = scmp.ne.s32.totalorder %s58, %s59
      %p71 = scmp.eq.s32.totalorder %s28, 1
      %p72 = por %p70, %p71
      %p74 = scmp.ne.s32.totalorder %s59, %s73
      %p75 = scmp.eq.s32.totalorder %s28, 0
      %p76 = por %p74, %p75
      %s78 = sadd.s32 %s77, 1
      %p81 = scmp.eq.s32.totalorder %s22, 1
      %p82 = scmp.ne.s32.totalorder %s77, %s79
      %p83 = scmp.eq.s32.totalorder %s22, 0
      %p84 = por %p82, %p83
      %p85 = scmp.ne.s32.totalorder %s77, %s79
      %p86 = scmp.eq.s32.totalorder %s27, 1
      %p87 = por %p85, %p86
      %p88 = scmp.ne.s32.totalorder %s79, %s80
      %p89 = scmp.eq.s32.totalorder %s27, 0
      %p90 = por %p88, %p89
      %p91 = scmp.ne.s32.totalorder %s79, %s80
      %p92 = scmp.eq.s32.totalorder %s28, 1
      %p93 = por %p91, %p92
      %p95 = scmp.ne.s32.totalorder %s80, %s94
      %p96 = scmp.eq.s32.totalorder %s28, 0
      %p97 = por %p95, %p96
      %s99 = sadd.s32 %s98, 1
      %p102 = scmp.eq.s32.totalorder %s22, 1
      %p103 = scmp.ne.s32.totalorder %s98, %s100
      %p104 = scmp.eq.s32.totalorder %s22, 0
      %p105 = por %p103, %p104
      %p106 = scmp.ne.s32.totalorder %s98, %s100
      %p107 = scmp.eq.s32.totalorder %s27, 1
      %p108 = por %p106, %p107
      %p109 = scmp.ne.s32.totalorder %s100, %s101
      %p110 = scmp.eq.s32.totalorder %s27, 0
      %p111 = por %p109, %p110
      %p112 = scmp.ne.s32.totalorder %s100, %s101
      %p113 = scmp.eq.s32.totalorder %s28, 1
      %p114 = por %p112, %p113
      %p116 = scmp.ne.s32.totalorder %s101, %s115
      %p117 = scmp.eq.s32.totalorder %s28, 0
      %p118 = por %p116, %p117
      %s120 = sadd.s32 %s119, 1
      %p123 = scmp.eq.s32.totalorder %s22, 1
      %p124 = scmp.ne.s32.totalorder %s119, %s121
      %p125 = scmp.eq.s32.totalorder %s22, 0
      %p126 = por %p124, %p125
      %p127 = scmp.ne.s32.totalorder %s119, %s121
      %p128 = scmp.eq.s32.totalorder %s27, 1
      %p129 = por %p127, %p128
      %p130 = scmp.ne.s32.totalorder %s121, %s122
      %p131 = scmp.eq.s32.totalorder %s27, 0
      %p132 = por %p130, %p131
      %p133 = scmp.ne.s32.totalorder %s121, %s122
      %p134 = scmp.eq.s32.totalorder %s28, 1
      %p135 = por %p133, %p134
      %p137 = scmp.ne.s32.totalorder %s122, %s136
      %p138 = scmp.eq.s32.totalorder %s28, 0
      %p139 = por %p137, %p138
      %s141 = sadd.s32 %s140, 1
      %p144 = scmp.eq.s32.totalorder %s22, 1
      %p145 = scmp.ne.s32.totalorder %s140, %s142
      %p146 = scmp.eq.s32.totalorder %s22, 0
      %p147 = por %p145, %p146
      %p148 = scmp.ne.s32.totalorder %s140, %s142
      %p149 = scmp.eq.s32.totalorder %s27, 1
      %p150 = por %p148, %p149
      %p151 = scmp.ne.s32.totalorder %s142, %s143
      %p152 = scmp.eq.s32.totalorder %s27, 0
      %p153 = por %p151, %p152
      %p154 = scmp.ne.s32.totalorder %s142, %s143
      %p155 = scmp.eq.s32.totalorder %s28, 1
      %p156 = por %p154, %p155
      %p158 = scmp.ne.s32.totalorder %s143, %s157
      %p159 = scmp.eq.s32.totalorder %s28, 0
      %p160 = por %p158, %p159
      %s162 = sadd.s32 %s161, 1
      %p165 = scmp.eq.s32.totalorder %s22, 1
      %p166 = scmp.ne.s32.totalorder %s161, %s163
      %p167 = scmp.eq.s32.totalorder %s22, 0
      %p168 = por %p166, %p167
      %p169 = scmp.ne.s32.totalorder %s161, %s163
      %p170 = scmp.eq.s32.totalorder %s27, 1
      %p171 = por %p169, %p170
      %p172 = scmp.ne.s32.totalorder %s163, %s164
      %p173 = scmp.eq.s32.totalorder %s27, 0
      %p174 = por %p172, %p173
      %p175 = scmp.ne.s32.totalorder %s163, %s164
      %p176 = scmp.eq.s32.totalorder %s28, 1
      %p177 = por %p175, %p176
      %p179 = scmp.ne.s32.totalorder %s164, %s178
      %p180 = scmp.eq.s32.totalorder %s28, 0
      %p181 = por %p179, %p180
      %s183 = sadd.s32 %s182, 1
      %p186 = scmp.eq.s32.totalorder %s22, 1
      %p187 = scmp.ne.s32.totalorder %s182, %s184
      %p188 = scmp.eq.s32.totalorder %s22, 0
      %p189 = por %p187, %p188
      %p190 = scmp.ne.s32.totalorder %s182, %s184
      %p191 = scmp.eq.s32.totalorder %s27, 1
      %p192 = por %p190, %p191
      %p193 = scmp.ne.s32.totalorder %s184, %s185
      %p194 = scmp.eq.s32.totalorder %s27, 0
      %p195 = por %p193, %p194
      %p196 = scmp.ne.s32.totalorder %s184, %s185
      %p197 = scmp.eq.s32.totalorder %s28, 1
      %p198 = por %p196, %p197
      %p200 = scmp.ne.s32.totalorder %s185, %s199
      %p201 = scmp.eq.s32.totalorder %s28, 0
      %p202 = por %p200, %p201
      %s204 = sadd.s32 %s203, 1
      %p207 = scmp.eq.s32.totalorder %s22, 1
      %p208 = scmp.ne.s32.totalorder %s203, %s205
      %p209 = scmp.eq.s32.totalorder %s22, 0
      %p210 = por %p208, %p209
      %p211 = scmp.ne.s32.totalorder %s203, %s205
      %p212 = scmp.eq.s32.totalorder %s27, 1
      %p213 = por %p211, %p212
      %p214 = scmp.ne.s32.totalorder %s205, %s206
      %p215 = scmp.eq.s32.totalorder %s27, 0
      %p216 = por %p214, %p215
      %p217 = scmp.ne.s32.totalorder %s205, %s206
      %p218 = scmp.eq.s32.totalorder %s28, 1
      %p219 = por %p217, %p218
      %p221 = scmp.ne.s32.totalorder %s206, %s220
      %p222 = scmp.eq.s32.totalorder %s28, 0
      %p223 = por %p221, %p222
      %s225 = sadd.s32 %s224, 1
      %p228 = scmp.eq.s32.totalorder %s22, 1
      %p229 = scmp.ne.s32.totalorder %s224, %s226
      %p230 = scmp.eq.s32.totalorder %s22, 0
      %p231 = por %p229, %p230
      %p232 = scmp.ne.s32.totalorder %s224, %s226
      %p233 = scmp.eq.s32.totalorder %s27, 1
      %p234 = por %p232, %p233
      %p235 = scmp.ne.s32.totalorder %s226, %s227
      %p236 = scmp.eq.s32.totalorder %s27, 0
      %p237 = por %p235, %p236
      %p238 = scmp.ne.s32.totalorder %s226, %s227
      %p239 = scmp.eq.s32.totalorder %s28, 1
      %p240 = por %p238, %p239
      %p242 = scmp.ne.s32.totalorder %s227, %s241
      %p243 = scmp.eq.s32.totalorder %s28, 0
      %p244 = por %p242, %p243
      %s246 = sadd.s32 %s245, 1
      %p249 = scmp.eq.s32.totalorder %s22, 1
      %p250 = scmp.ne.s32.totalorder %s245, %s247
      %p251 = scmp.eq.s32.totalorder %s22, 0
      %p252 = por %p250, %p251
      %p253 = scmp.ne.s32.totalorder %s245, %s247
      %p254 = scmp.eq.s32.totalorder %s27, 1
      %p255 = por %p253, %p254
      %p256 = scmp.ne.s32.totalorder %s247, %s248
      %p257 = scmp.eq.s32.totalorder %s27, 0
      %p258 = por %p256, %p257
      %p259 = scmp.ne.s32.totalorder %s247, %s248
      %p260 = scmp.eq.s32.totalorder %s28, 1
      %p261 = por %p259, %p260
      %p263 = scmp.ne.s32.totalorder %s248, %s262
      %p264 = scmp.eq.s32.totalorder %s28, 0
      %p265 = por %p263, %p264
      %s267 = sadd.s32 %s266, 1
      %p270 = scmp.eq.s32.totalorder %s22, 1
      %p271 = scmp.ne.s32.totalorder %s266, %s268
      %p272 = scmp.eq.s32.totalorder %s22, 0
      %p273 = por %p271, %p272
      %p274 = scmp.ne.s32.totalorder %s266, %s268
      %p275 = scmp.eq.s32.totalorder %s27, 1
      %p276 = por %p274, %p275
      %p277 = scmp.ne.s32.totalorder %s268, %s269
      %p278 = scmp.eq.s32.totalorder %s27, 0
      %p279 = por %p277, %p278
      %p280 = scmp.ne.s32.totalorder %s268, %s269
      %p281 = scmp.eq.s32.totalorder %s28, 1
      %p282 = por %p280, %p281
      %p284 = scmp.ne.s32.totalorder %s269, %s283
      %p285 = scmp.eq.s32.totalorder %s28, 0
      %p286 = por %p284, %p285
      %s288 = sadd.s32 %s287, 1
      %p291 = scmp.eq.s32.totalorder %s22, 1
      %p292 = scmp.ne.s32.totalorder %s287, %s289
      %p293 = scmp.eq.s32.totalorder %s22, 0
      %p294 = por %p292, %p293
      %p295 = scmp.ne.s32.totalorder %s287, %s289
      %p296 = scmp.eq.s32.totalorder %s27, 1
      %p297 = por %p295, %p296
      %p298 = scmp.ne.s32.totalorder %s289, %s290
      %p299 = scmp.eq.s32.totalorder %s27, 0
      %p300 = por %p298, %p299
      %p301 = scmp.ne.s32.totalorder %s289, %s290
      %p302 = scmp.eq.s32.totalorder %s28, 1
      %p303 = por %p301, %p302
      %p305 = scmp.ne.s32.totalorder %s290, %s304
      %p306 = scmp.eq.s32.totalorder %s28, 0
      %p307 = por %p305, %p306
      %s308 = ssub.s32 %s22, %s29
      %p309 = scmp.eq.s32.totalorder %s308, 0
      %s311 = sadd.s32 %s310, 1
      %s312 = scalar_select %p309, %s310, %s311
      %p315 = pneg %p309
      %p316 = scmp.eq.s32.totalorder %s22, 1
      %p317 = por %p315, %p316
      %p318 = scmp.ne.s32.totalorder %s310, %s313
      %p319 = scmp.eq.s32.totalorder %s22, 0
      %p320 = por %p318, %p319
      %p321 = scmp.ne.s32.totalorder %s310, %s313
      %p322 = scmp.eq.s32.totalorder %s27, 1
      %p323 = por %p321, %p322
      %p324 = scmp.ne.s32.totalorder %s313, %s314
      %p325 = scmp.eq.s32.totalorder %s27, 0
      %p326 = por %p324, %p325
      %p327 = scmp.ne.s32.totalorder %s313, %s314
      %p328 = scmp.eq.s32.totalorder %s28, 1
      %p329 = por %p327, %p328
      %p331 = scmp.ne.s32.totalorder %s314, %s330
      %p332 = scmp.eq.s32.totalorder %s28, 0
      %p333 = por %p331, %p332
      %p334 = scmp.le.s32.totalorder 1, %s22
      %p335 = scmp.lt.s32.totalorder %s22, 3
      %p336 = pnand %p334, %p335
      %p337 = pneg %p336
      // Predicated region
      $region9: #{qnetwork_forward.1} parent=5 // pred_check
        _
      $region10: #{qnetwork_forward.1} parent=5 // pred_check_branch
        %339 = sbr.rel (%p336) target = $region12
      $region11: #{qnetwork_forward.1} parent=5 // pred_region
        %s340 = ssub.s32 %s22, 1
        // Predicated region
        $region13: #{qnetwork_forward.1} parent=11 // pred_check
          %p341 = pneg %p69
        $region14: #{qnetwork_forward.1} parent=11 // pred_check_branch
          %343 = sbr.rel (%p341) target = $region16
        $region15: #{qnetwork_forward.1} parent=11 // pred_region
          _
        $region16: #{qnetwork_forward.1} parent=11 // pred_fallthru
          _
        // Predicated region
        $region17: #{qnetwork_forward.1} parent=11 // pred_check
          %p344 = pneg %p90
        $region18: #{qnetwork_forward.1} parent=11 // pred_check_branch
          %346 = sbr.rel (%p344) target = $region20
        $region19: #{qnetwork_forward.1} parent=11 // pred_region
          _
        $region20: #{qnetwork_forward.1} parent=11 // pred_fallthru
          _
        // Predicated region
        $region21: #{qnetwork_forward.1} parent=11 // pred_check
          %p347 = pneg %p111
        $region22: #{qnetwork_forward.1} parent=11 // pred_check_branch
          %349 = sbr.rel (%p347) target = $region24
        $region23: #{qnetwork_forward.1} parent=11 // pred_region
          _
        $region24: #{qnetwork_forward.1} parent=11 // pred_fallthru
          _
        // Predicated region
        $region25: #{qnetwork_forward.1} parent=11 // pred_check
          %p350 = pneg %p132
        $region26: #{qnetwork_forward.1} parent=11 // pred_check_branch
          %352 = sbr.rel (%p350) target = $region28
        $region27: #{qnetwork_forward.1} parent=11 // pred_region
          _
        $region28: #{qnetwork_forward.1} parent=11 // pred_fallthru
          _
        // Predicated region
        $region29: #{qnetwork_forward.1} parent=11 // pred_check
          %p353 = pneg %p153
        $region30: #{qnetwork_forward.1} parent=11 // pred_check_branch
          %355 = sbr.rel (%p353) target = $region32
        $region31: #{qnetwork_forward.1} parent=11 // pred_region
          _
        $region32: #{qnetwork_forward.1} parent=11 // pred_fallthru
          _
        // Predicated region
        $region33: #{qnetwork_forward.1} parent=11 // pred_check
          %p356 = pneg %p174
        $region34: #{qnetwork_forward.1} parent=11 // pred_check_branch
          %358 = sbr.rel (%p356) target = $region36
        $region35: #{qnetwork_forward.1} parent=11 // pred_region
          _
        $region36: #{qnetwork_forward.1} parent=11 // pred_fallthru
          _
        // Predicated region
        $region37: #{qnetwork_forward.1} parent=11 // pred_check
          %p359 = pneg %p195
        $region38: #{qnetwork_forward.1} parent=11 // pred_check_branch
          %361 = sbr.rel (%p359) target = $region40
        $region39: #{qnetwork_forward.1} parent=11 // pred_region
          _
        $region40: #{qnetwork_forward.1} parent=11 // pred_fallthru
          _
        // Predicated region
        $region41: #{qnetwork_forward.1} parent=11 // pred_check
          %p362 = pneg %p216
        $region42: #{qnetwork_forward.1} parent=11 // pred_check_branch
          %364 = sbr.rel (%p362) target = $region44
        $region43: #{qnetwork_forward.1} parent=11 // pred_region
          _
        $region44: #{qnetwork_forward.1} parent=11 // pred_fallthru
          _
        // Predicated region
        $region45: #{qnetwork_forward.1} parent=11 // pred_check
          %p365 = pneg %p237
        $region46: #{qnetwork_forward.1} parent=11 // pred_check_branch
          %367 = sbr.rel (%p365) target = $region48
        $region47: #{qnetwork_forward.1} parent=11 // pred_region
          _
        $region48: #{qnetwork_forward.1} parent=11 // pred_fallthru
          _
        // Predicated region
        $region49: #{qnetwork_forward.1} parent=11 // pred_check
          %p368 = pneg %p258
        $region50: #{qnetwork_forward.1} parent=11 // pred_check_branch
          %370 = sbr.rel (%p368) target = $region52
        $region51: #{qnetwork_forward.1} parent=11 // pred_region
          _
        $region52: #{qnetwork_forward.1} parent=11 // pred_fallthru
          _
        // Predicated region
        $region53: #{qnetwork_forward.1} parent=11 // pred_check
          %p371 = pneg %p279
        $region54: #{qnetwork_forward.1} parent=11 // pred_check_branch
          %373 = sbr.rel (%p371) target = $region56
        $region55: #{qnetwork_forward.1} parent=11 // pred_region
          _
        $region56: #{qnetwork_forward.1} parent=11 // pred_fallthru
          _
        // Predicated region
        $region57: #{qnetwork_forward.1} parent=11 // pred_check
          %p374 = pneg %p300
        $region58: #{qnetwork_forward.1} parent=11 // pred_check_branch
          %376 = sbr.rel (%p374) target = $region60
        $region59: #{qnetwork_forward.1} parent=11 // pred_region
          _
        $region60: #{qnetwork_forward.1} parent=11 // pred_fallthru
          _
      $region12: #{qnetwork_forward.1} parent=5 // pred_fallthru
        _
      %p377 = scmp.lt.s32.totalorder %s22, 2
      // Predicated region
      $region61: #{qnetwork_forward.1} parent=5 // pred_check
        %p378 = pneg %p377
      $region62: #{qnetwork_forward.1} parent=5 // pred_check_branch
        %380 = sbr.rel (%p378) target = $region64
      $region63: #{qnetwork_forward.1} parent=5 // pred_region
        // Predicated region
        $region65: #{qnetwork_forward.1} parent=63 // pred_check
          %p381 = pneg %p42
        $region66: #{qnetwork_forward.1} parent=63 // pred_check_branch
          %383 = sbr.rel (%p381) target = $region68
        $region67: #{qnetwork_forward.1} parent=63 // pred_region
          %p384 = scmp.lt.s32.totalorder %s22, 1
          %s385 = scalar_select %p384, %s22, 1
          %s386 = smul.addr %s385, 32
          %s387 = smul.addr %s386, 8
          %s388 = scalar_lea.vmem %s0, %s387
        $region68: #{qnetwork_forward.1} parent=63 // pred_fallthru
          _
      $region64: #{qnetwork_forward.1} parent=5 // pred_fallthru
        _
      %p389 = scmp.le.s32.totalorder 1, %s22
      %p390 = scmp.lt.s32.totalorder %s22, 3
      %p391 = pnand %p389, %p390
      %p392 = pneg %p391
      // Predicated region
      $region69: #{qnetwork_forward.1} parent=5 // pred_check
        _
      $region70: #{qnetwork_forward.1} parent=5 // pred_check_branch
        %394 = sbr.rel (%p391) target = $region72
      $region71: #{qnetwork_forward.1} parent=5 // pred_region
        %s395 = ssub.s32 %s22, 1
        %p396 = scmp.lt.s32.totalorder %s27, 1
        %s397 = scalar_select %p396, %s27, 1
        %s398 = smul.addr %s397, 32
        %s399 = smul.addr %s398, 8
        %s400 = scalar_lea.vmem %s0, %s399
        %p401 = pneg %p48
        %p402 = pneg %p45
        %p403 = pneg %p69
        %p404 = pneg %p66
        %p405 = pneg %p90
        %p406 = pneg %p87
        %p407 = pneg %p111
        %p408 = pneg %p108
        %p409 = pneg %p132
        %p410 = pneg %p129
        %p411 = pneg %p153
        %p412 = pneg %p150
        %p413 = pneg %p174
        %p414 = pneg %p171
        %p415 = pneg %p195
        %p416 = pneg %p192
        %p417 = pneg %p216
        %p418 = pneg %p213
        %p419 = pneg %p237
        %p420 = pneg %p234
        %p421 = pneg %p258
        %p422 = pneg %p255
        %p423 = pneg %p279
        %p424 = pneg %p276
        %p425 = pneg %p300
        %p426 = pneg %p297
        %p427 = pneg %p326
        %p428 = pneg %p323
        %s429 = sand.u32 %s313, 1
        %s430 = scalar_lea.sflag [#allocation10], %s429
        %s431 = sand.u32 %s313, 1
        %s432 = scalar_lea.vmem [#allocation9], %s431
        %p433 = scmp.lt.s32.totalorder %s27, 1
        %s434 = scalar_select %p433, %s27, 1
        %s435 = smul.addr %s434, 32
        %s436 = smul.addr %s435, 8
        %s437 = scalar_lea.vmem %s0, %s436
        %v439 = vld [vmem:[%s437] sm:$0xff]
        %v440 = vld [vmem:[%s437 + $0x8] sm:$0xff]
        %v441 = vld [vmem:[%s437 + $0x10] sm:$0xff]
        %v442 = vld [vmem:[%s437 + $0x18] sm:$0xff]
        %v443 = vld [vmem:[%s437 + $0x20] sm:$0xff]
        %v444 = vld [vmem:[%s437 + $0x28] sm:$0xff]
        %v445 = vld [vmem:[%s437 + $0x30] sm:$0xff]
        %v446 = vld [vmem:[%s437 + $0x38] sm:$0xff]
        %v447 = vpack.c.bf16 %v440, %v439
        %v448 = vpack.c.bf16 %v442, %v441
        %v449 = vpack.c.bf16 %v444, %v443
        %v450 = vpack.c.bf16 %v446, %v445
        %v451 = vld [vmem:[%s1] sm:$0x3f]
        %v453 = vcombine.high %v451, %v451
        %v455 = vunpack.c.l.s4 1983009808
        %v456 = vunpack.c.0.s8 %v455
        %v457 = vlaneseq
        %v458 = vshrl.u32 %v457, 7
        %v459 = vsub.s32 %v456, %v458
        %v460 = vrot.slane %v451, %v459
        %v462 = vunpack.c.l.s4 1983009808
        %v463 = vunpack.c.0.s8 %v462
        %v464 = vlaneseq
        %v465 = vshrl.u32 %v464, 7
        %v466 = vsub.s32 %v463, %v465
        %v467 = vrot.slane %v453, %v466
        %v468 = vcombine.high %v460, %v460
        %vm469 = vcmask 31744
        %v471 = vsel %vm469, %v447, 0
        %v474 = vsel %vm469, %v448, 0
        %v477 = vsel %vm469, %v449, 0
        %v480 = vsel %vm469, %v450, 0
        %vm482 = vcmask 1041408
        %v484 = vsel %vm482, %v460, 0
        %v487 = vsel %vm482, %v468, 0
        %v490 = vsel %vm482, %v467, 0
        %492 = vmatprep.subr.bf16.mxu0 0
        %493 = vmatpush1.bf16.msra.mxu0 0
        %494 = vmatprep.subr.bf16.mxu0 0
        %495 = vmatpush1.bf16.msra.mxu0 0
        %496 = vmatprep.subr.bf16.mxu0 0
        %497 = vmatpush1.bf16.msra.mxu0 0
        %498 = vmatprep.subr.bf16.mxu0 0
        %499 = vmatpush1.bf16.msra.mxu0 0
        %500 = vmatprep.subr.bf16.mxu0 0
        %501 = vmatpush1.bf16.msra.mxu0 0
        %502 = vmatprep.subr.bf16.mxu0 0
        %503 = vmatpush1.bf16.msra.mxu0 0
        %504 = vmatprep.subr.bf16.mxu0 0
        %505 = vmatpush1.bf16.msra.mxu0 0
        %506 = vmatprep.subr.bf16.mxu0 %v487
        %507 = vmatpush1.bf16.msra.mxu0 %v484
        %508 = vmatprep.subr.bf16.mxu0 0
        %509 = vmatpush2.bf16.msra.mxu0 0
        %510 = vmatprep.subr.bf16.mxu0 0
        %511 = vmatpush2.bf16.msra.mxu0 0
        %512 = vmatprep.subr.bf16.mxu0 0
        %513 = vmatpush2.bf16.msra.mxu0 0
        %514 = vmatprep.subr.bf16.mxu0 0
        %515 = vmatpush2.bf16.msra.mxu0 0
        %516 = vmatprep.subr.bf16.mxu0 0
        %517 = vmatpush2.bf16.msra.mxu0 0
        %518 = vmatprep.subr.bf16.mxu0 0
        %519 = vmatpush2.bf16.msra.mxu0 0
        %520 = vmatprep.subr.bf16.mxu0 0
        %521 = vmatpush2.bf16.msra.mxu0 0
        %522 = vmatprep.subr.bf16.mxu0 0
        %523 = vmatpush2.bf16.msra.mxu0 0
        %524 = vmatprep.mubr.bf16.mxu0 0
        %525 = vmatmul.mubr.bf16.gmra.mxu0 %v471
        %v526 = vpop.f32.mrf.mxu0
        %v527 = vadd.f32 0.0, %v526
        %v528 = vpop.f32.mrf.mxu0
        %v529 = vadd.f32 0.0, %v528
        %v530 = vpop.f32.mrf.mxu0
        %v531 = vadd.f32 0.0, %v530
        %v532 = vpop.f32.mrf.mxu0
        %v533 = vadd.f32 0.0, %v532
        %534 = vmatprep.mubr.bf16.mxu0 0
        %535 = vmatmul.mubr.bf16.gmra.mxu0 %v474
        %v536 = vpop.f32.mrf.mxu0
        %v537 = vadd.f32 0.0, %v536
        %v538 = vpop.f32.mrf.mxu0
        %v539 = vadd.f32 0.0, %v538
        %v540 = vpop.f32.mrf.mxu0
        %v541 = vadd.f32 0.0, %v540
        %v542 = vpop.f32.mrf.mxu0
        %v543 = vadd.f32 0.0, %v542
        %544 = vmatprep.mubr.bf16.mxu0 0
        %545 = vmatmul.mubr.bf16.gmra.mxu0 %v477
        %v546 = vpop.f32.mrf.mxu0
        %v547 = vadd.f32 0.0, %v546
        %v548 = vpop.f32.mrf.mxu0
        %v549 = vadd.f32 0.0, %v548
        %v550 = vpop.f32.mrf.mxu0
        %v551 = vadd.f32 0.0, %v550
        %v552 = vpop.f32.mrf.mxu0
        %v553 = vadd.f32 0.0, %v552
        %554 = vmatprep.mubr.bf16.mxu0 0
        %555 = vmatmul.mubr.bf16.gmra.mxu0 %v480
        %v556 = vpop.f32.mrf.mxu0
        %v557 = vadd.f32 0.0, %v556
        %v558 = vpop.f32.mrf.mxu0
        %v559 = vadd.f32 0.0, %v558
        %v560 = vpop.f32.mrf.mxu0
        %v561 = vadd.f32 0.0, %v560
        %v562 = vpop.f32.mrf.mxu0
        %v563 = vadd.f32 0.0, %v562
        %564 = vdwg.mxu0
        %565 = vmatprep.subr.bf16.mxu0 0
        %566 = vmatpush1.bf16.msra.mxu0 0
        %567 = vmatprep.subr.bf16.mxu0 0
        %568 = vmatpush1.bf16.msra.mxu0 0
        %569 = vmatprep.subr.bf16.mxu0 0
        %570 = vmatpush1.bf16.msra.mxu0 0
        %571 = vmatprep.subr.bf16.mxu0 0
        %572 = vmatpush1.bf16.msra.mxu0 0
        %573 = vmatprep.subr.bf16.mxu0 0
        %574 = vmatpush1.bf16.msra.mxu0 0
        %575 = vmatprep.subr.bf16.mxu0 0
        %576 = vmatpush1.bf16.msra.mxu0 0
        %577 = vmatprep.subr.bf16.mxu0 0
        %578 = vmatpush1.bf16.msra.mxu0 0
        %579 = vmatprep.subr.bf16.mxu0 0
        %580 = vmatpush1.bf16.msra.mxu0 %v490
        %581 = vmatprep.subr.bf16.mxu0 0
        %582 = vmatpush2.bf16.msra.mxu0 0
        %583 = vmatprep.subr.bf16.mxu0 0
        %584 = vmatpush2.bf16.msra.mxu0 0
        %585 = vmatprep.subr.bf16.mxu0 0
        %586 = vmatpush2.bf16.msra.mxu0 0
        %587 = vmatprep.subr.bf16.mxu0 0
        %588 = vmatpush2.bf16.msra.mxu0 0
        %589 = vmatprep.subr.bf16.mxu0 0
        %590 = vmatpush2.bf16.msra.mxu0 0
        %591 = vmatprep.subr.bf16.mxu0 0
        %592 = vmatpush2.bf16.msra.mxu0 0
        %593 = vmatprep.subr.bf16.mxu0 0
        %594 = vmatpush2.bf16.msra.mxu0 0
        %595 = vmatprep.subr.bf16.mxu0 0
        %596 = vmatpush2.bf16.msra.mxu0 0
        %597 = vmatprep.mubr.bf16.mxu0 0
        %598 = vmatmul.mubr.bf16.gmra.mxu0 %v471
        %v599 = vpop.f32.mrf.mxu0
        %v600 = vadd.f32 0.0, %v599
        %v601 = vpop.f32.mrf.mxu0
        %v602 = vpop.f32.mrf.mxu0
        %v603 = vadd.f32 0.0, %v602
        %v604 = vpop.f32.mrf.mxu0
        %605 = vmatprep.mubr.bf16.mxu0 0
        %606 = vmatmul.mubr.bf16.gmra.mxu0 %v474
        %v607 = vpop.f32.mrf.mxu0
        %v608 = vadd.f32 0.0, %v607
        %v609 = vpop.f32.mrf.mxu0
        %v610 = vpop.f32.mrf.mxu0
        %v611 = vadd.f32 0.0, %v610
        %v612 = vpop.f32.mrf.mxu0
        %613 = vmatprep.mubr.bf16.mxu0 0
        %614 = vmatmul.mubr.bf16.gmra.mxu0 %v477
        %v615 = vpop.f32.mrf.mxu0
        %v616 = vadd.f32 0.0, %v615
        %v617 = vpop.f32.mrf.mxu0
        %v618 = vpop.f32.mrf.mxu0
        %v619 = vadd.f32 0.0, %v618
        %v620 = vpop.f32.mrf.mxu0
        %621 = vmatprep.mubr.bf16.mxu0 0
        %622 = vmatmul.mubr.bf16.gmra.mxu0 %v480
        %v623 = vpop.f32.mrf.mxu0
        %v624 = vadd.f32 0.0, %v623
        %v625 = vpop.f32.mrf.mxu0
        %v626 = vpop.f32.mrf.mxu0
        %v627 = vadd.f32 0.0, %v626
        %v628 = vpop.f32.mrf.mxu0
        %629 = vdwg.mxu0
        %630 = vst [vmem:[#allocation7] sm:$0xff] %v527
        %631 = vst [vmem:[#allocation7 + $0x8] sm:$0xff] %v529
        %vm632 = vcmask 261120
        %633 = vst.msk [vmem:[#allocation7 + $0x10] sm:$0xff] %vm632, %v600
        %634 = vst [vmem:[#allocation7 + $0x18] sm:$0xff] %v531
        %635 = vst [vmem:[#allocation7 + $0x20] sm:$0xff] %v533
        %636 = vst.msk [vmem:[#allocation7 + $0x28] sm:$0xff] %vm632, %v603
        %637 = vst [vmem:[#allocation7 + $0x30] sm:$0xff] %v537
        %638 = vst [vmem:[#allocation7 + $0x38] sm:$0xff] %v539
        %639 = vst.msk [vmem:[#allocation7 + $0x40] sm:$0xff] %vm632, %v608
        %640 = vst [vmem:[#allocation7 + $0x48] sm:$0xff] %v541
        %641 = vst [vmem:[#allocation7 + $0x50] sm:$0xff] %v543
        %642 = vst.msk [vmem:[#allocation7 + $0x58] sm:$0xff] %vm632, %v611
        %643 = vst [vmem:[#allocation7 + $0x60] sm:$0xff] %v547
        %644 = vst [vmem:[#allocation7 + $0x68] sm:$0xff] %v549
        %645 = vst.msk [vmem:[#allocation7 + $0x70] sm:$0xff] %vm632, %v616
        %646 = vst [vmem:[#allocation7 + $0x78] sm:$0xff] %v551
        %647 = vst [vmem:[#allocation7 + $0x80] sm:$0xff] %v553
        %648 = vst.msk [vmem:[#allocation7 + $0x88] sm:$0xff] %vm632, %v619
        %649 = vst [vmem:[#allocation7 + $0x90] sm:$0xff] %v557
        %650 = vst [vmem:[#allocation7 + $0x98] sm:$0xff] %v559
        %651 = vst.msk [vmem:[#allocation7 + $0xa0] sm:$0xff] %vm632, %v624
        %652 = vst [vmem:[#allocation7 + $0xa8] sm:$0xff] %v561
        %653 = vst [vmem:[#allocation7 + $0xb0] sm:$0xff] %v563
        %654 = vst.msk [vmem:[#allocation7 + $0xb8] sm:$0xff] %vm632, %v627
        %v655 = vld [vmem:[%s437 + $0x40] sm:$0xff]
        %v656 = vld [vmem:[%s437 + $0x48] sm:$0xff]
        %v657 = vld [vmem:[%s437 + $0x50] sm:$0xff]
        %v658 = vld [vmem:[%s437 + $0x58] sm:$0xff]
        %v659 = vld [vmem:[%s437 + $0x60] sm:$0xff]
        %v660 = vld [vmem:[%s437 + $0x68] sm:$0xff]
        %v661 = vld [vmem:[%s437 + $0x70] sm:$0xff]
        %v662 = vld [vmem:[%s437 + $0x78] sm:$0xff]
        %v663 = vpack.c.bf16 %v656, %v655
        %v664 = vpack.c.bf16 %v658, %v657
        %v665 = vpack.c.bf16 %v660, %v659
        %v666 = vpack.c.bf16 %v662, %v661
        %v667 = vld [vmem:[%s1] sm:$0x3f]
        %v669 = vcombine.high %v667, %v667
        %v671 = vunpack.c.l.s4 1983009808
        %v672 = vunpack.c.0.s8 %v671
        %v673 = vlaneseq
        %v674 = vshrl.u32 %v673, 7
        %v675 = vsub.s32 %v672, %v674
        %v676 = vrot.slane %v667, %v675
        %v678 = vunpack.c.l.s4 1983009808
        %v679 = vunpack.c.0.s8 %v678
        %v680 = vlaneseq
        %v681 = vshrl.u32 %v680, 7
        %v682 = vsub.s32 %v679, %v681
        %v683 = vrot.slane %v669, %v682
        %v684 = vcombine.high %v676, %v676
        %v686 = vsel %vm469, %v663, 0
        %v689 = vsel %vm469, %v664, 0
        %v692 = vsel %vm469, %v665, 0
        %v695 = vsel %vm469, %v666, 0
        %v698 = vsel %vm482, %v676, 0
        %v701 = vsel %vm482, %v684, 0
        %v704 = vsel %vm482, %v683, 0
        %706 = vmatprep.subr.bf16.mxu0 0
        %707 = vmatpush1.bf16.msra.mxu0 0
        %708 = vmatprep.subr.bf16.mxu0 0
        %709 = vmatpush1.bf16.msra.mxu0 0
        %710 = vmatprep.subr.bf16.mxu0 0
        %711 = vmatpush1.bf16.msra.mxu0 0
        %712 = vmatprep.subr.bf16.mxu0 0
        %713 = vmatpush1.bf16.msra.mxu0 0
        %714 = vmatprep.subr.bf16.mxu0 0
        %715 = vmatpush1.bf16.msra.mxu0 0
        %716 = vmatprep.subr.bf16.mxu0 0
        %717 = vmatpush1.bf16.msra.mxu0 0
        %718 = vmatprep.subr.bf16.mxu0 0
        %719 = vmatpush1.bf16.msra.mxu0 0
        %720 = vmatprep.subr.bf16.mxu0 %v701
        %721 = vmatpush1.bf16.msra.mxu0 %v698
        %722 = vmatprep.subr.bf16.mxu0 0
        %723 = vmatpush2.bf16.msra.mxu0 0
        %724 = vmatprep.subr.bf16.mxu0 0
        %725 = vmatpush2.bf16.msra.mxu0 0
        %726 = vmatprep.subr.bf16.mxu0 0
        %727 = vmatpush2.bf16.msra.mxu0 0
        %728 = vmatprep.subr.bf16.mxu0 0
        %729 = vmatpush2.bf16.msra.mxu0 0
        %730 = vmatprep.subr.bf16.mxu0 0
        %731 = vmatpush2.bf16.msra.mxu0 0
        %732 = vmatprep.subr.bf16.mxu0 0
        %733 = vmatpush2.bf16.msra.mxu0 0
        %734 = vmatprep.subr.bf16.mxu0 0
        %735 = vmatpush2.bf16.msra.mxu0 0
        %736 = vmatprep.subr.bf16.mxu0 0
        %737 = vmatpush2.bf16.msra.mxu0 0
        %738 = vmatprep.mubr.bf16.mxu0 0
        %739 = vmatmul.mubr.bf16.gmra.mxu0 %v686
        %v740 = vpop.f32.mrf.mxu0
        %v741 = vadd.f32 0.0, %v740
        %v742 = vpop.f32.mrf.mxu0
        %v743 = vadd.f32 0.0, %v742
        %v744 = vpop.f32.mrf.mxu0
        %v745 = vadd.f32 0.0, %v744
        %v746 = vpop.f32.mrf.mxu0
        %v747 = vadd.f32 0.0, %v746
        %748 = vmatprep.mubr.bf16.mxu0 0
        %749 = vmatmul.mubr.bf16.gmra.mxu0 %v689
        %v750 = vpop.f32.mrf.mxu0
        %v751 = vadd.f32 0.0, %v750
        %v752 = vpop.f32.mrf.mxu0
        %v753 = vadd.f32 0.0, %v752
        %v754 = vpop.f32.mrf.mxu0
        %v755 = vadd.f32 0.0, %v754
        %v756 = vpop.f32.mrf.mxu0
        %v757 = vadd.f32 0.0, %v756
        %758 = vmatprep.mubr.bf16.mxu0 0
        %759 = vmatmul.mubr.bf16.gmra.mxu0 %v692
        %v760 = vpop.f32.mrf.mxu0
        %v761 = vadd.f32 0.0, %v760
        %v762 = vpop.f32.mrf.mxu0
        %v763 = vadd.f32 0.0, %v762
        %v764 = vpop.f32.mrf.mxu0
        %v765 = vadd.f32 0.0, %v764
        %v766 = vpop.f32.mrf.mxu0
        %v767 = vadd.f32 0.0, %v766
        %768 = vmatprep.mubr.bf16.mxu0 0
        %769 = vmatmul.mubr.bf16.gmra.mxu0 %v695
        %v770 = vpop.f32.mrf.mxu0
        %v771 = vadd.f32 0.0, %v770
        %v772 = vpop.f32.mrf.mxu0
        %v773 = vadd.f32 0.0, %v772
        %v774 = vpop.f32.mrf.mxu0
        %v775 = vadd.f32 0.0, %v774
        %v776 = vpop.f32.mrf.mxu0
        %v777 = vadd.f32 0.0, %v776
        %778 = vdwg.mxu0
        %779 = vmatprep.subr.bf16.mxu0 0
        %780 = vmatpush1.bf16.msra.mxu0 0
        %781 = vmatprep.subr.bf16.mxu0 0
        %782 = vmatpush1.bf16.msra.mxu0 0
        %783 = vmatprep.subr.bf16.mxu0 0
        %784 = vmatpush1.bf16.msra.mxu0 0
        %785 = vmatprep.subr.bf16.mxu0 0
        %786 = vmatpush1.bf16.msra.mxu0 0
        %787 = vmatprep.subr.bf16.mxu0 0
        %788 = vmatpush1.bf16.msra.mxu0 0
        %789 = vmatprep.subr.bf16.mxu0 0
        %790 = vmatpush1.bf16.msra.mxu0 0
        %791 = vmatprep.subr.bf16.mxu0 0
        %792 = vmatpush1.bf16.msra.mxu0 0
        %793 = vmatprep.subr.bf16.mxu0 0
        %794 = vmatpush1.bf16.msra.mxu0 %v704
        %795 = vmatprep.subr.bf16.mxu0 0
        %796 = vmatpush2.bf16.msra.mxu0 0
        %797 = vmatprep.subr.bf16.mxu0 0
        %798 = vmatpush2.bf16.msra.mxu0 0
        %799 = vmatprep.subr.bf16.mxu0 0
        %800 = vmatpush2.bf16.msra.mxu0 0
        %801 = vmatprep.subr.bf16.mxu0 0
        %802 = vmatpush2.bf16.msra.mxu0 0
        %803 = vmatprep.subr.bf16.mxu0 0
        %804 = vmatpush2.bf16.msra.mxu0 0
        %805 = vmatprep.subr.bf16.mxu0 0
        %806 = vmatpush2.bf16.msra.mxu0 0
        %807 = vmatprep.subr.bf16.mxu0 0
        %808 = vmatpush2.bf16.msra.mxu0 0
        %809 = vmatprep.subr.bf16.mxu0 0
        %810 = vmatpush2.bf16.msra.mxu0 0
        %811 = vmatprep.mubr.bf16.mxu0 0
        %812 = vmatmul.mubr.bf16.gmra.mxu0 %v686
        %v813 = vpop.f32.mrf.mxu0
        %v814 = vadd.f32 0.0, %v813
        %v815 = vpop.f32.mrf.mxu0
        %v816 = vpop.f32.mrf.mxu0
        %v817 = vadd.f32 0.0, %v816
        %v818 = vpop.f32.mrf.mxu0
        %819 = vmatprep.mubr.bf16.mxu0 0
        %820 = vmatmul.mubr.bf16.gmra.mxu0 %v689
        %v821 = vpop.f32.mrf.mxu0
        %v822 = vadd.f32 0.0, %v821
        %v823 = vpop.f32.mrf.mxu0
        %v824 = vpop.f32.mrf.mxu0
        %v825 = vadd.f32 0.0, %v824
        %v826 = vpop.f32.mrf.mxu0
        %827 = vmatprep.mubr.bf16.mxu0 0
        %828 = vmatmul.mubr.bf16.gmra.mxu0 %v692
        %v829 = vpop.f32.mrf.mxu0
        %v830 = vadd.f32 0.0, %v829
        %v831 = vpop.f32.mrf.mxu0
        %v832 = vpop.f32.mrf.mxu0
        %v833 = vadd.f32 0.0, %v832
        %v834 = vpop.f32.mrf.mxu0
        %835 = vmatprep.mubr.bf16.mxu0 0
        %836 = vmatmul.mubr.bf16.gmra.mxu0 %v695
        %v837 = vpop.f32.mrf.mxu0
        %v838 = vadd.f32 0.0, %v837
        %v839 = vpop.f32.mrf.mxu0
        %v840 = vpop.f32.mrf.mxu0
        %v841 = vadd.f32 0.0, %v840
        %v842 = vpop.f32.mrf.mxu0
        %843 = vdwg.mxu0
        %844 = vst [vmem:[#allocation7 + $0xc0] sm:$0xff] %v741
        %845 = vst [vmem:[#allocation7 + $0xc8] sm:$0xff] %v743
        %846 = vst.msk [vmem:[#allocation7 + $0xd0] sm:$0xff] %vm632, %v814
        %847 = vst [vmem:[#allocation7 + $0xd8] sm:$0xff] %v745
        %848 = vst [vmem:[#allocation7 + $0xe0] sm:$0xff] %v747
        %849 = vst.msk [vmem:[#allocation7 + $0xe8] sm:$0xff] %vm632, %v817
        %850 = vst [vmem:[#allocation7 + $0xf0] sm:$0xff] %v751
        %851 = vst [vmem:[#allocation7 + $0xf8] sm:$0xff] %v753
        %852 = vst.msk [vmem:[#allocation7 + $0x100] sm:$0xff] %vm632, %v822
        %853 = vst [vmem:[#allocation7 + $0x108] sm:$0xff] %v755
        %854 = vst [vmem:[#allocation7 + $0x110] sm:$0xff] %v757
        %855 = vst.msk [vmem:[#allocation7 + $0x118] sm:$0xff] %vm632, %v825
        %856 = vst [vmem:[#allocation7 + $0x120] sm:$0xff] %v761
        %857 = vst [vmem:[#allocation7 + $0x128] sm:$0xff] %v763
        %858 = vst.msk [vmem:[#allocation7 + $0x130] sm:$0xff] %vm632, %v830
        %859 = vst [vmem:[#allocation7 + $0x138] sm:$0xff] %v765
        %860 = vst [vmem:[#allocation7 + $0x140] sm:$0xff] %v767
        %861 = vst.msk [vmem:[#allocation7 + $0x148] sm:$0xff] %vm632, %v833
        %862 = vst [vmem:[#allocation7 + $0x150] sm:$0xff] %v771
        %863 = vst [vmem:[#allocation7 + $0x158] sm:$0xff] %v773
        %864 = vst.msk [vmem:[#allocation7 + $0x160] sm:$0xff] %vm632, %v838
        %865 = vst [vmem:[#allocation7 + $0x168] sm:$0xff] %v775
        %866 = vst [vmem:[#allocation7 + $0x170] sm:$0xff] %v777
        %867 = vst.msk [vmem:[#allocation7 + $0x178] sm:$0xff] %vm632, %v841
        %v868 = vld [vmem:[%s437 + $0x80] sm:$0xff]
        %v869 = vld [vmem:[%s437 + $0x88] sm:$0xff]
        %v870 = vld [vmem:[%s437 + $0x90] sm:$0xff]
        %v871 = vld [vmem:[%s437 + $0x98] sm:$0xff]
        %v872 = vld [vmem:[%s437 + $0xa0] sm:$0xff]
        %v873 = vld [vmem:[%s437 + $0xa8] sm:$0xff]
        %v874 = vld [vmem:[%s437 + $0xb0] sm:$0xff]
        %v875 = vld [vmem:[%s437 + $0xb8] sm:$0xff]
        %v876 = vpack.c.bf16 %v869, %v868
        %v877 = vpack.c.bf16 %v871, %v870
        %v878 = vpack.c.bf16 %v873, %v872
        %v879 = vpack.c.bf16 %v875, %v874
        %v880 = vld [vmem:[%s1] sm:$0x3f]
        %v882 = vcombine.high %v880, %v880
        %v884 = vunpack.c.l.s4 1983009808
        %v885 = vunpack.c.0.s8 %v884
        %v886 = vlaneseq
        %v887 = vshrl.u32 %v886, 7
        %v888 = vsub.s32 %v885, %v887
        %v889 = vrot.slane %v880, %v888
        %v891 = vunpack.c.l.s4 1983009808
        %v892 = vunpack.c.0.s8 %v891
        %v893 = vlaneseq
        %v894 = vshrl.u32 %v893, 7
        %v895 = vsub.s32 %v892, %v894
        %v896 = vrot.slane %v882, %v895
        %v897 = vcombine.high %v889, %v889
        %v899 = vsel %vm469, %v876, 0
        %v902 = vsel %vm469, %v877, 0
        %v905 = vsel %vm469, %v878, 0
        %v908 = vsel %vm469, %v879, 0
        %v911 = vsel %vm482, %v889, 0
        %v914 = vsel %vm482, %v897, 0
        %v917 = vsel %vm482, %v896, 0
        %919 = vmatprep.subr.bf16.mxu0 0
        %920 = vmatpush1.bf16.msra.mxu0 0
        %921 = vmatprep.subr.bf16.mxu0 0
        %922 = vmatpush1.bf16.msra.mxu0 0
        %923 = vmatprep.subr.bf16.mxu0 0
        %924 = vmatpush1.bf16.msra.mxu0 0
        %925 = vmatprep.subr.bf16.mxu0 0
        %926 = vmatpush1.bf16.msra.mxu0 0
        %927 = vmatprep.subr.bf16.mxu0 0
        %928 = vmatpush1.bf16.msra.mxu0 0
        %929 = vmatprep.subr.bf16.mxu0 0
        %930 = vmatpush1.bf16.msra.mxu0 0
        %931 = vmatprep.subr.bf16.mxu0 0
        %932 = vmatpush1.bf16.msra.mxu0 0
        %933 = vmatprep.subr.bf16.mxu0 %v914
        %934 = vmatpush1.bf16.msra.mxu0 %v911
        %935 = vmatprep.subr.bf16.mxu0 0
        %936 = vmatpush2.bf16.msra.mxu0 0
        %937 = vmatprep.subr.bf16.mxu0 0
        %938 = vmatpush2.bf16.msra.mxu0 0
        %939 = vmatprep.subr.bf16.mxu0 0
        %940 = vmatpush2.bf16.msra.mxu0 0
        %941 = vmatprep.subr.bf16.mxu0 0
        %942 = vmatpush2.bf16.msra.mxu0 0
        %943 = vmatprep.subr.bf16.mxu0 0
        %944 = vmatpush2.bf16.msra.mxu0 0
        %945 = vmatprep.subr.bf16.mxu0 0
        %946 = vmatpush2.bf16.msra.mxu0 0
        %947 = vmatprep.subr.bf16.mxu0 0
        %948 = vmatpush2.bf16.msra.mxu0 0
        %949 = vmatprep.subr.bf16.mxu0 0
        %950 = vmatpush2.bf16.msra.mxu0 0
        %951 = vmatprep.mubr.bf16.mxu0 0
        %952 = vmatmul.mubr.bf16.gmra.mxu0 %v899
        %v953 = vpop.f32.mrf.mxu0
        %v954 = vadd.f32 0.0, %v953
        %v955 = vpop.f32.mrf.mxu0
        %v956 = vadd.f32 0.0, %v955
        %v957 = vpop.f32.mrf.mxu0
        %v958 = vadd.f32 0.0, %v957
        %v959 = vpop.f32.mrf.mxu0
        %v960 = vadd.f32 0.0, %v959
        %961 = vmatprep.mubr.bf16.mxu0 0
        %962 = vmatmul.mubr.bf16.gmra.mxu0 %v902
        %v963 = vpop.f32.mrf.mxu0
        %v964 = vadd.f32 0.0, %v963
        %v965 = vpop.f32.mrf.mxu0
        %v966 = vadd.f32 0.0, %v965
        %v967 = vpop.f32.mrf.mxu0
        %v968 = vadd.f32 0.0, %v967
        %v969 = vpop.f32.mrf.mxu0
        %v970 = vadd.f32 0.0, %v969
        %971 = vmatprep.mubr.bf16.mxu0 0
        %972 = vmatmul.mubr.bf16.gmra.mxu0 %v905
        %v973 = vpop.f32.mrf.mxu0
        %v974 = vadd.f32 0.0, %v973
        %v975 = vpop.f32.mrf.mxu0
        %v976 = vadd.f32 0.0, %v975
        %v977 = vpop.f32.mrf.mxu0
        %v978 = vadd.f32 0.0, %v977
        %v979 = vpop.f32.mrf.mxu0
        %v980 = vadd.f32 0.0, %v979
        %981 = vmatprep.mubr.bf16.mxu0 0
        %982 = vmatmul.mubr.bf16.gmra.mxu0 %v908
        %v983 = vpop.f32.mrf.mxu0
        %v984 = vadd.f32 0.0, %v983
        %v985 = vpop.f32.mrf.mxu0
        %v986 = vadd.f32 0.0, %v985
        %v987 = vpop.f32.mrf.mxu0
        %v988 = vadd.f32 0.0, %v987
        %v989 = vpop.f32.mrf.mxu0
        %v990 = vadd.f32 0.0, %v989
        %991 = vdwg.mxu0
        %992 = vmatprep.subr.bf16.mxu0 0
        %993 = vmatpush1.bf16.msra.mxu0 0
        %994 = vmatprep.subr.bf16.mxu0 0
        %995 = vmatpush1.bf16.msra.mxu0 0
        %996 = vmatprep.subr.bf16.mxu0 0
        %997 = vmatpush1.bf16.msra.mxu0 0
        %998 = vmatprep.subr.bf16.mxu0 0
        %999 = vmatpush1.bf16.msra.mxu0 0
        %1000 = vmatprep.subr.bf16.mxu0 0
        %1001 = vmatpush1.bf16.msra.mxu0 0
        %1002 = vmatprep.subr.bf16.mxu0 0
        %1003 = vmatpush1.bf16.msra.mxu0 0
        %1004 = vmatprep.subr.bf16.mxu0 0
        %1005 = vmatpush1.bf16.msra.mxu0 0
        %1006 = vmatprep.subr.bf16.mxu0 0
        %1007 = vmatpush1.bf16.msra.mxu0 %v917
        %1008 = vmatprep.subr.bf16.mxu0 0
        %1009 = vmatpush2.bf16.msra.mxu0 0
        %1010 = vmatprep.subr.bf16.mxu0 0
        %1011 = vmatpush2.bf16.msra.mxu0 0
        %1012 = vmatprep.subr.bf16.mxu0 0
        %1013 = vmatpush2.bf16.msra.mxu0 0
        %1014 = vmatprep.subr.bf16.mxu0 0
        %1015 = vmatpush2.bf16.msra.mxu0 0
        %1016 = vmatprep.subr.bf16.mxu0 0
        %1017 = vmatpush2.bf16.msra.mxu0 0
        %1018 = vmatprep.subr.bf16.mxu0 0
        %1019 = vmatpush2.bf16.msra.mxu0 0
        %1020 = vmatprep.subr.bf16.mxu0 0
        %1021 = vmatpush2.bf16.msra.mxu0 0
        %1022 = vmatprep.subr.bf16.mxu0 0
        %1023 = vmatpush2.bf16.msra.mxu0 0
        %1024 = vmatprep.mubr.bf16.mxu0 0
        %1025 = vmatmul.mubr.bf16.gmra.mxu0 %v899
        %v1026 = vpop.f32.mrf.mxu0
        %v1027 = vadd.f32 0.0, %v1026
        %v1028 = vpop.f32.mrf.mxu0
        %v1029 = vpop.f32.mrf.mxu0
        %v1030 = vadd.f32 0.0, %v1029
        %v1031 = vpop.f32.mrf.mxu0
        %1032 = vmatprep.mubr.bf16.mxu0 0
        %1033 = vmatmul.mubr.bf16.gmra.mxu0 %v902
        %v1034 = vpop.f32.mrf.mxu0
        %v1035 = vadd.f32 0.0, %v1034
        %v1036 = vpop.f32.mrf.mxu0
        %v1037 = vpop.f32.mrf.mxu0
        %v1038 = vadd.f32 0.0, %v1037
        %v1039 = vpop.f32.mrf.mxu0
        %1040 = vmatprep.mubr.bf16.mxu0 0
        %1041 = vmatmul.mubr.bf16.gmra.mxu0 %v905
        %v1042 = vpop.f32.mrf.mxu0
        %v1043 = vadd.f32 0.0, %v1042
        %v1044 = vpop.f32.mrf.mxu0
        %v1045 = vpop.f32.mrf.mxu0
        %v1046 = vadd.f32 0.0, %v1045
        %v1047 = vpop.f32.mrf.mxu0
        %1048 = vmatprep.mubr.bf16.mxu0 0
        %1049 = vmatmul.mubr.bf16.gmra.mxu0 %v908
        %v1050 = vpop.f32.mrf.mxu0
        %v1051 = vadd.f32 0.0, %v1050
        %v1052 = vpop.f32.mrf.mxu0
        %v1053 = vpop.f32.mrf.mxu0
        %v1054 = vadd.f32 0.0, %v1053
        %v1055 = vpop.f32.mrf.mxu0
        %1056 = vdwg.mxu0
        %1057 = vst [vmem:[#allocation7 + $0x180] sm:$0xff] %v954
        %1058 = vst [vmem:[#allocation7 + $0x188] sm:$0xff] %v956
        %1059 = vst.msk [vmem:[#allocation7 + $0x190] sm:$0xff] %vm632, %v1027
        %1060 = vst [vmem:[#allocation7 + $0x198] sm:$0xff] %v958
        %1061 = vst [vmem:[#allocation7 + $0x1a0] sm:$0xff] %v960
        %1062 = vst.msk [vmem:[#allocation7 + $0x1a8] sm:$0xff] %vm632, %v1030
        %1063 = vst [vmem:[#allocation7 + $0x1b0] sm:$0xff] %v964
        %1064 = vst [vmem:[#allocation7 + $0x1b8] sm:$0xff] %v966
        %1065 = vst.msk [vmem:[#allocation7 + $0x1c0] sm:$0xff] %vm632, %v1035
        %1066 = vst [vmem:[#allocation7 + $0x1c8] sm:$0xff] %v968
        %1067 = vst [vmem:[#allocation7 + $0x1d0] sm:$0xff] %v970
        %1068 = vst.msk [vmem:[#allocation7 + $0x1d8] sm:$0xff] %vm632, %v1038
        %1069 = vst [vmem:[#allocation7 + $0x1e0] sm:$0xff] %v974
        %1070 = vst [vmem:[#allocation7 + $0x1e8] sm:$0xff] %v976
        %1071 = vst.msk [vmem:[#allocation7 + $0x1f0] sm:$0xff] %vm632, %v1043
        %1072 = vst [vmem:[#allocation7 + $0x1f8] sm:$0xff] %v978
        %1073 = vst [vmem:[#allocation7 + $0x200] sm:$0xff] %v980
        %1074 = vst.msk [vmem:[#allocation7 + $0x208] sm:$0xff] %vm632, %v1046
        %1075 = vst [vmem:[#allocation7 + $0x210] sm:$0xff] %v984
        %1076 = vst [vmem:[#allocation7 + $0x218] sm:$0xff] %v986
        %1077 = vst.msk [vmem:[#allocation7 + $0x220] sm:$0xff] %vm632, %v1051
        %1078 = vst [vmem:[#allocation7 + $0x228] sm:$0xff] %v988
        %1079 = vst [vmem:[#allocation7 + $0x230] sm:$0xff] %v990
        %1080 = vst.msk [vmem:[#allocation7 + $0x238] sm:$0xff] %vm632, %v1054
        %v1081 = vld [vmem:[%s437 + $0xc0] sm:$0xff]
        %v1082 = vld [vmem:[%s437 + $0xc8] sm:$0xff]
        %v1083 = vld [vmem:[%s437 + $0xd0] sm:$0xff]
        %v1084 = vld [vmem:[%s437 + $0xd8] sm:$0xff]
        %v1085 = vld [vmem:[%s437 + $0xe0] sm:$0xff]
        %v1086 = vld [vmem:[%s437 + $0xe8] sm:$0xff]
        %v1087 = vld [vmem:[%s437 + $0xf0] sm:$0xff]
        %v1088 = vld [vmem:[%s437 + $0xf8] sm:$0xff]
        %v1089 = vpack.c.bf16 %v1082, %v1081
        %v1090 = vpack.c.bf16 %v1084, %v1083
        %v1091 = vpack.c.bf16 %v1086, %v1085
        %v1092 = vpack.c.bf16 %v1088, %v1087
        %v1093 = vld [vmem:[%s1] sm:$0x3f]
        %v1095 = vcombine.high %v1093, %v1093
        %v1097 = vunpack.c.l.s4 1983009808
        %v1098 = vunpack.c.0.s8 %v1097
        %v1099 = vlaneseq
        %v1100 = vshrl.u32 %v1099, 7
        %v1101 = vsub.s32 %v1098, %v1100
        %v1102 = vrot.slane %v1093, %v1101
        %v1104 = vunpack.c.l.s4 1983009808
        %v1105 = vunpack.c.0.s8 %v1104
        %v1106 = vlaneseq
        %v1107 = vshrl.u32 %v1106, 7
        %v1108 = vsub.s32 %v1105, %v1107
        %v1109 = vrot.slane %v1095, %v1108
        %v1110 = vcombine.high %v1102, %v1102
        %v1112 = vsel %vm469, %v1089, 0
        %v1115 = vsel %vm469, %v1090, 0
        %v1118 = vsel %vm469, %v1091, 0
        %v1121 = vsel %vm469, %v1092, 0
        %v1124 = vsel %vm482, %v1102, 0
        %v1127 = vsel %vm482, %v1110, 0
        %v1130 = vsel %vm482, %v1109, 0
        %1132 = vmatprep.subr.bf16.mxu0 0
        %1133 = vmatpush1.bf16.msra.mxu0 0
        %1134 = vmatprep.subr.bf16.mxu0 0
        %1135 = vmatpush1.bf16.msra.mxu0 0
        %1136 = vmatprep.subr.bf16.mxu0 0
        %1137 = vmatpush1.bf16.msra.mxu0 0
        %1138 = vmatprep.subr.bf16.mxu0 0
        %1139 = vmatpush1.bf16.msra.mxu0 0
        %1140 = vmatprep.subr.bf16.mxu0 0
        %1141 = vmatpush1.bf16.msra.mxu0 0
        %1142 = vmatprep.subr.bf16.mxu0 0
        %1143 = vmatpush1.bf16.msra.mxu0 0
        %1144 = vmatprep.subr.bf16.mxu0 0
        %1145 = vmatpush1.bf16.msra.mxu0 0
        %1146 = vmatprep.subr.bf16.mxu0 %v1127
        %1147 = vmatpush1.bf16.msra.mxu0 %v1124
        %1148 = vmatprep.subr.bf16.mxu0 0
        %1149 = vmatpush2.bf16.msra.mxu0 0
        %1150 = vmatprep.subr.bf16.mxu0 0
        %1151 = vmatpush2.bf16.msra.mxu0 0
        %1152 = vmatprep.subr.bf16.mxu0 0
        %1153 = vmatpush2.bf16.msra.mxu0 0
        %1154 = vmatprep.subr.bf16.mxu0 0
        %1155 = vmatpush2.bf16.msra.mxu0 0
        %1156 = vmatprep.subr.bf16.mxu0 0
        %1157 = vmatpush2.bf16.msra.mxu0 0
        %1158 = vmatprep.subr.bf16.mxu0 0
        %1159 = vmatpush2.bf16.msra.mxu0 0
        %1160 = vmatprep.subr.bf16.mxu0 0
        %1161 = vmatpush2.bf16.msra.mxu0 0
        %1162 = vmatprep.subr.bf16.mxu0 0
        %1163 = vmatpush2.bf16.msra.mxu0 0
        %1164 = vmatprep.mubr.bf16.mxu0 0
        %1165 = vmatmul.mubr.bf16.gmra.mxu0 %v1112
        %v1166 = vpop.f32.mrf.mxu0
        %v1167 = vadd.f32 0.0, %v1166
        %v1168 = vpop.f32.mrf.mxu0
        %v1169 = vadd.f32 0.0, %v1168
        %v1170 = vpop.f32.mrf.mxu0
        %v1171 = vadd.f32 0.0, %v1170
        %v1172 = vpop.f32.mrf.mxu0
        %v1173 = vadd.f32 0.0, %v1172
        %1174 = vmatprep.mubr.bf16.mxu0 0
        %1175 = vmatmul.mubr.bf16.gmra.mxu0 %v1115
        %v1176 = vpop.f32.mrf.mxu0
        %v1177 = vadd.f32 0.0, %v1176
        %v1178 = vpop.f32.mrf.mxu0
        %v1179 = vadd.f32 0.0, %v1178
        %v1180 = vpop.f32.mrf.mxu0
        %v1181 = vadd.f32 0.0, %v1180
        %v1182 = vpop.f32.mrf.mxu0
        %v1183 = vadd.f32 0.0, %v1182
        %1184 = vmatprep.mubr.bf16.mxu0 0
        %1185 = vmatmul.mubr.bf16.gmra.mxu0 %v1118
        %v1186 = vpop.f32.mrf.mxu0
        %v1187 = vadd.f32 0.0, %v1186
        %v1188 = vpop.f32.mrf.mxu0
        %v1189 = vadd.f32 0.0, %v1188
        %v1190 = vpop.f32.mrf.mxu0
        %v1191 = vadd.f32 0.0, %v1190
        %v1192 = vpop.f32.mrf.mxu0
        %v1193 = vadd.f32 0.0, %v1192
        %1194 = vmatprep.mubr.bf16.mxu0 0
        %1195 = vmatmul.mubr.bf16.gmra.mxu0 %v1121
        %v1196 = vpop.f32.mrf.mxu0
        %v1197 = vadd.f32 0.0, %v1196
        %v1198 = vpop.f32.mrf.mxu0
        %v1199 = vadd.f32 0.0, %v1198
        %v1200 = vpop.f32.mrf.mxu0
        %v1201 = vadd.f32 0.0, %v1200
        %v1202 = vpop.f32.mrf.mxu0
        %v1203 = vadd.f32 0.0, %v1202
        %1204 = vdwg.mxu0
        %1205 = vmatprep.subr.bf16.mxu0 0
        %1206 = vmatpush1.bf16.msra.mxu0 0
        %1207 = vmatprep.subr.bf16.mxu0 0
        %1208 = vmatpush1.bf16.msra.mxu0 0
        %1209 = vmatprep.subr.bf16.mxu0 0
        %1210 = vmatpush1.bf16.msra.mxu0 0
        %1211 = vmatprep.subr.bf16.mxu0 0
        %1212 = vmatpush1.bf16.msra.mxu0 0
        %1213 = vmatprep.subr.bf16.mxu0 0
        %1214 = vmatpush1.bf16.msra.mxu0 0
        %1215 = vmatprep.subr.bf16.mxu0 0
        %1216 = vmatpush1.bf16.msra.mxu0 0
        %1217 = vmatprep.subr.bf16.mxu0 0
        %1218 = vmatpush1.bf16.msra.mxu0 0
        %1219 = vmatprep.subr.bf16.mxu0 0
        %1220 = vmatpush1.bf16.msra.mxu0 %v1130
        %1221 = vmatprep.subr.bf16.mxu0 0
        %1222 = vmatpush2.bf16.msra.mxu0 0
        %1223 = vmatprep.subr.bf16.mxu0 0
        %1224 = vmatpush2.bf16.msra.mxu0 0
        %1225 = vmatprep.subr.bf16.mxu0 0
        %1226 = vmatpush2.bf16.msra.mxu0 0
        %1227 = vmatprep.subr.bf16.mxu0 0
        %1228 = vmatpush2.bf16.msra.mxu0 0
        %1229 = vmatprep.subr.bf16.mxu0 0
        %1230 = vmatpush2.bf16.msra.mxu0 0
        %1231 = vmatprep.subr.bf16.mxu0 0
        %1232 = vmatpush2.bf16.msra.mxu0 0
        %1233 = vmatprep.subr.bf16.mxu0 0
        %1234 = vmatpush2.bf16.msra.mxu0 0
        %1235 = vmatprep.subr.bf16.mxu0 0
        %1236 = vmatpush2.bf16.msra.mxu0 0
        %1237 = vmatprep.mubr.bf16.mxu0 0
        %1238 = vmatmul.mubr.bf16.gmra.mxu0 %v1112
        %v1239 = vpop.f32.mrf.mxu0
        %v1240 = vadd.f32 0.0, %v1239
        %v1241 = vpop.f32.mrf.mxu0
        %v1242 = vpop.f32.mrf.mxu0
        %v1243 = vadd.f32 0.0, %v1242
        %v1244 = vpop.f32.mrf.mxu0
        %1245 = vmatprep.mubr.bf16.mxu0 0
        %1246 = vmatmul.mubr.bf16.gmra.mxu0 %v1115
        %v1247 = vpop.f32.mrf.mxu0
        %v1248 = vadd.f32 0.0, %v1247
        %v1249 = vpop.f32.mrf.mxu0
        %v1250 = vpop.f32.mrf.mxu0
        %v1251 = vadd.f32 0.0, %v1250
        %v1252 = vpop.f32.mrf.mxu0
        %1253 = vmatprep.mubr.bf16.mxu0 0
        %1254 = vmatmul.mubr.bf16.gmra.mxu0 %v1118
        %v1255 = vpop.f32.mrf.mxu0
        %v1256 = vadd.f32 0.0, %v1255
        %v1257 = vpop.f32.mrf.mxu0
        %v1258 = vpop.f32.mrf.mxu0
        %v1259 = vadd.f32 0.0, %v1258
        %v1260 = vpop.f32.mrf.mxu0
        %1261 = vmatprep.mubr.bf16.mxu0 0
        %1262 = vmatmul.mubr.bf16.gmra.mxu0 %v1121
        %v1263 = vpop.f32.mrf.mxu0
        %v1264 = vadd.f32 0.0, %v1263
        %v1265 = vpop.f32.mrf.mxu0
        %v1266 = vpop.f32.mrf.mxu0
        %v1267 = vadd.f32 0.0, %v1266
        %v1268 = vpop.f32.mrf.mxu0
        %1269 = vdwg.mxu0
        %1270 = vst [vmem:[#allocation7 + $0x240] sm:$0xff] %v1167
        %1271 = vst [vmem:[#allocation7 + $0x248] sm:$0xff] %v1169
        %1272 = vst.msk [vmem:[#allocation7 + $0x250] sm:$0xff] %vm632, %v1240
        %1273 = vst [vmem:[#allocation7 + $0x258] sm:$0xff] %v1171
        %1274 = vst [vmem:[#allocation7 + $0x260] sm:$0xff] %v1173
        %1275 = vst.msk [vmem:[#allocation7 + $0x268] sm:$0xff] %vm632, %v1243
        %1276 = vst [vmem:[#allocation7 + $0x270] sm:$0xff] %v1177
        %1277 = vst [vmem:[#allocation7 + $0x278] sm:$0xff] %v1179
        %1278 = vst.msk [vmem:[#allocation7 + $0x280] sm:$0xff] %vm632, %v1248
        %1279 = vst [vmem:[#allocation7 + $0x288] sm:$0xff] %v1181
        %1280 = vst [vmem:[#allocation7 + $0x290] sm:$0xff] %v1183
        %1281 = vst.msk [vmem:[#allocation7 + $0x298] sm:$0xff] %vm632, %v1251
        %1282 = vst [vmem:[#allocation7 + $0x2a0] sm:$0xff] %v1187
        %1283 = vst [vmem:[#allocation7 + $0x2a8] sm:$0xff] %v1189
        %1284 = vst.msk [vmem:[#allocation7 + $0x2b0] sm:$0xff] %vm632, %v1256
        %1285 = vst [vmem:[#allocation7 + $0x2b8] sm:$0xff] %v1191
        %1286 = vst [vmem:[#allocation7 + $0x2c0] sm:$0xff] %v1193
        %1287 = vst.msk [vmem:[#allocation7 + $0x2c8] sm:$0xff] %vm632, %v1259
        %1288 = vst [vmem:[#allocation7 + $0x2d0] sm:$0xff] %v1197
        %1289 = vst [vmem:[#allocation7 + $0x2d8] sm:$0xff] %v1199
        %1290 = vst.msk [vmem:[#allocation7 + $0x2e0] sm:$0xff] %vm632, %v1264
        %1291 = vst [vmem:[#allocation7 + $0x2e8] sm:$0xff] %v1201
        %1292 = vst [vmem:[#allocation7 + $0x2f0] sm:$0xff] %v1203
        %1293 = vst.msk [vmem:[#allocation7 + $0x2f8] sm:$0xff] %vm632, %v1267
        %v1294 = vld [vmem:[%s2] sm:$0x1]
        %v1296 = vlaneseq
        %v1297 = vshrl.u32 %v1296, 7
        %v1298 = vsub.s32 0, %v1297
        %v1299 = vrot.slane %v1294, %v1298
        %v1301 = vld [vmem:[#allocation7] sm:$0xff]
        %v1302 = vld [vmem:[#allocation7 + $0x18] sm:$0xff]
        %v1303 = vld [vmem:[#allocation7 + $0x30] sm:$0xff]
        %v1304 = vld [vmem:[#allocation7 + $0x48] sm:$0xff]
        %v1305 = vld [vmem:[#allocation7 + $0x60] sm:$0xff]
        %v1306 = vld [vmem:[#allocation7 + $0x78] sm:$0xff]
        %v1307 = vld [vmem:[#allocation7 + $0x90] sm:$0xff]
        %v1308 = vld [vmem:[#allocation7 + $0xa8] sm:$0xff]
        %v1309 = vld [vmem:[#allocation7 + $0xc0] sm:$0xff]
        %v1310 = vld [vmem:[#allocation7 + $0xd8] sm:$0xff]
        %v1311 = vld [vmem:[#allocation7 + $0xf0] sm:$0xff]
        %v1312 = vld [vmem:[#allocation7 + $0x108] sm:$0xff]
        %v1313 = vld [vmem:[#allocation7 + $0x120] sm:$0xff]
        %v1314 = vld [vmem:[#allocation7 + $0x138] sm:$0xff]
        %v1315 = vld [vmem:[#allocation7 + $0x150] sm:$0xff]
        %v1316 = vld [vmem:[#allocation7 + $0x168] sm:$0xff]
        %v1317 = vadd.f32 %v1299, %v1301
        %v1318 = vadd.f32 %v1299, %v1302
        %v1319 = vadd.f32 %v1299, %v1303
        %v1320 = vadd.f32 %v1299, %v1304
        %v1321 = vadd.f32 %v1299, %v1305
        %v1322 = vadd.f32 %v1299, %v1306
        %v1323 = vadd.f32 %v1299, %v1307
        %v1324 = vadd.f32 %v1299, %v1308
        %v1325 = vadd.f32 %v1299, %v1309
        %v1326 = vadd.f32 %v1299, %v1310
        %v1327 = vadd.f32 %v1299, %v1311
        %v1328 = vadd.f32 %v1299, %v1312
        %v1329 = vadd.f32 %v1299, %v1313
        %v1330 = vadd.f32 %v1299, %v1314
        %v1331 = vadd.f32 %v1299, %v1315
        %v1332 = vadd.f32 %v1299, %v1316
        %v1333 = vld [vmem:[#allocation7] sm:$0xfe]
        %v1334 = vld [vmem:[#allocation7 + $0x180] sm:$0x1]
        %vm1352 = vcmask 1046528
        %v1353 = vrot.slane %v1333, 1
        %v1354 = vrot.slane %v1302, 1
        %v1355 = vsel %vm1352, %v1353, %v1354
        %v1356 = vrot.slane %v1303, 1
        %v1357 = vsel %vm1352, %v1354, %v1356
        %v1358 = vrot.slane %v1304, 1
        %v1359 = vsel %vm1352, %v1356, %v1358
        %v1360 = vrot.slane %v1305, 1
        %v1361 = vsel %vm1352, %v1358, %v1360
        %v1362 = vrot.slane %v1306, 1
        %v1363 = vsel %vm1352, %v1360, %v1362
        %v1364 = vrot.slane %v1307, 1
        %v1365 = vsel %vm1352, %v1362, %v1364
        %v1366 = vrot.slane %v1308, 1
        %v1367 = vsel %vm1352, %v1364, %v1366
        %v1368 = vrot.slane %v1309, 1
        %v1369 = vsel %vm1352, %v1366, %v1368
        %v1370 = vrot.slane %v1310, 1
        %v1371 = vsel %vm1352, %v1368, %v1370
        %v1372 = vrot.slane %v1311, 1
        %v1373 = vsel %vm1352, %v1370, %v1372
        %v1374 = vrot.slane %v1312, 1
        %v1375 = vsel %vm1352, %v1372, %v1374
        %v1376 = vrot.slane %v1313, 1
        %v1377 = vsel %vm1352, %v1374, %v1376
        %v1378 = vrot.slane %v1314, 1
        %v1379 = vsel %vm1352, %v1376, %v1378
        %v1380 = vrot.slane %v1315, 1
        %v1381 = vsel %vm1352, %v1378, %v1380
        %v1382 = vrot.slane %v1316, 1
        %v1383 = vsel %vm1352, %v1380, %v1382
        %v1384 = vrot.slane %v1334, 1
        %v1385 = vsel %vm1352, %v1382, %v1384
        %1386 = vrot.lane.b32.xlu0 %v1355, 96
        %v1387 = vpop.permute.xlu0 %1386
        %1388 = vrot.lane.b32.xlu0 %v1357, 96
        %v1389 = vpop.permute.xlu0 %1388
        %1390 = vrot.lane.b32.xlu0 %v1359, 96
        %v1391 = vpop.permute.xlu0 %1390
        %1392 = vrot.lane.b32.xlu0 %v1361, 96
        %v1393 = vpop.permute.xlu0 %1392
        %1394 = vrot.lane.b32.xlu0 %v1363, 96
        %v1395 = vpop.permute.xlu0 %1394
        %1396 = vrot.lane.b32.xlu0 %v1365, 96
        %v1397 = vpop.permute.xlu0 %1396
        %1398 = vrot.lane.b32.xlu0 %v1367, 96
        %v1399 = vpop.permute.xlu0 %1398
        %1400 = vrot.lane.b32.xlu0 %v1369, 96
        %v1401 = vpop.permute.xlu0 %1400
        %1402 = vrot.lane.b32.xlu0 %v1371, 96
        %v1403 = vpop.permute.xlu0 %1402
        %1404 = vrot.lane.b32.xlu0 %v1373, 96
        %v1405 = vpop.permute.xlu0 %1404
        %1406 = vrot.lane.b32.xlu0 %v1375, 96
        %v1407 = vpop.permute.xlu0 %1406
        %1408 = vrot.lane.b32.xlu0 %v1377, 96
        %v1409 = vpop.permute.xlu0 %1408
        %1410 = vrot.lane.b32.xlu0 %v1379, 96
        %v1411 = vpop.permute.xlu0 %1410
        %1412 = vrot.lane.b32.xlu0 %v1381, 96
        %v1413 = vpop.permute.xlu0 %1412
        %1414 = vrot.lane.b32.xlu0 %v1383, 96
        %v1415 = vpop.permute.xlu0 %1414
        %1416 = vrot.lane.b32.xlu0 %v1385, 96
        %v1417 = vpop.permute.xlu0 %1416
        %v1434 = vadd.f32 %v1317, %v1387
        %v1435 = vadd.f32 %v1318, %v1389
        %v1436 = vadd.f32 %v1319, %v1391
        %v1437 = vadd.f32 %v1320, %v1393
        %v1438 = vadd.f32 %v1321, %v1395
        %v1439 = vadd.f32 %v1322, %v1397
        %v1440 = vadd.f32 %v1323, %v1399
        %v1441 = vadd.f32 %v1324, %v1401
        %v1442 = vadd.f32 %v1325, %v1403
        %v1443 = vadd.f32 %v1326, %v1405
        %v1444 = vadd.f32 %v1327, %v1407
        %v1445 = vadd.f32 %v1328, %v1409
        %v1446 = vadd.f32 %v1329, %v1411
        %v1447 = vadd.f32 %v1330, %v1413
        %v1448 = vadd.f32 %v1331, %v1415
        %v1449 = vadd.f32 %v1332, %v1417
        %v1450 = vld [vmem:[#allocation7] sm:$0xfc]
        %v1451 = vld [vmem:[#allocation7 + $0x180] sm:$0x3]
        %vm1454 = vcmask 1045504
        %v1455 = vrot.slane %v1450, 2
        %v1456 = vrot.slane %v1302, 2
        %v1457 = vsel %vm1454, %v1455, %v1456
        %v1458 = vrot.slane %v1303, 2
        %v1459 = vsel %vm1454, %v1456, %v1458
        %v1460 = vrot.slane %v1304, 2
        %v1461 = vsel %vm1454, %v1458, %v1460
        %v1462 = vrot.slane %v1305, 2
        %v1463 = vsel %vm1454, %v1460, %v1462
        %v1464 = vrot.slane %v1306, 2
        %v1465 = vsel %vm1454, %v1462, %v1464
        %v1466 = vrot.slane %v1307, 2
        %v1467 = vsel %vm1454, %v1464, %v1466
        %v1468 = vrot.slane %v1308, 2
        %v1469 = vsel %vm1454, %v1466, %v1468
        %v1470 = vrot.slane %v1309, 2
        %v1471 = vsel %vm1454, %v1468, %v1470
        %v1472 = vrot.slane %v1310, 2
        %v1473 = vsel %vm1454, %v1470, %v1472
        %v1474 = vrot.slane %v1311, 2
        %v1475 = vsel %vm1454, %v1472, %v1474
        %v1476 = vrot.slane %v1312, 2
        %v1477 = vsel %vm1454, %v1474, %v1476
        %v1478 = vrot.slane %v1313, 2
        %v1479 = vsel %vm1454, %v1476, %v1478
        %v1480 = vrot.slane %v1314, 2
        %v1481 = vsel %vm1454, %v1478, %v1480
        %v1482 = vrot.slane %v1315, 2
        %v1483 = vsel %vm1454, %v1480, %v1482
        %v1484 = vrot.slane %v1316, 2
        %v1485 = vsel %vm1454, %v1482, %v1484
        %v1486 = vrot.slane %v1451, 2
        %v1487 = vsel %vm1454, %v1484, %v1486
        %1488 = vrot.lane.b32.xlu0 %v1457, 64
        %v1489 = vpop.permute.xlu0 %1488
        %1490 = vrot.lane.b32.xlu0 %v1459, 64
        %v1491 = vpop.permute.xlu0 %1490
        %1492 = vrot.lane.b32.xlu0 %v1461, 64
        %v1493 = vpop.permute.xlu0 %1492
        %1494 = vrot.lane.b32.xlu0 %v1463, 64
        %v1495 = vpop.permute.xlu0 %1494
        %1496 = vrot.lane.b32.xlu0 %v1465, 64
        %v1497 = vpop.permute.xlu0 %1496
        %1498 = vrot.lane.b32.xlu0 %v1467, 64
        %v1499 = vpop.permute.xlu0 %1498
        %1500 = vrot.lane.b32.xlu0 %v1469, 64
        %v1501 = vpop.permute.xlu0 %1500
        %1502 = vrot.lane.b32.xlu0 %v1471, 64
        %v1503 = vpop.permute.xlu0 %1502
        %1504 = vrot.lane.b32.xlu0 %v1473, 64
        %v1505 = vpop.permute.xlu0 %1504
        %1506 = vrot.lane.b32.xlu0 %v1475, 64
        %v1507 = vpop.permute.xlu0 %1506
        %1508 = vrot.lane.b32.xlu0 %v1477, 64
        %v1509 = vpop.permute.xlu0 %1508
        %1510 = vrot.lane.b32.xlu0 %v1479, 64
        %v1511 = vpop.permute.xlu0 %1510
        %1512 = vrot.lane.b32.xlu0 %v1481, 64
        %v1513 = vpop.permute.xlu0 %1512
        %1514 = vrot.lane.b32.xlu0 %v1483, 64
        %v1515 = vpop.permute.xlu0 %1514
        %1516 = vrot.lane.b32.xlu0 %v1485, 64
        %v1517 = vpop.permute.xlu0 %1516
        %1518 = vrot.lane.b32.xlu0 %v1487, 64
        %v1519 = vpop.permute.xlu0 %1518
        %v1536 = vadd.f32 %v1434, %v1489
        %v1537 = vadd.f32 %v1435, %v1491
        %v1538 = vadd.f32 %v1436, %v1493
        %v1539 = vadd.f32 %v1437, %v1495
        %v1540 = vadd.f32 %v1438, %v1497
        %v1541 = vadd.f32 %v1439, %v1499
        %v1542 = vadd.f32 %v1440, %v1501
        %v1543 = vadd.f32 %v1441, %v1503
        %v1544 = vadd.f32 %v1442, %v1505
        %v1545 = vadd.f32 %v1443, %v1507
        %v1546 = vadd.f32 %v1444, %v1509
        %v1547 = vadd.f32 %v1445, %v1511
        %v1548 = vadd.f32 %v1446, %v1513
        %v1549 = vadd.f32 %v1447, %v1515
        %v1550 = vadd.f32 %v1448, %v1517
        %v1551 = vadd.f32 %v1449, %v1519
        %v1552 = vld [vmem:[#allocation7 + $0x180] sm:$0xff]
        %v1553 = vld [vmem:[#allocation7 + $0x198] sm:$0xff]
        %1556 = vrot.lane.b32.xlu0 %v1303, 32
        %v1557 = vpop.permute.xlu0 %1556
        %1558 = vrot.lane.b32.xlu0 %v1304, 32
        %v1559 = vpop.permute.xlu0 %1558
        %1560 = vrot.lane.b32.xlu0 %v1305, 32
        %v1561 = vpop.permute.xlu0 %1560
        %1562 = vrot.lane.b32.xlu0 %v1306, 32
        %v1563 = vpop.permute.xlu0 %1562
        %1564 = vrot.lane.b32.xlu0 %v1307, 32
        %v1565 = vpop.permute.xlu0 %1564
        %1566 = vrot.lane.b32.xlu0 %v1308, 32
        %v1567 = vpop.permute.xlu0 %1566
        %1568 = vrot.lane.b32.xlu0 %v1309, 32
        %v1569 = vpop.permute.xlu0 %1568
        %1570 = vrot.lane.b32.xlu0 %v1310, 32
        %v1571 = vpop.permute.xlu0 %1570
        %1572 = vrot.lane.b32.xlu0 %v1311, 32
        %v1573 = vpop.permute.xlu0 %1572
        %1574 = vrot.lane.b32.xlu0 %v1312, 32
        %v1575 = vpop.permute.xlu0 %1574
        %1576 = vrot.lane.b32.xlu0 %v1313, 32
        %v1577 = vpop.permute.xlu0 %1576
        %1578 = vrot.lane.b32.xlu0 %v1314, 32
        %v1579 = vpop.permute.xlu0 %1578
        %1580 = vrot.lane.b32.xlu0 %v1315, 32
        %v1581 = vpop.permute.xlu0 %1580
        %1582 = vrot.lane.b32.xlu0 %v1316, 32
        %v1583 = vpop.permute.xlu0 %1582
        %1584 = vrot.lane.b32.xlu0 %v1552, 32
        %v1585 = vpop.permute.xlu0 %1584
        %1586 = vrot.lane.b32.xlu0 %v1553, 32
        %v1587 = vpop.permute.xlu0 %1586
        %v1604 = vadd.f32 %v1536, %v1557
        %v1605 = vadd.f32 %v1537, %v1559
        %v1606 = vadd.f32 %v1538, %v1561
        %v1607 = vadd.f32 %v1539, %v1563
        %v1608 = vadd.f32 %v1540, %v1565
        %v1609 = vadd.f32 %v1541, %v1567
        %v1610 = vadd.f32 %v1542, %v1569
        %v1611 = vadd.f32 %v1543, %v1571
        %v1612 = vadd.f32 %v1544, %v1573
        %v1613 = vadd.f32 %v1545, %v1575
        %v1614 = vadd.f32 %v1546, %v1577
        %v1615 = vadd.f32 %v1547, %v1579
        %v1616 = vadd.f32 %v1548, %v1581
        %v1617 = vadd.f32 %v1549, %v1583
        %v1618 = vadd.f32 %v1550, %v1585
        %v1619 = vadd.f32 %v1551, %v1587
        %v1620 = vld [vmem:[#allocation7 + $0x38] sm:$0xfe]
        %v1621 = vld [vmem:[#allocation7 + $0x50] sm:$0xff]
        %v1622 = vld [vmem:[#allocation7 + $0x68] sm:$0xff]
        %v1623 = vld [vmem:[#allocation7 + $0x80] sm:$0xff]
        %v1624 = vld [vmem:[#allocation7 + $0x98] sm:$0xff]
        %v1625 = vld [vmem:[#allocation7 + $0xb0] sm:$0xff]
        %v1626 = vld [vmem:[#allocation7 + $0xc8] sm:$0xff]
        %v1627 = vld [vmem:[#allocation7 + $0xe0] sm:$0xff]
        %v1628 = vld [vmem:[#allocation7 + $0xf8] sm:$0xff]
        %v1629 = vld [vmem:[#allocation7 + $0x110] sm:$0xff]
        %v1630 = vld [vmem:[#allocation7 + $0x128] sm:$0xff]
        %v1631 = vld [vmem:[#allocation7 + $0x140] sm:$0xff]
        %v1632 = vld [vmem:[#allocation7 + $0x158] sm:$0xff]
        %v1633 = vld [vmem:[#allocation7 + $0x170] sm:$0xff]
        %v1634 = vld [vmem:[#allocation7 + $0x188] sm:$0xff]
        %v1635 = vld [vmem:[#allocation7 + $0x1a0] sm:$0xff]
        %v1636 = vld [vmem:[#allocation7 + $0x1b8] sm:$0x1]
        %v1654 = vrot.slane %v1620, 1
        %v1655 = vrot.slane %v1621, 1
        %v1656 = vsel %vm1352, %v1654, %v1655
        %v1657 = vrot.slane %v1622, 1
        %v1658 = vsel %vm1352, %v1655, %v1657
        %v1659 = vrot.slane %v1623, 1
        %v1660 = vsel %vm1352, %v1657, %v1659
        %v1661 = vrot.slane %v1624, 1
        %v1662 = vsel %vm1352, %v1659, %v1661
        %v1663 = vrot.slane %v1625, 1
        %v1664 = vsel %vm1352, %v1661, %v1663
        %v1665 = vrot.slane %v1626, 1
        %v1666 = vsel %vm1352, %v1663, %v1665
        %v1667 = vrot.slane %v1627, 1
        %v1668 = vsel %vm1352, %v1665, %v1667
        %v1669 = vrot.slane %v1628, 1
        %v1670 = vsel %vm1352, %v1667, %v1669
        %v1671 = vrot.slane %v1629, 1
        %v1672 = vsel %vm1352, %v1669, %v1671
        %v1673 = vrot.slane %v1630, 1
        %v1674 = vsel %vm1352, %v1671, %v1673
        %v1675 = vrot.slane %v1631, 1
        %v1676 = vsel %vm1352, %v1673, %v1675
        %v1677 = vrot.slane %v1632, 1
        %v1678 = vsel %vm1352, %v1675, %v1677
        %v1679 = vrot.slane %v1633, 1
        %v1680 = vsel %vm1352, %v1677, %v1679
        %v1681 = vrot.slane %v1634, 1
        %v1682 = vsel %vm1352, %v1679, %v1681
        %v1683 = vrot.slane %v1635, 1
        %v1684 = vsel %vm1352, %v1681, %v1683
        %v1685 = vrot.slane %v1636, 1
        %v1686 = vsel %vm1352, %v1683, %v1685
        %v1703 = vadd.f32 %v1604, %v1656
        %v1704 = vadd.f32 %v1605, %v1658
        %v1705 = vadd.f32 %v1606, %v1660
        %v1706 = vadd.f32 %v1607, %v1662
        %v1707 = vadd.f32 %v1608, %v1664
        %v1708 = vadd.f32 %v1609, %v1666
        %v1709 = vadd.f32 %v1610, %v1668
        %v1710 = vadd.f32 %v1611, %v1670
        %v1711 = vadd.f32 %v1612, %v1672
        %v1712 = vadd.f32 %v1613, %v1674
        %v1713 = vadd.f32 %v1614, %v1676
        %v1714 = vadd.f32 %v1615, %v1678
        %v1715 = vadd.f32 %v1616, %v1680
        %v1716 = vadd.f32 %v1617, %v1682
        %v1717 = vadd.f32 %v1618, %v1684
        %v1718 = vadd.f32 %v1619, %v1686
        %v1719 = vld [vmem:[#allocation7 + $0x38] sm:$0xfc]
        %v1720 = vld [vmem:[#allocation7 + $0x1b8] sm:$0x3]
        %v1723 = vrot.slane %v1719, 2
        %v1724 = vrot.slane %v1621, 2
        %v1725 = vsel %vm1454, %v1723, %v1724
        %v1726 = vrot.slane %v1622, 2
        %v1727 = vsel %vm1454, %v1724, %v1726
        %v1728 = vrot.slane %v1623, 2
        %v1729 = vsel %vm1454, %v1726, %v1728
        %v1730 = vrot.slane %v1624, 2
        %v1731 = vsel %vm1454, %v1728, %v1730
        %v1732 = vrot.slane %v1625, 2
        %v1733 = vsel %vm1454, %v1730, %v1732
        %v1734 = vrot.slane %v1626, 2
        %v1735 = vsel %vm1454, %v1732, %v1734
        %v1736 = vrot.slane %v1627, 2
        %v1737 = vsel %vm1454, %v1734, %v1736
        %v1738 = vrot.slane %v1628, 2
        %v1739 = vsel %vm1454, %v1736, %v1738
        %v1740 = vrot.slane %v1629, 2
        %v1741 = vsel %vm1454, %v1738, %v1740
        %v1742 = vrot.slane %v1630, 2
        %v1743 = vsel %vm1454, %v1740, %v1742
        %v1744 = vrot.slane %v1631, 2
        %v1745 = vsel %vm1454, %v1742, %v1744
        %v1746 = vrot.slane %v1632, 2
        %v1747 = vsel %vm1454, %v1744, %v1746
        %v1748 = vrot.slane %v1633, 2
        %v1749 = vsel %vm1454, %v1746, %v1748
        %v1750 = vrot.slane %v1634, 2
        %v1751 = vsel %vm1454, %v1748, %v1750
        %v1752 = vrot.slane %v1635, 2
        %v1753 = vsel %vm1454, %v1750, %v1752
        %v1754 = vrot.slane %v1720, 2
        %v1755 = vsel %vm1454, %v1752, %v1754
        %1756 = vrot.lane.b32.xlu0 %v1725, 96
        %v1757 = vpop.permute.xlu0 %1756
        %1758 = vrot.lane.b32.xlu0 %v1727, 96
        %v1759 = vpop.permute.xlu0 %1758
        %1760 = vrot.lane.b32.xlu0 %v1729, 96
        %v1761 = vpop.permute.xlu0 %1760
        %1762 = vrot.lane.b32.xlu0 %v1731, 96
        %v1763 = vpop.permute.xlu0 %1762
        %1764 = vrot.lane.b32.xlu0 %v1733, 96
        %v1765 = vpop.permute.xlu0 %1764
        %1766 = vrot.lane.b32.xlu0 %v1735, 96
        %v1767 = vpop.permute.xlu0 %1766
        %1768 = vrot.lane.b32.xlu0 %v1737, 96
        %v1769 = vpop.permute.xlu0 %1768
        %1770 = vrot.lane.b32.xlu0 %v1739, 96
        %v1771 = vpop.permute.xlu0 %1770
        %1772 = vrot.lane.b32.xlu0 %v1741, 96
        %v1773 = vpop.permute.xlu0 %1772
        %1774 = vrot.lane.b32.xlu0 %v1743, 96
        %v1775 = vpop.permute.xlu0 %1774
        %1776 = vrot.lane.b32.xlu0 %v1745, 96
        %v1777 = vpop.permute.xlu0 %1776
        %1778 = vrot.lane.b32.xlu0 %v1747, 96
        %v1779 = vpop.permute.xlu0 %1778
        %1780 = vrot.lane.b32.xlu0 %v1749, 96
        %v1781 = vpop.permute.xlu0 %1780
        %1782 = vrot.lane.b32.xlu0 %v1751, 96
        %v1783 = vpop.permute.xlu0 %1782
        %1784 = vrot.lane.b32.xlu0 %v1753, 96
        %v1785 = vpop.permute.xlu0 %1784
        %1786 = vrot.lane.b32.xlu0 %v1755, 96
        %v1787 = vpop.permute.xlu0 %1786
        %v1804 = vadd.f32 %v1703, %v1757
        %v1805 = vadd.f32 %v1704, %v1759
        %v1806 = vadd.f32 %v1705, %v1761
        %v1807 = vadd.f32 %v1706, %v1763
        %v1808 = vadd.f32 %v1707, %v1765
        %v1809 = vadd.f32 %v1708, %v1767
        %v1810 = vadd.f32 %v1709, %v1769
        %v1811 = vadd.f32 %v1710, %v1771
        %v1812 = vadd.f32 %v1711, %v1773
        %v1813 = vadd.f32 %v1712, %v1775
        %v1814 = vadd.f32 %v1713, %v1777
        %v1815 = vadd.f32 %v1714, %v1779
        %v1816 = vadd.f32 %v1715, %v1781
        %v1817 = vadd.f32 %v1716, %v1783
        %v1818 = vadd.f32 %v1717, %v1785
        %v1819 = vadd.f32 %v1718, %v1787
        %v1820 = vld [vmem:[#allocation7 + $0x1b8] sm:$0xff]
        %v1821 = vld [vmem:[#allocation7 + $0x1d0] sm:$0xff]
        %1824 = vrot.lane.b32.xlu0 %v1622, 64
        %v1825 = vpop.permute.xlu0 %1824
        %1826 = vrot.lane.b32.xlu0 %v1623, 64
        %v1827 = vpop.permute.xlu0 %1826
        %1828 = vrot.lane.b32.xlu0 %v1624, 64
        %v1829 = vpop.permute.xlu0 %1828
        %1830 = vrot.lane.b32.xlu0 %v1625, 64
        %v1831 = vpop.permute.xlu0 %1830
        %1832 = vrot.lane.b32.xlu0 %v1626, 64
        %v1833 = vpop.permute.xlu0 %1832
        %1834 = vrot.lane.b32.xlu0 %v1627, 64
        %v1835 = vpop.permute.xlu0 %1834
        %1836 = vrot.lane.b32.xlu0 %v1628, 64
        %v1837 = vpop.permute.xlu0 %1836
        %1838 = vrot.lane.b32.xlu0 %v1629, 64
        %v1839 = vpop.permute.xlu0 %1838
        %1840 = vrot.lane.b32.xlu0 %v1630, 64
        %v1841 = vpop.permute.xlu0 %1840
        %1842 = vrot.lane.b32.xlu0 %v1631, 64
        %v1843 = vpop.permute.xlu0 %1842
        %1844 = vrot.lane.b32.xlu0 %v1632, 64
        %v1845 = vpop.permute.xlu0 %1844
        %1846 = vrot.lane.b32.xlu0 %v1633, 64
        %v1847 = vpop.permute.xlu0 %1846
        %1848 = vrot.lane.b32.xlu0 %v1634, 64
        %v1849 = vpop.permute.xlu0 %1848
        %1850 = vrot.lane.b32.xlu0 %v1635, 64
        %v1851 = vpop.permute.xlu0 %1850
        %1852 = vrot.lane.b32.xlu0 %v1820, 64
        %v1853 = vpop.permute.xlu0 %1852
        %1854 = vrot.lane.b32.xlu0 %v1821, 64
        %v1855 = vpop.permute.xlu0 %1854
        %v1872 = vadd.f32 %v1804, %v1825
        %v1873 = vadd.f32 %v1805, %v1827
        %v1874 = vadd.f32 %v1806, %v1829
        %v1875 = vadd.f32 %v1807, %v1831
        %v1876 = vadd.f32 %v1808, %v1833
        %v1877 = vadd.f32 %v1809, %v1835
        %v1878 = vadd.f32 %v1810, %v1837
        %v1879 = vadd.f32 %v1811, %v1839
        %v1880 = vadd.f32 %v1812, %v1841
        %v1881 = vadd.f32 %v1813, %v1843
        %v1882 = vadd.f32 %v1814, %v1845
        %v1883 = vadd.f32 %v1815, %v1847
        %v1884 = vadd.f32 %v1816, %v1849
        %v1885 = vadd.f32 %v1817, %v1851
        %v1886 = vadd.f32 %v1818, %v1853
        %v1887 = vadd.f32 %v1819, %v1855
        %v1888 = vld [vmem:[#allocation7 + $0x68] sm:$0xfe]
        %v1889 = vld [vmem:[#allocation7 + $0x1e8] sm:$0x1]
        %v1892 = vrot.slane %v1888, 1
        %v1893 = vsel %vm1352, %v1892, %v1659
        %v1894 = vrot.slane %v1820, 1
        %v1895 = vsel %vm1352, %v1683, %v1894
        %v1896 = vrot.slane %v1821, 1
        %v1897 = vsel %vm1352, %v1894, %v1896
        %v1898 = vrot.slane %v1889, 1
        %v1899 = vsel %vm1352, %v1896, %v1898
        %1900 = vrot.lane.b32.xlu0 %v1893, 32
        %v1901 = vpop.permute.xlu0 %1900
        %1902 = vrot.lane.b32.xlu0 %v1662, 32
        %v1903 = vpop.permute.xlu0 %1902
        %1904 = vrot.lane.b32.xlu0 %v1664, 32
        %v1905 = vpop.permute.xlu0 %1904
        %1906 = vrot.lane.b32.xlu0 %v1666, 32
        %v1907 = vpop.permute.xlu0 %1906
        %1908 = vrot.lane.b32.xlu0 %v1668, 32
        %v1909 = vpop.permute.xlu0 %1908
        %1910 = vrot.lane.b32.xlu0 %v1670, 32
        %v1911 = vpop.permute.xlu0 %1910
        %1912 = vrot.lane.b32.xlu0 %v1672, 32
        %v1913 = vpop.permute.xlu0 %1912
        %1914 = vrot.lane.b32.xlu0 %v1674, 32
        %v1915 = vpop.permute.xlu0 %1914
        %1916 = vrot.lane.b32.xlu0 %v1676, 32
        %v1917 = vpop.permute.xlu0 %1916
        %1918 = vrot.lane.b32.xlu0 %v1678, 32
        %v1919 = vpop.permute.xlu0 %1918
        %1920 = vrot.lane.b32.xlu0 %v1680, 32
        %v1921 = vpop.permute.xlu0 %1920
        %1922 = vrot.lane.b32.xlu0 %v1682, 32
        %v1923 = vpop.permute.xlu0 %1922
        %1924 = vrot.lane.b32.xlu0 %v1684, 32
        %v1925 = vpop.permute.xlu0 %1924
        %1926 = vrot.lane.b32.xlu0 %v1895, 32
        %v1927 = vpop.permute.xlu0 %1926
        %1928 = vrot.lane.b32.xlu0 %v1897, 32
        %v1929 = vpop.permute.xlu0 %1928
        %1930 = vrot.lane.b32.xlu0 %v1899, 32
        %v1931 = vpop.permute.xlu0 %1930
        %v1948 = vadd.f32 %v1872, %v1901
        %v1949 = vadd.f32 %v1873, %v1903
        %v1950 = vadd.f32 %v1874, %v1905
        %v1951 = vadd.f32 %v1875, %v1907
        %v1952 = vadd.f32 %v1876, %v1909
        %v1953 = vadd.f32 %v1877, %v1911
        %v1954 = vadd.f32 %v1878, %v1913
        %v1955 = vadd.f32 %v1879, %v1915
        %v1956 = vadd.f32 %v1880, %v1917
        %v1957 = vadd.f32 %v1881, %v1919
        %v1958 = vadd.f32 %v1882, %v1921
        %v1959 = vadd.f32 %v1883, %v1923
        %v1960 = vadd.f32 %v1884, %v1925
        %v1961 = vadd.f32 %v1885, %v1927
        %v1962 = vadd.f32 %v1886, %v1929
        %v1963 = vadd.f32 %v1887, %v1931
        %v1964 = vld [vmem:[#allocation7 + $0x70] sm:$0xfc]
        %v1965 = vld [vmem:[#allocation7 + $0x88] sm:$0xff]
        %v1966 = vld [vmem:[#allocation7 + $0xa0] sm:$0xff]
        %v1967 = vld [vmem:[#allocation7 + $0xb8] sm:$0xff]
        %v1968 = vld [vmem:[#allocation7 + $0xd0] sm:$0xff]
        %v1969 = vld [vmem:[#allocation7 + $0xe8] sm:$0xff]
        %v1970 = vld [vmem:[#allocation7 + $0x100] sm:$0xff]
        %v1971 = vld [vmem:[#allocation7 + $0x118] sm:$0xff]
        %v1972 = vld [vmem:[#allocation7 + $0x130] sm:$0xff]
        %v1973 = vld [vmem:[#allocation7 + $0x148] sm:$0xff]
        %v1974 = vld [vmem:[#allocation7 + $0x160] sm:$0xff]
        %v1975 = vld [vmem:[#allocation7 + $0x178] sm:$0xff]
        %v1976 = vld [vmem:[#allocation7 + $0x190] sm:$0xff]
        %v1977 = vld [vmem:[#allocation7 + $0x1a8] sm:$0xff]
        %v1978 = vld [vmem:[#allocation7 + $0x1c0] sm:$0xff]
        %v1979 = vld [vmem:[#allocation7 + $0x1d8] sm:$0xff]
        %v1980 = vld [vmem:[#allocation7 + $0x1f0] sm:$0x3]
        %v1998 = vrot.slane %v1964, 2
        %v1999 = vrot.slane %v1965, 2
        %v2000 = vsel %vm1454, %v1998, %v1999
        %v2001 = vrot.slane %v1966, 2
        %v2002 = vsel %vm1454, %v1999, %v2001
        %v2003 = vrot.slane %v1967, 2
        %v2004 = vsel %vm1454, %v2001, %v2003
        %v2005 = vrot.slane %v1968, 2
        %v2006 = vsel %vm1454, %v2003, %v2005
        %v2007 = vrot.slane %v1969, 2
        %v2008 = vsel %vm1454, %v2005, %v2007
        %v2009 = vrot.slane %v1970, 2
        %v2010 = vsel %vm1454, %v2007, %v2009
        %v2011 = vrot.slane %v1971, 2
        %v2012 = vsel %vm1454, %v2009, %v2011
        %v2013 = vrot.slane %v1972, 2
        %v2014 = vsel %vm1454, %v2011, %v2013
        %v2015 = vrot.slane %v1973, 2
        %v2016 = vsel %vm1454, %v2013, %v2015
        %v2017 = vrot.slane %v1974, 2
        %v2018 = vsel %vm1454, %v2015, %v2017
        %v2019 = vrot.slane %v1975, 2
        %v2020 = vsel %vm1454, %v2017, %v2019
        %v2021 = vrot.slane %v1976, 2
        %v2022 = vsel %vm1454, %v2019, %v2021
        %v2023 = vrot.slane %v1977, 2
        %v2024 = vsel %vm1454, %v2021, %v2023
        %v2025 = vrot.slane %v1978, 2
        %v2026 = vsel %vm1454, %v2023, %v2025
        %v2027 = vrot.slane %v1979, 2
        %v2028 = vsel %vm1454, %v2025, %v2027
        %v2029 = vrot.slane %v1980, 2
        %v2030 = vsel %vm1454, %v2027, %v2029
        %v2047 = vadd.f32 %v1948, %v2000
        %v2048 = vadd.f32 %v1949, %v2002
        %v2049 = vadd.f32 %v1950, %v2004
        %v2050 = vadd.f32 %v1951, %v2006
        %v2051 = vadd.f32 %v1952, %v2008
        %v2052 = vadd.f32 %v1953, %v2010
        %v2053 = vadd.f32 %v1954, %v2012
        %v2054 = vadd.f32 %v1955, %v2014
        %v2055 = vadd.f32 %v1956, %v2016
        %v2056 = vadd.f32 %v1957, %v2018
        %v2057 = vadd.f32 %v1958, %v2020
        %v2058 = vadd.f32 %v1959, %v2022
        %v2059 = vadd.f32 %v1960, %v2024
        %v2060 = vadd.f32 %v1961, %v2026
        %v2061 = vadd.f32 %v1962, %v2028
        %v2062 = vadd.f32 %v1963, %v2030
        %v2063 = vmax.f32 %v2047, 0.0
        %v2064 = vmax.f32 %v2048, 0.0
        %v2065 = vmax.f32 %v2049, 0.0
        %v2066 = vmax.f32 %v2050, 0.0
        %v2067 = vmax.f32 %v2051, 0.0
        %v2068 = vmax.f32 %v2052, 0.0
        %v2069 = vmax.f32 %v2053, 0.0
        %v2070 = vmax.f32 %v2054, 0.0
        %v2071 = vmax.f32 %v2055, 0.0
        %v2072 = vmax.f32 %v2056, 0.0
        %v2073 = vmax.f32 %v2057, 0.0
        %v2074 = vmax.f32 %v2058, 0.0
        %v2075 = vmax.f32 %v2059, 0.0
        %v2076 = vmax.f32 %v2060, 0.0
        %v2077 = vmax.f32 %v2061, 0.0
        %v2078 = vmax.f32 %v2062, 0.0
        %v2079 = vpack.c.bf16 %v2064, %v2063
        %v2080 = vpack.c.bf16 %v2066, %v2065
        %v2081 = vpack.c.bf16 %v2068, %v2067
        %v2082 = vpack.c.bf16 %v2070, %v2069
        %v2083 = vpack.c.bf16 %v2072, %v2071
        %v2084 = vpack.c.bf16 %v2074, %v2073
        %v2085 = vpack.c.bf16 %v2076, %v2075
        %v2086 = vpack.c.bf16 %v2078, %v2077
        %v2095 = vunpack.c.l.b16 %v2079
        %v2096 = vunpack.c.h.b16 %v2079
        %v2097 = vunpack.c.l.b16 %v2080
        %v2098 = vunpack.c.h.b16 %v2080
        %v2099 = vunpack.c.l.b16 %v2081
        %v2100 = vunpack.c.h.b16 %v2081
        %v2101 = vunpack.c.l.b16 %v2082
        %v2102 = vunpack.c.h.b16 %v2082
        %v2103 = vunpack.c.l.b16 %v2083
        %v2104 = vunpack.c.h.b16 %v2083
        %v2105 = vunpack.c.l.b16 %v2084
        %v2106 = vunpack.c.h.b16 %v2084
        %v2107 = vunpack.c.l.b16 %v2085
        %v2108 = vunpack.c.h.b16 %v2085
        %v2109 = vunpack.c.l.b16 %v2086
        %v2110 = vunpack.c.h.b16 %v2086
        %v2111 = vpack.c.b16 %v2095, %v2095
        %v2112 = vpack.c.b16 %v2096, %v2096
        %v2113 = vpack.c.b16 %v2097, %v2097
        %v2114 = vpack.c.b16 %v2098, %v2098
        %v2115 = vpack.c.b16 %v2099, %v2099
        %v2116 = vpack.c.b16 %v2100, %v2100
        %v2117 = vpack.c.b16 %v2101, %v2101
        %v2118 = vpack.c.b16 %v2102, %v2102
        %v2119 = vpack.c.b16 %v2103, %v2103
        %v2120 = vpack.c.b16 %v2104, %v2104
        %v2121 = vpack.c.b16 %v2105, %v2105
        %v2122 = vpack.c.b16 %v2106, %v2106
        %v2123 = vpack.c.b16 %v2107, %v2107
        %v2124 = vpack.c.b16 %v2108, %v2108
        %v2125 = vpack.c.b16 %v2109, %v2109
        %v2126 = vpack.c.b16 %v2110, %v2110
        %vm2143 = vcmask 257024
        %2144 = vst.msk [vmem:[#allocation2] sm:$0xf] %vm2143, %v2111
        %2145 = vst.msk [vmem:[#allocation2 + $0x4] sm:$0xf] %vm2143, %v2112
        %2146 = vst.msk [vmem:[#allocation2 + $0x8] sm:$0xf] %vm2143, %v2113
        %2147 = vst.msk [vmem:[#allocation2 + $0xc] sm:$0xf] %vm2143, %v2114
        %2148 = vst.msk [vmem:[#allocation2 + $0x10] sm:$0xf] %vm2143, %v2115
        %2149 = vst.msk [vmem:[#allocation2 + $0x14] sm:$0xf] %vm2143, %v2116
        %2150 = vst.msk [vmem:[#allocation2 + $0x18] sm:$0xf] %vm2143, %v2117
        %2151 = vst.msk [vmem:[#allocation2 + $0x1c] sm:$0xf] %vm2143, %v2118
        %2152 = vst.msk [vmem:[#allocation2 + $0x20] sm:$0xf] %vm2143, %v2119
        %2153 = vst.msk [vmem:[#allocation2 + $0x24] sm:$0xf] %vm2143, %v2120
        %2154 = vst.msk [vmem:[#allocation2 + $0x28] sm:$0xf] %vm2143, %v2121
        %2155 = vst.msk [vmem:[#allocation2 + $0x2c] sm:$0xf] %vm2143, %v2122
        %2156 = vst.msk [vmem:[#allocation2 + $0x30] sm:$0xf] %vm2143, %v2123
        %2157 = vst.msk [vmem:[#allocation2 + $0x34] sm:$0xf] %vm2143, %v2124
        %2158 = vst.msk [vmem:[#allocation2 + $0x38] sm:$0xf] %vm2143, %v2125
        %2159 = vst.msk [vmem:[#allocation2 + $0x3c] sm:$0xf] %vm2143, %v2126
        %v2160 = vld [vmem:[#allocation7 + $0x180] sm:$0xff]
        %v2161 = vld [vmem:[#allocation7 + $0x198] sm:$0xff]
        %v2162 = vld [vmem:[#allocation7 + $0x1b0] sm:$0xff]
        %v2163 = vld [vmem:[#allocation7 + $0x1c8] sm:$0xff]
        %v2164 = vld [vmem:[#allocation7 + $0x1e0] sm:$0xff]
        %v2165 = vld [vmem:[#allocation7 + $0x1f8] sm:$0xff]
        %v2166 = vld [vmem:[#allocation7 + $0x210] sm:$0xff]
        %v2167 = vld [vmem:[#allocation7 + $0x228] sm:$0xff]
        %v2168 = vld [vmem:[#allocation7 + $0x240] sm:$0xff]
        %v2169 = vld [vmem:[#allocation7 + $0x258] sm:$0xff]
        %v2170 = vld [vmem:[#allocation7 + $0x270] sm:$0xff]
        %v2171 = vld [vmem:[#allocation7 + $0x288] sm:$0xff]
        %v2172 = vld [vmem:[#allocation7 + $0x2a0] sm:$0xff]
        %v2173 = vld [vmem:[#allocation7 + $0x2b8] sm:$0xff]
        %v2174 = vld [vmem:[#allocation7 + $0x2d0] sm:$0xff]
        %v2175 = vld [vmem:[#allocation7 + $0x2e8] sm:$0xff]
        %v2176 = vadd.f32 %v1299, %v2160
        %v2177 = vadd.f32 %v1299, %v2161
        %v2178 = vadd.f32 %v1299, %v2162
        %v2179 = vadd.f32 %v1299, %v2163
        %v2180 = vadd.f32 %v1299, %v2164
        %v2181 = vadd.f32 %v1299, %v2165
        %v2182 = vadd.f32 %v1299, %v2166
        %v2183 = vadd.f32 %v1299, %v2167
        %v2184 = vadd.f32 %v1299, %v2168
        %v2185 = vadd.f32 %v1299, %v2169
        %v2186 = vadd.f32 %v1299, %v2170
        %v2187 = vadd.f32 %v1299, %v2171
        %v2188 = vadd.f32 %v1299, %v2172
        %v2189 = vadd.f32 %v1299, %v2173
        %v2190 = vadd.f32 %v1299, %v2174
        %v2191 = vadd.f32 %v1299, %v2175
        %v2192 = vld [vmem:[#allocation7 + $0x180] sm:$0xfe]
        %v2193 = vld [vmem:[#allocation7 + $0x300] sm:$0x1]
        %v2211 = vrot.slane %v2192, 1
        %v2212 = vrot.slane %v2161, 1
        %v2213 = vsel %vm1352, %v2211, %v2212
        %v2214 = vrot.slane %v2162, 1
        %v2215 = vsel %vm1352, %v2212, %v2214
        %v2216 = vrot.slane %v2163, 1
        %v2217 = vsel %vm1352, %v2214, %v2216
        %v2218 = vrot.slane %v2164, 1
        %v2219 = vsel %vm1352, %v2216, %v2218
        %v2220 = vrot.slane %v2165, 1
        %v2221 = vsel %vm1352, %v2218, %v2220
        %v2222 = vrot.slane %v2166, 1
        %v2223 = vsel %vm1352, %v2220, %v2222
        %v2224 = vrot.slane %v2167, 1
        %v2225 = vsel %vm1352, %v2222, %v2224
        %v2226 = vrot.slane %v2168, 1
        %v2227 = vsel %vm1352, %v2224, %v2226
        %v2228 = vrot.slane %v2169, 1
        %v2229 = vsel %vm1352, %v2226, %v2228
        %v2230 = vrot.slane %v2170, 1
        %v2231 = vsel %vm1352, %v2228, %v2230
        %v2232 = vrot.slane %v2171, 1
        %v2233 = vsel %vm1352, %v2230, %v2232
        %v2234 = vrot.slane %v2172, 1
        %v2235 = vsel %vm1352, %v2232, %v2234
        %v2236 = vrot.slane %v2173, 1
        %v2237 = vsel %vm1352, %v2234, %v2236
        %v2238 = vrot.slane %v2174, 1
        %v2239 = vsel %vm1352, %v2236, %v2238
        %v2240 = vrot.slane %v2175, 1
        %v2241 = vsel %vm1352, %v2238, %v2240
        %v2242 = vrot.slane %v2193, 1
        %v2243 = vsel %vm1352, %v2240, %v2242
        %2244 = vrot.lane.b32.xlu0 %v2213, 96
        %v2245 = vpop.permute.xlu0 %2244
        %2246 = vrot.lane.b32.xlu0 %v2215, 96
        %v2247 = vpop.permute.xlu0 %2246
        %2248 = vrot.lane.b32.xlu0 %v2217, 96
        %v2249 = vpop.permute.xlu0 %2248
        %2250 = vrot.lane.b32.xlu0 %v2219, 96
        %v2251 = vpop.permute.xlu0 %2250
        %2252 = vrot.lane.b32.xlu0 %v2221, 96
        %v2253 = vpop.permute.xlu0 %2252
        %2254 = vrot.lane.b32.xlu0 %v2223, 96
        %v2255 = vpop.permute.xlu0 %2254
        %2256 = vrot.lane.b32.xlu0 %v2225, 96
        %v2257 = vpop.permute.xlu0 %2256
        %2258 = vrot.lane.b32.xlu0 %v2227, 96
        %v2259 = vpop.permute.xlu0 %2258
        %2260 = vrot.lane.b32.xlu0 %v2229, 96
        %v2261 = vpop.permute.xlu0 %2260
        %2262 = vrot.lane.b32.xlu0 %v2231, 96
        %v2263 = vpop.permute.xlu0 %2262
        %2264 = vrot.lane.b32.xlu0 %v2233, 96
        %v2265 = vpop.permute.xlu0 %2264
        %2266 = vrot.lane.b32.xlu0 %v2235, 96
        %v2267 = vpop.permute.xlu0 %2266
        %2268 = vrot.lane.b32.xlu0 %v2237, 96
        %v2269 = vpop.permute.xlu0 %2268
        %2270 = vrot.lane.b32.xlu0 %v2239, 96
        %v2271 = vpop.permute.xlu0 %2270
        %2272 = vrot.lane.b32.xlu0 %v2241, 96
        %v2273 = vpop.permute.xlu0 %2272
        %2274 = vrot.lane.b32.xlu0 %v2243, 96
        %v2275 = vpop.permute.xlu0 %2274
        %v2292 = vadd.f32 %v2176, %v2245
        %v2293 = vadd.f32 %v2177, %v2247
        %v2294 = vadd.f32 %v2178, %v2249
        %v2295 = vadd.f32 %v2179, %v2251
        %v2296 = vadd.f32 %v2180, %v2253
        %v2297 = vadd.f32 %v2181, %v2255
        %v2298 = vadd.f32 %v2182, %v2257
        %v2299 = vadd.f32 %v2183, %v2259
        %v2300 = vadd.f32 %v2184, %v2261
        %v2301 = vadd.f32 %v2185, %v2263
        %v2302 = vadd.f32 %v2186, %v2265
        %v2303 = vadd.f32 %v2187, %v2267
        %v2304 = vadd.f32 %v2188, %v2269
        %v2305 = vadd.f32 %v2189, %v2271
        %v2306 = vadd.f32 %v2190, %v2273
        %v2307 = vadd.f32 %v2191, %v2275
        %v2308 = vld [vmem:[#allocation7 + $0x180] sm:$0xfc]
        %v2309 = vld [vmem:[#allocation7 + $0x300] sm:$0x3]
        %v2312 = vrot.slane %v2308, 2
        %v2313 = vrot.slane %v2161, 2
        %v2314 = vsel %vm1454, %v2312, %v2313
        %v2315 = vrot.slane %v2162, 2
        %v2316 = vsel %vm1454, %v2313, %v2315
        %v2317 = vrot.slane %v2163, 2
        %v2318 = vsel %vm1454, %v2315, %v2317
        %v2319 = vrot.slane %v2164, 2
        %v2320 = vsel %vm1454, %v2317, %v2319
        %v2321 = vrot.slane %v2165, 2
        %v2322 = vsel %vm1454, %v2319, %v2321
        %v2323 = vrot.slane %v2166, 2
        %v2324 = vsel %vm1454, %v2321, %v2323
        %v2325 = vrot.slane %v2167, 2
        %v2326 = vsel %vm1454, %v2323, %v2325
        %v2327 = vrot.slane %v2168, 2
        %v2328 = vsel %vm1454, %v2325, %v2327
        %v2329 = vrot.slane %v2169, 2
        %v2330 = vsel %vm1454, %v2327, %v2329
        %v2331 = vrot.slane %v2170, 2
        %v2332 = vsel %vm1454, %v2329, %v2331
        %v2333 = vrot.slane %v2171, 2
        %v2334 = vsel %vm1454, %v2331, %v2333
        %v2335 = vrot.slane %v2172, 2
        %v2336 = vsel %vm1454, %v2333, %v2335
        %v2337 = vrot.slane %v2173, 2
        %v2338 = vsel %vm1454, %v2335, %v2337
        %v2339 = vrot.slane %v2174, 2
        %v2340 = vsel %vm1454, %v2337, %v2339
        %v2341 = vrot.slane %v2175, 2
        %v2342 = vsel %vm1454, %v2339, %v2341
        %v2343 = vrot.slane %v2309, 2
        %v2344 = vsel %vm1454, %v2341, %v2343
        %2345 = vrot.lane.b32.xlu0 %v2314, 64
        %v2346 = vpop.permute.xlu0 %2345
        %2347 = vrot.lane.b32.xlu0 %v2316, 64
        %v2348 = vpop.permute.xlu0 %2347
        %2349 = vrot.lane.b32.xlu0 %v2318, 64
        %v2350 = vpop.permute.xlu0 %2349
        %2351 = vrot.lane.b32.xlu0 %v2320, 64
        %v2352 = vpop.permute.xlu0 %2351
        %2353 = vrot.lane.b32.xlu0 %v2322, 64
        %v2354 = vpop.permute.xlu0 %2353
        %2355 = vrot.lane.b32.xlu0 %v2324, 64
        %v2356 = vpop.permute.xlu0 %2355
        %2357 = vrot.lane.b32.xlu0 %v2326, 64
        %v2358 = vpop.permute.xlu0 %2357
        %2359 = vrot.lane.b32.xlu0 %v2328, 64
        %v2360 = vpop.permute.xlu0 %2359
        %2361 = vrot.lane.b32.xlu0 %v2330, 64
        %v2362 = vpop.permute.xlu0 %2361
        %2363 = vrot.lane.b32.xlu0 %v2332, 64
        %v2364 = vpop.permute.xlu0 %2363
        %2365 = vrot.lane.b32.xlu0 %v2334, 64
        %v2366 = vpop.permute.xlu0 %2365
        %2367 = vrot.lane.b32.xlu0 %v2336, 64
        %v2368 = vpop.permute.xlu0 %2367
        %2369 = vrot.lane.b32.xlu0 %v2338, 64
        %v2370 = vpop.permute.xlu0 %2369
        %2371 = vrot.lane.b32.xlu0 %v2340, 64
        %v2372 = vpop.permute.xlu0 %2371
        %2373 = vrot.lane.b32.xlu0 %v2342, 64
        %v2374 = vpop.permute.xlu0 %2373
        %2375 = vrot.lane.b32.xlu0 %v2344, 64
        %v2376 = vpop.permute.xlu0 %2375
        %v2393 = vadd.f32 %v2292, %v2346
        %v2394 = vadd.f32 %v2293, %v2348
        %v2395 = vadd.f32 %v2294, %v2350
        %v2396 = vadd.f32 %v2295, %v2352
        %v2397 = vadd.f32 %v2296, %v2354
        %v2398 = vadd.f32 %v2297, %v2356
        %v2399 = vadd.f32 %v2298, %v2358
        %v2400 = vadd.f32 %v2299, %v2360
        %v2401 = vadd.f32 %v2300, %v2362
        %v2402 = vadd.f32 %v2301, %v2364
        %v2403 = vadd.f32 %v2302, %v2366
        %v2404 = vadd.f32 %v2303, %v2368
        %v2405 = vadd.f32 %v2304, %v2370
        %v2406 = vadd.f32 %v2305, %v2372
        %v2407 = vadd.f32 %v2306, %v2374
        %v2408 = vadd.f32 %v2307, %v2376
        %v2409 = vld [vmem:[#allocation7 + $0x300] sm:$0xff]
        %v2410 = vld [vmem:[#allocation7 + $0x318] sm:$0xff]
        %2413 = vrot.lane.b32.xlu0 %v2162, 32
        %v2414 = vpop.permute.xlu0 %2413
        %2415 = vrot.lane.b32.xlu0 %v2163, 32
        %v2416 = vpop.permute.xlu0 %2415
        %2417 = vrot.lane.b32.xlu0 %v2164, 32
        %v2418 = vpop.permute.xlu0 %2417
        %2419 = vrot.lane.b32.xlu0 %v2165, 32
        %v2420 = vpop.permute.xlu0 %2419
        %2421 = vrot.lane.b32.xlu0 %v2166, 32
        %v2422 = vpop.permute.xlu0 %2421
        %2423 = vrot.lane.b32.xlu0 %v2167, 32
        %v2424 = vpop.permute.xlu0 %2423
        %2425 = vrot.lane.b32.xlu0 %v2168, 32
        %v2426 = vpop.permute.xlu0 %2425
        %2427 = vrot.lane.b32.xlu0 %v2169, 32
        %v2428 = vpop.permute.xlu0 %2427
        %2429 = vrot.lane.b32.xlu0 %v2170, 32
        %v2430 = vpop.permute.xlu0 %2429
        %2431 = vrot.lane.b32.xlu0 %v2171, 32
        %v2432 = vpop.permute.xlu0 %2431
        %2433 = vrot.lane.b32.xlu0 %v2172, 32
        %v2434 = vpop.permute.xlu0 %2433
        %2435 = vrot.lane.b32.xlu0 %v2173, 32
        %v2436 = vpop.permute.xlu0 %2435
        %2437 = vrot.lane.b32.xlu0 %v2174, 32
        %v2438 = vpop.permute.xlu0 %2437
        %2439 = vrot.lane.b32.xlu0 %v2175, 32
        %v2440 = vpop.permute.xlu0 %2439
        %2441 = vrot.lane.b32.xlu0 %v2409, 32
        %v2442 = vpop.permute.xlu0 %2441
        %2443 = vrot.lane.b32.xlu0 %v2410, 32
        %v2444 = vpop.permute.xlu0 %2443
        %v2461 = vadd.f32 %v2393, %v2414
        %v2462 = vadd.f32 %v2394, %v2416
        %v2463 = vadd.f32 %v2395, %v2418
        %v2464 = vadd.f32 %v2396, %v2420
        %v2465 = vadd.f32 %v2397, %v2422
        %v2466 = vadd.f32 %v2398, %v2424
        %v2467 = vadd.f32 %v2399, %v2426
        %v2468 = vadd.f32 %v2400, %v2428
        %v2469 = vadd.f32 %v2401, %v2430
        %v2470 = vadd.f32 %v2402, %v2432
        %v2471 = vadd.f32 %v2403, %v2434
        %v2472 = vadd.f32 %v2404, %v2436
        %v2473 = vadd.f32 %v2405, %v2438
        %v2474 = vadd.f32 %v2406, %v2440
        %v2475 = vadd.f32 %v2407, %v2442
        %v2476 = vadd.f32 %v2408, %v2444
        %v2477 = vld [vmem:[#allocation7 + $0x1b8] sm:$0xfe]
        %v2478 = vld [vmem:[#allocation7 + $0x1d0] sm:$0xff]
        %v2479 = vld [vmem:[#allocation7 + $0x1e8] sm:$0xff]
        %v2480 = vld [vmem:[#allocation7 + $0x200] sm:$0xff]
        %v2481 = vld [vmem:[#allocation7 + $0x218] sm:$0xff]
        %v2482 = vld [vmem:[#allocation7 + $0x230] sm:$0xff]
        %v2483 = vld [vmem:[#allocation7 + $0x248] sm:$0xff]
        %v2484 = vld [vmem:[#allocation7 + $0x260] sm:$0xff]
        %v2485 = vld [vmem:[#allocation7 + $0x278] sm:$0xff]
        %v2486 = vld [vmem:[#allocation7 + $0x290] sm:$0xff]
        %v2487 = vld [vmem:[#allocation7 + $0x2a8] sm:$0xff]
        %v2488 = vld [vmem:[#allocation7 + $0x2c0] sm:$0xff]
        %v2489 = vld [vmem:[#allocation7 + $0x2d8] sm:$0xff]
        %v2490 = vld [vmem:[#allocation7 + $0x2f0] sm:$0xff]
        %v2491 = vld [vmem:[#allocation7 + $0x308] sm:$0xff]
        %v2492 = vld [vmem:[#allocation7 + $0x320] sm:$0xff]
        %v2493 = vld [vmem:[#allocation7 + $0x338] sm:$0x1]
        %v2511 = vrot.slane %v2477, 1
        %v2512 = vrot.slane %v2478, 1
        %v2513 = vsel %vm1352, %v2511, %v2512
        %v2514 = vrot.slane %v2479, 1
        %v2515 = vsel %vm1352, %v2512, %v2514
        %v2516 = vrot.slane %v2480, 1
        %v2517 = vsel %vm1352, %v2514, %v2516
        %v2518 = vrot.slane %v2481, 1
        %v2519 = vsel %vm1352, %v2516, %v2518
        %v2520 = vrot.slane %v2482, 1
        %v2521 = vsel %vm1352, %v2518, %v2520
        %v2522 = vrot.slane %v2483, 1
        %v2523 = vsel %vm1352, %v2520, %v2522
        %v2524 = vrot.slane %v2484, 1
        %v2525 = vsel %vm1352, %v2522, %v2524
        %v2526 = vrot.slane %v2485, 1
        %v2527 = vsel %vm1352, %v2524, %v2526
        %v2528 = vrot.slane %v2486, 1
        %v2529 = vsel %vm1352, %v2526, %v2528
        %v2530 = vrot.slane %v2487, 1
        %v2531 = vsel %vm1352, %v2528, %v2530
        %v2532 = vrot.slane %v2488, 1
        %v2533 = vsel %vm1352, %v2530, %v2532
        %v2534 = vrot.slane %v2489, 1
        %v2535 = vsel %vm1352, %v2532, %v2534
        %v2536 = vrot.slane %v2490, 1
        %v2537 = vsel %vm1352, %v2534, %v2536
        %v2538 = vrot.slane %v2491, 1
        %v2539 = vsel %vm1352, %v2536, %v2538
        %v2540 = vrot.slane %v2492, 1
        %v2541 = vsel %vm1352, %v2538, %v2540
        %v2542 = vrot.slane %v2493, 1
        %v2543 = vsel %vm1352, %v2540, %v2542
        %v2560 = vadd.f32 %v2461, %v2513
        %v2561 = vadd.f32 %v2462, %v2515
        %v2562 = vadd.f32 %v2463, %v2517
        %v2563 = vadd.f32 %v2464, %v2519
        %v2564 = vadd.f32 %v2465, %v2521
        %v2565 = vadd.f32 %v2466, %v2523
        %v2566 = vadd.f32 %v2467, %v2525
        %v2567 = vadd.f32 %v2468, %v2527
        %v2568 = vadd.f32 %v2469, %v2529
        %v2569 = vadd.f32 %v2470, %v2531
        %v2570 = vadd.f32 %v2471, %v2533
        %v2571 = vadd.f32 %v2472, %v2535
        %v2572 = vadd.f32 %v2473, %v2537
        %v2573 = vadd.f32 %v2474, %v2539
        %v2574 = vadd.f32 %v2475, %v2541
        %v2575 = vadd.f32 %v2476, %v2543
        %v2576 = vld [vmem:[#allocation7 + $0x1b8] sm:$0xfc]
        %v2577 = vld [vmem:[#allocation7 + $0x338] sm:$0x3]
        %v2580 = vrot.slane %v2576, 2
        %v2581 = vrot.slane %v2478, 2
        %v2582 = vsel %vm1454, %v2580, %v2581
        %v2583 = vrot.slane %v2479, 2
        %v2584 = vsel %vm1454, %v2581, %v2583
        %v2585 = vrot.slane %v2480, 2
        %v2586 = vsel %vm1454, %v2583, %v2585
        %v2587 = vrot.slane %v2481, 2
        %v2588 = vsel %vm1454, %v2585, %v2587
        %v2589 = vrot.slane %v2482, 2
        %v2590 = vsel %vm1454, %v2587, %v2589
        %v2591 = vrot.slane %v2483, 2
        %v2592 = vsel %vm1454, %v2589, %v2591
        %v2593 = vrot.slane %v2484, 2
        %v2594 = vsel %vm1454, %v2591, %v2593
        %v2595 = vrot.slane %v2485, 2
        %v2596 = vsel %vm1454, %v2593, %v2595
        %v2597 = vrot.slane %v2486, 2
        %v2598 = vsel %vm1454, %v2595, %v2597
        %v2599 = vrot.slane %v2487, 2
        %v2600 = vsel %vm1454, %v2597, %v2599
        %v2601 = vrot.slane %v2488, 2
        %v2602 = vsel %vm1454, %v2599, %v2601
        %v2603 = vrot.slane %v2489, 2
        %v2604 = vsel %vm1454, %v2601, %v2603
        %v2605 = vrot.slane %v2490, 2
        %v2606 = vsel %vm1454, %v2603, %v2605
        %v2607 = vrot.slane %v2491, 2
        %v2608 = vsel %vm1454, %v2605, %v2607
        %v2609 = vrot.slane %v2492, 2
        %v2610 = vsel %vm1454, %v2607, %v2609
        %v2611 = vrot.slane %v2577, 2
        %v2612 = vsel %vm1454, %v2609, %v2611
        %2613 = vrot.lane.b32.xlu0 %v2582, 96
        %v2614 = vpop.permute.xlu0 %2613
        %2615 = vrot.lane.b32.xlu0 %v2584, 96
        %v2616 = vpop.permute.xlu0 %2615
        %2617 = vrot.lane.b32.xlu0 %v2586, 96
        %v2618 = vpop.permute.xlu0 %2617
        %2619 = vrot.lane.b32.xlu0 %v2588, 96
        %v2620 = vpop.permute.xlu0 %2619
        %2621 = vrot.lane.b32.xlu0 %v2590, 96
        %v2622 = vpop.permute.xlu0 %2621
        %2623 = vrot.lane.b32.xlu0 %v2592, 96
        %v2624 = vpop.permute.xlu0 %2623
        %2625 = vrot.lane.b32.xlu0 %v2594, 96
        %v2626 = vpop.permute.xlu0 %2625
        %2627 = vrot.lane.b32.xlu0 %v2596, 96
        %v2628 = vpop.permute.xlu0 %2627
        %2629 = vrot.lane.b32.xlu0 %v2598, 96
        %v2630 = vpop.permute.xlu0 %2629
        %2631 = vrot.lane.b32.xlu0 %v2600, 96
        %v2632 = vpop.permute.xlu0 %2631
        %2633 = vrot.lane.b32.xlu0 %v2602, 96
        %v2634 = vpop.permute.xlu0 %2633
        %2635 = vrot.lane.b32.xlu0 %v2604, 96
        %v2636 = vpop.permute.xlu0 %2635
        %2637 = vrot.lane.b32.xlu0 %v2606, 96
        %v2638 = vpop.permute.xlu0 %2637
        %2639 = vrot.lane.b32.xlu0 %v2608, 96
        %v2640 = vpop.permute.xlu0 %2639
        %2641 = vrot.lane.b32.xlu0 %v2610, 96
        %v2642 = vpop.permute.xlu0 %2641
        %2643 = vrot.lane.b32.xlu0 %v2612, 96
        %v2644 = vpop.permute.xlu0 %2643
        %v2661 = vadd.f32 %v2560, %v2614
        %v2662 = vadd.f32 %v2561, %v2616
        %v2663 = vadd.f32 %v2562, %v2618
        %v2664 = vadd.f32 %v2563, %v2620
        %v2665 = vadd.f32 %v2564, %v2622
        %v2666 = vadd.f32 %v2565, %v2624
        %v2667 = vadd.f32 %v2566, %v2626
        %v2668 = vadd.f32 %v2567, %v2628
        %v2669 = vadd.f32 %v2568, %v2630
        %v2670 = vadd.f32 %v2569, %v2632
        %v2671 = vadd.f32 %v2570, %v2634
        %v2672 = vadd.f32 %v2571, %v2636
        %v2673 = vadd.f32 %v2572, %v2638
        %v2674 = vadd.f32 %v2573, %v2640
        %v2675 = vadd.f32 %v2574, %v2642
        %v2676 = vadd.f32 %v2575, %v2644
        %v2677 = vld [vmem:[#allocation7 + $0x338] sm:$0xff]
        %v2678 = vld [vmem:[#allocation7 + $0x350] sm:$0xff]
        %2681 = vrot.lane.b32.xlu0 %v2479, 64
        %v2682 = vpop.permute.xlu0 %2681
        %2683 = vrot.lane.b32.xlu0 %v2480, 64
        %v2684 = vpop.permute.xlu0 %2683
        %2685 = vrot.lane.b32.xlu0 %v2481, 64
        %v2686 = vpop.permute.xlu0 %2685
        %2687 = vrot.lane.b32.xlu0 %v2482, 64
        %v2688 = vpop.permute.xlu0 %2687
        %2689 = vrot.lane.b32.xlu0 %v2483, 64
        %v2690 = vpop.permute.xlu0 %2689
        %2691 = vrot.lane.b32.xlu0 %v2484, 64
        %v2692 = vpop.permute.xlu0 %2691
        %2693 = vrot.lane.b32.xlu0 %v2485, 64
        %v2694 = vpop.permute.xlu0 %2693
        %2695 = vrot.lane.b32.xlu0 %v2486, 64
        %v2696 = vpop.permute.xlu0 %2695
        %2697 = vrot.lane.b32.xlu0 %v2487, 64
        %v2698 = vpop.permute.xlu0 %2697
        %2699 = vrot.lane.b32.xlu0 %v2488, 64
        %v2700 = vpop.permute.xlu0 %2699
        %2701 = vrot.lane.b32.xlu0 %v2489, 64
        %v2702 = vpop.permute.xlu0 %2701
        %2703 = vrot.lane.b32.xlu0 %v2490, 64
        %v2704 = vpop.permute.xlu0 %2703
        %2705 = vrot.lane.b32.xlu0 %v2491, 64
        %v2706 = vpop.permute.xlu0 %2705
        %2707 = vrot.lane.b32.xlu0 %v2492, 64
        %v2708 = vpop.permute.xlu0 %2707
        %2709 = vrot.lane.b32.xlu0 %v2677, 64
        %v2710 = vpop.permute.xlu0 %2709
        %2711 = vrot.lane.b32.xlu0 %v2678, 64
        %v2712 = vpop.permute.xlu0 %2711
        %v2729 = vadd.f32 %v2661, %v2682
        %v2730 = vadd.f32 %v2662, %v2684
        %v2731 = vadd.f32 %v2663, %v2686
        %v2732 = vadd.f32 %v2664, %v2688
        %v2733 = vadd.f32 %v2665, %v2690
        %v2734 = vadd.f32 %v2666, %v2692
        %v2735 = vadd.f32 %v2667, %v2694
        %v2736 = vadd.f32 %v2668, %v2696
        %v2737 = vadd.f32 %v2669, %v2698
        %v2738 = vadd.f32 %v2670, %v2700
        %v2739 = vadd.f32 %v2671, %v2702
        %v2740 = vadd.f32 %v2672, %v2704
        %v2741 = vadd.f32 %v2673, %v2706
        %v2742 = vadd.f32 %v2674, %v2708
        %v2743 = vadd.f32 %v2675, %v2710
        %v2744 = vadd.f32 %v2676, %v2712
        %v2745 = vld [vmem:[#allocation7 + $0x1e8] sm:$0xfe]
        %v2746 = vld [vmem:[#allocation7 + $0x368] sm:$0x1]
        %v2749 = vrot.slane %v2745, 1
        %v2750 = vsel %vm1352, %v2749, %v2516
        %v2751 = vrot.slane %v2677, 1
        %v2752 = vsel %vm1352, %v2540, %v2751
        %v2753 = vrot.slane %v2678, 1
        %v2754 = vsel %vm1352, %v2751, %v2753
        %v2755 = vrot.slane %v2746, 1
        %v2756 = vsel %vm1352, %v2753, %v2755
        %2757 = vrot.lane.b32.xlu0 %v2750, 32
        %v2758 = vpop.permute.xlu0 %2757
        %2759 = vrot.lane.b32.xlu0 %v2519, 32
        %v2760 = vpop.permute.xlu0 %2759
        %2761 = vrot.lane.b32.xlu0 %v2521, 32
        %v2762 = vpop.permute.xlu0 %2761
        %2763 = vrot.lane.b32.xlu0 %v2523, 32
        %v2764 = vpop.permute.xlu0 %2763
        %2765 = vrot.lane.b32.xlu0 %v2525, 32
        %v2766 = vpop.permute.xlu0 %2765
        %2767 = vrot.lane.b32.xlu0 %v2527, 32
        %v2768 = vpop.permute.xlu0 %2767
        %2769 = vrot.lane.b32.xlu0 %v2529, 32
        %v2770 = vpop.permute.xlu0 %2769
        %2771 = vrot.lane.b32.xlu0 %v2531, 32
        %v2772 = vpop.permute.xlu0 %2771
        %2773 = vrot.lane.b32.xlu0 %v2533, 32
        %v2774 = vpop.permute.xlu0 %2773
        %2775 = vrot.lane.b32.xlu0 %v2535, 32
        %v2776 = vpop.permute.xlu0 %2775
        %2777 = vrot.lane.b32.xlu0 %v2537, 32
        %v2778 = vpop.permute.xlu0 %2777
        %2779 = vrot.lane.b32.xlu0 %v2539, 32
        %v2780 = vpop.permute.xlu0 %2779
        %2781 = vrot.lane.b32.xlu0 %v2541, 32
        %v2782 = vpop.permute.xlu0 %2781
        %2783 = vrot.lane.b32.xlu0 %v2752, 32
        %v2784 = vpop.permute.xlu0 %2783
        %2785 = vrot.lane.b32.xlu0 %v2754, 32
        %v2786 = vpop.permute.xlu0 %2785
        %2787 = vrot.lane.b32.xlu0 %v2756, 32
        %v2788 = vpop.permute.xlu0 %2787
        %v2805 = vadd.f32 %v2729, %v2758
        %v2806 = vadd.f32 %v2730, %v2760
        %v2807 = vadd.f32 %v2731, %v2762
        %v2808 = vadd.f32 %v2732, %v2764
        %v2809 = vadd.f32 %v2733, %v2766
        %v2810 = vadd.f32 %v2734, %v2768
        %v2811 = vadd.f32 %v2735, %v2770
        %v2812 = vadd.f32 %v2736, %v2772
        %v2813 = vadd.f32 %v2737, %v2774
        %v2814 = vadd.f32 %v2738, %v2776
        %v2815 = vadd.f32 %v2739, %v2778
        %v2816 = vadd.f32 %v2740, %v2780
        %v2817 = vadd.f32 %v2741, %v2782
        %v2818 = vadd.f32 %v2742, %v2784
        %v2819 = vadd.f32 %v2743, %v2786
        %v2820 = vadd.f32 %v2744, %v2788
        %v2821 = vld [vmem:[#allocation7 + $0x1f0] sm:$0xfc]
        %v2822 = vld [vmem:[#allocation7 + $0x208] sm:$0xff]
        %v2823 = vld [vmem:[#allocation7 + $0x220] sm:$0xff]
        %v2824 = vld [vmem:[#allocation7 + $0x238] sm:$0xff]
        %v2825 = vld [vmem:[#allocation7 + $0x250] sm:$0xff]
        %v2826 = vld [vmem:[#allocation7 + $0x268] sm:$0xff]
        %v2827 = vld [vmem:[#allocation7 + $0x280] sm:$0xff]
        %v2828 = vld [vmem:[#allocation7 + $0x298] sm:$0xff]
        %v2829 = vld [vmem:[#allocation7 + $0x2b0] sm:$0xff]
        %v2830 = vld [vmem:[#allocation7 + $0x2c8] sm:$0xff]
        %v2831 = vld [vmem:[#allocation7 + $0x2e0] sm:$0xff]
        %v2832 = vld [vmem:[#allocation7 + $0x2f8] sm:$0xff]
        %v2833 = vld [vmem:[#allocation7 + $0x310] sm:$0xff]
        %v2834 = vld [vmem:[#allocation7 + $0x328] sm:$0xff]
        %v2835 = vld [vmem:[#allocation7 + $0x340] sm:$0xff]
        %v2836 = vld [vmem:[#allocation7 + $0x358] sm:$0xff]
        %v2837 = vld [vmem:[#allocation7 + $0x370] sm:$0x3]
        %v2855 = vrot.slane %v2821, 2
        %v2856 = vrot.slane %v2822, 2
        %v2857 = vsel %vm1454, %v2855, %v2856
        %v2858 = vrot.slane %v2823, 2
        %v2859 = vsel %vm1454, %v2856, %v2858
        %v2860 = vrot.slane %v2824, 2
        %v2861 = vsel %vm1454, %v2858, %v2860
        %v2862 = vrot.slane %v2825, 2
        %v2863 = vsel %vm1454, %v2860, %v2862
        %v2864 = vrot.slane %v2826, 2
        %v2865 = vsel %vm1454, %v2862, %v2864
        %v2866 = vrot.slane %v2827, 2
        %v2867 = vsel %vm1454, %v2864, %v2866
        %v2868 = vrot.slane %v2828, 2
        %v2869 = vsel %vm1454, %v2866, %v2868
        %v2870 = vrot.slane %v2829, 2
        %v2871 = vsel %vm1454, %v2868, %v2870
        %v2872 = vrot.slane %v2830, 2
        %v2873 = vsel %vm1454, %v2870, %v2872
        %v2874 = vrot.slane %v2831, 2
        %v2875 = vsel %vm1454, %v2872, %v2874
        %v2876 = vrot.slane %v2832, 2
        %v2877 = vsel %vm1454, %v2874, %v2876
        %v2878 = vrot.slane %v2833, 2
        %v2879 = vsel %vm1454, %v2876, %v2878
        %v2880 = vrot.slane %v2834, 2
        %v2881 = vsel %vm1454, %v2878, %v2880
        %v2882 = vrot.slane %v2835, 2
        %v2883 = vsel %vm1454, %v2880, %v2882
        %v2884 = vrot.slane %v2836, 2
        %v2885 = vsel %vm1454, %v2882, %v2884
        %v2886 = vrot.slane %v2837, 2
        %v2887 = vsel %vm1454, %v2884, %v2886
        %v2904 = vadd.f32 %v2805, %v2857
        %v2905 = vadd.f32 %v2806, %v2859
        %v2906 = vadd.f32 %v2807, %v2861
        %v2907 = vadd.f32 %v2808, %v2863
        %v2908 = vadd.f32 %v2809, %v2865
        %v2909 = vadd.f32 %v2810, %v2867
        %v2910 = vadd.f32 %v2811, %v2869
        %v2911 = vadd.f32 %v2812, %v2871
        %v2912 = vadd.f32 %v2813, %v2873
        %v2913 = vadd.f32 %v2814, %v2875
        %v2914 = vadd.f32 %v2815, %v2877
        %v2915 = vadd.f32 %v2816, %v2879
        %v2916 = vadd.f32 %v2817, %v2881
        %v2917 = vadd.f32 %v2818, %v2883
        %v2918 = vadd.f32 %v2819, %v2885
        %v2919 = vadd.f32 %v2820, %v2887
        %v2920 = vmax.f32 %v2904, 0.0
        %v2921 = vmax.f32 %v2905, 0.0
        %v2922 = vmax.f32 %v2906, 0.0
        %v2923 = vmax.f32 %v2907, 0.0
        %v2924 = vmax.f32 %v2908, 0.0
        %v2925 = vmax.f32 %v2909, 0.0
        %v2926 = vmax.f32 %v2910, 0.0
        %v2927 = vmax.f32 %v2911, 0.0
        %v2928 = vmax.f32 %v2912, 0.0
        %v2929 = vmax.f32 %v2913, 0.0
        %v2930 = vmax.f32 %v2914, 0.0
        %v2931 = vmax.f32 %v2915, 0.0
        %v2932 = vmax.f32 %v2916, 0.0
        %v2933 = vmax.f32 %v2917, 0.0
        %v2934 = vmax.f32 %v2918, 0.0
        %v2935 = vmax.f32 %v2919, 0.0
        %v2936 = vpack.c.bf16 %v2921, %v2920
        %v2937 = vpack.c.bf16 %v2923, %v2922
        %v2938 = vpack.c.bf16 %v2925, %v2924
        %v2939 = vpack.c.bf16 %v2927, %v2926
        %v2940 = vpack.c.bf16 %v2929, %v2928
        %v2941 = vpack.c.bf16 %v2931, %v2930
        %v2942 = vpack.c.bf16 %v2933, %v2932
        %v2943 = vpack.c.bf16 %v2935, %v2934
        %v2952 = vunpack.c.l.b16 %v2936
        %v2953 = vunpack.c.h.b16 %v2936
        %v2954 = vunpack.c.l.b16 %v2937
        %v2955 = vunpack.c.h.b16 %v2937
        %v2956 = vunpack.c.l.b16 %v2938
        %v2957 = vunpack.c.h.b16 %v2938
        %v2958 = vunpack.c.l.b16 %v2939
        %v2959 = vunpack.c.h.b16 %v2939
        %v2960 = vunpack.c.l.b16 %v2940
        %v2961 = vunpack.c.h.b16 %v2940
        %v2962 = vunpack.c.l.b16 %v2941
        %v2963 = vunpack.c.h.b16 %v2941
        %v2964 = vunpack.c.l.b16 %v2942
        %v2965 = vunpack.c.h.b16 %v2942
        %v2966 = vunpack.c.l.b16 %v2943
        %v2967 = vunpack.c.h.b16 %v2943
        %v2968 = vpack.c.b16 %v2952, %v2952
        %v2969 = vpack.c.b16 %v2953, %v2953
        %v2970 = vpack.c.b16 %v2954, %v2954
        %v2971 = vpack.c.b16 %v2955, %v2955
        %v2972 = vpack.c.b16 %v2956, %v2956
        %v2973 = vpack.c.b16 %v2957, %v2957
        %v2974 = vpack.c.b16 %v2958, %v2958
        %v2975 = vpack.c.b16 %v2959, %v2959
        %v2976 = vpack.c.b16 %v2960, %v2960
        %v2977 = vpack.c.b16 %v2961, %v2961
        %v2978 = vpack.c.b16 %v2962, %v2962
        %v2979 = vpack.c.b16 %v2963, %v2963
        %v2980 = vpack.c.b16 %v2964, %v2964
        %v2981 = vpack.c.b16 %v2965, %v2965
        %v2982 = vpack.c.b16 %v2966, %v2966
        %v2983 = vpack.c.b16 %v2967, %v2967
        %3000 = vst.msk [vmem:[#allocation2 + $0x40] sm:$0xf] %vm2143, %v2968
        %3001 = vst.msk [vmem:[#allocation2 + $0x44] sm:$0xf] %vm2143, %v2969
        %3002 = vst.msk [vmem:[#allocation2 + $0x48] sm:$0xf] %vm2143, %v2970
        %3003 = vst.msk [vmem:[#allocation2 + $0x4c] sm:$0xf] %vm2143, %v2971
        %3004 = vst.msk [vmem:[#allocation2 + $0x50] sm:$0xf] %vm2143, %v2972
        %3005 = vst.msk [vmem:[#allocation2 + $0x54] sm:$0xf] %vm2143, %v2973
        %3006 = vst.msk [vmem:[#allocation2 + $0x58] sm:$0xf] %vm2143, %v2974
        %3007 = vst.msk [vmem:[#allocation2 + $0x5c] sm:$0xf] %vm2143, %v2975
        %3008 = vst.msk [vmem:[#allocation2 + $0x60] sm:$0xf] %vm2143, %v2976
        %3009 = vst.msk [vmem:[#allocation2 + $0x64] sm:$0xf] %vm2143, %v2977
        %3010 = vst.msk [vmem:[#allocation2 + $0x68] sm:$0xf] %vm2143, %v2978
        %3011 = vst.msk [vmem:[#allocation2 + $0x6c] sm:$0xf] %vm2143, %v2979
        %3012 = vst.msk [vmem:[#allocation2 + $0x70] sm:$0xf] %vm2143, %v2980
        %3013 = vst.msk [vmem:[#allocation2 + $0x74] sm:$0xf] %vm2143, %v2981
        %3014 = vst.msk [vmem:[#allocation2 + $0x78] sm:$0xf] %vm2143, %v2982
        %3015 = vst.msk [vmem:[#allocation2 + $0x7c] sm:$0xf] %vm2143, %v2983
        %v3016 = vld [vmem:[#allocation2] sm:$0xf]
        %v3017 = vld [vmem:[#allocation2 + $0x4] sm:$0xf]
        %v3018 = vld [vmem:[#allocation2 + $0x8] sm:$0xf]
        %v3019 = vld [vmem:[#allocation2 + $0xc] sm:$0xf]
        %v3020 = vld [vmem:[#allocation2 + $0x10] sm:$0xf]
        %v3021 = vld [vmem:[#allocation2 + $0x14] sm:$0xf]
        %v3022 = vld [vmem:[#allocation2 + $0x18] sm:$0xf]
        %v3023 = vld [vmem:[#allocation2 + $0x1c] sm:$0xf]
        %v3024 = vld [vmem:[%s3] sm:$0xff]
        %v3025 = vld [vmem:[%s3 + $0x8] sm:$0xf]
        %v3026 = vld [vmem:[%s3 + $0xc] sm:$0xff]
        %v3027 = vld [vmem:[%s3 + $0x14] sm:$0xf]
        %v3028 = vld [vmem:[%s3 + $0x18] sm:$0xff]
        %v3029 = vld [vmem:[%s3 + $0x20] sm:$0xf]
        %v3030 = vld [vmem:[%s3 + $0x24] sm:$0xff]
        %v3031 = vld [vmem:[%s3 + $0x2c] sm:$0xf]
        %v3040 = vunpack.c.l.b16 %v3016
        %v3041 = vunpack.c.l.b16 %v3017
        %v3042 = vunpack.c.l.b16 %v3018
        %v3043 = vunpack.c.l.b16 %v3019
        %v3044 = vunpack.c.l.b16 %v3020
        %v3045 = vunpack.c.l.b16 %v3021
        %v3046 = vunpack.c.l.b16 %v3022
        %v3047 = vunpack.c.l.b16 %v3023
        %v3048 = vpack.c.b16 %v3041, %v3040
        %v3049 = vpack.c.b16 %v3043, %v3042
        %v3050 = vpack.c.b16 %v3045, %v3044
        %v3051 = vpack.c.b16 %v3047, %v3046
        %v3060 = vunpack.c.l.b16 %v3024
        %v3061 = vunpack.c.h.b16 %v3024
        %v3062 = vunpack.c.l.b16 %v3025
        %v3063 = vunpack.c.l.b16 %v3026
        %v3064 = vunpack.c.h.b16 %v3026
        %v3065 = vunpack.c.l.b16 %v3027
        %v3066 = vunpack.c.l.b16 %v3028
        %v3067 = vunpack.c.h.b16 %v3028
        %v3068 = vunpack.c.l.b16 %v3029
        %v3069 = vunpack.c.l.b16 %v3030
        %v3070 = vunpack.c.h.b16 %v3030
        %v3071 = vunpack.c.l.b16 %v3031
        %v3072 = vpack.c.b16 %v3063, %v3060
        %v3073 = vpack.c.b16 %v3064, %v3061
        %v3074 = vpack.c.b16 %v3065, %v3062
        %v3075 = vpack.c.b16 %v3069, %v3066
        %v3076 = vpack.c.b16 %v3070, %v3067
        %v3077 = vpack.c.b16 %v3071, %v3068
        %v3085 = vsel %vm632, %v3048, 0
        %v3088 = vsel %vm632, %v3049, 0
        %v3091 = vsel %vm632, %v3050, 0
        %v3094 = vsel %vm632, %v3051, 0
        %3096 = vmatprep.subr.bf16.mxu0 0
        %3097 = vmatpush1.bf16.msra.mxu0 0
        %3098 = vmatprep.subr.bf16.mxu0 0
        %3099 = vmatpush1.bf16.msra.mxu0 0
        %3100 = vmatprep.subr.bf16.mxu0 0
        %3101 = vmatpush1.bf16.msra.mxu0 0
        %3102 = vmatprep.subr.bf16.mxu0 0
        %3103 = vmatpush1.bf16.msra.mxu0 0
        %3104 = vmatprep.subr.bf16.mxu0 0
        %3105 = vmatpush1.bf16.msra.mxu0 0
        %3106 = vmatprep.subr.bf16.mxu0 0
        %3107 = vmatpush1.bf16.msra.mxu0 0
        %3108 = vmatprep.subr.bf16.mxu0 %v3076
        %3109 = vmatpush1.bf16.msra.mxu0 %v3075
        %3110 = vmatprep.subr.bf16.mxu0 %v3073
        %3111 = vmatpush1.bf16.msra.mxu0 %v3072
        %3112 = vmatprep.subr.bf16.mxu0 0
        %3113 = vmatpush2.bf16.msra.mxu0 0
        %3114 = vmatprep.subr.bf16.mxu0 0
        %3115 = vmatpush2.bf16.msra.mxu0 0
        %3116 = vmatprep.subr.bf16.mxu0 0
        %3117 = vmatpush2.bf16.msra.mxu0 0
        %3118 = vmatprep.subr.bf16.mxu0 0
        %3119 = vmatpush2.bf16.msra.mxu0 0
        %3120 = vmatprep.subr.bf16.mxu0 0
        %3121 = vmatpush2.bf16.msra.mxu0 0
        %3122 = vmatprep.subr.bf16.mxu0 0
        %3123 = vmatpush2.bf16.msra.mxu0 0
        %3124 = vmatprep.subr.bf16.mxu0 0
        %3125 = vmatpush2.bf16.msra.mxu0 0
        %3126 = vmatprep.subr.bf16.mxu0 0
        %3127 = vmatpush2.bf16.msra.mxu0 0
        %3128 = vmatprep.mubr.bf16.mxu0 0
        %3129 = vmatmul.mubr.bf16.gmra.mxu0 %v3085
        %v3130 = vpop.f32.mrf.mxu0
        %v3131 = vadd.f32 0.0, %v3130
        %v3132 = vpop.f32.mrf.mxu0
        %v3133 = vadd.f32 0.0, %v3132
        %v3134 = vpop.f32.mrf.mxu0
        %v3135 = vadd.f32 0.0, %v3134
        %v3136 = vpop.f32.mrf.mxu0
        %v3137 = vadd.f32 0.0, %v3136
        %3138 = vmatprep.mubr.bf16.mxu0 0
        %3139 = vmatmul.mubr.bf16.gmra.mxu0 %v3088
        %v3140 = vpop.f32.mrf.mxu0
        %v3141 = vadd.f32 0.0, %v3140
        %v3142 = vpop.f32.mrf.mxu0
        %v3143 = vadd.f32 0.0, %v3142
        %v3144 = vpop.f32.mrf.mxu0
        %v3145 = vadd.f32 0.0, %v3144
        %v3146 = vpop.f32.mrf.mxu0
        %v3147 = vadd.f32 0.0, %v3146
        %3148 = vmatprep.mubr.bf16.mxu0 0
        %3149 = vmatmul.mubr.bf16.gmra.mxu0 %v3091
        %v3150 = vpop.f32.mrf.mxu0
        %v3151 = vadd.f32 0.0, %v3150
        %v3152 = vpop.f32.mrf.mxu0
        %v3153 = vadd.f32 0.0, %v3152
        %v3154 = vpop.f32.mrf.mxu0
        %v3155 = vadd.f32 0.0, %v3154
        %v3156 = vpop.f32.mrf.mxu0
        %v3157 = vadd.f32 0.0, %v3156
        %3158 = vmatprep.mubr.bf16.mxu0 0
        %3159 = vmatmul.mubr.bf16.gmra.mxu0 %v3094
        %v3160 = vpop.f32.mrf.mxu0
        %v3161 = vadd.f32 0.0, %v3160
        %v3162 = vpop.f32.mrf.mxu0
        %v3163 = vadd.f32 0.0, %v3162
        %v3164 = vpop.f32.mrf.mxu0
        %v3165 = vadd.f32 0.0, %v3164
        %v3166 = vpop.f32.mrf.mxu0
        %v3167 = vadd.f32 0.0, %v3166
        %3168 = vdwg.mxu0
        %3169 = vmatprep.subr.bf16.mxu0 0
        %3170 = vmatpush1.bf16.msra.mxu0 0
        %3171 = vmatprep.subr.bf16.mxu0 0
        %3172 = vmatpush1.bf16.msra.mxu0 0
        %3173 = vmatprep.subr.bf16.mxu0 0
        %3174 = vmatpush1.bf16.msra.mxu0 0
        %3175 = vmatprep.subr.bf16.mxu0 0
        %3176 = vmatpush1.bf16.msra.mxu0 0
        %3177 = vmatprep.subr.bf16.mxu0 0
        %3178 = vmatpush1.bf16.msra.mxu0 0
        %3179 = vmatprep.subr.bf16.mxu0 0
        %3180 = vmatpush1.bf16.msra.mxu0 0
        %3181 = vmatprep.subr.bf16.mxu0 0
        %3182 = vmatpush1.bf16.msra.mxu0 %v3077
        %3183 = vmatprep.subr.bf16.mxu0 0
        %3184 = vmatpush1.bf16.msra.mxu0 %v3074
        %3185 = vmatprep.subr.bf16.mxu0 0
        %3186 = vmatpush2.bf16.msra.mxu0 0
        %3187 = vmatprep.subr.bf16.mxu0 0
        %3188 = vmatpush2.bf16.msra.mxu0 0
        %3189 = vmatprep.subr.bf16.mxu0 0
        %3190 = vmatpush2.bf16.msra.mxu0 0
        %3191 = vmatprep.subr.bf16.mxu0 0
        %3192 = vmatpush2.bf16.msra.mxu0 0
        %3193 = vmatprep.subr.bf16.mxu0 0
        %3194 = vmatpush2.bf16.msra.mxu0 0
        %3195 = vmatprep.subr.bf16.mxu0 0
        %3196 = vmatpush2.bf16.msra.mxu0 0
        %3197 = vmatprep.subr.bf16.mxu0 0
        %3198 = vmatpush2.bf16.msra.mxu0 0
        %3199 = vmatprep.subr.bf16.mxu0 0
        %3200 = vmatpush2.bf16.msra.mxu0 0
        %3201 = vmatprep.mubr.bf16.mxu0 0
        %3202 = vmatmul.mubr.bf16.gmra.mxu0 %v3085
        %v3203 = vpop.f32.mrf.mxu0
        %v3204 = vadd.f32 0.0, %v3203
        %v3205 = vpop.f32.mrf.mxu0
        %v3206 = vpop.f32.mrf.mxu0
        %v3207 = vadd.f32 0.0, %v3206
        %v3208 = vpop.f32.mrf.mxu0
        %3209 = vmatprep.mubr.bf16.mxu0 0
        %3210 = vmatmul.mubr.bf16.gmra.mxu0 %v3088
        %v3211 = vpop.f32.mrf.mxu0
        %v3212 = vadd.f32 0.0, %v3211
        %v3213 = vpop.f32.mrf.mxu0
        %v3214 = vpop.f32.mrf.mxu0
        %v3215 = vadd.f32 0.0, %v3214
        %v3216 = vpop.f32.mrf.mxu0
        %3217 = vmatprep.mubr.bf16.mxu0 0
        %3218 = vmatmul.mubr.bf16.gmra.mxu0 %v3091
        %v3219 = vpop.f32.mrf.mxu0
        %v3220 = vadd.f32 0.0, %v3219
        %v3221 = vpop.f32.mrf.mxu0
        %v3222 = vpop.f32.mrf.mxu0
        %v3223 = vadd.f32 0.0, %v3222
        %v3224 = vpop.f32.mrf.mxu0
        %3225 = vmatprep.mubr.bf16.mxu0 0
        %3226 = vmatmul.mubr.bf16.gmra.mxu0 %v3094
        %v3227 = vpop.f32.mrf.mxu0
        %v3228 = vadd.f32 0.0, %v3227
        %v3229 = vpop.f32.mrf.mxu0
        %v3230 = vpop.f32.mrf.mxu0
        %v3231 = vadd.f32 0.0, %v3230
        %v3232 = vpop.f32.mrf.mxu0
        %3233 = vdwg.mxu0
        %3234 = vst [vmem:[#allocation7] sm:$0xff] %v3131
        %3235 = vst [vmem:[#allocation7 + $0x8] sm:$0xff] %v3133
        %3236 = vst.msk [vmem:[#allocation7 + $0x10] sm:$0xff] %vm632, %v3204
        %3237 = vst [vmem:[#allocation7 + $0x18] sm:$0xff] %v3135
        %3238 = vst [vmem:[#allocation7 + $0x20] sm:$0xff] %v3137
        %3239 = vst.msk [vmem:[#allocation7 + $0x28] sm:$0xff] %vm632, %v3207
        %3240 = vst [vmem:[#allocation7 + $0x30] sm:$0xff] %v3141
        %3241 = vst [vmem:[#allocation7 + $0x38] sm:$0xff] %v3143
        %3242 = vst.msk [vmem:[#allocation7 + $0x40] sm:$0xff] %vm632, %v3212
        %3243 = vst [vmem:[#allocation7 + $0x48] sm:$0xff] %v3145
        %3244 = vst [vmem:[#allocation7 + $0x50] sm:$0xff] %v3147
        %3245 = vst.msk [vmem:[#allocation7 + $0x58] sm:$0xff] %vm632, %v3215
        %3246 = vst [vmem:[#allocation7 + $0x60] sm:$0xff] %v3151
        %3247 = vst [vmem:[#allocation7 + $0x68] sm:$0xff] %v3153
        %3248 = vst.msk [vmem:[#allocation7 + $0x70] sm:$0xff] %vm632, %v3220
        %3249 = vst [vmem:[#allocation7 + $0x78] sm:$0xff] %v3155
        %3250 = vst [vmem:[#allocation7 + $0x80] sm:$0xff] %v3157
        %3251 = vst.msk [vmem:[#allocation7 + $0x88] sm:$0xff] %vm632, %v3223
        %3252 = vst [vmem:[#allocation7 + $0x90] sm:$0xff] %v3161
        %3253 = vst [vmem:[#allocation7 + $0x98] sm:$0xff] %v3163
        %3254 = vst.msk [vmem:[#allocation7 + $0xa0] sm:$0xff] %vm632, %v3228
        %3255 = vst [vmem:[#allocation7 + $0xa8] sm:$0xff] %v3165
        %3256 = vst [vmem:[#allocation7 + $0xb0] sm:$0xff] %v3167
        %3257 = vst.msk [vmem:[#allocation7 + $0xb8] sm:$0xff] %vm632, %v3231
        %v3258 = vld [vmem:[#allocation2 + $0x20] sm:$0xf]
        %v3259 = vld [vmem:[#allocation2 + $0x24] sm:$0xf]
        %v3260 = vld [vmem:[#allocation2 + $0x28] sm:$0xf]
        %v3261 = vld [vmem:[#allocation2 + $0x2c] sm:$0xf]
        %v3262 = vld [vmem:[#allocation2 + $0x30] sm:$0xf]
        %v3263 = vld [vmem:[#allocation2 + $0x34] sm:$0xf]
        %v3264 = vld [vmem:[#allocation2 + $0x38] sm:$0xf]
        %v3265 = vld [vmem:[#allocation2 + $0x3c] sm:$0xf]
        %v3266 = vld [vmem:[%s3] sm:$0xff]
        %v3267 = vld [vmem:[%s3 + $0x8] sm:$0xf]
        %v3268 = vld [vmem:[%s3 + $0xc] sm:$0xff]
        %v3269 = vld [vmem:[%s3 + $0x14] sm:$0xf]
        %v3270 = vld [vmem:[%s3 + $0x18] sm:$0xff]
        %v3271 = vld [vmem:[%s3 + $0x20] sm:$0xf]
        %v3272 = vld [vmem:[%s3 + $0x24] sm:$0xff]
        %v3273 = vld [vmem:[%s3 + $0x2c] sm:$0xf]
        %v3282 = vunpack.c.l.b16 %v3258
        %v3283 = vunpack.c.l.b16 %v3259
        %v3284 = vunpack.c.l.b16 %v3260
        %v3285 = vunpack.c.l.b16 %v3261
        %v3286 = vunpack.c.l.b16 %v3262
        %v3287 = vunpack.c.l.b16 %v3263
        %v3288 = vunpack.c.l.b16 %v3264
        %v3289 = vunpack.c.l.b16 %v3265
        %v3290 = vpack.c.b16 %v3283, %v3282
        %v3291 = vpack.c.b16 %v3285, %v3284
        %v3292 = vpack.c.b16 %v3287, %v3286
        %v3293 = vpack.c.b16 %v3289, %v3288
        %v3302 = vunpack.c.l.b16 %v3266
        %v3303 = vunpack.c.h.b16 %v3266
        %v3304 = vunpack.c.l.b16 %v3267
        %v3305 = vunpack.c.l.b16 %v3268
        %v3306 = vunpack.c.h.b16 %v3268
        %v3307 = vunpack.c.l.b16 %v3269
        %v3308 = vunpack.c.l.b16 %v3270
        %v3309 = vunpack.c.h.b16 %v3270
        %v3310 = vunpack.c.l.b16 %v3271
        %v3311 = vunpack.c.l.b16 %v3272
        %v3312 = vunpack.c.h.b16 %v3272
        %v3313 = vunpack.c.l.b16 %v3273
        %v3314 = vpack.c.b16 %v3305, %v3302
        %v3315 = vpack.c.b16 %v3306, %v3303
        %v3316 = vpack.c.b16 %v3307, %v3304
        %v3317 = vpack.c.b16 %v3311, %v3308
        %v3318 = vpack.c.b16 %v3312, %v3309
        %v3319 = vpack.c.b16 %v3313, %v3310
        %v3327 = vsel %vm632, %v3290, 0
        %v3330 = vsel %vm632, %v3291, 0
        %v3333 = vsel %vm632, %v3292, 0
        %v3336 = vsel %vm632, %v3293, 0
        %3338 = vmatprep.subr.bf16.mxu0 0
        %3339 = vmatpush1.bf16.msra.mxu0 0
        %3340 = vmatprep.subr.bf16.mxu0 0
        %3341 = vmatpush1.bf16.msra.mxu0 0
        %3342 = vmatprep.subr.bf16.mxu0 0
        %3343 = vmatpush1.bf16.msra.mxu0 0
        %3344 = vmatprep.subr.bf16.mxu0 0
        %3345 = vmatpush1.bf16.msra.mxu0 0
        %3346 = vmatprep.subr.bf16.mxu0 0
        %3347 = vmatpush1.bf16.msra.mxu0 0
        %3348 = vmatprep.subr.bf16.mxu0 0
        %3349 = vmatpush1.bf16.msra.mxu0 0
        %3350 = vmatprep.subr.bf16.mxu0 %v3318
        %3351 = vmatpush1.bf16.msra.mxu0 %v3317
        %3352 = vmatprep.subr.bf16.mxu0 %v3315
        %3353 = vmatpush1.bf16.msra.mxu0 %v3314
        %3354 = vmatprep.subr.bf16.mxu0 0
        %3355 = vmatpush2.bf16.msra.mxu0 0
        %3356 = vmatprep.subr.bf16.mxu0 0
        %3357 = vmatpush2.bf16.msra.mxu0 0
        %3358 = vmatprep.subr.bf16.mxu0 0
        %3359 = vmatpush2.bf16.msra.mxu0 0
        %3360 = vmatprep.subr.bf16.mxu0 0
        %3361 = vmatpush2.bf16.msra.mxu0 0
        %3362 = vmatprep.subr.bf16.mxu0 0
        %3363 = vmatpush2.bf16.msra.mxu0 0
        %3364 = vmatprep.subr.bf16.mxu0 0
        %3365 = vmatpush2.bf16.msra.mxu0 0
        %3366 = vmatprep.subr.bf16.mxu0 0
        %3367 = vmatpush2.bf16.msra.mxu0 0
        %3368 = vmatprep.subr.bf16.mxu0 0
        %3369 = vmatpush2.bf16.msra.mxu0 0
        %3370 = vmatprep.mubr.bf16.mxu0 0
        %3371 = vmatmul.mubr.bf16.gmra.mxu0 %v3327
        %v3372 = vpop.f32.mrf.mxu0
        %v3373 = vadd.f32 0.0, %v3372
        %v3374 = vpop.f32.mrf.mxu0
        %v3375 = vadd.f32 0.0, %v3374
        %v3376 = vpop.f32.mrf.mxu0
        %v3377 = vadd.f32 0.0, %v3376
        %v3378 = vpop.f32.mrf.mxu0
        %v3379 = vadd.f32 0.0, %v3378
        %3380 = vmatprep.mubr.bf16.mxu0 0
        %3381 = vmatmul.mubr.bf16.gmra.mxu0 %v3330
        %v3382 = vpop.f32.mrf.mxu0
        %v3383 = vadd.f32 0.0, %v3382
        %v3384 = vpop.f32.mrf.mxu0
        %v3385 = vadd.f32 0.0, %v3384
        %v3386 = vpop.f32.mrf.mxu0
        %v3387 = vadd.f32 0.0, %v3386
        %v3388 = vpop.f32.mrf.mxu0
        %v3389 = vadd.f32 0.0, %v3388
        %3390 = vmatprep.mubr.bf16.mxu0 0
        %3391 = vmatmul.mubr.bf16.gmra.mxu0 %v3333
        %v3392 = vpop.f32.mrf.mxu0
        %v3393 = vadd.f32 0.0, %v3392
        %v3394 = vpop.f32.mrf.mxu0
        %v3395 = vadd.f32 0.0, %v3394
        %v3396 = vpop.f32.mrf.mxu0
        %v3397 = vadd.f32 0.0, %v3396
        %v3398 = vpop.f32.mrf.mxu0
        %v3399 = vadd.f32 0.0, %v3398
        %3400 = vmatprep.mubr.bf16.mxu0 0
        %3401 = vmatmul.mubr.bf16.gmra.mxu0 %v3336
        %v3402 = vpop.f32.mrf.mxu0
        %v3403 = vadd.f32 0.0, %v3402
        %v3404 = vpop.f32.mrf.mxu0
        %v3405 = vadd.f32 0.0, %v3404
        %v3406 = vpop.f32.mrf.mxu0
        %v3407 = vadd.f32 0.0, %v3406
        %v3408 = vpop.f32.mrf.mxu0
        %v3409 = vadd.f32 0.0, %v3408
        %3410 = vdwg.mxu0
        %3411 = vmatprep.subr.bf16.mxu0 0
        %3412 = vmatpush1.bf16.msra.mxu0 0
        %3413 = vmatprep.subr.bf16.mxu0 0
        %3414 = vmatpush1.bf16.msra.mxu0 0
        %3415 = vmatprep.subr.bf16.mxu0 0
        %3416 = vmatpush1.bf16.msra.mxu0 0
        %3417 = vmatprep.subr.bf16.mxu0 0
        %3418 = vmatpush1.bf16.msra.mxu0 0
        %3419 = vmatprep.subr.bf16.mxu0 0
        %3420 = vmatpush1.bf16.msra.mxu0 0
        %3421 = vmatprep.subr.bf16.mxu0 0
        %3422 = vmatpush1.bf16.msra.mxu0 0
        %3423 = vmatprep.subr.bf16.mxu0 0
        %3424 = vmatpush1.bf16.msra.mxu0 %v3319
        %3425 = vmatprep.subr.bf16.mxu0 0
        %3426 = vmatpush1.bf16.msra.mxu0 %v3316
        %3427 = vmatprep.subr.bf16.mxu0 0
        %3428 = vmatpush2.bf16.msra.mxu0 0
        %3429 = vmatprep.subr.bf16.mxu0 0
        %3430 = vmatpush2.bf16.msra.mxu0 0
        %3431 = vmatprep.subr.bf16.mxu0 0
        %3432 = vmatpush2.bf16.msra.mxu0 0
        %3433 = vmatprep.subr.bf16.mxu0 0
        %3434 = vmatpush2.bf16.msra.mxu0 0
        %3435 = vmatprep.subr.bf16.mxu0 0
        %3436 = vmatpush2.bf16.msra.mxu0 0
        %3437 = vmatprep.subr.bf16.mxu0 0
        %3438 = vmatpush2.bf16.msra.mxu0 0
        %3439 = vmatprep.subr.bf16.mxu0 0
        %3440 = vmatpush2.bf16.msra.mxu0 0
        %3441 = vmatprep.subr.bf16.mxu0 0
        %3442 = vmatpush2.bf16.msra.mxu0 0
        %3443 = vmatprep.mubr.bf16.mxu0 0
        %3444 = vmatmul.mubr.bf16.gmra.mxu0 %v3327
        %v3445 = vpop.f32.mrf.mxu0
        %v3446 = vadd.f32 0.0, %v3445
        %v3447 = vpop.f32.mrf.mxu0
        %v3448 = vpop.f32.mrf.mxu0
        %v3449 = vadd.f32 0.0, %v3448
        %v3450 = vpop.f32.mrf.mxu0
        %3451 = vmatprep.mubr.bf16.mxu0 0
        %3452 = vmatmul.mubr.bf16.gmra.mxu0 %v3330
        %v3453 = vpop.f32.mrf.mxu0
        %v3454 = vadd.f32 0.0, %v3453
        %v3455 = vpop.f32.mrf.mxu0
        %v3456 = vpop.f32.mrf.mxu0
        %v3457 = vadd.f32 0.0, %v3456
        %v3458 = vpop.f32.mrf.mxu0
        %3459 = vmatprep.mubr.bf16.mxu0 0
        %3460 = vmatmul.mubr.bf16.gmra.mxu0 %v3333
        %v3461 = vpop.f32.mrf.mxu0
        %v3462 = vadd.f32 0.0, %v3461
        %v3463 = vpop.f32.mrf.mxu0
        %v3464 = vpop.f32.mrf.mxu0
        %v3465 = vadd.f32 0.0, %v3464
        %v3466 = vpop.f32.mrf.mxu0
        %3467 = vmatprep.mubr.bf16.mxu0 0
        %3468 = vmatmul.mubr.bf16.gmra.mxu0 %v3336
        %v3469 = vpop.f32.mrf.mxu0
        %v3470 = vadd.f32 0.0, %v3469
        %v3471 = vpop.f32.mrf.mxu0
        %v3472 = vpop.f32.mrf.mxu0
        %v3473 = vadd.f32 0.0, %v3472
        %v3474 = vpop.f32.mrf.mxu0
        %3475 = vdwg.mxu0
        %3476 = vst [vmem:[#allocation7 + $0xc0] sm:$0xff] %v3373
        %3477 = vst [vmem:[#allocation7 + $0xc8] sm:$0xff] %v3375
        %3478 = vst.msk [vmem:[#allocation7 + $0xd0] sm:$0xff] %vm632, %v3446
        %3479 = vst [vmem:[#allocation7 + $0xd8] sm:$0xff] %v3377
        %3480 = vst [vmem:[#allocation7 + $0xe0] sm:$0xff] %v3379
        %3481 = vst.msk [vmem:[#allocation7 + $0xe8] sm:$0xff] %vm632, %v3449
        %3482 = vst [vmem:[#allocation7 + $0xf0] sm:$0xff] %v3383
        %3483 = vst [vmem:[#allocation7 + $0xf8] sm:$0xff] %v3385
        %3484 = vst.msk [vmem:[#allocation7 + $0x100] sm:$0xff] %vm632, %v3454
        %3485 = vst [vmem:[#allocation7 + $0x108] sm:$0xff] %v3387
        %3486 = vst [vmem:[#allocation7 + $0x110] sm:$0xff] %v3389
        %3487 = vst.msk [vmem:[#allocation7 + $0x118] sm:$0xff] %vm632, %v3457
        %3488 = vst [vmem:[#allocation7 + $0x120] sm:$0xff] %v3393
        %3489 = vst [vmem:[#allocation7 + $0x128] sm:$0xff] %v3395
        %3490 = vst.msk [vmem:[#allocation7 + $0x130] sm:$0xff] %vm632, %v3462
        %3491 = vst [vmem:[#allocation7 + $0x138] sm:$0xff] %v3397
        %3492 = vst [vmem:[#allocation7 + $0x140] sm:$0xff] %v3399
        %3493 = vst.msk [vmem:[#allocation7 + $0x148] sm:$0xff] %vm632, %v3465
        %3494 = vst [vmem:[#allocation7 + $0x150] sm:$0xff] %v3403
        %3495 = vst [vmem:[#allocation7 + $0x158] sm:$0xff] %v3405
        %3496 = vst.msk [vmem:[#allocation7 + $0x160] sm:$0xff] %vm632, %v3470
        %3497 = vst [vmem:[#allocation7 + $0x168] sm:$0xff] %v3407
        %3498 = vst [vmem:[#allocation7 + $0x170] sm:$0xff] %v3409
        %3499 = vst.msk [vmem:[#allocation7 + $0x178] sm:$0xff] %vm632, %v3473
        %v3500 = vld [vmem:[#allocation2 + $0x40] sm:$0xf]
        %v3501 = vld [vmem:[#allocation2 + $0x44] sm:$0xf]
        %v3502 = vld [vmem:[#allocation2 + $0x48] sm:$0xf]
        %v3503 = vld [vmem:[#allocation2 + $0x4c] sm:$0xf]
        %v3504 = vld [vmem:[#allocation2 + $0x50] sm:$0xf]
        %v3505 = vld [vmem:[#allocation2 + $0x54] sm:$0xf]
        %v3506 = vld [vmem:[#allocation2 + $0x58] sm:$0xf]
        %v3507 = vld [vmem:[#allocation2 + $0x5c] sm:$0xf]
        %v3508 = vld [vmem:[%s3] sm:$0xff]
        %v3509 = vld [vmem:[%s3 + $0x8] sm:$0xf]
        %v3510 = vld [vmem:[%s3 + $0xc] sm:$0xff]
        %v3511 = vld [vmem:[%s3 + $0x14] sm:$0xf]
        %v3512 = vld [vmem:[%s3 + $0x18] sm:$0xff]
        %v3513 = vld [vmem:[%s3 + $0x20] sm:$0xf]
        %v3514 = vld [vmem:[%s3 + $0x24] sm:$0xff]
        %v3515 = vld [vmem:[%s3 + $0x2c] sm:$0xf]
        %v3524 = vunpack.c.l.b16 %v3500
        %v3525 = vunpack.c.l.b16 %v3501
        %v3526 = vunpack.c.l.b16 %v3502
        %v3527 = vunpack.c.l.b16 %v3503
        %v3528 = vunpack.c.l.b16 %v3504
        %v3529 = vunpack.c.l.b16 %v3505
        %v3530 = vunpack.c.l.b16 %v3506
        %v3531 = vunpack.c.l.b16 %v3507
        %v3532 = vpack.c.b16 %v3525, %v3524
        %v3533 = vpack.c.b16 %v3527, %v3526
        %v3534 = vpack.c.b16 %v3529, %v3528
        %v3535 = vpack.c.b16 %v3531, %v3530
        %v3544 = vunpack.c.l.b16 %v3508
        %v3545 = vunpack.c.h.b16 %v3508
        %v3546 = vunpack.c.l.b16 %v3509
        %v3547 = vunpack.c.l.b16 %v3510
        %v3548 = vunpack.c.h.b16 %v3510
        %v3549 = vunpack.c.l.b16 %v3511
        %v3550 = vunpack.c.l.b16 %v3512
        %v3551 = vunpack.c.h.b16 %v3512
        %v3552 = vunpack.c.l.b16 %v3513
        %v3553 = vunpack.c.l.b16 %v3514
        %v3554 = vunpack.c.h.b16 %v3514
        %v3555 = vunpack.c.l.b16 %v3515
        %v3556 = vpack.c.b16 %v3547, %v3544
        %v3557 = vpack.c.b16 %v3548, %v3545
        %v3558 = vpack.c.b16 %v3549, %v3546
        %v3559 = vpack.c.b16 %v3553, %v3550
        %v3560 = vpack.c.b16 %v3554, %v3551
        %v3561 = vpack.c.b16 %v3555, %v3552
        %v3569 = vsel %vm632, %v3532, 0
        %v3572 = vsel %vm632, %v3533, 0
        %v3575 = vsel %vm632, %v3534, 0
        %v3578 = vsel %vm632, %v3535, 0
        %3580 = vmatprep.subr.bf16.mxu0 0
        %3581 = vmatpush1.bf16.msra.mxu0 0
        %3582 = vmatprep.subr.bf16.mxu0 0
        %3583 = vmatpush1.bf16.msra.mxu0 0
        %3584 = vmatprep.subr.bf16.mxu0 0
        %3585 = vmatpush1.bf16.msra.mxu0 0
        %3586 = vmatprep.subr.bf16.mxu0 0
        %3587 = vmatpush1.bf16.msra.mxu0 0
        %3588 = vmatprep.subr.bf16.mxu0 0
        %3589 = vmatpush1.bf16.msra.mxu0 0
        %3590 = vmatprep.subr.bf16.mxu0 0
        %3591 = vmatpush1.bf16.msra.mxu0 0
        %3592 = vmatprep.subr.bf16.mxu0 %v3560
        %3593 = vmatpush1.bf16.msra.mxu0 %v3559
        %3594 = vmatprep.subr.bf16.mxu0 %v3557
        %3595 = vmatpush1.bf16.msra.mxu0 %v3556
        %3596 = vmatprep.subr.bf16.mxu0 0
        %3597 = vmatpush2.bf16.msra.mxu0 0
        %3598 = vmatprep.subr.bf16.mxu0 0
        %3599 = vmatpush2.bf16.msra.mxu0 0
        %3600 = vmatprep.subr.bf16.mxu0 0
        %3601 = vmatpush2.bf16.msra.mxu0 0
        %3602 = vmatprep.subr.bf16.mxu0 0
        %3603 = vmatpush2.bf16.msra.mxu0 0
        %3604 = vmatprep.subr.bf16.mxu0 0
        %3605 = vmatpush2.bf16.msra.mxu0 0
        %3606 = vmatprep.subr.bf16.mxu0 0
        %3607 = vmatpush2.bf16.msra.mxu0 0
        %3608 = vmatprep.subr.bf16.mxu0 0
        %3609 = vmatpush2.bf16.msra.mxu0 0
        %3610 = vmatprep.subr.bf16.mxu0 0
        %3611 = vmatpush2.bf16.msra.mxu0 0
        %3612 = vmatprep.mubr.bf16.mxu0 0
        %3613 = vmatmul.mubr.bf16.gmra.mxu0 %v3569
        %v3614 = vpop.f32.mrf.mxu0
        %v3615 = vadd.f32 0.0, %v3614
        %v3616 = vpop.f32.mrf.mxu0
        %v3617 = vadd.f32 0.0, %v3616
        %v3618 = vpop.f32.mrf.mxu0
        %v3619 = vadd.f32 0.0, %v3618
        %v3620 = vpop.f32.mrf.mxu0
        %v3621 = vadd.f32 0.0, %v3620
        %3622 = vmatprep.mubr.bf16.mxu0 0
        %3623 = vmatmul.mubr.bf16.gmra.mxu0 %v3572
        %v3624 = vpop.f32.mrf.mxu0
        %v3625 = vadd.f32 0.0, %v3624
        %v3626 = vpop.f32.mrf.mxu0
        %v3627 = vadd.f32 0.0, %v3626
        %v3628 = vpop.f32.mrf.mxu0
        %v3629 = vadd.f32 0.0, %v3628
        %v3630 = vpop.f32.mrf.mxu0
        %v3631 = vadd.f32 0.0, %v3630
        %3632 = vmatprep.mubr.bf16.mxu0 0
        %3633 = vmatmul.mubr.bf16.gmra.mxu0 %v3575
        %v3634 = vpop.f32.mrf.mxu0
        %v3635 = vadd.f32 0.0, %v3634
        %v3636 = vpop.f32.mrf.mxu0
        %v3637 = vadd.f32 0.0, %v3636
        %v3638 = vpop.f32.mrf.mxu0
        %v3639 = vadd.f32 0.0, %v3638
        %v3640 = vpop.f32.mrf.mxu0
        %v3641 = vadd.f32 0.0, %v3640
        %3642 = vmatprep.mubr.bf16.mxu0 0
        %3643 = vmatmul.mubr.bf16.gmra.mxu0 %v3578
        %v3644 = vpop.f32.mrf.mxu0
        %v3645 = vadd.f32 0.0, %v3644
        %v3646 = vpop.f32.mrf.mxu0
        %v3647 = vadd.f32 0.0, %v3646
        %v3648 = vpop.f32.mrf.mxu0
        %v3649 = vadd.f32 0.0, %v3648
        %v3650 = vpop.f32.mrf.mxu0
        %v3651 = vadd.f32 0.0, %v3650
        %3652 = vdwg.mxu0
        %3653 = vmatprep.subr.bf16.mxu0 0
        %3654 = vmatpush1.bf16.msra.mxu0 0
        %3655 = vmatprep.subr.bf16.mxu0 0
        %3656 = vmatpush1.bf16.msra.mxu0 0
        %3657 = vmatprep.subr.bf16.mxu0 0
        %3658 = vmatpush1.bf16.msra.mxu0 0
        %3659 = vmatprep.subr.bf16.mxu0 0
        %3660 = vmatpush1.bf16.msra.mxu0 0
        %3661 = vmatprep.subr.bf16.mxu0 0
        %3662 = vmatpush1.bf16.msra.mxu0 0
        %3663 = vmatprep.subr.bf16.mxu0 0
        %3664 = vmatpush1.bf16.msra.mxu0 0
        %3665 = vmatprep.subr.bf16.mxu0 0
        %3666 = vmatpush1.bf16.msra.mxu0 %v3561
        %3667 = vmatprep.subr.bf16.mxu0 0
        %3668 = vmatpush1.bf16.msra.mxu0 %v3558
        %3669 = vmatprep.subr.bf16.mxu0 0
        %3670 = vmatpush2.bf16.msra.mxu0 0
        %3671 = vmatprep.subr.bf16.mxu0 0
        %3672 = vmatpush2.bf16.msra.mxu0 0
        %3673 = vmatprep.subr.bf16.mxu0 0
        %3674 = vmatpush2.bf16.msra.mxu0 0
        %3675 = vmatprep.subr.bf16.mxu0 0
        %3676 = vmatpush2.bf16.msra.mxu0 0
        %3677 = vmatprep.subr.bf16.mxu0 0
        %3678 = vmatpush2.bf16.msra.mxu0 0
        %3679 = vmatprep.subr.bf16.mxu0 0
        %3680 = vmatpush2.bf16.msra.mxu0 0
        %3681 = vmatprep.subr.bf16.mxu0 0
        %3682 = vmatpush2.bf16.msra.mxu0 0
        %3683 = vmatprep.subr.bf16.mxu0 0
        %3684 = vmatpush2.bf16.msra.mxu0 0
        %3685 = vmatprep.mubr.bf16.mxu0 0
        %3686 = vmatmul.mubr.bf16.gmra.mxu0 %v3569
        %v3687 = vpop.f32.mrf.mxu0
        %v3688 = vadd.f32 0.0, %v3687
        %v3689 = vpop.f32.mrf.mxu0
        %v3690 = vpop.f32.mrf.mxu0
        %v3691 = vadd.f32 0.0, %v3690
        %v3692 = vpop.f32.mrf.mxu0
        %3693 = vmatprep.mubr.bf16.mxu0 0
        %3694 = vmatmul.mubr.bf16.gmra.mxu0 %v3572
        %v3695 = vpop.f32.mrf.mxu0
        %v3696 = vadd.f32 0.0, %v3695
        %v3697 = vpop.f32.mrf.mxu0
        %v3698 = vpop.f32.mrf.mxu0
        %v3699 = vadd.f32 0.0, %v3698
        %v3700 = vpop.f32.mrf.mxu0
        %3701 = vmatprep.mubr.bf16.mxu0 0
        %3702 = vmatmul.mubr.bf16.gmra.mxu0 %v3575
        %v3703 = vpop.f32.mrf.mxu0
        %v3704 = vadd.f32 0.0, %v3703
        %v3705 = vpop.f32.mrf.mxu0
        %v3706 = vpop.f32.mrf.mxu0
        %v3707 = vadd.f32 0.0, %v3706
        %v3708 = vpop.f32.mrf.mxu0
        %3709 = vmatprep.mubr.bf16.mxu0 0
        %3710 = vmatmul.mubr.bf16.gmra.mxu0 %v3578
        %v3711 = vpop.f32.mrf.mxu0
        %v3712 = vadd.f32 0.0, %v3711
        %v3713 = vpop.f32.mrf.mxu0
        %v3714 = vpop.f32.mrf.mxu0
        %v3715 = vadd.f32 0.0, %v3714
        %v3716 = vpop.f32.mrf.mxu0
        %3717 = vdwg.mxu0
        %3718 = vst [vmem:[#allocation7 + $0x180] sm:$0xff] %v3615
        %3719 = vst [vmem:[#allocation7 + $0x188] sm:$0xff] %v3617
        %3720 = vst.msk [vmem:[#allocation7 + $0x190] sm:$0xff] %vm632, %v3688
        %3721 = vst [vmem:[#allocation7 + $0x198] sm:$0xff] %v3619
        %3722 = vst [vmem:[#allocation7 + $0x1a0] sm:$0xff] %v3621
        %3723 = vst.msk [vmem:[#allocation7 + $0x1a8] sm:$0xff] %vm632, %v3691
        %3724 = vst [vmem:[#allocation7 + $0x1b0] sm:$0xff] %v3625
        %3725 = vst [vmem:[#allocation7 + $0x1b8] sm:$0xff] %v3627
        %3726 = vst.msk [vmem:[#allocation7 + $0x1c0] sm:$0xff] %vm632, %v3696
        %3727 = vst [vmem:[#allocation7 + $0x1c8] sm:$0xff] %v3629
        %3728 = vst [vmem:[#allocation7 + $0x1d0] sm:$0xff] %v3631
        %3729 = vst.msk [vmem:[#allocation7 + $0x1d8] sm:$0xff] %vm632, %v3699
        %3730 = vst [vmem:[#allocation7 + $0x1e0] sm:$0xff] %v3635
        %3731 = vst [vmem:[#allocation7 + $0x1e8] sm:$0xff] %v3637
        %3732 = vst.msk [vmem:[#allocation7 + $0x1f0] sm:$0xff] %vm632, %v3704
        %3733 = vst [vmem:[#allocation7 + $0x1f8] sm:$0xff] %v3639
        %3734 = vst [vmem:[#allocation7 + $0x200] sm:$0xff] %v3641
        %3735 = vst.msk [vmem:[#allocation7 + $0x208] sm:$0xff] %vm632, %v3707
        %3736 = vst [vmem:[#allocation7 + $0x210] sm:$0xff] %v3645
        %3737 = vst [vmem:[#allocation7 + $0x218] sm:$0xff] %v3647
        %3738 = vst.msk [vmem:[#allocation7 + $0x220] sm:$0xff] %vm632, %v3712
        %3739 = vst [vmem:[#allocation7 + $0x228] sm:$0xff] %v3649
        %3740 = vst [vmem:[#allocation7 + $0x230] sm:$0xff] %v3651
        %3741 = vst.msk [vmem:[#allocation7 + $0x238] sm:$0xff] %vm632, %v3715
        %v3742 = vld [vmem:[#allocation2 + $0x60] sm:$0xf]
        %v3743 = vld [vmem:[#allocation2 + $0x64] sm:$0xf]
        %v3744 = vld [vmem:[#allocation2 + $0x68] sm:$0xf]
        %v3745 = vld [vmem:[#allocation2 + $0x6c] sm:$0xf]
        %v3746 = vld [vmem:[#allocation2 + $0x70] sm:$0xf]
        %v3747 = vld [vmem:[#allocation2 + $0x74] sm:$0xf]
        %v3748 = vld [vmem:[#allocation2 + $0x78] sm:$0xf]
        %v3749 = vld [vmem:[#allocation2 + $0x7c] sm:$0xf]
        %v3750 = vld [vmem:[%s3] sm:$0xff]
        %v3751 = vld [vmem:[%s3 + $0x8] sm:$0xf]
        %v3752 = vld [vmem:[%s3 + $0xc] sm:$0xff]
        %v3753 = vld [vmem:[%s3 + $0x14] sm:$0xf]
        %v3754 = vld [vmem:[%s3 + $0x18] sm:$0xff]
        %v3755 = vld [vmem:[%s3 + $0x20] sm:$0xf]
        %v3756 = vld [vmem:[%s3 + $0x24] sm:$0xff]
        %v3757 = vld [vmem:[%s3 + $0x2c] sm:$0xf]
        %v3766 = vunpack.c.l.b16 %v3742
        %v3767 = vunpack.c.l.b16 %v3743
        %v3768 = vunpack.c.l.b16 %v3744
        %v3769 = vunpack.c.l.b16 %v3745
        %v3770 = vunpack.c.l.b16 %v3746
        %v3771 = vunpack.c.l.b16 %v3747
        %v3772 = vunpack.c.l.b16 %v3748
        %v3773 = vunpack.c.l.b16 %v3749
        %v3774 = vpack.c.b16 %v3767, %v3766
        %v3775 = vpack.c.b16 %v3769, %v3768
        %v3776 = vpack.c.b16 %v3771, %v3770
        %v3777 = vpack.c.b16 %v3773, %v3772
        %v3786 = vunpack.c.l.b16 %v3750
        %v3787 = vunpack.c.h.b16 %v3750
        %v3788 = vunpack.c.l.b16 %v3751
        %v3789 = vunpack.c.l.b16 %v3752
        %v3790 = vunpack.c.h.b16 %v3752
        %v3791 = vunpack.c.l.b16 %v3753
        %v3792 = vunpack.c.l.b16 %v3754
        %v3793 = vunpack.c.h.b16 %v3754
        %v3794 = vunpack.c.l.b16 %v3755
        %v3795 = vunpack.c.l.b16 %v3756
        %v3796 = vunpack.c.h.b16 %v3756
        %v3797 = vunpack.c.l.b16 %v3757
        %v3798 = vpack.c.b16 %v3789, %v3786
        %v3799 = vpack.c.b16 %v3790, %v3787
        %v3800 = vpack.c.b16 %v3791, %v3788
        %v3801 = vpack.c.b16 %v3795, %v3792
        %v3802 = vpack.c.b16 %v3796, %v3793
        %v3803 = vpack.c.b16 %v3797, %v3794
        %v3811 = vsel %vm632, %v3774, 0
        %v3814 = vsel %vm632, %v3775, 0
        %v3817 = vsel %vm632, %v3776, 0
        %v3820 = vsel %vm632, %v3777, 0
        %3822 = vmatprep.subr.bf16.mxu0 0
        %3823 = vmatpush1.bf16.msra.mxu0 0
        %3824 = vmatprep.subr.bf16.mxu0 0
        %3825 = vmatpush1.bf16.msra.mxu0 0
        %3826 = vmatprep.subr.bf16.mxu0 0
        %3827 = vmatpush1.bf16.msra.mxu0 0
        %3828 = vmatprep.subr.bf16.mxu0 0
        %3829 = vmatpush1.bf16.msra.mxu0 0
        %3830 = vmatprep.subr.bf16.mxu0 0
        %3831 = vmatpush1.bf16.msra.mxu0 0
        %3832 = vmatprep.subr.bf16.mxu0 0
        %3833 = vmatpush1.bf16.msra.mxu0 0
        %3834 = vmatprep.subr.bf16.mxu0 %v3802
        %3835 = vmatpush1.bf16.msra.mxu0 %v3801
        %3836 = vmatprep.subr.bf16.mxu0 %v3799
        %3837 = vmatpush1.bf16.msra.mxu0 %v3798
        %3838 = vmatprep.subr.bf16.mxu0 0
        %3839 = vmatpush2.bf16.msra.mxu0 0
        %3840 = vmatprep.subr.bf16.mxu0 0
        %3841 = vmatpush2.bf16.msra.mxu0 0
        %3842 = vmatprep.subr.bf16.mxu0 0
        %3843 = vmatpush2.bf16.msra.mxu0 0
        %3844 = vmatprep.subr.bf16.mxu0 0
        %3845 = vmatpush2.bf16.msra.mxu0 0
        %3846 = vmatprep.subr.bf16.mxu0 0
        %3847 = vmatpush2.bf16.msra.mxu0 0
        %3848 = vmatprep.subr.bf16.mxu0 0
        %3849 = vmatpush2.bf16.msra.mxu0 0
        %3850 = vmatprep.subr.bf16.mxu0 0
        %3851 = vmatpush2.bf16.msra.mxu0 0
        %3852 = vmatprep.subr.bf16.mxu0 0
        %3853 = vmatpush2.bf16.msra.mxu0 0
        %3854 = vmatprep.mubr.bf16.mxu0 0
        %3855 = vmatmul.mubr.bf16.gmra.mxu0 %v3811
        %v3856 = vpop.f32.mrf.mxu0
        %v3857 = vadd.f32 0.0, %v3856
        %v3858 = vpop.f32.mrf.mxu0
        %v3859 = vadd.f32 0.0, %v3858
        %v3860 = vpop.f32.mrf.mxu0
        %v3861 = vadd.f32 0.0, %v3860
        %v3862 = vpop.f32.mrf.mxu0
        %v3863 = vadd.f32 0.0, %v3862
        %3864 = vmatprep.mubr.bf16.mxu0 0
        %3865 = vmatmul.mubr.bf16.gmra.mxu0 %v3814
        %v3866 = vpop.f32.mrf.mxu0
        %v3867 = vadd.f32 0.0, %v3866
        %v3868 = vpop.f32.mrf.mxu0
        %v3869 = vadd.f32 0.0, %v3868
        %v3870 = vpop.f32.mrf.mxu0
        %v3871 = vadd.f32 0.0, %v3870
        %v3872 = vpop.f32.mrf.mxu0
        %v3873 = vadd.f32 0.0, %v3872
        %3874 = vmatprep.mubr.bf16.mxu0 0
        %3875 = vmatmul.mubr.bf16.gmra.mxu0 %v3817
        %v3876 = vpop.f32.mrf.mxu0
        %v3877 = vadd.f32 0.0, %v3876
        %v3878 = vpop.f32.mrf.mxu0
        %v3879 = vadd.f32 0.0, %v3878
        %v3880 = vpop.f32.mrf.mxu0
        %v3881 = vadd.f32 0.0, %v3880
        %v3882 = vpop.f32.mrf.mxu0
        %v3883 = vadd.f32 0.0, %v3882
        %3884 = vmatprep.mubr.bf16.mxu0 0
        %3885 = vmatmul.mubr.bf16.gmra.mxu0 %v3820
        %v3886 = vpop.f32.mrf.mxu0
        %v3887 = vadd.f32 0.0, %v3886
        %v3888 = vpop.f32.mrf.mxu0
        %v3889 = vadd.f32 0.0, %v3888
        %v3890 = vpop.f32.mrf.mxu0
        %v3891 = vadd.f32 0.0, %v3890
        %v3892 = vpop.f32.mrf.mxu0
        %v3893 = vadd.f32 0.0, %v3892
        %3894 = vdwg.mxu0
        %3895 = vmatprep.subr.bf16.mxu0 0
        %3896 = vmatpush1.bf16.msra.mxu0 0
        %3897 = vmatprep.subr.bf16.mxu0 0
        %3898 = vmatpush1.bf16.msra.mxu0 0
        %3899 = vmatprep.subr.bf16.mxu0 0
        %3900 = vmatpush1.bf16.msra.mxu0 0
        %3901 = vmatprep.subr.bf16.mxu0 0
        %3902 = vmatpush1.bf16.msra.mxu0 0
        %3903 = vmatprep.subr.bf16.mxu0 0
        %3904 = vmatpush1.bf16.msra.mxu0 0
        %3905 = vmatprep.subr.bf16.mxu0 0
        %3906 = vmatpush1.bf16.msra.mxu0 0
        %3907 = vmatprep.subr.bf16.mxu0 0
        %3908 = vmatpush1.bf16.msra.mxu0 %v3803
        %3909 = vmatprep.subr.bf16.mxu0 0
        %3910 = vmatpush1.bf16.msra.mxu0 %v3800
        %3911 = vmatprep.subr.bf16.mxu0 0
        %3912 = vmatpush2.bf16.msra.mxu0 0
        %3913 = vmatprep.subr.bf16.mxu0 0
        %3914 = vmatpush2.bf16.msra.mxu0 0
        %3915 = vmatprep.subr.bf16.mxu0 0
        %3916 = vmatpush2.bf16.msra.mxu0 0
        %3917 = vmatprep.subr.bf16.mxu0 0
        %3918 = vmatpush2.bf16.msra.mxu0 0
        %3919 = vmatprep.subr.bf16.mxu0 0
        %3920 = vmatpush2.bf16.msra.mxu0 0
        %3921 = vmatprep.subr.bf16.mxu0 0
        %3922 = vmatpush2.bf16.msra.mxu0 0
        %3923 = vmatprep.subr.bf16.mxu0 0
        %3924 = vmatpush2.bf16.msra.mxu0 0
        %3925 = vmatprep.subr.bf16.mxu0 0
        %3926 = vmatpush2.bf16.msra.mxu0 0
        %3927 = vmatprep.mubr.bf16.mxu0 0
        %3928 = vmatmul.mubr.bf16.gmra.mxu0 %v3811
        %v3929 = vpop.f32.mrf.mxu0
        %v3930 = vadd.f32 0.0, %v3929
        %v3931 = vpop.f32.mrf.mxu0
        %v3932 = vpop.f32.mrf.mxu0
        %v3933 = vadd.f32 0.0, %v3932
        %v3934 = vpop.f32.mrf.mxu0
        %3935 = vmatprep.mubr.bf16.mxu0 0
        %3936 = vmatmul.mubr.bf16.gmra.mxu0 %v3814
        %v3937 = vpop.f32.mrf.mxu0
        %v3938 = vadd.f32 0.0, %v3937
        %v3939 = vpop.f32.mrf.mxu0
        %v3940 = vpop.f32.mrf.mxu0
        %v3941 = vadd.f32 0.0, %v3940
        %v3942 = vpop.f32.mrf.mxu0
        %3943 = vmatprep.mubr.bf16.mxu0 0
        %3944 = vmatmul.mubr.bf16.gmra.mxu0 %v3817
        %v3945 = vpop.f32.mrf.mxu0
        %v3946 = vadd.f32 0.0, %v3945
        %v3947 = vpop.f32.mrf.mxu0
        %v3948 = vpop.f32.mrf.mxu0
        %v3949 = vadd.f32 0.0, %v3948
        %v3950 = vpop.f32.mrf.mxu0
        %3951 = vmatprep.mubr.bf16.mxu0 0
        %3952 = vmatmul.mubr.bf16.gmra.mxu0 %v3820
        %v3953 = vpop.f32.mrf.mxu0
        %v3954 = vadd.f32 0.0, %v3953
        %v3955 = vpop.f32.mrf.mxu0
        %v3956 = vpop.f32.mrf.mxu0
        %v3957 = vadd.f32 0.0, %v3956
        %v3958 = vpop.f32.mrf.mxu0
        %3959 = vdwg.mxu0
        %3960 = vst [vmem:[#allocation7 + $0x240] sm:$0xff] %v3857
        %3961 = vst [vmem:[#allocation7 + $0x248] sm:$0xff] %v3859
        %3962 = vst.msk [vmem:[#allocation7 + $0x250] sm:$0xff] %vm632, %v3930
        %3963 = vst [vmem:[#allocation7 + $0x258] sm:$0xff] %v3861
        %3964 = vst [vmem:[#allocation7 + $0x260] sm:$0xff] %v3863
        %3965 = vst.msk [vmem:[#allocation7 + $0x268] sm:$0xff] %vm632, %v3933
        %3966 = vst [vmem:[#allocation7 + $0x270] sm:$0xff] %v3867
        %3967 = vst [vmem:[#allocation7 + $0x278] sm:$0xff] %v3869
        %3968 = vst.msk [vmem:[#allocation7 + $0x280] sm:$0xff] %vm632, %v3938
        %3969 = vst [vmem:[#allocation7 + $0x288] sm:$0xff] %v3871
        %3970 = vst [vmem:[#allocation7 + $0x290] sm:$0xff] %v3873
        %3971 = vst.msk [vmem:[#allocation7 + $0x298] sm:$0xff] %vm632, %v3941
        %3972 = vst [vmem:[#allocation7 + $0x2a0] sm:$0xff] %v3877
        %3973 = vst [vmem:[#allocation7 + $0x2a8] sm:$0xff] %v3879
        %3974 = vst.msk [vmem:[#allocation7 + $0x2b0] sm:$0xff] %vm632, %v3946
        %3975 = vst [vmem:[#allocation7 + $0x2b8] sm:$0xff] %v3881
        %3976 = vst [vmem:[#allocation7 + $0x2c0] sm:$0xff] %v3883
        %3977 = vst.msk [vmem:[#allocation7 + $0x2c8] sm:$0xff] %vm632, %v3949
        %3978 = vst [vmem:[#allocation7 + $0x2d0] sm:$0xff] %v3887
        %3979 = vst [vmem:[#allocation7 + $0x2d8] sm:$0xff] %v3889
        %3980 = vst.msk [vmem:[#allocation7 + $0x2e0] sm:$0xff] %vm632, %v3954
        %3981 = vst [vmem:[#allocation7 + $0x2e8] sm:$0xff] %v3891
        %3982 = vst [vmem:[#allocation7 + $0x2f0] sm:$0xff] %v3893
        %3983 = vst.msk [vmem:[#allocation7 + $0x2f8] sm:$0xff] %vm632, %v3957
        %v3984 = vld [vmem:[%s4] sm:$0x1]
        %v3986 = vlaneseq
        %v3987 = vshrl.u32 %v3986, 7
        %v3988 = vsub.s32 0, %v3987
        %v3989 = vrot.slane %v3984, %v3988
        %v3991 = vld [vmem:[#allocation7] sm:$0xff]
        %v3992 = vld [vmem:[#allocation7 + $0x18] sm:$0xff]
        %v3993 = vld [vmem:[#allocation7 + $0x30] sm:$0xff]
        %v3994 = vld [vmem:[#allocation7 + $0x48] sm:$0xff]
        %v3995 = vld [vmem:[#allocation7 + $0x60] sm:$0xff]
        %v3996 = vld [vmem:[#allocation7 + $0x78] sm:$0xff]
        %v3997 = vld [vmem:[#allocation7 + $0x90] sm:$0xff]
        %v3998 = vld [vmem:[#allocation7 + $0xa8] sm:$0xff]
        %v3999 = vld [vmem:[#allocation7 + $0xc0] sm:$0xff]
        %v4000 = vld [vmem:[#allocation7 + $0xd8] sm:$0xff]
        %v4001 = vld [vmem:[#allocation7 + $0xf0] sm:$0xff]
        %v4002 = vld [vmem:[#allocation7 + $0x108] sm:$0xff]
        %v4003 = vld [vmem:[#allocation7 + $0x120] sm:$0xff]
        %v4004 = vld [vmem:[#allocation7 + $0x138] sm:$0xff]
        %v4005 = vld [vmem:[#allocation7 + $0x150] sm:$0xff]
        %v4006 = vld [vmem:[#allocation7 + $0x168] sm:$0xff]
        %v4007 = vadd.f32 %v3989, %v3991
        %v4008 = vadd.f32 %v3989, %v3992
        %v4009 = vadd.f32 %v3989, %v3993
        %v4010 = vadd.f32 %v3989, %v3994
        %v4011 = vadd.f32 %v3989, %v3995
        %v4012 = vadd.f32 %v3989, %v3996
        %v4013 = vadd.f32 %v3989, %v3997
        %v4014 = vadd.f32 %v3989, %v3998
        %v4015 = vadd.f32 %v3989, %v3999
        %v4016 = vadd.f32 %v3989, %v4000
        %v4017 = vadd.f32 %v3989, %v4001
        %v4018 = vadd.f32 %v3989, %v4002
        %v4019 = vadd.f32 %v3989, %v4003
        %v4020 = vadd.f32 %v3989, %v4004
        %v4021 = vadd.f32 %v3989, %v4005
        %v4022 = vadd.f32 %v3989, %v4006
        %v4023 = vld [vmem:[#allocation7] sm:$0xfe]
        %v4024 = vld [vmem:[#allocation7 + $0x180] sm:$0x1]
        %v4042 = vrot.slane %v4023, 1
        %v4043 = vrot.slane %v3992, 1
        %v4044 = vsel %vm1352, %v4042, %v4043
        %v4045 = vrot.slane %v3993, 1
        %v4046 = vsel %vm1352, %v4043, %v4045
        %v4047 = vrot.slane %v3994, 1
        %v4048 = vsel %vm1352, %v4045, %v4047
        %v4049 = vrot.slane %v3995, 1
        %v4050 = vsel %vm1352, %v4047, %v4049
        %v4051 = vrot.slane %v3996, 1
        %v4052 = vsel %vm1352, %v4049, %v4051
        %v4053 = vrot.slane %v3997, 1
        %v4054 = vsel %vm1352, %v4051, %v4053
        %v4055 = vrot.slane %v3998, 1
        %v4056 = vsel %vm1352, %v4053, %v4055
        %v4057 = vrot.slane %v3999, 1
        %v4058 = vsel %vm1352, %v4055, %v4057
        %v4059 = vrot.slane %v4000, 1
        %v4060 = vsel %vm1352, %v4057, %v4059
        %v4061 = vrot.slane %v4001, 1
        %v4062 = vsel %vm1352, %v4059, %v4061
        %v4063 = vrot.slane %v4002, 1
        %v4064 = vsel %vm1352, %v4061, %v4063
        %v4065 = vrot.slane %v4003, 1
        %v4066 = vsel %vm1352, %v4063, %v4065
        %v4067 = vrot.slane %v4004, 1
        %v4068 = vsel %vm1352, %v4065, %v4067
        %v4069 = vrot.slane %v4005, 1
        %v4070 = vsel %vm1352, %v4067, %v4069
        %v4071 = vrot.slane %v4006, 1
        %v4072 = vsel %vm1352, %v4069, %v4071
        %v4073 = vrot.slane %v4024, 1
        %v4074 = vsel %vm1352, %v4071, %v4073
        %4075 = vrot.lane.b32.xlu0 %v4044, 96
        %v4076 = vpop.permute.xlu0 %4075
        %4077 = vrot.lane.b32.xlu0 %v4046, 96
        %v4078 = vpop.permute.xlu0 %4077
        %4079 = vrot.lane.b32.xlu0 %v4048, 96
        %v4080 = vpop.permute.xlu0 %4079
        %4081 = vrot.lane.b32.xlu0 %v4050, 96
        %v4082 = vpop.permute.xlu0 %4081
        %4083 = vrot.lane.b32.xlu0 %v4052, 96
        %v4084 = vpop.permute.xlu0 %4083
        %4085 = vrot.lane.b32.xlu0 %v4054, 96
        %v4086 = vpop.permute.xlu0 %4085
        %4087 = vrot.lane.b32.xlu0 %v4056, 96
        %v4088 = vpop.permute.xlu0 %4087
        %4089 = vrot.lane.b32.xlu0 %v4058, 96
        %v4090 = vpop.permute.xlu0 %4089
        %4091 = vrot.lane.b32.xlu0 %v4060, 96
        %v4092 = vpop.permute.xlu0 %4091
        %4093 = vrot.lane.b32.xlu0 %v4062, 96
        %v4094 = vpop.permute.xlu0 %4093
        %4095 = vrot.lane.b32.xlu0 %v4064, 96
        %v4096 = vpop.permute.xlu0 %4095
        %4097 = vrot.lane.b32.xlu0 %v4066, 96
        %v4098 = vpop.permute.xlu0 %4097
        %4099 = vrot.lane.b32.xlu0 %v4068, 96
        %v4100 = vpop.permute.xlu0 %4099
        %4101 = vrot.lane.b32.xlu0 %v4070, 96
        %v4102 = vpop.permute.xlu0 %4101
        %4103 = vrot.lane.b32.xlu0 %v4072, 96
        %v4104 = vpop.permute.xlu0 %4103
        %4105 = vrot.lane.b32.xlu0 %v4074, 96
        %v4106 = vpop.permute.xlu0 %4105
        %v4123 = vadd.f32 %v4007, %v4076
        %v4124 = vadd.f32 %v4008, %v4078
        %v4125 = vadd.f32 %v4009, %v4080
        %v4126 = vadd.f32 %v4010, %v4082
        %v4127 = vadd.f32 %v4011, %v4084
        %v4128 = vadd.f32 %v4012, %v4086
        %v4129 = vadd.f32 %v4013, %v4088
        %v4130 = vadd.f32 %v4014, %v4090
        %v4131 = vadd.f32 %v4015, %v4092
        %v4132 = vadd.f32 %v4016, %v4094
        %v4133 = vadd.f32 %v4017, %v4096
        %v4134 = vadd.f32 %v4018, %v4098
        %v4135 = vadd.f32 %v4019, %v4100
        %v4136 = vadd.f32 %v4020, %v4102
        %v4137 = vadd.f32 %v4021, %v4104
        %v4138 = vadd.f32 %v4022, %v4106
        %v4139 = vld [vmem:[#allocation7] sm:$0xfc]
        %v4140 = vld [vmem:[#allocation7 + $0x180] sm:$0x3]
        %v4143 = vrot.slane %v4139, 2
        %v4144 = vrot.slane %v3992, 2
        %v4145 = vsel %vm1454, %v4143, %v4144
        %v4146 = vrot.slane %v3993, 2
        %v4147 = vsel %vm1454, %v4144, %v4146
        %v4148 = vrot.slane %v3994, 2
        %v4149 = vsel %vm1454, %v4146, %v4148
        %v4150 = vrot.slane %v3995, 2
        %v4151 = vsel %vm1454, %v4148, %v4150
        %v4152 = vrot.slane %v3996, 2
        %v4153 = vsel %vm1454, %v4150, %v4152
        %v4154 = vrot.slane %v3997, 2
        %v4155 = vsel %vm1454, %v4152, %v4154
        %v4156 = vrot.slane %v3998, 2
        %v4157 = vsel %vm1454, %v4154, %v4156
        %v4158 = vrot.slane %v3999, 2
        %v4159 = vsel %vm1454, %v4156, %v4158
        %v4160 = vrot.slane %v4000, 2
        %v4161 = vsel %vm1454, %v4158, %v4160
        %v4162 = vrot.slane %v4001, 2
        %v4163 = vsel %vm1454, %v4160, %v4162
        %v4164 = vrot.slane %v4002, 2
        %v4165 = vsel %vm1454, %v4162, %v4164
        %v4166 = vrot.slane %v4003, 2
        %v4167 = vsel %vm1454, %v4164, %v4166
        %v4168 = vrot.slane %v4004, 2
        %v4169 = vsel %vm1454, %v4166, %v4168
        %v4170 = vrot.slane %v4005, 2
        %v4171 = vsel %vm1454, %v4168, %v4170
        %v4172 = vrot.slane %v4006, 2
        %v4173 = vsel %vm1454, %v4170, %v4172
        %v4174 = vrot.slane %v4140, 2
        %v4175 = vsel %vm1454, %v4172, %v4174
        %4176 = vrot.lane.b32.xlu0 %v4145, 64
        %v4177 = vpop.permute.xlu0 %4176
        %4178 = vrot.lane.b32.xlu0 %v4147, 64
        %v4179 = vpop.permute.xlu0 %4178
        %4180 = vrot.lane.b32.xlu0 %v4149, 64
        %v4181 = vpop.permute.xlu0 %4180
        %4182 = vrot.lane.b32.xlu0 %v4151, 64
        %v4183 = vpop.permute.xlu0 %4182
        %4184 = vrot.lane.b32.xlu0 %v4153, 64
        %v4185 = vpop.permute.xlu0 %4184
        %4186 = vrot.lane.b32.xlu0 %v4155, 64
        %v4187 = vpop.permute.xlu0 %4186
        %4188 = vrot.lane.b32.xlu0 %v4157, 64
        %v4189 = vpop.permute.xlu0 %4188
        %4190 = vrot.lane.b32.xlu0 %v4159, 64
        %v4191 = vpop.permute.xlu0 %4190
        %4192 = vrot.lane.b32.xlu0 %v4161, 64
        %v4193 = vpop.permute.xlu0 %4192
        %4194 = vrot.lane.b32.xlu0 %v4163, 64
        %v4195 = vpop.permute.xlu0 %4194
        %4196 = vrot.lane.b32.xlu0 %v4165, 64
        %v4197 = vpop.permute.xlu0 %4196
        %4198 = vrot.lane.b32.xlu0 %v4167, 64
        %v4199 = vpop.permute.xlu0 %4198
        %4200 = vrot.lane.b32.xlu0 %v4169, 64
        %v4201 = vpop.permute.xlu0 %4200
        %4202 = vrot.lane.b32.xlu0 %v4171, 64
        %v4203 = vpop.permute.xlu0 %4202
        %4204 = vrot.lane.b32.xlu0 %v4173, 64
        %v4205 = vpop.permute.xlu0 %4204
        %4206 = vrot.lane.b32.xlu0 %v4175, 64
        %v4207 = vpop.permute.xlu0 %4206
        %v4224 = vadd.f32 %v4123, %v4177
        %v4225 = vadd.f32 %v4124, %v4179
        %v4226 = vadd.f32 %v4125, %v4181
        %v4227 = vadd.f32 %v4126, %v4183
        %v4228 = vadd.f32 %v4127, %v4185
        %v4229 = vadd.f32 %v4128, %v4187
        %v4230 = vadd.f32 %v4129, %v4189
        %v4231 = vadd.f32 %v4130, %v4191
        %v4232 = vadd.f32 %v4131, %v4193
        %v4233 = vadd.f32 %v4132, %v4195
        %v4234 = vadd.f32 %v4133, %v4197
        %v4235 = vadd.f32 %v4134, %v4199
        %v4236 = vadd.f32 %v4135, %v4201
        %v4237 = vadd.f32 %v4136, %v4203
        %v4238 = vadd.f32 %v4137, %v4205
        %v4239 = vadd.f32 %v4138, %v4207
        %v4240 = vld [vmem:[#allocation7 + $0x180] sm:$0xff]
        %v4241 = vld [vmem:[#allocation7 + $0x198] sm:$0xff]
        %4244 = vrot.lane.b32.xlu0 %v3993, 32
        %v4245 = vpop.permute.xlu0 %4244
        %4246 = vrot.lane.b32.xlu0 %v3994, 32
        %v4247 = vpop.permute.xlu0 %4246
        %4248 = vrot.lane.b32.xlu0 %v3995, 32
        %v4249 = vpop.permute.xlu0 %4248
        %4250 = vrot.lane.b32.xlu0 %v3996, 32
        %v4251 = vpop.permute.xlu0 %4250
        %4252 = vrot.lane.b32.xlu0 %v3997, 32
        %v4253 = vpop.permute.xlu0 %4252
        %4254 = vrot.lane.b32.xlu0 %v3998, 32
        %v4255 = vpop.permute.xlu0 %4254
        %4256 = vrot.lane.b32.xlu0 %v3999, 32
        %v4257 = vpop.permute.xlu0 %4256
        %4258 = vrot.lane.b32.xlu0 %v4000, 32
        %v4259 = vpop.permute.xlu0 %4258
        %4260 = vrot.lane.b32.xlu0 %v4001, 32
        %v4261 = vpop.permute.xlu0 %4260
        %4262 = vrot.lane.b32.xlu0 %v4002, 32
        %v4263 = vpop.permute.xlu0 %4262
        %4264 = vrot.lane.b32.xlu0 %v4003, 32
        %v4265 = vpop.permute.xlu0 %4264
        %4266 = vrot.lane.b32.xlu0 %v4004, 32
        %v4267 = vpop.permute.xlu0 %4266
        %4268 = vrot.lane.b32.xlu0 %v4005, 32
        %v4269 = vpop.permute.xlu0 %4268
        %4270 = vrot.lane.b32.xlu0 %v4006, 32
        %v4271 = vpop.permute.xlu0 %4270
        %4272 = vrot.lane.b32.xlu0 %v4240, 32
        %v4273 = vpop.permute.xlu0 %4272
        %4274 = vrot.lane.b32.xlu0 %v4241, 32
        %v4275 = vpop.permute.xlu0 %4274
        %v4292 = vadd.f32 %v4224, %v4245
        %v4293 = vadd.f32 %v4225, %v4247
        %v4294 = vadd.f32 %v4226, %v4249
        %v4295 = vadd.f32 %v4227, %v4251
        %v4296 = vadd.f32 %v4228, %v4253
        %v4297 = vadd.f32 %v4229, %v4255
        %v4298 = vadd.f32 %v4230, %v4257
        %v4299 = vadd.f32 %v4231, %v4259
        %v4300 = vadd.f32 %v4232, %v4261
        %v4301 = vadd.f32 %v4233, %v4263
        %v4302 = vadd.f32 %v4234, %v4265
        %v4303 = vadd.f32 %v4235, %v4267
        %v4304 = vadd.f32 %v4236, %v4269
        %v4305 = vadd.f32 %v4237, %v4271
        %v4306 = vadd.f32 %v4238, %v4273
        %v4307 = vadd.f32 %v4239, %v4275
        %v4308 = vld [vmem:[#allocation7 + $0x38] sm:$0xfe]
        %v4309 = vld [vmem:[#allocation7 + $0x50] sm:$0xff]
        %v4310 = vld [vmem:[#allocation7 + $0x68] sm:$0xff]
        %v4311 = vld [vmem:[#allocation7 + $0x80] sm:$0xff]
        %v4312 = vld [vmem:[#allocation7 + $0x98] sm:$0xff]
        %v4313 = vld [vmem:[#allocation7 + $0xb0] sm:$0xff]
        %v4314 = vld [vmem:[#allocation7 + $0xc8] sm:$0xff]
        %v4315 = vld [vmem:[#allocation7 + $0xe0] sm:$0xff]
        %v4316 = vld [vmem:[#allocation7 + $0xf8] sm:$0xff]
        %v4317 = vld [vmem:[#allocation7 + $0x110] sm:$0xff]
        %v4318 = vld [vmem:[#allocation7 + $0x128] sm:$0xff]
        %v4319 = vld [vmem:[#allocation7 + $0x140] sm:$0xff]
        %v4320 = vld [vmem:[#allocation7 + $0x158] sm:$0xff]
        %v4321 = vld [vmem:[#allocation7 + $0x170] sm:$0xff]
        %v4322 = vld [vmem:[#allocation7 + $0x188] sm:$0xff]
        %v4323 = vld [vmem:[#allocation7 + $0x1a0] sm:$0xff]
        %v4324 = vld [vmem:[#allocation7 + $0x1b8] sm:$0x1]
        %v4342 = vrot.slane %v4308, 1
        %v4343 = vrot.slane %v4309, 1
        %v4344 = vsel %vm1352, %v4342, %v4343
        %v4345 = vrot.slane %v4310, 1
        %v4346 = vsel %vm1352, %v4343, %v4345
        %v4347 = vrot.slane %v4311, 1
        %v4348 = vsel %vm1352, %v4345, %v4347
        %v4349 = vrot.slane %v4312, 1
        %v4350 = vsel %vm1352, %v4347, %v4349
        %v4351 = vrot.slane %v4313, 1
        %v4352 = vsel %vm1352, %v4349, %v4351
        %v4353 = vrot.slane %v4314, 1
        %v4354 = vsel %vm1352, %v4351, %v4353
        %v4355 = vrot.slane %v4315, 1
        %v4356 = vsel %vm1352, %v4353, %v4355
        %v4357 = vrot.slane %v4316, 1
        %v4358 = vsel %vm1352, %v4355, %v4357
        %v4359 = vrot.slane %v4317, 1
        %v4360 = vsel %vm1352, %v4357, %v4359
        %v4361 = vrot.slane %v4318, 1
        %v4362 = vsel %vm1352, %v4359, %v4361
        %v4363 = vrot.slane %v4319, 1
        %v4364 = vsel %vm1352, %v4361, %v4363
        %v4365 = vrot.slane %v4320, 1
        %v4366 = vsel %vm1352, %v4363, %v4365
        %v4367 = vrot.slane %v4321, 1
        %v4368 = vsel %vm1352, %v4365, %v4367
        %v4369 = vrot.slane %v4322, 1
        %v4370 = vsel %vm1352, %v4367, %v4369
        %v4371 = vrot.slane %v4323, 1
        %v4372 = vsel %vm1352, %v4369, %v4371
        %v4373 = vrot.slane %v4324, 1
        %v4374 = vsel %vm1352, %v4371, %v4373
        %v4391 = vadd.f32 %v4292, %v4344
        %v4392 = vadd.f32 %v4293, %v4346
        %v4393 = vadd.f32 %v4294, %v4348
        %v4394 = vadd.f32 %v4295, %v4350
        %v4395 = vadd.f32 %v4296, %v4352
        %v4396 = vadd.f32 %v4297, %v4354
        %v4397 = vadd.f32 %v4298, %v4356
        %v4398 = vadd.f32 %v4299, %v4358
        %v4399 = vadd.f32 %v4300, %v4360
        %v4400 = vadd.f32 %v4301, %v4362
        %v4401 = vadd.f32 %v4302, %v4364
        %v4402 = vadd.f32 %v4303, %v4366
        %v4403 = vadd.f32 %v4304, %v4368
        %v4404 = vadd.f32 %v4305, %v4370
        %v4405 = vadd.f32 %v4306, %v4372
        %v4406 = vadd.f32 %v4307, %v4374
        %v4407 = vld [vmem:[#allocation7 + $0x38] sm:$0xfc]
        %v4408 = vld [vmem:[#allocation7 + $0x1b8] sm:$0x3]
        %v4411 = vrot.slane %v4407, 2
        %v4412 = vrot.slane %v4309, 2
        %v4413 = vsel %vm1454, %v4411, %v4412
        %v4414 = vrot.slane %v4310, 2
        %v4415 = vsel %vm1454, %v4412, %v4414
        %v4416 = vrot.slane %v4311, 2
        %v4417 = vsel %vm1454, %v4414, %v4416
        %v4418 = vrot.slane %v4312, 2
        %v4419 = vsel %vm1454, %v4416, %v4418
        %v4420 = vrot.slane %v4313, 2
        %v4421 = vsel %vm1454, %v4418, %v4420
        %v4422 = vrot.slane %v4314, 2
        %v4423 = vsel %vm1454, %v4420, %v4422
        %v4424 = vrot.slane %v4315, 2
        %v4425 = vsel %vm1454, %v4422, %v4424
        %v4426 = vrot.slane %v4316, 2
        %v4427 = vsel %vm1454, %v4424, %v4426
        %v4428 = vrot.slane %v4317, 2
        %v4429 = vsel %vm1454, %v4426, %v4428
        %v4430 = vrot.slane %v4318, 2
        %v4431 = vsel %vm1454, %v4428, %v4430
        %v4432 = vrot.slane %v4319, 2
        %v4433 = vsel %vm1454, %v4430, %v4432
        %v4434 = vrot.slane %v4320, 2
        %v4435 = vsel %vm1454, %v4432, %v4434
        %v4436 = vrot.slane %v4321, 2
        %v4437 = vsel %vm1454, %v4434, %v4436
        %v4438 = vrot.slane %v4322, 2
        %v4439 = vsel %vm1454, %v4436, %v4438
        %v4440 = vrot.slane %v4323, 2
        %v4441 = vsel %vm1454, %v4438, %v4440
        %v4442 = vrot.slane %v4408, 2
        %v4443 = vsel %vm1454, %v4440, %v4442
        %4444 = vrot.lane.b32.xlu0 %v4413, 96
        %v4445 = vpop.permute.xlu0 %4444
        %4446 = vrot.lane.b32.xlu0 %v4415, 96
        %v4447 = vpop.permute.xlu0 %4446
        %4448 = vrot.lane.b32.xlu0 %v4417, 96
        %v4449 = vpop.permute.xlu0 %4448
        %4450 = vrot.lane.b32.xlu0 %v4419, 96
        %v4451 = vpop.permute.xlu0 %4450
        %4452 = vrot.lane.b32.xlu0 %v4421, 96
        %v4453 = vpop.permute.xlu0 %4452
        %4454 = vrot.lane.b32.xlu0 %v4423, 96
        %v4455 = vpop.permute.xlu0 %4454
        %4456 = vrot.lane.b32.xlu0 %v4425, 96
        %v4457 = vpop.permute.xlu0 %4456
        %4458 = vrot.lane.b32.xlu0 %v4427, 96
        %v4459 = vpop.permute.xlu0 %4458
        %4460 = vrot.lane.b32.xlu0 %v4429, 96
        %v4461 = vpop.permute.xlu0 %4460
        %4462 = vrot.lane.b32.xlu0 %v4431, 96
        %v4463 = vpop.permute.xlu0 %4462
        %4464 = vrot.lane.b32.xlu0 %v4433, 96
        %v4465 = vpop.permute.xlu0 %4464
        %4466 = vrot.lane.b32.xlu0 %v4435, 96
        %v4467 = vpop.permute.xlu0 %4466
        %4468 = vrot.lane.b32.xlu0 %v4437, 96
        %v4469 = vpop.permute.xlu0 %4468
        %4470 = vrot.lane.b32.xlu0 %v4439, 96
        %v4471 = vpop.permute.xlu0 %4470
        %4472 = vrot.lane.b32.xlu0 %v4441, 96
        %v4473 = vpop.permute.xlu0 %4472
        %4474 = vrot.lane.b32.xlu0 %v4443, 96
        %v4475 = vpop.permute.xlu0 %4474
        %v4492 = vadd.f32 %v4391, %v4445
        %v4493 = vadd.f32 %v4392, %v4447
        %v4494 = vadd.f32 %v4393, %v4449
        %v4495 = vadd.f32 %v4394, %v4451
        %v4496 = vadd.f32 %v4395, %v4453
        %v4497 = vadd.f32 %v4396, %v4455
        %v4498 = vadd.f32 %v4397, %v4457
        %v4499 = vadd.f32 %v4398, %v4459
        %v4500 = vadd.f32 %v4399, %v4461
        %v4501 = vadd.f32 %v4400, %v4463
        %v4502 = vadd.f32 %v4401, %v4465
        %v4503 = vadd.f32 %v4402, %v4467
        %v4504 = vadd.f32 %v4403, %v4469
        %v4505 = vadd.f32 %v4404, %v4471
        %v4506 = vadd.f32 %v4405, %v4473
        %v4507 = vadd.f32 %v4406, %v4475
        %v4508 = vld [vmem:[#allocation7 + $0x1b8] sm:$0xff]
        %v4509 = vld [vmem:[#allocation7 + $0x1d0] sm:$0xff]
        %4512 = vrot.lane.b32.xlu0 %v4310, 64
        %v4513 = vpop.permute.xlu0 %4512
        %4514 = vrot.lane.b32.xlu0 %v4311, 64
        %v4515 = vpop.permute.xlu0 %4514
        %4516 = vrot.lane.b32.xlu0 %v4312, 64
        %v4517 = vpop.permute.xlu0 %4516
        %4518 = vrot.lane.b32.xlu0 %v4313, 64
        %v4519 = vpop.permute.xlu0 %4518
        %4520 = vrot.lane.b32.xlu0 %v4314, 64
        %v4521 = vpop.permute.xlu0 %4520
        %4522 = vrot.lane.b32.xlu0 %v4315, 64
        %v4523 = vpop.permute.xlu0 %4522
        %4524 = vrot.lane.b32.xlu0 %v4316, 64
        %v4525 = vpop.permute.xlu0 %4524
        %4526 = vrot.lane.b32.xlu0 %v4317, 64
        %v4527 = vpop.permute.xlu0 %4526
        %4528 = vrot.lane.b32.xlu0 %v4318, 64
        %v4529 = vpop.permute.xlu0 %4528
        %4530 = vrot.lane.b32.xlu0 %v4319, 64
        %v4531 = vpop.permute.xlu0 %4530
        %4532 = vrot.lane.b32.xlu0 %v4320, 64
        %v4533 = vpop.permute.xlu0 %4532
        %4534 = vrot.lane.b32.xlu0 %v4321, 64
        %v4535 = vpop.permute.xlu0 %4534
        %4536 = vrot.lane.b32.xlu0 %v4322, 64
        %v4537 = vpop.permute.xlu0 %4536
        %4538 = vrot.lane.b32.xlu0 %v4323, 64
        %v4539 = vpop.permute.xlu0 %4538
        %4540 = vrot.lane.b32.xlu0 %v4508, 64
        %v4541 = vpop.permute.xlu0 %4540
        %4542 = vrot.lane.b32.xlu0 %v4509, 64
        %v4543 = vpop.permute.xlu0 %4542
        %v4560 = vadd.f32 %v4492, %v4513
        %v4561 = vadd.f32 %v4493, %v4515
        %v4562 = vadd.f32 %v4494, %v4517
        %v4563 = vadd.f32 %v4495, %v4519
        %v4564 = vadd.f32 %v4496, %v4521
        %v4565 = vadd.f32 %v4497, %v4523
        %v4566 = vadd.f32 %v4498, %v4525
        %v4567 = vadd.f32 %v4499, %v4527
        %v4568 = vadd.f32 %v4500, %v4529
        %v4569 = vadd.f32 %v4501, %v4531
        %v4570 = vadd.f32 %v4502, %v4533
        %v4571 = vadd.f32 %v4503, %v4535
        %v4572 = vadd.f32 %v4504, %v4537
        %v4573 = vadd.f32 %v4505, %v4539
        %v4574 = vadd.f32 %v4506, %v4541
        %v4575 = vadd.f32 %v4507, %v4543
        %v4576 = vld [vmem:[#allocation7 + $0x68] sm:$0xfe]
        %v4577 = vld [vmem:[#allocation7 + $0x1e8] sm:$0x1]
        %v4580 = vrot.slane %v4576, 1
        %v4581 = vsel %vm1352, %v4580, %v4347
        %v4582 = vrot.slane %v4508, 1
        %v4583 = vsel %vm1352, %v4371, %v4582
        %v4584 = vrot.slane %v4509, 1
        %v4585 = vsel %vm1352, %v4582, %v4584
        %v4586 = vrot.slane %v4577, 1
        %v4587 = vsel %vm1352, %v4584, %v4586
        %4588 = vrot.lane.b32.xlu0 %v4581, 32
        %v4589 = vpop.permute.xlu0 %4588
        %4590 = vrot.lane.b32.xlu0 %v4350, 32
        %v4591 = vpop.permute.xlu0 %4590
        %4592 = vrot.lane.b32.xlu0 %v4352, 32
        %v4593 = vpop.permute.xlu0 %4592
        %4594 = vrot.lane.b32.xlu0 %v4354, 32
        %v4595 = vpop.permute.xlu0 %4594
        %4596 = vrot.lane.b32.xlu0 %v4356, 32
        %v4597 = vpop.permute.xlu0 %4596
        %4598 = vrot.lane.b32.xlu0 %v4358, 32
        %v4599 = vpop.permute.xlu0 %4598
        %4600 = vrot.lane.b32.xlu0 %v4360, 32
        %v4601 = vpop.permute.xlu0 %4600
        %4602 = vrot.lane.b32.xlu0 %v4362, 32
        %v4603 = vpop.permute.xlu0 %4602
        %4604 = vrot.lane.b32.xlu0 %v4364, 32
        %v4605 = vpop.permute.xlu0 %4604
        %4606 = vrot.lane.b32.xlu0 %v4366, 32
        %v4607 = vpop.permute.xlu0 %4606
        %4608 = vrot.lane.b32.xlu0 %v4368, 32
        %v4609 = vpop.permute.xlu0 %4608
        %4610 = vrot.lane.b32.xlu0 %v4370, 32
        %v4611 = vpop.permute.xlu0 %4610
        %4612 = vrot.lane.b32.xlu0 %v4372, 32
        %v4613 = vpop.permute.xlu0 %4612
        %4614 = vrot.lane.b32.xlu0 %v4583, 32
        %v4615 = vpop.permute.xlu0 %4614
        %4616 = vrot.lane.b32.xlu0 %v4585, 32
        %v4617 = vpop.permute.xlu0 %4616
        %4618 = vrot.lane.b32.xlu0 %v4587, 32
        %v4619 = vpop.permute.xlu0 %4618
        %v4636 = vadd.f32 %v4560, %v4589
        %v4637 = vadd.f32 %v4561, %v4591
        %v4638 = vadd.f32 %v4562, %v4593
        %v4639 = vadd.f32 %v4563, %v4595
        %v4640 = vadd.f32 %v4564, %v4597
        %v4641 = vadd.f32 %v4565, %v4599
        %v4642 = vadd.f32 %v4566, %v4601
        %v4643 = vadd.f32 %v4567, %v4603
        %v4644 = vadd.f32 %v4568, %v4605
        %v4645 = vadd.f32 %v4569, %v4607
        %v4646 = vadd.f32 %v4570, %v4609
        %v4647 = vadd.f32 %v4571, %v4611
        %v4648 = vadd.f32 %v4572, %v4613
        %v4649 = vadd.f32 %v4573, %v4615
        %v4650 = vadd.f32 %v4574, %v4617
        %v4651 = vadd.f32 %v4575, %v4619
        %v4652 = vld [vmem:[#allocation7 + $0x70] sm:$0xfc]
        %v4653 = vld [vmem:[#allocation7 + $0x88] sm:$0xff]
        %v4654 = vld [vmem:[#allocation7 + $0xa0] sm:$0xff]
        %v4655 = vld [vmem:[#allocation7 + $0xb8] sm:$0xff]
        %v4656 = vld [vmem:[#allocation7 + $0xd0] sm:$0xff]
        %v4657 = vld [vmem:[#allocation7 + $0xe8] sm:$0xff]
        %v4658 = vld [vmem:[#allocation7 + $0x100] sm:$0xff]
        %v4659 = vld [vmem:[#allocation7 + $0x118] sm:$0xff]
        %v4660 = vld [vmem:[#allocation7 + $0x130] sm:$0xff]
        %v4661 = vld [vmem:[#allocation7 + $0x148] sm:$0xff]
        %v4662 = vld [vmem:[#allocation7 + $0x160] sm:$0xff]
        %v4663 = vld [vmem:[#allocation7 + $0x178] sm:$0xff]
        %v4664 = vld [vmem:[#allocation7 + $0x190] sm:$0xff]
        %v4665 = vld [vmem:[#allocation7 + $0x1a8] sm:$0xff]
        %v4666 = vld [vmem:[#allocation7 + $0x1c0] sm:$0xff]
        %v4667 = vld [vmem:[#allocation7 + $0x1d8] sm:$0xff]
        %v4668 = vld [vmem:[#allocation7 + $0x1f0] sm:$0x3]
        %v4686 = vrot.slane %v4652, 2
        %v4687 = vrot.slane %v4653, 2
        %v4688 = vsel %vm1454, %v4686, %v4687
        %v4689 = vrot.slane %v4654, 2
        %v4690 = vsel %vm1454, %v4687, %v4689
        %v4691 = vrot.slane %v4655, 2
        %v4692 = vsel %vm1454, %v4689, %v4691
        %v4693 = vrot.slane %v4656, 2
        %v4694 = vsel %vm1454, %v4691, %v4693
        %v4695 = vrot.slane %v4657, 2
        %v4696 = vsel %vm1454, %v4693, %v4695
        %v4697 = vrot.slane %v4658, 2
        %v4698 = vsel %vm1454, %v4695, %v4697
        %v4699 = vrot.slane %v4659, 2
        %v4700 = vsel %vm1454, %v4697, %v4699
        %v4701 = vrot.slane %v4660, 2
        %v4702 = vsel %vm1454, %v4699, %v4701
        %v4703 = vrot.slane %v4661, 2
        %v4704 = vsel %vm1454, %v4701, %v4703
        %v4705 = vrot.slane %v4662, 2
        %v4706 = vsel %vm1454, %v4703, %v4705
        %v4707 = vrot.slane %v4663, 2
        %v4708 = vsel %vm1454, %v4705, %v4707
        %v4709 = vrot.slane %v4664, 2
        %v4710 = vsel %vm1454, %v4707, %v4709
        %v4711 = vrot.slane %v4665, 2
        %v4712 = vsel %vm1454, %v4709, %v4711
        %v4713 = vrot.slane %v4666, 2
        %v4714 = vsel %vm1454, %v4711, %v4713
        %v4715 = vrot.slane %v4667, 2
        %v4716 = vsel %vm1454, %v4713, %v4715
        %v4717 = vrot.slane %v4668, 2
        %v4718 = vsel %vm1454, %v4715, %v4717
        %v4735 = vadd.f32 %v4636, %v4688
        %v4736 = vadd.f32 %v4637, %v4690
        %v4737 = vadd.f32 %v4638, %v4692
        %v4738 = vadd.f32 %v4639, %v4694
        %v4739 = vadd.f32 %v4640, %v4696
        %v4740 = vadd.f32 %v4641, %v4698
        %v4741 = vadd.f32 %v4642, %v4700
        %v4742 = vadd.f32 %v4643, %v4702
        %v4743 = vadd.f32 %v4644, %v4704
        %v4744 = vadd.f32 %v4645, %v4706
        %v4745 = vadd.f32 %v4646, %v4708
        %v4746 = vadd.f32 %v4647, %v4710
        %v4747 = vadd.f32 %v4648, %v4712
        %v4748 = vadd.f32 %v4649, %v4714
        %v4749 = vadd.f32 %v4650, %v4716
        %v4750 = vadd.f32 %v4651, %v4718
        %v4751 = vmax.f32 %v4735, 0.0
        %v4752 = vmax.f32 %v4736, 0.0
        %v4753 = vmax.f32 %v4737, 0.0
        %v4754 = vmax.f32 %v4738, 0.0
        %v4755 = vmax.f32 %v4739, 0.0
        %v4756 = vmax.f32 %v4740, 0.0
        %v4757 = vmax.f32 %v4741, 0.0
        %v4758 = vmax.f32 %v4742, 0.0
        %v4759 = vmax.f32 %v4743, 0.0
        %v4760 = vmax.f32 %v4744, 0.0
        %v4761 = vmax.f32 %v4745, 0.0
        %v4762 = vmax.f32 %v4746, 0.0
        %v4763 = vmax.f32 %v4747, 0.0
        %v4764 = vmax.f32 %v4748, 0.0
        %v4765 = vmax.f32 %v4749, 0.0
        %v4766 = vmax.f32 %v4750, 0.0
        %v4767 = vpack.c.bf16 %v4752, %v4751
        %v4768 = vpack.c.bf16 %v4754, %v4753
        %v4769 = vpack.c.bf16 %v4756, %v4755
        %v4770 = vpack.c.bf16 %v4758, %v4757
        %v4771 = vpack.c.bf16 %v4760, %v4759
        %v4772 = vpack.c.bf16 %v4762, %v4761
        %v4773 = vpack.c.bf16 %v4764, %v4763
        %v4774 = vpack.c.bf16 %v4766, %v4765
        %v4783 = vunpack.c.l.b16 %v4767
        %v4784 = vunpack.c.h.b16 %v4767
        %v4785 = vunpack.c.l.b16 %v4768
        %v4786 = vunpack.c.h.b16 %v4768
        %v4787 = vunpack.c.l.b16 %v4769
        %v4788 = vunpack.c.h.b16 %v4769
        %v4789 = vunpack.c.l.b16 %v4770
        %v4790 = vunpack.c.h.b16 %v4770
        %v4791 = vunpack.c.l.b16 %v4771
        %v4792 = vunpack.c.h.b16 %v4771
        %v4793 = vunpack.c.l.b16 %v4772
        %v4794 = vunpack.c.h.b16 %v4772
        %v4795 = vunpack.c.l.b16 %v4773
        %v4796 = vunpack.c.h.b16 %v4773
        %v4797 = vunpack.c.l.b16 %v4774
        %v4798 = vunpack.c.h.b16 %v4774
        %v4799 = vpack.c.b16 %v4783, %v4783
        %v4800 = vpack.c.b16 %v4784, %v4784
        %v4801 = vpack.c.b16 %v4785, %v4785
        %v4802 = vpack.c.b16 %v4786, %v4786
        %v4803 = vpack.c.b16 %v4787, %v4787
        %v4804 = vpack.c.b16 %v4788, %v4788
        %v4805 = vpack.c.b16 %v4789, %v4789
        %v4806 = vpack.c.b16 %v4790, %v4790
        %v4807 = vpack.c.b16 %v4791, %v4791
        %v4808 = vpack.c.b16 %v4792, %v4792
        %v4809 = vpack.c.b16 %v4793, %v4793
        %v4810 = vpack.c.b16 %v4794, %v4794
        %v4811 = vpack.c.b16 %v4795, %v4795
        %v4812 = vpack.c.b16 %v4796, %v4796
        %v4813 = vpack.c.b16 %v4797, %v4797
        %v4814 = vpack.c.b16 %v4798, %v4798
        %4831 = vst.msk [vmem:[#allocation3] sm:$0xf] %vm2143, %v4799
        %4832 = vst.msk [vmem:[#allocation3 + $0x4] sm:$0xf] %vm2143, %v4800
        %4833 = vst.msk [vmem:[#allocation3 + $0x8] sm:$0xf] %vm2143, %v4801
        %4834 = vst.msk [vmem:[#allocation3 + $0xc] sm:$0xf] %vm2143, %v4802
        %4835 = vst.msk [vmem:[#allocation3 + $0x10] sm:$0xf] %vm2143, %v4803
        %4836 = vst.msk [vmem:[#allocation3 + $0x14] sm:$0xf] %vm2143, %v4804
        %4837 = vst.msk [vmem:[#allocation3 + $0x18] sm:$0xf] %vm2143, %v4805
        %4838 = vst.msk [vmem:[#allocation3 + $0x1c] sm:$0xf] %vm2143, %v4806
        %4839 = vst.msk [vmem:[#allocation3 + $0x20] sm:$0xf] %vm2143, %v4807
        %4840 = vst.msk [vmem:[#allocation3 + $0x24] sm:$0xf] %vm2143, %v4808
        %4841 = vst.msk [vmem:[#allocation3 + $0x28] sm:$0xf] %vm2143, %v4809
        %4842 = vst.msk [vmem:[#allocation3 + $0x2c] sm:$0xf] %vm2143, %v4810
        %4843 = vst.msk [vmem:[#allocation3 + $0x30] sm:$0xf] %vm2143, %v4811
        %4844 = vst.msk [vmem:[#allocation3 + $0x34] sm:$0xf] %vm2143, %v4812
        %4845 = vst.msk [vmem:[#allocation3 + $0x38] sm:$0xf] %vm2143, %v4813
        %4846 = vst.msk [vmem:[#allocation3 + $0x3c] sm:$0xf] %vm2143, %v4814
        %v4847 = vld [vmem:[#allocation7 + $0x180] sm:$0xff]
        %v4848 = vld [vmem:[#allocation7 + $0x198] sm:$0xff]
        %v4849 = vld [vmem:[#allocation7 + $0x1b0] sm:$0xff]
        %v4850 = vld [vmem:[#allocation7 + $0x1c8] sm:$0xff]
        %v4851 = vld [vmem:[#allocation7 + $0x1e0] sm:$0xff]
        %v4852 = vld [vmem:[#allocation7 + $0x1f8] sm:$0xff]
        %v4853 = vld [vmem:[#allocation7 + $0x210] sm:$0xff]
        %v4854 = vld [vmem:[#allocation7 + $0x228] sm:$0xff]
        %v4855 = vld [vmem:[#allocation7 + $0x240] sm:$0xff]
        %v4856 = vld [vmem:[#allocation7 + $0x258] sm:$0xff]
        %v4857 = vld [vmem:[#allocation7 + $0x270] sm:$0xff]
        %v4858 = vld [vmem:[#allocation7 + $0x288] sm:$0xff]
        %v4859 = vld [vmem:[#allocation7 + $0x2a0] sm:$0xff]
        %v4860 = vld [vmem:[#allocation7 + $0x2b8] sm:$0xff]
        %v4861 = vld [vmem:[#allocation7 + $0x2d0] sm:$0xff]
        %v4862 = vld [vmem:[#allocation7 + $0x2e8] sm:$0xff]
        %v4863 = vadd.f32 %v3989, %v4847
        %v4864 = vadd.f32 %v3989, %v4848
        %v4865 = vadd.f32 %v3989, %v4849
        %v4866 = vadd.f32 %v3989, %v4850
        %v4867 = vadd.f32 %v3989, %v4851
        %v4868 = vadd.f32 %v3989, %v4852
        %v4869 = vadd.f32 %v3989, %v4853
        %v4870 = vadd.f32 %v3989, %v4854
        %v4871 = vadd.f32 %v3989, %v4855
        %v4872 = vadd.f32 %v3989, %v4856
        %v4873 = vadd.f32 %v3989, %v4857
        %v4874 = vadd.f32 %v3989, %v4858
        %v4875 = vadd.f32 %v3989, %v4859
        %v4876 = vadd.f32 %v3989, %v4860
        %v4877 = vadd.f32 %v3989, %v4861
        %v4878 = vadd.f32 %v3989, %v4862
        %v4879 = vld [vmem:[#allocation7 + $0x180] sm:$0xfe]
        %v4880 = vld [vmem:[#allocation7 + $0x300] sm:$0x1]
        %v4898 = vrot.slane %v4879, 1
        %v4899 = vrot.slane %v4848, 1
        %v4900 = vsel %vm1352, %v4898, %v4899
        %v4901 = vrot.slane %v4849, 1
        %v4902 = vsel %vm1352, %v4899, %v4901
        %v4903 = vrot.slane %v4850, 1
        %v4904 = vsel %vm1352, %v4901, %v4903
        %v4905 = vrot.slane %v4851, 1
        %v4906 = vsel %vm1352, %v4903, %v4905
        %v4907 = vrot.slane %v4852, 1
        %v4908 = vsel %vm1352, %v4905, %v4907
        %v4909 = vrot.slane %v4853, 1
        %v4910 = vsel %vm1352, %v4907, %v4909
        %v4911 = vrot.slane %v4854, 1
        %v4912 = vsel %vm1352, %v4909, %v4911
        %v4913 = vrot.slane %v4855, 1
        %v4914 = vsel %vm1352, %v4911, %v4913
        %v4915 = vrot.slane %v4856, 1
        %v4916 = vsel %vm1352, %v4913, %v4915
        %v4917 = vrot.slane %v4857, 1
        %v4918 = vsel %vm1352, %v4915, %v4917
        %v4919 = vrot.slane %v4858, 1
        %v4920 = vsel %vm1352, %v4917, %v4919
        %v4921 = vrot.slane %v4859, 1
        %v4922 = vsel %vm1352, %v4919, %v4921
        %v4923 = vrot.slane %v4860, 1
        %v4924 = vsel %vm1352, %v4921, %v4923
        %v4925 = vrot.slane %v4861, 1
        %v4926 = vsel %vm1352, %v4923, %v4925
        %v4927 = vrot.slane %v4862, 1
        %v4928 = vsel %vm1352, %v4925, %v4927
        %v4929 = vrot.slane %v4880, 1
        %v4930 = vsel %vm1352, %v4927, %v4929
        %4931 = vrot.lane.b32.xlu0 %v4900, 96
        %v4932 = vpop.permute.xlu0 %4931
        %4933 = vrot.lane.b32.xlu0 %v4902, 96
        %v4934 = vpop.permute.xlu0 %4933
        %4935 = vrot.lane.b32.xlu0 %v4904, 96
        %v4936 = vpop.permute.xlu0 %4935
        %4937 = vrot.lane.b32.xlu0 %v4906, 96
        %v4938 = vpop.permute.xlu0 %4937
        %4939 = vrot.lane.b32.xlu0 %v4908, 96
        %v4940 = vpop.permute.xlu0 %4939
        %4941 = vrot.lane.b32.xlu0 %v4910, 96
        %v4942 = vpop.permute.xlu0 %4941
        %4943 = vrot.lane.b32.xlu0 %v4912, 96
        %v4944 = vpop.permute.xlu0 %4943
        %4945 = vrot.lane.b32.xlu0 %v4914, 96
        %v4946 = vpop.permute.xlu0 %4945
        %4947 = vrot.lane.b32.xlu0 %v4916, 96
        %v4948 = vpop.permute.xlu0 %4947
        %4949 = vrot.lane.b32.xlu0 %v4918, 96
        %v4950 = vpop.permute.xlu0 %4949
        %4951 = vrot.lane.b32.xlu0 %v4920, 96
        %v4952 = vpop.permute.xlu0 %4951
        %4953 = vrot.lane.b32.xlu0 %v4922, 96
        %v4954 = vpop.permute.xlu0 %4953
        %4955 = vrot.lane.b32.xlu0 %v4924, 96
        %v4956 = vpop.permute.xlu0 %4955
        %4957 = vrot.lane.b32.xlu0 %v4926, 96
        %v4958 = vpop.permute.xlu0 %4957
        %4959 = vrot.lane.b32.xlu0 %v4928, 96
        %v4960 = vpop.permute.xlu0 %4959
        %4961 = vrot.lane.b32.xlu0 %v4930, 96
        %v4962 = vpop.permute.xlu0 %4961
        %v4979 = vadd.f32 %v4863, %v4932
        %v4980 = vadd.f32 %v4864, %v4934
        %v4981 = vadd.f32 %v4865, %v4936
        %v4982 = vadd.f32 %v4866, %v4938
        %v4983 = vadd.f32 %v4867, %v4940
        %v4984 = vadd.f32 %v4868, %v4942
        %v4985 = vadd.f32 %v4869, %v4944
        %v4986 = vadd.f32 %v4870, %v4946
        %v4987 = vadd.f32 %v4871, %v4948
        %v4988 = vadd.f32 %v4872, %v4950
        %v4989 = vadd.f32 %v4873, %v4952
        %v4990 = vadd.f32 %v4874, %v4954
        %v4991 = vadd.f32 %v4875, %v4956
        %v4992 = vadd.f32 %v4876, %v4958
        %v4993 = vadd.f32 %v4877, %v4960
        %v4994 = vadd.f32 %v4878, %v4962
        %v4995 = vld [vmem:[#allocation7 + $0x180] sm:$0xfc]
        %v4996 = vld [vmem:[#allocation7 + $0x300] sm:$0x3]
        %v4999 = vrot.slane %v4995, 2
        %v5000 = vrot.slane %v4848, 2
        %v5001 = vsel %vm1454, %v4999, %v5000
        %v5002 = vrot.slane %v4849, 2
        %v5003 = vsel %vm1454, %v5000, %v5002
        %v5004 = vrot.slane %v4850, 2
        %v5005 = vsel %vm1454, %v5002, %v5004
        %v5006 = vrot.slane %v4851, 2
        %v5007 = vsel %vm1454, %v5004, %v5006
        %v5008 = vrot.slane %v4852, 2
        %v5009 = vsel %vm1454, %v5006, %v5008
        %v5010 = vrot.slane %v4853, 2
        %v5011 = vsel %vm1454, %v5008, %v5010
        %v5012 = vrot.slane %v4854, 2
        %v5013 = vsel %vm1454, %v5010, %v5012
        %v5014 = vrot.slane %v4855, 2
        %v5015 = vsel %vm1454, %v5012, %v5014
        %v5016 = vrot.slane %v4856, 2
        %v5017 = vsel %vm1454, %v5014, %v5016
        %v5018 = vrot.slane %v4857, 2
        %v5019 = vsel %vm1454, %v5016, %v5018
        %v5020 = vrot.slane %v4858, 2
        %v5021 = vsel %vm1454, %v5018, %v5020
        %v5022 = vrot.slane %v4859, 2
        %v5023 = vsel %vm1454, %v5020, %v5022
        %v5024 = vrot.slane %v4860, 2
        %v5025 = vsel %vm1454, %v5022, %v5024
        %v5026 = vrot.slane %v4861, 2
        %v5027 = vsel %vm1454, %v5024, %v5026
        %v5028 = vrot.slane %v4862, 2
        %v5029 = vsel %vm1454, %v5026, %v5028
        %v5030 = vrot.slane %v4996, 2
        %v5031 = vsel %vm1454, %v5028, %v5030
        %5032 = vrot.lane.b32.xlu0 %v5001, 64
        %v5033 = vpop.permute.xlu0 %5032
        %5034 = vrot.lane.b32.xlu0 %v5003, 64
        %v5035 = vpop.permute.xlu0 %5034
        %5036 = vrot.lane.b32.xlu0 %v5005, 64
        %v5037 = vpop.permute.xlu0 %5036
        %5038 = vrot.lane.b32.xlu0 %v5007, 64
        %v5039 = vpop.permute.xlu0 %5038
        %5040 = vrot.lane.b32.xlu0 %v5009, 64
        %v5041 = vpop.permute.xlu0 %5040
        %5042 = vrot.lane.b32.xlu0 %v5011, 64
        %v5043 = vpop.permute.xlu0 %5042
        %5044 = vrot.lane.b32.xlu0 %v5013, 64
        %v5045 = vpop.permute.xlu0 %5044
        %5046 = vrot.lane.b32.xlu0 %v5015, 64
        %v5047 = vpop.permute.xlu0 %5046
        %5048 = vrot.lane.b32.xlu0 %v5017, 64
        %v5049 = vpop.permute.xlu0 %5048
        %5050 = vrot.lane.b32.xlu0 %v5019, 64
        %v5051 = vpop.permute.xlu0 %5050
        %5052 = vrot.lane.b32.xlu0 %v5021, 64
        %v5053 = vpop.permute.xlu0 %5052
        %5054 = vrot.lane.b32.xlu0 %v5023, 64
        %v5055 = vpop.permute.xlu0 %5054
        %5056 = vrot.lane.b32.xlu0 %v5025, 64
        %v5057 = vpop.permute.xlu0 %5056
        %5058 = vrot.lane.b32.xlu0 %v5027, 64
        %v5059 = vpop.permute.xlu0 %5058
        %5060 = vrot.lane.b32.xlu0 %v5029, 64
        %v5061 = vpop.permute.xlu0 %5060
        %5062 = vrot.lane.b32.xlu0 %v5031, 64
        %v5063 = vpop.permute.xlu0 %5062
        %v5080 = vadd.f32 %v4979, %v5033
        %v5081 = vadd.f32 %v4980, %v5035
        %v5082 = vadd.f32 %v4981, %v5037
        %v5083 = vadd.f32 %v4982, %v5039
        %v5084 = vadd.f32 %v4983, %v5041
        %v5085 = vadd.f32 %v4984, %v5043
        %v5086 = vadd.f32 %v4985, %v5045
        %v5087 = vadd.f32 %v4986, %v5047
        %v5088 = vadd.f32 %v4987, %v5049
        %v5089 = vadd.f32 %v4988, %v5051
        %v5090 = vadd.f32 %v4989, %v5053
        %v5091 = vadd.f32 %v4990, %v5055
        %v5092 = vadd.f32 %v4991, %v5057
        %v5093 = vadd.f32 %v4992, %v5059
        %v5094 = vadd.f32 %v4993, %v5061
        %v5095 = vadd.f32 %v4994, %v5063
        %v5096 = vld [vmem:[#allocation7 + $0x300] sm:$0xff]
        %v5097 = vld [vmem:[#allocation7 + $0x318] sm:$0xff]
        %5100 = vrot.lane.b32.xlu0 %v4849, 32
        %v5101 = vpop.permute.xlu0 %5100
        %5102 = vrot.lane.b32.xlu0 %v4850, 32
        %v5103 = vpop.permute.xlu0 %5102
        %5104 = vrot.lane.b32.xlu0 %v4851, 32
        %v5105 = vpop.permute.xlu0 %5104
        %5106 = vrot.lane.b32.xlu0 %v4852, 32
        %v5107 = vpop.permute.xlu0 %5106
        %5108 = vrot.lane.b32.xlu0 %v4853, 32
        %v5109 = vpop.permute.xlu0 %5108
        %5110 = vrot.lane.b32.xlu0 %v4854, 32
        %v5111 = vpop.permute.xlu0 %5110
        %5112 = vrot.lane.b32.xlu0 %v4855, 32
        %v5113 = vpop.permute.xlu0 %5112
        %5114 = vrot.lane.b32.xlu0 %v4856, 32
        %v5115 = vpop.permute.xlu0 %5114
        %5116 = vrot.lane.b32.xlu0 %v4857, 32
        %v5117 = vpop.permute.xlu0 %5116
        %5118 = vrot.lane.b32.xlu0 %v4858, 32
        %v5119 = vpop.permute.xlu0 %5118
        %5120 = vrot.lane.b32.xlu0 %v4859, 32
        %v5121 = vpop.permute.xlu0 %5120
        %5122 = vrot.lane.b32.xlu0 %v4860, 32
        %v5123 = vpop.permute.xlu0 %5122
        %5124 = vrot.lane.b32.xlu0 %v4861, 32
        %v5125 = vpop.permute.xlu0 %5124
        %5126 = vrot.lane.b32.xlu0 %v4862, 32
        %v5127 = vpop.permute.xlu0 %5126
        %5128 = vrot.lane.b32.xlu0 %v5096, 32
        %v5129 = vpop.permute.xlu0 %5128
        %5130 = vrot.lane.b32.xlu0 %v5097, 32
        %v5131 = vpop.permute.xlu0 %5130
        %v5148 = vadd.f32 %v5080, %v5101
        %v5149 = vadd.f32 %v5081, %v5103
        %v5150 = vadd.f32 %v5082, %v5105
        %v5151 = vadd.f32 %v5083, %v5107
        %v5152 = vadd.f32 %v5084, %v5109
        %v5153 = vadd.f32 %v5085, %v5111
        %v5154 = vadd.f32 %v5086, %v5113
        %v5155 = vadd.f32 %v5087, %v5115
        %v5156 = vadd.f32 %v5088, %v5117
        %v5157 = vadd.f32 %v5089, %v5119
        %v5158 = vadd.f32 %v5090, %v5121
        %v5159 = vadd.f32 %v5091, %v5123
        %v5160 = vadd.f32 %v5092, %v5125
        %v5161 = vadd.f32 %v5093, %v5127
        %v5162 = vadd.f32 %v5094, %v5129
        %v5163 = vadd.f32 %v5095, %v5131
        %v5164 = vld [vmem:[#allocation7 + $0x1b8] sm:$0xfe]
        %v5165 = vld [vmem:[#allocation7 + $0x1d0] sm:$0xff]
        %v5166 = vld [vmem:[#allocation7 + $0x1e8] sm:$0xff]
        %v5167 = vld [vmem:[#allocation7 + $0x200] sm:$0xff]
        %v5168 = vld [vmem:[#allocation7 + $0x218] sm:$0xff]
        %v5169 = vld [vmem:[#allocation7 + $0x230] sm:$0xff]
        %v5170 = vld [vmem:[#allocation7 + $0x248] sm:$0xff]
        %v5171 = vld [vmem:[#allocation7 + $0x260] sm:$0xff]
        %v5172 = vld [vmem:[#allocation7 + $0x278] sm:$0xff]
        %v5173 = vld [vmem:[#allocation7 + $0x290] sm:$0xff]
        %v5174 = vld [vmem:[#allocation7 + $0x2a8] sm:$0xff]
        %v5175 = vld [vmem:[#allocation7 + $0x2c0] sm:$0xff]
        %v5176 = vld [vmem:[#allocation7 + $0x2d8] sm:$0xff]
        %v5177 = vld [vmem:[#allocation7 + $0x2f0] sm:$0xff]
        %v5178 = vld [vmem:[#allocation7 + $0x308] sm:$0xff]
        %v5179 = vld [vmem:[#allocation7 + $0x320] sm:$0xff]
        %v5180 = vld [vmem:[#allocation7 + $0x338] sm:$0x1]
        %v5198 = vrot.slane %v5164, 1
        %v5199 = vrot.slane %v5165, 1
        %v5200 = vsel %vm1352, %v5198, %v5199
        %v5201 = vrot.slane %v5166, 1
        %v5202 = vsel %vm1352, %v5199, %v5201
        %v5203 = vrot.slane %v5167, 1
        %v5204 = vsel %vm1352, %v5201, %v5203
        %v5205 = vrot.slane %v5168, 1
        %v5206 = vsel %vm1352, %v5203, %v5205
        %v5207 = vrot.slane %v5169, 1
        %v5208 = vsel %vm1352, %v5205, %v5207
        %v5209 = vrot.slane %v5170, 1
        %v5210 = vsel %vm1352, %v5207, %v5209
        %v5211 = vrot.slane %v5171, 1
        %v5212 = vsel %vm1352, %v5209, %v5211
        %v5213 = vrot.slane %v5172, 1
        %v5214 = vsel %vm1352, %v5211, %v5213
        %v5215 = vrot.slane %v5173, 1
        %v5216 = vsel %vm1352, %v5213, %v5215
        %v5217 = vrot.slane %v5174, 1
        %v5218 = vsel %vm1352, %v5215, %v5217
        %v5219 = vrot.slane %v5175, 1
        %v5220 = vsel %vm1352, %v5217, %v5219
        %v5221 = vrot.slane %v5176, 1
        %v5222 = vsel %vm1352, %v5219, %v5221
        %v5223 = vrot.slane %v5177, 1
        %v5224 = vsel %vm1352, %v5221, %v5223
        %v5225 = vrot.slane %v5178, 1
        %v5226 = vsel %vm1352, %v5223, %v5225
        %v5227 = vrot.slane %v5179, 1
        %v5228 = vsel %vm1352, %v5225, %v5227
        %v5229 = vrot.slane %v5180, 1
        %v5230 = vsel %vm1352, %v5227, %v5229
        %v5247 = vadd.f32 %v5148, %v5200
        %v5248 = vadd.f32 %v5149, %v5202
        %v5249 = vadd.f32 %v5150, %v5204
        %v5250 = vadd.f32 %v5151, %v5206
        %v5251 = vadd.f32 %v5152, %v5208
        %v5252 = vadd.f32 %v5153, %v5210
        %v5253 = vadd.f32 %v5154, %v5212
        %v5254 = vadd.f32 %v5155, %v5214
        %v5255 = vadd.f32 %v5156, %v5216
        %v5256 = vadd.f32 %v5157, %v5218
        %v5257 = vadd.f32 %v5158, %v5220
        %v5258 = vadd.f32 %v5159, %v5222
        %v5259 = vadd.f32 %v5160, %v5224
        %v5260 = vadd.f32 %v5161, %v5226
        %v5261 = vadd.f32 %v5162, %v5228
        %v5262 = vadd.f32 %v5163, %v5230
        %v5263 = vld [vmem:[#allocation7 + $0x1b8] sm:$0xfc]
        %v5264 = vld [vmem:[#allocation7 + $0x338] sm:$0x3]
        %v5267 = vrot.slane %v5263, 2
        %v5268 = vrot.slane %v5165, 2
        %v5269 = vsel %vm1454, %v5267, %v5268
        %v5270 = vrot.slane %v5166, 2
        %v5271 = vsel %vm1454, %v5268, %v5270
        %v5272 = vrot.slane %v5167, 2
        %v5273 = vsel %vm1454, %v5270, %v5272
        %v5274 = vrot.slane %v5168, 2
        %v5275 = vsel %vm1454, %v5272, %v5274
        %v5276 = vrot.slane %v5169, 2
        %v5277 = vsel %vm1454, %v5274, %v5276
        %v5278 = vrot.slane %v5170, 2
        %v5279 = vsel %vm1454, %v5276, %v5278
        %v5280 = vrot.slane %v5171, 2
        %v5281 = vsel %vm1454, %v5278, %v5280
        %v5282 = vrot.slane %v5172, 2
        %v5283 = vsel %vm1454, %v5280, %v5282
        %v5284 = vrot.slane %v5173, 2
        %v5285 = vsel %vm1454, %v5282, %v5284
        %v5286 = vrot.slane %v5174, 2
        %v5287 = vsel %vm1454, %v5284, %v5286
        %v5288 = vrot.slane %v5175, 2
        %v5289 = vsel %vm1454, %v5286, %v5288
        %v5290 = vrot.slane %v5176, 2
        %v5291 = vsel %vm1454, %v5288, %v5290
        %v5292 = vrot.slane %v5177, 2
        %v5293 = vsel %vm1454, %v5290, %v5292
        %v5294 = vrot.slane %v5178, 2
        %v5295 = vsel %vm1454, %v5292, %v5294
        %v5296 = vrot.slane %v5179, 2
        %v5297 = vsel %vm1454, %v5294, %v5296
        %v5298 = vrot.slane %v5264, 2
        %v5299 = vsel %vm1454, %v5296, %v5298
        %5300 = vrot.lane.b32.xlu0 %v5269, 96
        %v5301 = vpop.permute.xlu0 %5300
        %5302 = vrot.lane.b32.xlu0 %v5271, 96
        %v5303 = vpop.permute.xlu0 %5302
        %5304 = vrot.lane.b32.xlu0 %v5273, 96
        %v5305 = vpop.permute.xlu0 %5304
        %5306 = vrot.lane.b32.xlu0 %v5275, 96
        %v5307 = vpop.permute.xlu0 %5306
        %5308 = vrot.lane.b32.xlu0 %v5277, 96
        %v5309 = vpop.permute.xlu0 %5308
        %5310 = vrot.lane.b32.xlu0 %v5279, 96
        %v5311 = vpop.permute.xlu0 %5310
        %5312 = vrot.lane.b32.xlu0 %v5281, 96
        %v5313 = vpop.permute.xlu0 %5312
        %5314 = vrot.lane.b32.xlu0 %v5283, 96
        %v5315 = vpop.permute.xlu0 %5314
        %5316 = vrot.lane.b32.xlu0 %v5285, 96
        %v5317 = vpop.permute.xlu0 %5316
        %5318 = vrot.lane.b32.xlu0 %v5287, 96
        %v5319 = vpop.permute.xlu0 %5318
        %5320 = vrot.lane.b32.xlu0 %v5289, 96
        %v5321 = vpop.permute.xlu0 %5320
        %5322 = vrot.lane.b32.xlu0 %v5291, 96
        %v5323 = vpop.permute.xlu0 %5322
        %5324 = vrot.lane.b32.xlu0 %v5293, 96
        %v5325 = vpop.permute.xlu0 %5324
        %5326 = vrot.lane.b32.xlu0 %v5295, 96
        %v5327 = vpop.permute.xlu0 %5326
        %5328 = vrot.lane.b32.xlu0 %v5297, 96
        %v5329 = vpop.permute.xlu0 %5328
        %5330 = vrot.lane.b32.xlu0 %v5299, 96
        %v5331 = vpop.permute.xlu0 %5330
        %v5348 = vadd.f32 %v5247, %v5301
        %v5349 = vadd.f32 %v5248, %v5303
        %v5350 = vadd.f32 %v5249, %v5305
        %v5351 = vadd.f32 %v5250, %v5307
        %v5352 = vadd.f32 %v5251, %v5309
        %v5353 = vadd.f32 %v5252, %v5311
        %v5354 = vadd.f32 %v5253, %v5313
        %v5355 = vadd.f32 %v5254, %v5315
        %v5356 = vadd.f32 %v5255, %v5317
        %v5357 = vadd.f32 %v5256, %v5319
        %v5358 = vadd.f32 %v5257, %v5321
        %v5359 = vadd.f32 %v5258, %v5323
        %v5360 = vadd.f32 %v5259, %v5325
        %v5361 = vadd.f32 %v5260, %v5327
        %v5362 = vadd.f32 %v5261, %v5329
        %v5363 = vadd.f32 %v5262, %v5331
        %v5364 = vld [vmem:[#allocation7 + $0x338] sm:$0xff]
        %v5365 = vld [vmem:[#allocation7 + $0x350] sm:$0xff]
        %5368 = vrot.lane.b32.xlu0 %v5166, 64
        %v5369 = vpop.permute.xlu0 %5368
        %5370 = vrot.lane.b32.xlu0 %v5167, 64
        %v5371 = vpop.permute.xlu0 %5370
        %5372 = vrot.lane.b32.xlu0 %v5168, 64
        %v5373 = vpop.permute.xlu0 %5372
        %5374 = vrot.lane.b32.xlu0 %v5169, 64
        %v5375 = vpop.permute.xlu0 %5374
        %5376 = vrot.lane.b32.xlu0 %v5170, 64
        %v5377 = vpop.permute.xlu0 %5376
        %5378 = vrot.lane.b32.xlu0 %v5171, 64
        %v5379 = vpop.permute.xlu0 %5378
        %5380 = vrot.lane.b32.xlu0 %v5172, 64
        %v5381 = vpop.permute.xlu0 %5380
        %5382 = vrot.lane.b32.xlu0 %v5173, 64
        %v5383 = vpop.permute.xlu0 %5382
        %5384 = vrot.lane.b32.xlu0 %v5174, 64
        %v5385 = vpop.permute.xlu0 %5384
        %5386 = vrot.lane.b32.xlu0 %v5175, 64
        %v5387 = vpop.permute.xlu0 %5386
        %5388 = vrot.lane.b32.xlu0 %v5176, 64
        %v5389 = vpop.permute.xlu0 %5388
        %5390 = vrot.lane.b32.xlu0 %v5177, 64
        %v5391 = vpop.permute.xlu0 %5390
        %5392 = vrot.lane.b32.xlu0 %v5178, 64
        %v5393 = vpop.permute.xlu0 %5392
        %5394 = vrot.lane.b32.xlu0 %v5179, 64
        %v5395 = vpop.permute.xlu0 %5394
        %5396 = vrot.lane.b32.xlu0 %v5364, 64
        %v5397 = vpop.permute.xlu0 %5396
        %5398 = vrot.lane.b32.xlu0 %v5365, 64
        %v5399 = vpop.permute.xlu0 %5398
        %v5416 = vadd.f32 %v5348, %v5369
        %v5417 = vadd.f32 %v5349, %v5371
        %v5418 = vadd.f32 %v5350, %v5373
        %v5419 = vadd.f32 %v5351, %v5375
        %v5420 = vadd.f32 %v5352, %v5377
        %v5421 = vadd.f32 %v5353, %v5379
        %v5422 = vadd.f32 %v5354, %v5381
        %v5423 = vadd.f32 %v5355, %v5383
        %v5424 = vadd.f32 %v5356, %v5385
        %v5425 = vadd.f32 %v5357, %v5387
        %v5426 = vadd.f32 %v5358, %v5389
        %v5427 = vadd.f32 %v5359, %v5391
        %v5428 = vadd.f32 %v5360, %v5393
        %v5429 = vadd.f32 %v5361, %v5395
        %v5430 = vadd.f32 %v5362, %v5397
        %v5431 = vadd.f32 %v5363, %v5399
        %v5432 = vld [vmem:[#allocation7 + $0x1e8] sm:$0xfe]
        %v5433 = vld [vmem:[#allocation7 + $0x368] sm:$0x1]
        %v5436 = vrot.slane %v5432, 1
        %v5437 = vsel %vm1352, %v5436, %v5203
        %v5438 = vrot.slane %v5364, 1
        %v5439 = vsel %vm1352, %v5227, %v5438
        %v5440 = vrot.slane %v5365, 1
        %v5441 = vsel %vm1352, %v5438, %v5440
        %v5442 = vrot.slane %v5433, 1
        %v5443 = vsel %vm1352, %v5440, %v5442
        %5444 = vrot.lane.b32.xlu0 %v5437, 32
        %v5445 = vpop.permute.xlu0 %5444
        %5446 = vrot.lane.b32.xlu0 %v5206, 32
        %v5447 = vpop.permute.xlu0 %5446
        %5448 = vrot.lane.b32.xlu0 %v5208, 32
        %v5449 = vpop.permute.xlu0 %5448
        %5450 = vrot.lane.b32.xlu0 %v5210, 32
        %v5451 = vpop.permute.xlu0 %5450
        %5452 = vrot.lane.b32.xlu0 %v5212, 32
        %v5453 = vpop.permute.xlu0 %5452
        %5454 = vrot.lane.b32.xlu0 %v5214, 32
        %v5455 = vpop.permute.xlu0 %5454
        %5456 = vrot.lane.b32.xlu0 %v5216, 32
        %v5457 = vpop.permute.xlu0 %5456
        %5458 = vrot.lane.b32.xlu0 %v5218, 32
        %v5459 = vpop.permute.xlu0 %5458
        %5460 = vrot.lane.b32.xlu0 %v5220, 32
        %v5461 = vpop.permute.xlu0 %5460
        %5462 = vrot.lane.b32.xlu0 %v5222, 32
        %v5463 = vpop.permute.xlu0 %5462
        %5464 = vrot.lane.b32.xlu0 %v5224, 32
        %v5465 = vpop.permute.xlu0 %5464
        %5466 = vrot.lane.b32.xlu0 %v5226, 32
        %v5467 = vpop.permute.xlu0 %5466
        %5468 = vrot.lane.b32.xlu0 %v5228, 32
        %v5469 = vpop.permute.xlu0 %5468
        %5470 = vrot.lane.b32.xlu0 %v5439, 32
        %v5471 = vpop.permute.xlu0 %5470
        %5472 = vrot.lane.b32.xlu0 %v5441, 32
        %v5473 = vpop.permute.xlu0 %5472
        %5474 = vrot.lane.b32.xlu0 %v5443, 32
        %v5475 = vpop.permute.xlu0 %5474
        %v5492 = vadd.f32 %v5416, %v5445
        %v5493 = vadd.f32 %v5417, %v5447
        %v5494 = vadd.f32 %v5418, %v5449
        %v5495 = vadd.f32 %v5419, %v5451
        %v5496 = vadd.f32 %v5420, %v5453
        %v5497 = vadd.f32 %v5421, %v5455
        %v5498 = vadd.f32 %v5422, %v5457
        %v5499 = vadd.f32 %v5423, %v5459
        %v5500 = vadd.f32 %v5424, %v5461
        %v5501 = vadd.f32 %v5425, %v5463
        %v5502 = vadd.f32 %v5426, %v5465
        %v5503 = vadd.f32 %v5427, %v5467
        %v5504 = vadd.f32 %v5428, %v5469
        %v5505 = vadd.f32 %v5429, %v5471
        %v5506 = vadd.f32 %v5430, %v5473
        %v5507 = vadd.f32 %v5431, %v5475
        %v5508 = vld [vmem:[#allocation7 + $0x1f0] sm:$0xfc]
        %v5509 = vld [vmem:[#allocation7 + $0x208] sm:$0xff]
        %v5510 = vld [vmem:[#allocation7 + $0x220] sm:$0xff]
        %v5511 = vld [vmem:[#allocation7 + $0x238] sm:$0xff]
        %v5512 = vld [vmem:[#allocation7 + $0x250] sm:$0xff]
        %v5513 = vld [vmem:[#allocation7 + $0x268] sm:$0xff]
        %v5514 = vld [vmem:[#allocation7 + $0x280] sm:$0xff]
        %v5515 = vld [vmem:[#allocation7 + $0x298] sm:$0xff]
        %v5516 = vld [vmem:[#allocation7 + $0x2b0] sm:$0xff]
        %v5517 = vld [vmem:[#allocation7 + $0x2c8] sm:$0xff]
        %v5518 = vld [vmem:[#allocation7 + $0x2e0] sm:$0xff]
        %v5519 = vld [vmem:[#allocation7 + $0x2f8] sm:$0xff]
        %v5520 = vld [vmem:[#allocation7 + $0x310] sm:$0xff]
        %v5521 = vld [vmem:[#allocation7 + $0x328] sm:$0xff]
        %v5522 = vld [vmem:[#allocation7 + $0x340] sm:$0xff]
        %v5523 = vld [vmem:[#allocation7 + $0x358] sm:$0xff]
        %v5524 = vld [vmem:[#allocation7 + $0x370] sm:$0x3]
        %v5542 = vrot.slane %v5508, 2
        %v5543 = vrot.slane %v5509, 2
        %v5544 = vsel %vm1454, %v5542, %v5543
        %v5545 = vrot.slane %v5510, 2
        %v5546 = vsel %vm1454, %v5543, %v5545
        %v5547 = vrot.slane %v5511, 2
        %v5548 = vsel %vm1454, %v5545, %v5547
        %v5549 = vrot.slane %v5512, 2
        %v5550 = vsel %vm1454, %v5547, %v5549
        %v5551 = vrot.slane %v5513, 2
        %v5552 = vsel %vm1454, %v5549, %v5551
        %v5553 = vrot.slane %v5514, 2
        %v5554 = vsel %vm1454, %v5551, %v5553
        %v5555 = vrot.slane %v5515, 2
        %v5556 = vsel %vm1454, %v5553, %v5555
        %v5557 = vrot.slane %v5516, 2
        %v5558 = vsel %vm1454, %v5555, %v5557
        %v5559 = vrot.slane %v5517, 2
        %v5560 = vsel %vm1454, %v5557, %v5559
        %v5561 = vrot.slane %v5518, 2
        %v5562 = vsel %vm1454, %v5559, %v5561
        %v5563 = vrot.slane %v5519, 2
        %v5564 = vsel %vm1454, %v5561, %v5563
        %v5565 = vrot.slane %v5520, 2
        %v5566 = vsel %vm1454, %v5563, %v5565
        %v5567 = vrot.slane %v5521, 2
        %v5568 = vsel %vm1454, %v5565, %v5567
        %v5569 = vrot.slane %v5522, 2
        %v5570 = vsel %vm1454, %v5567, %v5569
        %v5571 = vrot.slane %v5523, 2
        %v5572 = vsel %vm1454, %v5569, %v5571
        %v5573 = vrot.slane %v5524, 2
        %v5574 = vsel %vm1454, %v5571, %v5573
        %v5591 = vadd.f32 %v5492, %v5544
        %v5592 = vadd.f32 %v5493, %v5546
        %v5593 = vadd.f32 %v5494, %v5548
        %v5594 = vadd.f32 %v5495, %v5550
        %v5595 = vadd.f32 %v5496, %v5552
        %v5596 = vadd.f32 %v5497, %v5554
        %v5597 = vadd.f32 %v5498, %v5556
        %v5598 = vadd.f32 %v5499, %v5558
        %v5599 = vadd.f32 %v5500, %v5560
        %v5600 = vadd.f32 %v5501, %v5562
        %v5601 = vadd.f32 %v5502, %v5564
        %v5602 = vadd.f32 %v5503, %v5566
        %v5603 = vadd.f32 %v5504, %v5568
        %v5604 = vadd.f32 %v5505, %v5570
        %v5605 = vadd.f32 %v5506, %v5572
        %v5606 = vadd.f32 %v5507, %v5574
        %v5607 = vmax.f32 %v5591, 0.0
        %v5608 = vmax.f32 %v5592, 0.0
        %v5609 = vmax.f32 %v5593, 0.0
        %v5610 = vmax.f32 %v5594, 0.0
        %v5611 = vmax.f32 %v5595, 0.0
        %v5612 = vmax.f32 %v5596, 0.0
        %v5613 = vmax.f32 %v5597, 0.0
        %v5614 = vmax.f32 %v5598, 0.0
        %v5615 = vmax.f32 %v5599, 0.0
        %v5616 = vmax.f32 %v5600, 0.0
        %v5617 = vmax.f32 %v5601, 0.0
        %v5618 = vmax.f32 %v5602, 0.0
        %v5619 = vmax.f32 %v5603, 0.0
        %v5620 = vmax.f32 %v5604, 0.0
        %v5621 = vmax.f32 %v5605, 0.0
        %v5622 = vmax.f32 %v5606, 0.0
        %v5623 = vpack.c.bf16 %v5608, %v5607
        %v5624 = vpack.c.bf16 %v5610, %v5609
        %v5625 = vpack.c.bf16 %v5612, %v5611
        %v5626 = vpack.c.bf16 %v5614, %v5613
        %v5627 = vpack.c.bf16 %v5616, %v5615
        %v5628 = vpack.c.bf16 %v5618, %v5617
        %v5629 = vpack.c.bf16 %v5620, %v5619
        %v5630 = vpack.c.bf16 %v5622, %v5621
        %v5639 = vunpack.c.l.b16 %v5623
        %v5640 = vunpack.c.h.b16 %v5623
        %v5641 = vunpack.c.l.b16 %v5624
        %v5642 = vunpack.c.h.b16 %v5624
        %v5643 = vunpack.c.l.b16 %v5625
        %v5644 = vunpack.c.h.b16 %v5625
        %v5645 = vunpack.c.l.b16 %v5626
        %v5646 = vunpack.c.h.b16 %v5626
        %v5647 = vunpack.c.l.b16 %v5627
        %v5648 = vunpack.c.h.b16 %v5627
        %v5649 = vunpack.c.l.b16 %v5628
        %v5650 = vunpack.c.h.b16 %v5628
        %v5651 = vunpack.c.l.b16 %v5629
        %v5652 = vunpack.c.h.b16 %v5629
        %v5653 = vunpack.c.l.b16 %v5630
        %v5654 = vunpack.c.h.b16 %v5630
        %v5655 = vpack.c.b16 %v5639, %v5639
        %v5656 = vpack.c.b16 %v5640, %v5640
        %v5657 = vpack.c.b16 %v5641, %v5641
        %v5658 = vpack.c.b16 %v5642, %v5642
        %v5659 = vpack.c.b16 %v5643, %v5643
        %v5660 = vpack.c.b16 %v5644, %v5644
        %v5661 = vpack.c.b16 %v5645, %v5645
        %v5662 = vpack.c.b16 %v5646, %v5646
        %v5663 = vpack.c.b16 %v5647, %v5647
        %v5664 = vpack.c.b16 %v5648, %v5648
        %v5665 = vpack.c.b16 %v5649, %v5649
        %v5666 = vpack.c.b16 %v5650, %v5650
        %v5667 = vpack.c.b16 %v5651, %v5651
        %v5668 = vpack.c.b16 %v5652, %v5652
        %v5669 = vpack.c.b16 %v5653, %v5653
        %v5670 = vpack.c.b16 %v5654, %v5654
        %5687 = vst.msk [vmem:[#allocation3 + $0x40] sm:$0xf] %vm2143, %v5655
        %5688 = vst.msk [vmem:[#allocation3 + $0x44] sm:$0xf] %vm2143, %v5656
        %5689 = vst.msk [vmem:[#allocation3 + $0x48] sm:$0xf] %vm2143, %v5657
        %5690 = vst.msk [vmem:[#allocation3 + $0x4c] sm:$0xf] %vm2143, %v5658
        %5691 = vst.msk [vmem:[#allocation3 + $0x50] sm:$0xf] %vm2143, %v5659
        %5692 = vst.msk [vmem:[#allocation3 + $0x54] sm:$0xf] %vm2143, %v5660
        %5693 = vst.msk [vmem:[#allocation3 + $0x58] sm:$0xf] %vm2143, %v5661
        %5694 = vst.msk [vmem:[#allocation3 + $0x5c] sm:$0xf] %vm2143, %v5662
        %5695 = vst.msk [vmem:[#allocation3 + $0x60] sm:$0xf] %vm2143, %v5663
        %5696 = vst.msk [vmem:[#allocation3 + $0x64] sm:$0xf] %vm2143, %v5664
        %5697 = vst.msk [vmem:[#allocation3 + $0x68] sm:$0xf] %vm2143, %v5665
        %5698 = vst.msk [vmem:[#allocation3 + $0x6c] sm:$0xf] %vm2143, %v5666
        %5699 = vst.msk [vmem:[#allocation3 + $0x70] sm:$0xf] %vm2143, %v5667
        %5700 = vst.msk [vmem:[#allocation3 + $0x74] sm:$0xf] %vm2143, %v5668
        %5701 = vst.msk [vmem:[#allocation3 + $0x78] sm:$0xf] %vm2143, %v5669
        %5702 = vst.msk [vmem:[#allocation3 + $0x7c] sm:$0xf] %vm2143, %v5670
        %v5703 = vld [vmem:[#allocation3] sm:$0xf]
        %v5704 = vld [vmem:[#allocation3 + $0x4] sm:$0xf]
        %v5705 = vld [vmem:[#allocation3 + $0x8] sm:$0xf]
        %v5706 = vld [vmem:[#allocation3 + $0xc] sm:$0xf]
        %v5707 = vld [vmem:[#allocation3 + $0x10] sm:$0xf]
        %v5708 = vld [vmem:[#allocation3 + $0x14] sm:$0xf]
        %v5709 = vld [vmem:[#allocation3 + $0x18] sm:$0xf]
        %v5710 = vld [vmem:[#allocation3 + $0x1c] sm:$0xf]
        %v5711 = vld [vmem:[#allocation3 + $0x20] sm:$0xf]
        %v5712 = vld [vmem:[#allocation3 + $0x24] sm:$0xf]
        %v5713 = vld [vmem:[#allocation3 + $0x28] sm:$0xf]
        %v5714 = vld [vmem:[#allocation3 + $0x2c] sm:$0xf]
        %v5715 = vld [vmem:[#allocation3 + $0x30] sm:$0xf]
        %v5716 = vld [vmem:[#allocation3 + $0x34] sm:$0xf]
        %v5717 = vld [vmem:[#allocation3 + $0x38] sm:$0xf]
        %v5718 = vld [vmem:[#allocation3 + $0x3c] sm:$0xf]
        %v5719 = vld [vmem:[#allocation3 + $0x40] sm:$0xf]
        %v5720 = vld [vmem:[#allocation3 + $0x44] sm:$0xf]
        %v5721 = vld [vmem:[#allocation3 + $0x48] sm:$0xf]
        %v5722 = vld [vmem:[#allocation3 + $0x4c] sm:$0xf]
        %v5723 = vld [vmem:[#allocation3 + $0x50] sm:$0xf]
        %v5724 = vld [vmem:[#allocation3 + $0x54] sm:$0xf]
        %v5725 = vld [vmem:[#allocation3 + $0x58] sm:$0xf]
        %v5726 = vld [vmem:[#allocation3 + $0x5c] sm:$0xf]
        %v5727 = vld [vmem:[#allocation3 + $0x60] sm:$0xf]
        %v5728 = vld [vmem:[#allocation3 + $0x64] sm:$0xf]
        %v5729 = vld [vmem:[#allocation3 + $0x68] sm:$0xf]
        %v5730 = vld [vmem:[#allocation3 + $0x6c] sm:$0xf]
        %v5731 = vld [vmem:[#allocation3 + $0x70] sm:$0xf]
        %v5732 = vld [vmem:[#allocation3 + $0x74] sm:$0xf]
        %v5733 = vld [vmem:[#allocation3 + $0x78] sm:$0xf]
        %v5734 = vld [vmem:[#allocation3 + $0x7c] sm:$0xf]
        %v5735 = vld [vmem:[#allocation3 + $0x80] sm:$0x1]
        %vm5736 = vsmask.f32 3328
        %vm5737 = vsmask.f32 7440
        %vm5738 = vmor %vm5736, %vm5737
        %v5740 = vshrl.u32 %v5703, 16
        %v5742 = vrot.slane %v5740, 4
        %v5743 = vshll.u32 %v5703, 16
        %v5745 = vrot.slane %v5743, 5
        %v5746 = vor.u32 %v5742, %v5745
        %v5747 = vrot.slane %v5746, 4
        %v5749 = vshll.u32 %v5704, 16
        %v5751 = vrot.slane %v5749, 5
        %v5752 = vsel %vm5738, %v5747, %v5751
        %v5753 = vshrl.u32 %v5704, 16
        %v5755 = vrot.slane %v5753, 4
        %v5756 = vor.u32 %v5755, %v5751
        %v5757 = vrot.slane %v5756, 4
        %v5759 = vshll.u32 %v5705, 16
        %v5761 = vrot.slane %v5759, 5
        %v5762 = vsel %vm5738, %v5757, %v5761
        %v5763 = vshrl.u32 %v5705, 16
        %v5765 = vrot.slane %v5763, 4
        %v5766 = vor.u32 %v5765, %v5761
        %v5767 = vrot.slane %v5766, 4
        %v5769 = vshll.u32 %v5706, 16
        %v5771 = vrot.slane %v5769, 5
        %v5772 = vsel %vm5738, %v5767, %v5771
        %v5773 = vshrl.u32 %v5706, 16
        %v5775 = vrot.slane %v5773, 4
        %v5776 = vor.u32 %v5775, %v5771
        %v5777 = vrot.slane %v5776, 4
        %v5779 = vshll.u32 %v5707, 16
        %v5781 = vrot.slane %v5779, 5
        %v5782 = vsel %vm5738, %v5777, %v5781
        %v5783 = vshrl.u32 %v5707, 16
        %v5785 = vrot.slane %v5783, 4
        %v5786 = vor.u32 %v5785, %v5781
        %v5787 = vrot.slane %v5786, 4
        %v5789 = vshll.u32 %v5708, 16
        %v5791 = vrot.slane %v5789, 5
        %v5792 = vsel %vm5738, %v5787, %v5791
        %v5793 = vshrl.u32 %v5708, 16
        %v5795 = vrot.slane %v5793, 4
        %v5796 = vor.u32 %v5795, %v5791
        %v5797 = vrot.slane %v5796, 4
        %v5799 = vshll.u32 %v5709, 16
        %v5801 = vrot.slane %v5799, 5
        %v5802 = vsel %vm5738, %v5797, %v5801
        %v5803 = vshrl.u32 %v5709, 16
        %v5805 = vrot.slane %v5803, 4
        %v5806 = vor.u32 %v5805, %v5801
        %v5807 = vrot.slane %v5806, 4
        %v5809 = vshll.u32 %v5710, 16
        %v5811 = vrot.slane %v5809, 5
        %v5812 = vsel %vm5738, %v5807, %v5811
        %v5813 = vshrl.u32 %v5710, 16
        %v5815 = vrot.slane %v5813, 4
        %v5816 = vor.u32 %v5815, %v5811
        %v5817 = vrot.slane %v5816, 4
        %v5819 = vshll.u32 %v5711, 16
        %v5821 = vrot.slane %v5819, 5
        %v5822 = vsel %vm5738, %v5817, %v5821
        %v5823 = vshrl.u32 %v5711, 16
        %v5825 = vrot.slane %v5823, 4
        %v5826 = vor.u32 %v5825, %v5821
        %v5827 = vrot.slane %v5826, 4
        %v5829 = vshll.u32 %v5712, 16
        %v5831 = vrot.slane %v5829, 5
        %v5832 = vsel %vm5738, %v5827, %v5831
        %v5833 = vshrl.u32 %v5712, 16
        %v5835 = vrot.slane %v5833, 4
        %v5836 = vor.u32 %v5835, %v5831
        %v5837 = vrot.slane %v5836, 4
        %v5839 = vshll.u32 %v5713, 16
        %v5841 = vrot.slane %v5839, 5
        %v5842 = vsel %vm5738, %v5837, %v5841
        %v5843 = vshrl.u32 %v5713, 16
        %v5845 = vrot.slane %v5843, 4
        %v5846 = vor.u32 %v5845, %v5841
        %v5847 = vrot.slane %v5846, 4
        %v5849 = vshll.u32 %v5714, 16
        %v5851 = vrot.slane %v5849, 5
        %v5852 = vsel %vm5738, %v5847, %v5851
        %v5853 = vshrl.u32 %v5714, 16
        %v5855 = vrot.slane %v5853, 4
        %v5856 = vor.u32 %v5855, %v5851
        %v5857 = vrot.slane %v5856, 4
        %v5859 = vshll.u32 %v5715, 16
        %v5861 = vrot.slane %v5859, 5
        %v5862 = vsel %vm5738, %v5857, %v5861
        %v5863 = vshrl.u32 %v5715, 16
        %v5865 = vrot.slane %v5863, 4
        %v5866 = vor.u32 %v5865, %v5861
        %v5867 = vrot.slane %v5866, 4
        %v5869 = vshll.u32 %v5716, 16
        %v5871 = vrot.slane %v5869, 5
        %v5872 = vsel %vm5738, %v5867, %v5871
        %v5873 = vshrl.u32 %v5716, 16
        %v5875 = vrot.slane %v5873, 4
        %v5876 = vor.u32 %v5875, %v5871
        %v5877 = vrot.slane %v5876, 4
        %v5879 = vshll.u32 %v5717, 16
        %v5881 = vrot.slane %v5879, 5
        %v5882 = vsel %vm5738, %v5877, %v5881
        %v5883 = vshrl.u32 %v5717, 16
        %v5885 = vrot.slane %v5883, 4
        %v5886 = vor.u32 %v5885, %v5881
        %v5887 = vrot.slane %v5886, 4
        %v5889 = vshll.u32 %v5718, 16
        %v5891 = vrot.slane %v5889, 5
        %v5892 = vsel %vm5738, %v5887, %v5891
        %v5893 = vshrl.u32 %v5718, 16
        %v5895 = vrot.slane %v5893, 4
        %v5896 = vor.u32 %v5895, %v5891
        %v5897 = vrot.slane %v5896, 4
        %v5899 = vshll.u32 %v5719, 16
        %v5901 = vrot.slane %v5899, 5
        %v5902 = vsel %vm5738, %v5897, %v5901
        %v5903 = vshrl.u32 %v5719, 16
        %v5905 = vrot.slane %v5903, 4
        %v5906 = vor.u32 %v5905, %v5901
        %v5907 = vrot.slane %v5906, 4
        %v5909 = vshll.u32 %v5720, 16
        %v5911 = vrot.slane %v5909, 5
        %v5912 = vsel %vm5738, %v5907, %v5911
        %v5913 = vshrl.u32 %v5720, 16
        %v5915 = vrot.slane %v5913, 4
        %v5916 = vor.u32 %v5915, %v5911
        %v5917 = vrot.slane %v5916, 4
        %v5919 = vshll.u32 %v5721, 16
        %v5921 = vrot.slane %v5919, 5
        %v5922 = vsel %vm5738, %v5917, %v5921
        %v5923 = vshrl.u32 %v5721, 16
        %v5925 = vrot.slane %v5923, 4
        %v5926 = vor.u32 %v5925, %v5921
        %v5927 = vrot.slane %v5926, 4
        %v5929 = vshll.u32 %v5722, 16
        %v5931 = vrot.slane %v5929, 5
        %v5932 = vsel %vm5738, %v5927, %v5931
        %v5933 = vshrl.u32 %v5722, 16
        %v5935 = vrot.slane %v5933, 4
        %v5936 = vor.u32 %v5935, %v5931
        %v5937 = vrot.slane %v5936, 4
        %v5939 = vshll.u32 %v5723, 16
        %v5941 = vrot.slane %v5939, 5
        %v5942 = vsel %vm5738, %v5937, %v5941
        %v5943 = vshrl.u32 %v5723, 16
        %v5945 = vrot.slane %v5943, 4
        %v5946 = vor.u32 %v5945, %v5941
        %v5947 = vrot.slane %v5946, 4
        %v5949 = vshll.u32 %v5724, 16
        %v5951 = vrot.slane %v5949, 5
        %v5952 = vsel %vm5738, %v5947, %v5951
        %v5953 = vshrl.u32 %v5724, 16
        %v5955 = vrot.slane %v5953, 4
        %v5956 = vor.u32 %v5955, %v5951
        %v5957 = vrot.slane %v5956, 4
        %v5959 = vshll.u32 %v5725, 16
        %v5961 = vrot.slane %v5959, 5
        %v5962 = vsel %vm5738, %v5957, %v5961
        %v5963 = vshrl.u32 %v5725, 16
        %v5965 = vrot.slane %v5963, 4
        %v5966 = vor.u32 %v5965, %v5961
        %v5967 = vrot.slane %v5966, 4
        %v5969 = vshll.u32 %v5726, 16
        %v5971 = vrot.slane %v5969, 5
        %v5972 = vsel %vm5738, %v5967, %v5971
        %v5973 = vshrl.u32 %v5726, 16
        %v5975 = vrot.slane %v5973, 4
        %v5976 = vor.u32 %v5975, %v5971
        %v5977 = vrot.slane %v5976, 4
        %v5979 = vshll.u32 %v5727, 16
        %v5981 = vrot.slane %v5979, 5
        %v5982 = vsel %vm5738, %v5977, %v5981
        %v5983 = vshrl.u32 %v5727, 16
        %v5985 = vrot.slane %v5983, 4
        %v5986 = vor.u32 %v5985, %v5981
        %v5987 = vrot.slane %v5986, 4
        %v5989 = vshll.u32 %v5728, 16
        %v5991 = vrot.slane %v5989, 5
        %v5992 = vsel %vm5738, %v5987, %v5991
        %v5993 = vshrl.u32 %v5728, 16
        %v5995 = vrot.slane %v5993, 4
        %v5996 = vor.u32 %v5995, %v5991
        %v5997 = vrot.slane %v5996, 4
        %v5999 = vshll.u32 %v5729, 16
        %v6001 = vrot.slane %v5999, 5
        %v6002 = vsel %vm5738, %v5997, %v6001
        %v6003 = vshrl.u32 %v5729, 16
        %v6005 = vrot.slane %v6003, 4
        %v6006 = vor.u32 %v6005, %v6001
        %v6007 = vrot.slane %v6006, 4
        %v6009 = vshll.u32 %v5730, 16
        %v6011 = vrot.slane %v6009, 5
        %v6012 = vsel %vm5738, %v6007, %v6011
        %v6013 = vshrl.u32 %v5730, 16
        %v6015 = vrot.slane %v6013, 4
        %v6016 = vor.u32 %v6015, %v6011
        %v6017 = vrot.slane %v6016, 4
        %v6019 = vshll.u32 %v5731, 16
        %v6021 = vrot.slane %v6019, 5
        %v6022 = vsel %vm5738, %v6017, %v6021
        %v6023 = vshrl.u32 %v5731, 16
        %v6025 = vrot.slane %v6023, 4
        %v6026 = vor.u32 %v6025, %v6021
        %v6027 = vrot.slane %v6026, 4
        %v6029 = vshll.u32 %v5732, 16
        %v6031 = vrot.slane %v6029, 5
        %v6032 = vsel %vm5738, %v6027, %v6031
        %v6033 = vshrl.u32 %v5732, 16
        %v6035 = vrot.slane %v6033, 4
        %v6036 = vor.u32 %v6035, %v6031
        %v6037 = vrot.slane %v6036, 4
        %v6039 = vshll.u32 %v5733, 16
        %v6041 = vrot.slane %v6039, 5
        %v6042 = vsel %vm5738, %v6037, %v6041
        %v6043 = vshrl.u32 %v5733, 16
        %v6045 = vrot.slane %v6043, 4
        %v6046 = vor.u32 %v6045, %v6041
        %v6047 = vrot.slane %v6046, 4
        %v6049 = vshll.u32 %v5734, 16
        %v6051 = vrot.slane %v6049, 5
        %v6052 = vsel %vm5738, %v6047, %v6051
        %v6053 = vshrl.u32 %v5734, 16
        %v6055 = vrot.slane %v6053, 4
        %v6056 = vor.u32 %v6055, %v6051
        %v6057 = vrot.slane %v6056, 4
        %v6059 = vshll.u32 %v5735, 16
        %v6061 = vrot.slane %v6059, 5
        %v6062 = vsel %vm5738, %v6057, %v6061
        %v6095 = vmax.bf16 %v5703, %v5752
        %v6096 = vmax.bf16 %v5704, %v5762
        %v6097 = vmax.bf16 %v5705, %v5772
        %v6098 = vmax.bf16 %v5706, %v5782
        %v6099 = vmax.bf16 %v5707, %v5792
        %v6100 = vmax.bf16 %v5708, %v5802
        %v6101 = vmax.bf16 %v5709, %v5812
        %v6102 = vmax.bf16 %v5710, %v5822
        %v6103 = vmax.bf16 %v5711, %v5832
        %v6104 = vmax.bf16 %v5712, %v5842
        %v6105 = vmax.bf16 %v5713, %v5852
        %v6106 = vmax.bf16 %v5714, %v5862
        %v6107 = vmax.bf16 %v5715, %v5872
        %v6108 = vmax.bf16 %v5716, %v5882
        %v6109 = vmax.bf16 %v5717, %v5892
        %v6110 = vmax.bf16 %v5718, %v5902
        %v6111 = vmax.bf16 %v5719, %v5912
        %v6112 = vmax.bf16 %v5720, %v5922
        %v6113 = vmax.bf16 %v5721, %v5932
        %v6114 = vmax.bf16 %v5722, %v5942
        %v6115 = vmax.bf16 %v5723, %v5952
        %v6116 = vmax.bf16 %v5724, %v5962
        %v6117 = vmax.bf16 %v5725, %v5972
        %v6118 = vmax.bf16 %v5726, %v5982
        %v6119 = vmax.bf16 %v5727, %v5992
        %v6120 = vmax.bf16 %v5728, %v6002
        %v6121 = vmax.bf16 %v5729, %v6012
        %v6122 = vmax.bf16 %v5730, %v6022
        %v6123 = vmax.bf16 %v5731, %v6032
        %v6124 = vmax.bf16 %v5732, %v6042
        %v6125 = vmax.bf16 %v5733, %v6052
        %v6126 = vmax.bf16 %v5734, %v6062
        %v6127 = vld [vmem:[#allocation3 + $0x80] sm:$0xf]
        %v6128 = vld [vmem:[#allocation3 + $0x84] sm:$0xf]
        %v6129 = vld [vmem:[#allocation3 + $0x88] sm:$0x1]
        %v6131 = vshll.u32 %v6127, 16
        %v6133 = vrot.slane %v6131, 5
        %v6134 = vsel %vm5738, %v6057, %v6133
        %v6135 = vshrl.u32 %v6127, 16
        %v6137 = vrot.slane %v6135, 4
        %v6138 = vor.u32 %v6137, %v6133
        %v6139 = vrot.slane %v6138, 4
        %v6141 = vshll.u32 %v6128, 16
        %v6143 = vrot.slane %v6141, 5
        %v6144 = vsel %vm5738, %v6139, %v6143
        %v6145 = vshrl.u32 %v6128, 16
        %v6147 = vrot.slane %v6145, 4
        %v6148 = vor.u32 %v6147, %v6143
        %v6149 = vrot.slane %v6148, 4
        %v6151 = vshll.u32 %v6129, 16
        %v6153 = vrot.slane %v6151, 5
        %v6154 = vsel %vm5738, %v6149, %v6153
        %v6158 = vmax.bf16 %v5734, %v6134
        %v6159 = vmax.bf16 %v6127, %v6144
        %v6160 = vmax.bf16 %v6128, %v6154
        %v6161 = vmax.bf16 %v6095, %v6097
        %v6162 = vmax.bf16 %v6096, %v6098
        %v6163 = vmax.bf16 %v6097, %v6099
        %v6164 = vmax.bf16 %v6098, %v6100
        %v6165 = vmax.bf16 %v6099, %v6101
        %v6166 = vmax.bf16 %v6100, %v6102
        %v6167 = vmax.bf16 %v6101, %v6103
        %v6168 = vmax.bf16 %v6102, %v6104
        %v6169 = vmax.bf16 %v6103, %v6105
        %v6170 = vmax.bf16 %v6104, %v6106
        %v6171 = vmax.bf16 %v6105, %v6107
        %v6172 = vmax.bf16 %v6106, %v6108
        %v6173 = vmax.bf16 %v6107, %v6109
        %v6174 = vmax.bf16 %v6108, %v6110
        %v6175 = vmax.bf16 %v6109, %v6111
        %v6176 = vmax.bf16 %v6110, %v6112
        %v6177 = vmax.bf16 %v6111, %v6113
        %v6178 = vmax.bf16 %v6112, %v6114
        %v6179 = vmax.bf16 %v6113, %v6115
        %v6180 = vmax.bf16 %v6114, %v6116
        %v6181 = vmax.bf16 %v6115, %v6117
        %v6182 = vmax.bf16 %v6116, %v6118
        %v6183 = vmax.bf16 %v6117, %v6119
        %v6184 = vmax.bf16 %v6118, %v6120
        %v6185 = vmax.bf16 %v6119, %v6121
        %v6186 = vmax.bf16 %v6120, %v6122
        %v6187 = vmax.bf16 %v6121, %v6123
        %v6188 = vmax.bf16 %v6122, %v6124
        %v6189 = vmax.bf16 %v6123, %v6125
        %v6190 = vmax.bf16 %v6124, %v6158
        %v6191 = vmax.bf16 %v6125, %v6159
        %v6192 = vmax.bf16 %v6126, %v6160
        %6193 = vst.msk [vmem:[#allocation4] sm:$0xf] %vm2143, %v6161
        %6194 = vst.msk [vmem:[#allocation4 + $0x4] sm:$0xf] %vm2143, %v6162
        %6195 = vst.msk [vmem:[#allocation4 + $0x8] sm:$0xf] %vm2143, %v6163
        %6196 = vst.msk [vmem:[#allocation4 + $0xc] sm:$0xf] %vm2143, %v6164
        %6197 = vst.msk [vmem:[#allocation4 + $0x10] sm:$0xf] %vm2143, %v6165
        %6198 = vst.msk [vmem:[#allocation4 + $0x14] sm:$0xf] %vm2143, %v6166
        %6199 = vst.msk [vmem:[#allocation4 + $0x18] sm:$0xf] %vm2143, %v6167
        %6200 = vst.msk [vmem:[#allocation4 + $0x1c] sm:$0xf] %vm2143, %v6168
        %6201 = vst.msk [vmem:[#allocation4 + $0x20] sm:$0xf] %vm2143, %v6169
        %6202 = vst.msk [vmem:[#allocation4 + $0x24] sm:$0xf] %vm2143, %v6170
        %6203 = vst.msk [vmem:[#allocation4 + $0x28] sm:$0xf] %vm2143, %v6171
        %6204 = vst.msk [vmem:[#allocation4 + $0x2c] sm:$0xf] %vm2143, %v6172
        %6205 = vst.msk [vmem:[#allocation4 + $0x30] sm:$0xf] %vm2143, %v6173
        %6206 = vst.msk [vmem:[#allocation4 + $0x34] sm:$0xf] %vm2143, %v6174
        %6207 = vst.msk [vmem:[#allocation4 + $0x38] sm:$0xf] %vm2143, %v6175
        %6208 = vst.msk [vmem:[#allocation4 + $0x3c] sm:$0xf] %vm2143, %v6176
        %6209 = vst.msk [vmem:[#allocation4 + $0x40] sm:$0xf] %vm2143, %v6177
        %6210 = vst.msk [vmem:[#allocation4 + $0x44] sm:$0xf] %vm2143, %v6178
        %6211 = vst.msk [vmem:[#allocation4 + $0x48] sm:$0xf] %vm2143, %v6179
        %6212 = vst.msk [vmem:[#allocation4 + $0x4c] sm:$0xf] %vm2143, %v6180
        %6213 = vst.msk [vmem:[#allocation4 + $0x50] sm:$0xf] %vm2143, %v6181
        %6214 = vst.msk [vmem:[#allocation4 + $0x54] sm:$0xf] %vm2143, %v6182
        %6215 = vst.msk [vmem:[#allocation4 + $0x58] sm:$0xf] %vm2143, %v6183
        %6216 = vst.msk [vmem:[#allocation4 + $0x5c] sm:$0xf] %vm2143, %v6184
        %6217 = vst.msk [vmem:[#allocation4 + $0x60] sm:$0xf] %vm2143, %v6185
        %6218 = vst.msk [vmem:[#allocation4 + $0x64] sm:$0xf] %vm2143, %v6186
        %6219 = vst.msk [vmem:[#allocation4 + $0x68] sm:$0xf] %vm2143, %v6187
        %6220 = vst.msk [vmem:[#allocation4 + $0x6c] sm:$0xf] %vm2143, %v6188
        %6221 = vst.msk [vmem:[#allocation4 + $0x70] sm:$0xf] %vm2143, %v6189
        %6222 = vst.msk [vmem:[#allocation4 + $0x74] sm:$0xf] %vm2143, %v6190
        %6223 = vst.msk [vmem:[#allocation4 + $0x78] sm:$0xf] %vm2143, %v6191
        %6224 = vst.msk [vmem:[#allocation4 + $0x7c] sm:$0xf] %vm2143, %v6192
        %v6225 = vld [vmem:[#allocation4] sm:$0xf]
        %v6226 = vld [vmem:[#allocation4 + $0x4] sm:$0xf]
        %v6227 = vld [vmem:[#allocation4 + $0x8] sm:$0xf]
        %v6228 = vld [vmem:[#allocation4 + $0xc] sm:$0xf]
        %v6229 = vld [vmem:[#allocation4 + $0x10] sm:$0xf]
        %v6230 = vld [vmem:[#allocation4 + $0x14] sm:$0xf]
        %v6231 = vld [vmem:[#allocation4 + $0x18] sm:$0xf]
        %v6232 = vld [vmem:[#allocation4 + $0x1c] sm:$0xf]
        %v6233 = vld [vmem:[%s5] sm:$0xff]
        %v6234 = vld [vmem:[%s5 + $0x8] sm:$0xff]
        %v6235 = vld [vmem:[%s5 + $0x10] sm:$0xff]
        %v6236 = vld [vmem:[%s5 + $0x18] sm:$0xff]
        %v6245 = vunpack.c.l.b16 %v6225
        %v6246 = vunpack.c.l.b16 %v6226
        %v6247 = vunpack.c.l.b16 %v6227
        %v6248 = vunpack.c.l.b16 %v6228
        %v6249 = vunpack.c.l.b16 %v6229
        %v6250 = vunpack.c.l.b16 %v6230
        %v6251 = vunpack.c.l.b16 %v6231
        %v6252 = vunpack.c.l.b16 %v6232
        %v6253 = vpack.c.b16 %v6246, %v6245
        %v6254 = vpack.c.b16 %v6248, %v6247
        %v6255 = vpack.c.b16 %v6250, %v6249
        %v6256 = vpack.c.b16 %v6252, %v6251
        %v6261 = vunpack.c.l.b16 %v6233
        %v6262 = vunpack.c.h.b16 %v6233
        %v6263 = vunpack.c.l.b16 %v6234
        %v6264 = vunpack.c.h.b16 %v6234
        %v6265 = vunpack.c.l.b16 %v6235
        %v6266 = vunpack.c.h.b16 %v6235
        %v6267 = vunpack.c.l.b16 %v6236
        %v6268 = vunpack.c.h.b16 %v6236
        %v6269 = vpack.c.b16 %v6263, %v6261
        %v6270 = vpack.c.b16 %v6264, %v6262
        %v6271 = vpack.c.b16 %v6267, %v6265
        %v6272 = vpack.c.b16 %v6268, %v6266
        %v6278 = vsel %vm632, %v6253, 0
        %v6281 = vsel %vm632, %v6254, 0
        %v6284 = vsel %vm632, %v6255, 0
        %v6287 = vsel %vm632, %v6256, 0
        %6289 = vmatprep.subr.bf16.mxu0 0
        %6290 = vmatpush1.bf16.msra.mxu0 0
        %6291 = vmatprep.subr.bf16.mxu0 0
        %6292 = vmatpush1.bf16.msra.mxu0 0
        %6293 = vmatprep.subr.bf16.mxu0 0
        %6294 = vmatpush1.bf16.msra.mxu0 0
        %6295 = vmatprep.subr.bf16.mxu0 0
        %6296 = vmatpush1.bf16.msra.mxu0 0
        %6297 = vmatprep.subr.bf16.mxu0 0
        %6298 = vmatpush1.bf16.msra.mxu0 0
        %6299 = vmatprep.subr.bf16.mxu0 0
        %6300 = vmatpush1.bf16.msra.mxu0 0
        %6301 = vmatprep.subr.bf16.mxu0 %v6272
        %6302 = vmatpush1.bf16.msra.mxu0 %v6271
        %6303 = vmatprep.subr.bf16.mxu0 %v6270
        %6304 = vmatpush1.bf16.msra.mxu0 %v6269
        %6305 = vmatprep.subr.bf16.mxu0 0
        %6306 = vmatpush2.bf16.msra.mxu0 0
        %6307 = vmatprep.subr.bf16.mxu0 0
        %6308 = vmatpush2.bf16.msra.mxu0 0
        %6309 = vmatprep.subr.bf16.mxu0 0
        %6310 = vmatpush2.bf16.msra.mxu0 0
        %6311 = vmatprep.subr.bf16.mxu0 0
        %6312 = vmatpush2.bf16.msra.mxu0 0
        %6313 = vmatprep.subr.bf16.mxu0 0
        %6314 = vmatpush2.bf16.msra.mxu0 0
        %6315 = vmatprep.subr.bf16.mxu0 0
        %6316 = vmatpush2.bf16.msra.mxu0 0
        %6317 = vmatprep.subr.bf16.mxu0 0
        %6318 = vmatpush2.bf16.msra.mxu0 0
        %6319 = vmatprep.subr.bf16.mxu0 0
        %6320 = vmatpush2.bf16.msra.mxu0 0
        %6321 = vmatprep.mubr.bf16.mxu0 0
        %6322 = vmatmul.mubr.bf16.gmra.mxu0 %v6278
        %v6323 = vpop.f32.mrf.mxu0
        %v6324 = vadd.f32 0.0, %v6323
        %v6325 = vpop.f32.mrf.mxu0
        %v6326 = vadd.f32 0.0, %v6325
        %v6327 = vpop.f32.mrf.mxu0
        %v6328 = vadd.f32 0.0, %v6327
        %v6329 = vpop.f32.mrf.mxu0
        %v6330 = vadd.f32 0.0, %v6329
        %6331 = vmatprep.mubr.bf16.mxu0 0
        %6332 = vmatmul.mubr.bf16.gmra.mxu0 %v6281
        %v6333 = vpop.f32.mrf.mxu0
        %v6334 = vadd.f32 0.0, %v6333
        %v6335 = vpop.f32.mrf.mxu0
        %v6336 = vadd.f32 0.0, %v6335
        %v6337 = vpop.f32.mrf.mxu0
        %v6338 = vadd.f32 0.0, %v6337
        %v6339 = vpop.f32.mrf.mxu0
        %v6340 = vadd.f32 0.0, %v6339
        %6341 = vmatprep.mubr.bf16.mxu0 0
        %6342 = vmatmul.mubr.bf16.gmra.mxu0 %v6284
        %v6343 = vpop.f32.mrf.mxu0
        %v6344 = vadd.f32 0.0, %v6343
        %v6345 = vpop.f32.mrf.mxu0
        %v6346 = vadd.f32 0.0, %v6345
        %v6347 = vpop.f32.mrf.mxu0
        %v6348 = vadd.f32 0.0, %v6347
        %v6349 = vpop.f32.mrf.mxu0
        %v6350 = vadd.f32 0.0, %v6349
        %6351 = vmatprep.mubr.bf16.mxu0 0
        %6352 = vmatmul.mubr.bf16.gmra.mxu0 %v6287
        %v6353 = vpop.f32.mrf.mxu0
        %v6354 = vadd.f32 0.0, %v6353
        %v6355 = vpop.f32.mrf.mxu0
        %v6356 = vadd.f32 0.0, %v6355
        %v6357 = vpop.f32.mrf.mxu0
        %v6358 = vadd.f32 0.0, %v6357
        %v6359 = vpop.f32.mrf.mxu0
        %v6360 = vadd.f32 0.0, %v6359
        %6361 = vdwg.mxu0
        %6362 = vst [vmem:[#allocation7] sm:$0xff] %v6324
        %vm6363 = vcmask 130048
        %6364 = vst.msk [vmem:[#allocation7 + $0x8] sm:$0xff] %vm6363, %v6326
        %6365 = vst [vmem:[#allocation7 + $0x18] sm:$0xff] %v6328
        %6366 = vst.msk [vmem:[#allocation7 + $0x20] sm:$0xff] %vm6363, %v6330
        %6367 = vst [vmem:[#allocation7 + $0x30] sm:$0xff] %v6334
        %6368 = vst.msk [vmem:[#allocation7 + $0x38] sm:$0xff] %vm6363, %v6336
        %6369 = vst [vmem:[#allocation7 + $0x48] sm:$0xff] %v6338
        %6370 = vst.msk [vmem:[#allocation7 + $0x50] sm:$0xff] %vm6363, %v6340
        %6371 = vst [vmem:[#allocation7 + $0x60] sm:$0xff] %v6344
        %6372 = vst.msk [vmem:[#allocation7 + $0x68] sm:$0xff] %vm6363, %v6346
        %6373 = vst [vmem:[#allocation7 + $0x78] sm:$0xff] %v6348
        %6374 = vst.msk [vmem:[#allocation7 + $0x80] sm:$0xff] %vm6363, %v6350
        %6375 = vst [vmem:[#allocation7 + $0x90] sm:$0xff] %v6354
        %6376 = vst.msk [vmem:[#allocation7 + $0x98] sm:$0xff] %vm6363, %v6356
        %6377 = vst [vmem:[#allocation7 + $0xa8] sm:$0xff] %v6358
        %6378 = vst.msk [vmem:[#allocation7 + $0xb0] sm:$0xff] %vm6363, %v6360
        %v6379 = vld [vmem:[#allocation4 + $0x20] sm:$0xf]
        %v6380 = vld [vmem:[#allocation4 + $0x24] sm:$0xf]
        %v6381 = vld [vmem:[#allocation4 + $0x28] sm:$0xf]
        %v6382 = vld [vmem:[#allocation4 + $0x2c] sm:$0xf]
        %v6383 = vld [vmem:[#allocation4 + $0x30] sm:$0xf]
        %v6384 = vld [vmem:[#allocation4 + $0x34] sm:$0xf]
        %v6385 = vld [vmem:[#allocation4 + $0x38] sm:$0xf]
        %v6386 = vld [vmem:[#allocation4 + $0x3c] sm:$0xf]
        %v6387 = vld [vmem:[%s5] sm:$0xff]
        %v6388 = vld [vmem:[%s5 + $0x8] sm:$0xff]
        %v6389 = vld [vmem:[%s5 + $0x10] sm:$0xff]
        %v6390 = vld [vmem:[%s5 + $0x18] sm:$0xff]
        %v6399 = vunpack.c.l.b16 %v6379
        %v6400 = vunpack.c.l.b16 %v6380
        %v6401 = vunpack.c.l.b16 %v6381
        %v6402 = vunpack.c.l.b16 %v6382
        %v6403 = vunpack.c.l.b16 %v6383
        %v6404 = vunpack.c.l.b16 %v6384
        %v6405 = vunpack.c.l.b16 %v6385
        %v6406 = vunpack.c.l.b16 %v6386
        %v6407 = vpack.c.b16 %v6400, %v6399
        %v6408 = vpack.c.b16 %v6402, %v6401
        %v6409 = vpack.c.b16 %v6404, %v6403
        %v6410 = vpack.c.b16 %v6406, %v6405
        %v6415 = vunpack.c.l.b16 %v6387
        %v6416 = vunpack.c.h.b16 %v6387
        %v6417 = vunpack.c.l.b16 %v6388
        %v6418 = vunpack.c.h.b16 %v6388
        %v6419 = vunpack.c.l.b16 %v6389
        %v6420 = vunpack.c.h.b16 %v6389
        %v6421 = vunpack.c.l.b16 %v6390
        %v6422 = vunpack.c.h.b16 %v6390
        %v6423 = vpack.c.b16 %v6417, %v6415
        %v6424 = vpack.c.b16 %v6418, %v6416
        %v6425 = vpack.c.b16 %v6421, %v6419
        %v6426 = vpack.c.b16 %v6422, %v6420
        %v6432 = vsel %vm632, %v6407, 0
        %v6435 = vsel %vm632, %v6408, 0
        %v6438 = vsel %vm632, %v6409, 0
        %v6441 = vsel %vm632, %v6410, 0
        %6443 = vmatprep.subr.bf16.mxu0 0
        %6444 = vmatpush1.bf16.msra.mxu0 0
        %6445 = vmatprep.subr.bf16.mxu0 0
        %6446 = vmatpush1.bf16.msra.mxu0 0
        %6447 = vmatprep.subr.bf16.mxu0 0
        %6448 = vmatpush1.bf16.msra.mxu0 0
        %6449 = vmatprep.subr.bf16.mxu0 0
        %6450 = vmatpush1.bf16.msra.mxu0 0
        %6451 = vmatprep.subr.bf16.mxu0 0
        %6452 = vmatpush1.bf16.msra.mxu0 0
        %6453 = vmatprep.subr.bf16.mxu0 0
        %6454 = vmatpush1.bf16.msra.mxu0 0
        %6455 = vmatprep.subr.bf16.mxu0 %v6426
        %6456 = vmatpush1.bf16.msra.mxu0 %v6425
        %6457 = vmatprep.subr.bf16.mxu0 %v6424
        %6458 = vmatpush1.bf16.msra.mxu0 %v6423
        %6459 = vmatprep.subr.bf16.mxu0 0
        %6460 = vmatpush2.bf16.msra.mxu0 0
        %6461 = vmatprep.subr.bf16.mxu0 0
        %6462 = vmatpush2.bf16.msra.mxu0 0
        %6463 = vmatprep.subr.bf16.mxu0 0
        %6464 = vmatpush2.bf16.msra.mxu0 0
        %6465 = vmatprep.subr.bf16.mxu0 0
        %6466 = vmatpush2.bf16.msra.mxu0 0
        %6467 = vmatprep.subr.bf16.mxu0 0
        %6468 = vmatpush2.bf16.msra.mxu0 0
        %6469 = vmatprep.subr.bf16.mxu0 0
        %6470 = vmatpush2.bf16.msra.mxu0 0
        %6471 = vmatprep.subr.bf16.mxu0 0
        %6472 = vmatpush2.bf16.msra.mxu0 0
        %6473 = vmatprep.subr.bf16.mxu0 0
        %6474 = vmatpush2.bf16.msra.mxu0 0
        %6475 = vmatprep.mubr.bf16.mxu0 0
        %6476 = vmatmul.mubr.bf16.gmra.mxu0 %v6432
        %v6477 = vpop.f32.mrf.mxu0
        %v6478 = vadd.f32 0.0, %v6477
        %v6479 = vpop.f32.mrf.mxu0
        %v6480 = vadd.f32 0.0, %v6479
        %v6481 = vpop.f32.mrf.mxu0
        %v6482 = vadd.f32 0.0, %v6481
        %v6483 = vpop.f32.mrf.mxu0
        %v6484 = vadd.f32 0.0, %v6483
        %6485 = vmatprep.mubr.bf16.mxu0 0
        %6486 = vmatmul.mubr.bf16.gmra.mxu0 %v6435
        %v6487 = vpop.f32.mrf.mxu0
        %v6488 = vadd.f32 0.0, %v6487
        %v6489 = vpop.f32.mrf.mxu0
        %v6490 = vadd.f32 0.0, %v6489
        %v6491 = vpop.f32.mrf.mxu0
        %v6492 = vadd.f32 0.0, %v6491
        %v6493 = vpop.f32.mrf.mxu0
        %v6494 = vadd.f32 0.0, %v6493
        %6495 = vmatprep.mubr.bf16.mxu0 0
        %6496 = vmatmul.mubr.bf16.gmra.mxu0 %v6438
        %v6497 = vpop.f32.mrf.mxu0
        %v6498 = vadd.f32 0.0, %v6497
        %v6499 = vpop.f32.mrf.mxu0
        %v6500 = vadd.f32 0.0, %v6499
        %v6501 = vpop.f32.mrf.mxu0
        %v6502 = vadd.f32 0.0, %v6501
        %v6503 = vpop.f32.mrf.mxu0
        %v6504 = vadd.f32 0.0, %v6503
        %6505 = vmatprep.mubr.bf16.mxu0 0
        %6506 = vmatmul.mubr.bf16.gmra.mxu0 %v6441
        %v6507 = vpop.f32.mrf.mxu0
        %v6508 = vadd.f32 0.0, %v6507
        %v6509 = vpop.f32.mrf.mxu0
        %v6510 = vadd.f32 0.0, %v6509
        %v6511 = vpop.f32.mrf.mxu0
        %v6512 = vadd.f32 0.0, %v6511
        %v6513 = vpop.f32.mrf.mxu0
        %v6514 = vadd.f32 0.0, %v6513
        %6515 = vdwg.mxu0
        %6516 = vst [vmem:[#allocation7 + $0xc0] sm:$0xff] %v6478
        %6517 = vst.msk [vmem:[#allocation7 + $0xc8] sm:$0xff] %vm6363, %v6480
        %6518 = vst [vmem:[#allocation7 + $0xd8] sm:$0xff] %v6482
        %6519 = vst.msk [vmem:[#allocation7 + $0xe0] sm:$0xff] %vm6363, %v6484
        %6520 = vst [vmem:[#allocation7 + $0xf0] sm:$0xff] %v6488
        %6521 = vst.msk [vmem:[#allocation7 + $0xf8] sm:$0xff] %vm6363, %v6490
        %6522 = vst [vmem:[#allocation7 + $0x108] sm:$0xff] %v6492
        %6523 = vst.msk [vmem:[#allocation7 + $0x110] sm:$0xff] %vm6363, %v6494
        %6524 = vst [vmem:[#allocation7 + $0x120] sm:$0xff] %v6498
        %6525 = vst.msk [vmem:[#allocation7 + $0x128] sm:$0xff] %vm6363, %v6500
        %6526 = vst [vmem:[#allocation7 + $0x138] sm:$0xff] %v6502
        %6527 = vst.msk [vmem:[#allocation7 + $0x140] sm:$0xff] %vm6363, %v6504
        %6528 = vst [vmem:[#allocation7 + $0x150] sm:$0xff] %v6508
        %6529 = vst.msk [vmem:[#allocation7 + $0x158] sm:$0xff] %vm6363, %v6510
        %6530 = vst [vmem:[#allocation7 + $0x168] sm:$0xff] %v6512
        %6531 = vst.msk [vmem:[#allocation7 + $0x170] sm:$0xff] %vm6363, %v6514
        %v6532 = vld [vmem:[#allocation4 + $0x40] sm:$0xf]
        %v6533 = vld [vmem:[#allocation4 + $0x44] sm:$0xf]
        %v6534 = vld [vmem:[#allocation4 + $0x48] sm:$0xf]
        %v6535 = vld [vmem:[#allocation4 + $0x4c] sm:$0xf]
        %v6536 = vld [vmem:[#allocation4 + $0x50] sm:$0xf]
        %v6537 = vld [vmem:[#allocation4 + $0x54] sm:$0xf]
        %v6538 = vld [vmem:[#allocation4 + $0x58] sm:$0xf]
        %v6539 = vld [vmem:[#allocation4 + $0x5c] sm:$0xf]
        %v6540 = vld [vmem:[%s5] sm:$0xff]
        %v6541 = vld [vmem:[%s5 + $0x8] sm:$0xff]
        %v6542 = vld [vmem:[%s5 + $0x10] sm:$0xff]
        %v6543 = vld [vmem:[%s5 + $0x18] sm:$0xff]
        %v6552 = vunpack.c.l.b16 %v6532
        %v6553 = vunpack.c.l.b16 %v6533
        %v6554 = vunpack.c.l.b16 %v6534
        %v6555 = vunpack.c.l.b16 %v6535
        %v6556 = vunpack.c.l.b16 %v6536
        %v6557 = vunpack.c.l.b16 %v6537
        %v6558 = vunpack.c.l.b16 %v6538
        %v6559 = vunpack.c.l.b16 %v6539
        %v6560 = vpack.c.b16 %v6553, %v6552
        %v6561 = vpack.c.b16 %v6555, %v6554
        %v6562 = vpack.c.b16 %v6557, %v6556
        %v6563 = vpack.c.b16 %v6559, %v6558
        %v6568 = vunpack.c.l.b16 %v6540
        %v6569 = vunpack.c.h.b16 %v6540
        %v6570 = vunpack.c.l.b16 %v6541
        %v6571 = vunpack.c.h.b16 %v6541
        %v6572 = vunpack.c.l.b16 %v6542
        %v6573 = vunpack.c.h.b16 %v6542
        %v6574 = vunpack.c.l.b16 %v6543
        %v6575 = vunpack.c.h.b16 %v6543
        %v6576 = vpack.c.b16 %v6570, %v6568
        %v6577 = vpack.c.b16 %v6571, %v6569
        %v6578 = vpack.c.b16 %v6574, %v6572
        %v6579 = vpack.c.b16 %v6575, %v6573
        %v6585 = vsel %vm632, %v6560, 0
        %v6588 = vsel %vm632, %v6561, 0
        %v6591 = vsel %vm632, %v6562, 0
        %v6594 = vsel %vm632, %v6563, 0
        %6596 = vmatprep.subr.bf16.mxu0 0
        %6597 = vmatpush1.bf16.msra.mxu0 0
        %6598 = vmatprep.subr.bf16.mxu0 0
        %6599 = vmatpush1.bf16.msra.mxu0 0
        %6600 = vmatprep.subr.bf16.mxu0 0
        %6601 = vmatpush1.bf16.msra.mxu0 0
        %6602 = vmatprep.subr.bf16.mxu0 0
        %6603 = vmatpush1.bf16.msra.mxu0 0
        %6604 = vmatprep.subr.bf16.mxu0 0
        %6605 = vmatpush1.bf16.msra.mxu0 0
        %6606 = vmatprep.subr.bf16.mxu0 0
        %6607 = vmatpush1.bf16.msra.mxu0 0
        %6608 = vmatprep.subr.bf16.mxu0 %v6579
        %6609 = vmatpush1.bf16.msra.mxu0 %v6578
        %6610 = vmatprep.subr.bf16.mxu0 %v6577
        %6611 = vmatpush1.bf16.msra.mxu0 %v6576
        %6612 = vmatprep.subr.bf16.mxu0 0
        %6613 = vmatpush2.bf16.msra.mxu0 0
        %6614 = vmatprep.subr.bf16.mxu0 0
        %6615 = vmatpush2.bf16.msra.mxu0 0
        %6616 = vmatprep.subr.bf16.mxu0 0
        %6617 = vmatpush2.bf16.msra.mxu0 0
        %6618 = vmatprep.subr.bf16.mxu0 0
        %6619 = vmatpush2.bf16.msra.mxu0 0
        %6620 = vmatprep.subr.bf16.mxu0 0
        %6621 = vmatpush2.bf16.msra.mxu0 0
        %6622 = vmatprep.subr.bf16.mxu0 0
        %6623 = vmatpush2.bf16.msra.mxu0 0
        %6624 = vmatprep.subr.bf16.mxu0 0
        %6625 = vmatpush2.bf16.msra.mxu0 0
        %6626 = vmatprep.subr.bf16.mxu0 0
        %6627 = vmatpush2.bf16.msra.mxu0 0
        %6628 = vmatprep.mubr.bf16.mxu0 0
        %6629 = vmatmul.mubr.bf16.gmra.mxu0 %v6585
        %v6630 = vpop.f32.mrf.mxu0
        %v6631 = vadd.f32 0.0, %v6630
        %v6632 = vpop.f32.mrf.mxu0
        %v6633 = vadd.f32 0.0, %v6632
        %v6634 = vpop.f32.mrf.mxu0
        %v6635 = vadd.f32 0.0, %v6634
        %v6636 = vpop.f32.mrf.mxu0
        %v6637 = vadd.f32 0.0, %v6636
        %6638 = vmatprep.mubr.bf16.mxu0 0
        %6639 = vmatmul.mubr.bf16.gmra.mxu0 %v6588
        %v6640 = vpop.f32.mrf.mxu0
        %v6641 = vadd.f32 0.0, %v6640
        %v6642 = vpop.f32.mrf.mxu0
        %v6643 = vadd.f32 0.0, %v6642
        %v6644 = vpop.f32.mrf.mxu0
        %v6645 = vadd.f32 0.0, %v6644
        %v6646 = vpop.f32.mrf.mxu0
        %v6647 = vadd.f32 0.0, %v6646
        %6648 = vmatprep.mubr.bf16.mxu0 0
        %6649 = vmatmul.mubr.bf16.gmra.mxu0 %v6591
        %v6650 = vpop.f32.mrf.mxu0
        %v6651 = vadd.f32 0.0, %v6650
        %v6652 = vpop.f32.mrf.mxu0
        %v6653 = vadd.f32 0.0, %v6652
        %v6654 = vpop.f32.mrf.mxu0
        %v6655 = vadd.f32 0.0, %v6654
        %v6656 = vpop.f32.mrf.mxu0
        %v6657 = vadd.f32 0.0, %v6656
        %6658 = vmatprep.mubr.bf16.mxu0 0
        %6659 = vmatmul.mubr.bf16.gmra.mxu0 %v6594
        %v6660 = vpop.f32.mrf.mxu0
        %v6661 = vadd.f32 0.0, %v6660
        %v6662 = vpop.f32.mrf.mxu0
        %v6663 = vadd.f32 0.0, %v6662
        %v6664 = vpop.f32.mrf.mxu0
        %v6665 = vadd.f32 0.0, %v6664
        %v6666 = vpop.f32.mrf.mxu0
        %v6667 = vadd.f32 0.0, %v6666
        %6668 = vdwg.mxu0
        %6669 = vst [vmem:[#allocation7 + $0x180] sm:$0xff] %v6631
        %6670 = vst.msk [vmem:[#allocation7 + $0x188] sm:$0xff] %vm6363, %v6633
        %6671 = vst [vmem:[#allocation7 + $0x198] sm:$0xff] %v6635
        %6672 = vst.msk [vmem:[#allocation7 + $0x1a0] sm:$0xff] %vm6363, %v6637
        %6673 = vst [vmem:[#allocation7 + $0x1b0] sm:$0xff] %v6641
        %6674 = vst.msk [vmem:[#allocation7 + $0x1b8] sm:$0xff] %vm6363, %v6643
        %6675 = vst [vmem:[#allocation7 + $0x1c8] sm:$0xff] %v6645
        %6676 = vst.msk [vmem:[#allocation7 + $0x1d0] sm:$0xff] %vm6363, %v6647
        %6677 = vst [vmem:[#allocation7 + $0x1e0] sm:$0xff] %v6651
        %6678 = vst.msk [vmem:[#allocation7 + $0x1e8] sm:$0xff] %vm6363, %v6653
        %6679 = vst [vmem:[#allocation7 + $0x1f8] sm:$0xff] %v6655
        %6680 = vst.msk [vmem:[#allocation7 + $0x200] sm:$0xff] %vm6363, %v6657
        %6681 = vst [vmem:[#allocation7 + $0x210] sm:$0xff] %v6661
        %6682 = vst.msk [vmem:[#allocation7 + $0x218] sm:$0xff] %vm6363, %v6663
        %6683 = vst [vmem:[#allocation7 + $0x228] sm:$0xff] %v6665
        %6684 = vst.msk [vmem:[#allocation7 + $0x230] sm:$0xff] %vm6363, %v6667
        %v6685 = vld [vmem:[#allocation4 + $0x60] sm:$0xf]
        %v6686 = vld [vmem:[#allocation4 + $0x64] sm:$0xf]
        %v6687 = vld [vmem:[#allocation4 + $0x68] sm:$0xf]
        %v6688 = vld [vmem:[#allocation4 + $0x6c] sm:$0xf]
        %v6689 = vld [vmem:[#allocation4 + $0x70] sm:$0xf]
        %v6690 = vld [vmem:[#allocation4 + $0x74] sm:$0xf]
        %v6691 = vld [vmem:[#allocation4 + $0x78] sm:$0xf]
        %v6692 = vld [vmem:[#allocation4 + $0x7c] sm:$0xf]
        %v6693 = vld [vmem:[%s5] sm:$0xff]
        %v6694 = vld [vmem:[%s5 + $0x8] sm:$0xff]
        %v6695 = vld [vmem:[%s5 + $0x10] sm:$0xff]
        %v6696 = vld [vmem:[%s5 + $0x18] sm:$0xff]
        %v6705 = vunpack.c.l.b16 %v6685
        %v6706 = vunpack.c.l.b16 %v6686
        %v6707 = vunpack.c.l.b16 %v6687
        %v6708 = vunpack.c.l.b16 %v6688
        %v6709 = vunpack.c.l.b16 %v6689
        %v6710 = vunpack.c.l.b16 %v6690
        %v6711 = vunpack.c.l.b16 %v6691
        %v6712 = vunpack.c.l.b16 %v6692
        %v6713 = vpack.c.b16 %v6706, %v6705
        %v6714 = vpack.c.b16 %v6708, %v6707
        %v6715 = vpack.c.b16 %v6710, %v6709
        %v6716 = vpack.c.b16 %v6712, %v6711
        %v6721 = vunpack.c.l.b16 %v6693
        %v6722 = vunpack.c.h.b16 %v6693
        %v6723 = vunpack.c.l.b16 %v6694
        %v6724 = vunpack.c.h.b16 %v6694
        %v6725 = vunpack.c.l.b16 %v6695
        %v6726 = vunpack.c.h.b16 %v6695
        %v6727 = vunpack.c.l.b16 %v6696
        %v6728 = vunpack.c.h.b16 %v6696
        %v6729 = vpack.c.b16 %v6723, %v6721
        %v6730 = vpack.c.b16 %v6724, %v6722
        %v6731 = vpack.c.b16 %v6727, %v6725
        %v6732 = vpack.c.b16 %v6728, %v6726
        %v6738 = vsel %vm632, %v6713, 0
        %v6741 = vsel %vm632, %v6714, 0
        %v6744 = vsel %vm632, %v6715, 0
        %v6747 = vsel %vm632, %v6716, 0
        %6749 = vmatprep.subr.bf16.mxu0 0
        %6750 = vmatpush1.bf16.msra.mxu0 0
        %6751 = vmatprep.subr.bf16.mxu0 0
        %6752 = vmatpush1.bf16.msra.mxu0 0
        %6753 = vmatprep.subr.bf16.mxu0 0
        %6754 = vmatpush1.bf16.msra.mxu0 0
        %6755 = vmatprep.subr.bf16.mxu0 0
        %6756 = vmatpush1.bf16.msra.mxu0 0
        %6757 = vmatprep.subr.bf16.mxu0 0
        %6758 = vmatpush1.bf16.msra.mxu0 0
        %6759 = vmatprep.subr.bf16.mxu0 0
        %6760 = vmatpush1.bf16.msra.mxu0 0
        %6761 = vmatprep.subr.bf16.mxu0 %v6732
        %6762 = vmatpush1.bf16.msra.mxu0 %v6731
        %6763 = vmatprep.subr.bf16.mxu0 %v6730
        %6764 = vmatpush1.bf16.msra.mxu0 %v6729
        %6765 = vmatprep.subr.bf16.mxu0 0
        %6766 = vmatpush2.bf16.msra.mxu0 0
        %6767 = vmatprep.subr.bf16.mxu0 0
        %6768 = vmatpush2.bf16.msra.mxu0 0
        %6769 = vmatprep.subr.bf16.mxu0 0
        %6770 = vmatpush2.bf16.msra.mxu0 0
        %6771 = vmatprep.subr.bf16.mxu0 0
        %6772 = vmatpush2.bf16.msra.mxu0 0
        %6773 = vmatprep.subr.bf16.mxu0 0
        %6774 = vmatpush2.bf16.msra.mxu0 0
        %6775 = vmatprep.subr.bf16.mxu0 0
        %6776 = vmatpush2.bf16.msra.mxu0 0
        %6777 = vmatprep.subr.bf16.mxu0 0
        %6778 = vmatpush2.bf16.msra.mxu0 0
        %6779 = vmatprep.subr.bf16.mxu0 0
        %6780 = vmatpush2.bf16.msra.mxu0 0
        %6781 = vmatprep.mubr.bf16.mxu0 0
        %6782 = vmatmul.mubr.bf16.gmra.mxu0 %v6738
        %v6783 = vpop.f32.mrf.mxu0
        %v6784 = vadd.f32 0.0, %v6783
        %v6785 = vpop.f32.mrf.mxu0
        %v6786 = vadd.f32 0.0, %v6785
        %v6787 = vpop.f32.mrf.mxu0
        %v6788 = vadd.f32 0.0, %v6787
        %v6789 = vpop.f32.mrf.mxu0
        %v6790 = vadd.f32 0.0, %v6789
        %6791 = vmatprep.mubr.bf16.mxu0 0
        %6792 = vmatmul.mubr.bf16.gmra.mxu0 %v6741
        %v6793 = vpop.f32.mrf.mxu0
        %v6794 = vadd.f32 0.0, %v6793
        %v6795 = vpop.f32.mrf.mxu0
        %v6796 = vadd.f32 0.0, %v6795
        %v6797 = vpop.f32.mrf.mxu0
        %v6798 = vadd.f32 0.0, %v6797
        %v6799 = vpop.f32.mrf.mxu0
        %v6800 = vadd.f32 0.0, %v6799
        %6801 = vmatprep.mubr.bf16.mxu0 0
        %6802 = vmatmul.mubr.bf16.gmra.mxu0 %v6744
        %v6803 = vpop.f32.mrf.mxu0
        %v6804 = vadd.f32 0.0, %v6803
        %v6805 = vpop.f32.mrf.mxu0
        %v6806 = vadd.f32 0.0, %v6805
        %v6807 = vpop.f32.mrf.mxu0
        %v6808 = vadd.f32 0.0, %v6807
        %v6809 = vpop.f32.mrf.mxu0
        %v6810 = vadd.f32 0.0, %v6809
        %6811 = vmatprep.mubr.bf16.mxu0 0
        %6812 = vmatmul.mubr.bf16.gmra.mxu0 %v6747
        %v6813 = vpop.f32.mrf.mxu0
        %v6814 = vadd.f32 0.0, %v6813
        %v6815 = vpop.f32.mrf.mxu0
        %v6816 = vadd.f32 0.0, %v6815
        %v6817 = vpop.f32.mrf.mxu0
        %v6818 = vadd.f32 0.0, %v6817
        %v6819 = vpop.f32.mrf.mxu0
        %v6820 = vadd.f32 0.0, %v6819
        %6821 = vdwg.mxu0
        %6822 = vst [vmem:[#allocation7 + $0x240] sm:$0xff] %v6784
        %6823 = vst.msk [vmem:[#allocation7 + $0x248] sm:$0xff] %vm6363, %v6786
        %6824 = vst [vmem:[#allocation7 + $0x258] sm:$0xff] %v6788
        %6825 = vst.msk [vmem:[#allocation7 + $0x260] sm:$0xff] %vm6363, %v6790
        %6826 = vst [vmem:[#allocation7 + $0x270] sm:$0xff] %v6794
        %6827 = vst.msk [vmem:[#allocation7 + $0x278] sm:$0xff] %vm6363, %v6796
        %6828 = vst [vmem:[#allocation7 + $0x288] sm:$0xff] %v6798
        %6829 = vst.msk [vmem:[#allocation7 + $0x290] sm:$0xff] %vm6363, %v6800
        %6830 = vst [vmem:[#allocation7 + $0x2a0] sm:$0xff] %v6804
        %6831 = vst.msk [vmem:[#allocation7 + $0x2a8] sm:$0xff] %vm6363, %v6806
        %6832 = vst [vmem:[#allocation7 + $0x2b8] sm:$0xff] %v6808
        %6833 = vst.msk [vmem:[#allocation7 + $0x2c0] sm:$0xff] %vm6363, %v6810
        %6834 = vst [vmem:[#allocation7 + $0x2d0] sm:$0xff] %v6814
        %6835 = vst.msk [vmem:[#allocation7 + $0x2d8] sm:$0xff] %vm6363, %v6816
        %6836 = vst [vmem:[#allocation7 + $0x2e8] sm:$0xff] %v6818
        %6837 = vst.msk [vmem:[#allocation7 + $0x2f0] sm:$0xff] %vm6363, %v6820
        %v6838 = vld [vmem:[%s6] sm:$0x1]
        %v6840 = vlaneseq
        %v6841 = vshrl.u32 %v6840, 7
        %v6842 = vsub.s32 0, %v6841
        %v6843 = vrot.slane %v6838, %v6842
        %v6845 = vld [vmem:[#allocation7] sm:$0xff]
        %v6846 = vld [vmem:[#allocation7 + $0x18] sm:$0xff]
        %v6847 = vld [vmem:[#allocation7 + $0x30] sm:$0xff]
        %v6848 = vld [vmem:[#allocation7 + $0x48] sm:$0xff]
        %v6849 = vld [vmem:[#allocation7 + $0x60] sm:$0xff]
        %v6850 = vld [vmem:[#allocation7 + $0x78] sm:$0xff]
        %v6851 = vld [vmem:[#allocation7 + $0x90] sm:$0xff]
        %v6852 = vld [vmem:[#allocation7 + $0xa8] sm:$0xff]
        %v6853 = vld [vmem:[#allocation7 + $0xc0] sm:$0xff]
        %v6854 = vld [vmem:[#allocation7 + $0xd8] sm:$0xff]
        %v6855 = vld [vmem:[#allocation7 + $0xf0] sm:$0xff]
        %v6856 = vld [vmem:[#allocation7 + $0x108] sm:$0xff]
        %v6857 = vld [vmem:[#allocation7 + $0x120] sm:$0xff]
        %v6858 = vld [vmem:[#allocation7 + $0x138] sm:$0xff]
        %v6859 = vld [vmem:[#allocation7 + $0x150] sm:$0xff]
        %v6860 = vld [vmem:[#allocation7 + $0x168] sm:$0xff]
        %v6861 = vadd.f32 %v6843, %v6845
        %v6862 = vadd.f32 %v6843, %v6846
        %v6863 = vadd.f32 %v6843, %v6847
        %v6864 = vadd.f32 %v6843, %v6848
        %v6865 = vadd.f32 %v6843, %v6849
        %v6866 = vadd.f32 %v6843, %v6850
        %v6867 = vadd.f32 %v6843, %v6851
        %v6868 = vadd.f32 %v6843, %v6852
        %v6869 = vadd.f32 %v6843, %v6853
        %v6870 = vadd.f32 %v6843, %v6854
        %v6871 = vadd.f32 %v6843, %v6855
        %v6872 = vadd.f32 %v6843, %v6856
        %v6873 = vadd.f32 %v6843, %v6857
        %v6874 = vadd.f32 %v6843, %v6858
        %v6875 = vadd.f32 %v6843, %v6859
        %v6876 = vadd.f32 %v6843, %v6860
        %v6877 = vld [vmem:[#allocation7] sm:$0xfc]
        %v6878 = vld [vmem:[#allocation7 + $0x180] sm:$0x3]
        %v6896 = vrot.slane %v6877, 2
        %v6897 = vrot.slane %v6846, 2
        %v6898 = vsel %vm1454, %v6896, %v6897
        %v6899 = vrot.slane %v6847, 2
        %v6900 = vsel %vm1454, %v6897, %v6899
        %v6901 = vrot.slane %v6848, 2
        %v6902 = vsel %vm1454, %v6899, %v6901
        %v6903 = vrot.slane %v6849, 2
        %v6904 = vsel %vm1454, %v6901, %v6903
        %v6905 = vrot.slane %v6850, 2
        %v6906 = vsel %vm1454, %v6903, %v6905
        %v6907 = vrot.slane %v6851, 2
        %v6908 = vsel %vm1454, %v6905, %v6907
        %v6909 = vrot.slane %v6852, 2
        %v6910 = vsel %vm1454, %v6907, %v6909
        %v6911 = vrot.slane %v6853, 2
        %v6912 = vsel %vm1454, %v6909, %v6911
        %v6913 = vrot.slane %v6854, 2
        %v6914 = vsel %vm1454, %v6911, %v6913
        %v6915 = vrot.slane %v6855, 2
        %v6916 = vsel %vm1454, %v6913, %v6915
        %v6917 = vrot.slane %v6856, 2
        %v6918 = vsel %vm1454, %v6915, %v6917
        %v6919 = vrot.slane %v6857, 2
        %v6920 = vsel %vm1454, %v6917, %v6919
        %v6921 = vrot.slane %v6858, 2
        %v6922 = vsel %vm1454, %v6919, %v6921
        %v6923 = vrot.slane %v6859, 2
        %v6924 = vsel %vm1454, %v6921, %v6923
        %v6925 = vrot.slane %v6860, 2
        %v6926 = vsel %vm1454, %v6923, %v6925
        %v6927 = vrot.slane %v6878, 2
        %v6928 = vsel %vm1454, %v6925, %v6927
        %6929 = vrot.lane.b32.xlu0 %v6898, 112
        %v6930 = vpop.permute.xlu0 %6929
        %6931 = vrot.lane.b32.xlu0 %v6900, 112
        %v6932 = vpop.permute.xlu0 %6931
        %6933 = vrot.lane.b32.xlu0 %v6902, 112
        %v6934 = vpop.permute.xlu0 %6933
        %6935 = vrot.lane.b32.xlu0 %v6904, 112
        %v6936 = vpop.permute.xlu0 %6935
        %6937 = vrot.lane.b32.xlu0 %v6906, 112
        %v6938 = vpop.permute.xlu0 %6937
        %6939 = vrot.lane.b32.xlu0 %v6908, 112
        %v6940 = vpop.permute.xlu0 %6939
        %6941 = vrot.lane.b32.xlu0 %v6910, 112
        %v6942 = vpop.permute.xlu0 %6941
        %6943 = vrot.lane.b32.xlu0 %v6912, 112
        %v6944 = vpop.permute.xlu0 %6943
        %6945 = vrot.lane.b32.xlu0 %v6914, 112
        %v6946 = vpop.permute.xlu0 %6945
        %6947 = vrot.lane.b32.xlu0 %v6916, 112
        %v6948 = vpop.permute.xlu0 %6947
        %6949 = vrot.lane.b32.xlu0 %v6918, 112
        %v6950 = vpop.permute.xlu0 %6949
        %6951 = vrot.lane.b32.xlu0 %v6920, 112
        %v6952 = vpop.permute.xlu0 %6951
        %6953 = vrot.lane.b32.xlu0 %v6922, 112
        %v6954 = vpop.permute.xlu0 %6953
        %6955 = vrot.lane.b32.xlu0 %v6924, 112
        %v6956 = vpop.permute.xlu0 %6955
        %6957 = vrot.lane.b32.xlu0 %v6926, 112
        %v6958 = vpop.permute.xlu0 %6957
        %6959 = vrot.lane.b32.xlu0 %v6928, 112
        %v6960 = vpop.permute.xlu0 %6959
        %v6977 = vadd.f32 %v6861, %v6930
        %v6978 = vadd.f32 %v6862, %v6932
        %v6979 = vadd.f32 %v6863, %v6934
        %v6980 = vadd.f32 %v6864, %v6936
        %v6981 = vadd.f32 %v6865, %v6938
        %v6982 = vadd.f32 %v6866, %v6940
        %v6983 = vadd.f32 %v6867, %v6942
        %v6984 = vadd.f32 %v6868, %v6944
        %v6985 = vadd.f32 %v6869, %v6946
        %v6986 = vadd.f32 %v6870, %v6948
        %v6987 = vadd.f32 %v6871, %v6950
        %v6988 = vadd.f32 %v6872, %v6952
        %v6989 = vadd.f32 %v6873, %v6954
        %v6990 = vadd.f32 %v6874, %v6956
        %v6991 = vadd.f32 %v6875, %v6958
        %v6992 = vadd.f32 %v6876, %v6960
        %v6993 = vld [vmem:[#allocation7] sm:$0xf0]
        %v6994 = vld [vmem:[#allocation7 + $0x180] sm:$0xf]
        %vm6997 = vcmask 1043456
        %v6998 = vrot.slane %v6993, 4
        %v6999 = vrot.slane %v6846, 4
        %v7000 = vsel %vm6997, %v6998, %v6999
        %v7001 = vrot.slane %v6847, 4
        %v7002 = vsel %vm6997, %v6999, %v7001
        %v7003 = vrot.slane %v6848, 4
        %v7004 = vsel %vm6997, %v7001, %v7003
        %v7005 = vrot.slane %v6849, 4
        %v7006 = vsel %vm6997, %v7003, %v7005
        %v7007 = vrot.slane %v6850, 4
        %v7008 = vsel %vm6997, %v7005, %v7007
        %v7009 = vrot.slane %v6851, 4
        %v7010 = vsel %vm6997, %v7007, %v7009
        %v7011 = vrot.slane %v6852, 4
        %v7012 = vsel %vm6997, %v7009, %v7011
        %v7013 = vrot.slane %v6853, 4
        %v7014 = vsel %vm6997, %v7011, %v7013
        %v7015 = vrot.slane %v6854, 4
        %v7016 = vsel %vm6997, %v7013, %v7015
        %v7017 = vrot.slane %v6855, 4
        %v7018 = vsel %vm6997, %v7015, %v7017
        %v7019 = vrot.slane %v6856, 4
        %v7020 = vsel %vm6997, %v7017, %v7019
        %v7021 = vrot.slane %v6857, 4
        %v7022 = vsel %vm6997, %v7019, %v7021
        %v7023 = vrot.slane %v6858, 4
        %v7024 = vsel %vm6997, %v7021, %v7023
        %v7025 = vrot.slane %v6859, 4
        %v7026 = vsel %vm6997, %v7023, %v7025
        %v7027 = vrot.slane %v6860, 4
        %v7028 = vsel %vm6997, %v7025, %v7027
        %v7029 = vrot.slane %v6994, 4
        %v7030 = vsel %vm6997, %v7027, %v7029
        %7031 = vrot.lane.b32.xlu0 %v7000, 96
        %v7032 = vpop.permute.xlu0 %7031
        %7033 = vrot.lane.b32.xlu0 %v7002, 96
        %v7034 = vpop.permute.xlu0 %7033
        %7035 = vrot.lane.b32.xlu0 %v7004, 96
        %v7036 = vpop.permute.xlu0 %7035
        %7037 = vrot.lane.b32.xlu0 %v7006, 96
        %v7038 = vpop.permute.xlu0 %7037
        %7039 = vrot.lane.b32.xlu0 %v7008, 96
        %v7040 = vpop.permute.xlu0 %7039
        %7041 = vrot.lane.b32.xlu0 %v7010, 96
        %v7042 = vpop.permute.xlu0 %7041
        %7043 = vrot.lane.b32.xlu0 %v7012, 96
        %v7044 = vpop.permute.xlu0 %7043
        %7045 = vrot.lane.b32.xlu0 %v7014, 96
        %v7046 = vpop.permute.xlu0 %7045
        %7047 = vrot.lane.b32.xlu0 %v7016, 96
        %v7048 = vpop.permute.xlu0 %7047
        %7049 = vrot.lane.b32.xlu0 %v7018, 96
        %v7050 = vpop.permute.xlu0 %7049
        %7051 = vrot.lane.b32.xlu0 %v7020, 96
        %v7052 = vpop.permute.xlu0 %7051
        %7053 = vrot.lane.b32.xlu0 %v7022, 96
        %v7054 = vpop.permute.xlu0 %7053
        %7055 = vrot.lane.b32.xlu0 %v7024, 96
        %v7056 = vpop.permute.xlu0 %7055
        %7057 = vrot.lane.b32.xlu0 %v7026, 96
        %v7058 = vpop.permute.xlu0 %7057
        %7059 = vrot.lane.b32.xlu0 %v7028, 96
        %v7060 = vpop.permute.xlu0 %7059
        %7061 = vrot.lane.b32.xlu0 %v7030, 96
        %v7062 = vpop.permute.xlu0 %7061
        %v7079 = vadd.f32 %v6977, %v7032
        %v7080 = vadd.f32 %v6978, %v7034
        %v7081 = vadd.f32 %v6979, %v7036
        %v7082 = vadd.f32 %v6980, %v7038
        %v7083 = vadd.f32 %v6981, %v7040
        %v7084 = vadd.f32 %v6982, %v7042
        %v7085 = vadd.f32 %v6983, %v7044
        %v7086 = vadd.f32 %v6984, %v7046
        %v7087 = vadd.f32 %v6985, %v7048
        %v7088 = vadd.f32 %v6986, %v7050
        %v7089 = vadd.f32 %v6987, %v7052
        %v7090 = vadd.f32 %v6988, %v7054
        %v7091 = vadd.f32 %v6989, %v7056
        %v7092 = vadd.f32 %v6990, %v7058
        %v7093 = vadd.f32 %v6991, %v7060
        %v7094 = vadd.f32 %v6992, %v7062
        %v7095 = vld [vmem:[#allocation7 + $0x180] sm:$0xff]
        %v7096 = vld [vmem:[#allocation7 + $0x198] sm:$0xff]
        %v7097 = vld [vmem:[#allocation7 + $0x1b0] sm:$0xff]
        %v7098 = vld [vmem:[#allocation7 + $0x1c8] sm:$0xff]
        %7103 = vrot.lane.b32.xlu0 %v6849, 80
        %v7104 = vpop.permute.xlu0 %7103
        %7105 = vrot.lane.b32.xlu0 %v6850, 80
        %v7106 = vpop.permute.xlu0 %7105
        %7107 = vrot.lane.b32.xlu0 %v6851, 80
        %v7108 = vpop.permute.xlu0 %7107
        %7109 = vrot.lane.b32.xlu0 %v6852, 80
        %v7110 = vpop.permute.xlu0 %7109
        %7111 = vrot.lane.b32.xlu0 %v6853, 80
        %v7112 = vpop.permute.xlu0 %7111
        %7113 = vrot.lane.b32.xlu0 %v6854, 80
        %v7114 = vpop.permute.xlu0 %7113
        %7115 = vrot.lane.b32.xlu0 %v6855, 80
        %v7116 = vpop.permute.xlu0 %7115
        %7117 = vrot.lane.b32.xlu0 %v6856, 80
        %v7118 = vpop.permute.xlu0 %7117
        %7119 = vrot.lane.b32.xlu0 %v6857, 80
        %v7120 = vpop.permute.xlu0 %7119
        %7121 = vrot.lane.b32.xlu0 %v6858, 80
        %v7122 = vpop.permute.xlu0 %7121
        %7123 = vrot.lane.b32.xlu0 %v6859, 80
        %v7124 = vpop.permute.xlu0 %7123
        %7125 = vrot.lane.b32.xlu0 %v6860, 80
        %v7126 = vpop.permute.xlu0 %7125
        %7127 = vrot.lane.b32.xlu0 %v7095, 80
        %v7128 = vpop.permute.xlu0 %7127
        %7129 = vrot.lane.b32.xlu0 %v7096, 80
        %v7130 = vpop.permute.xlu0 %7129
        %7131 = vrot.lane.b32.xlu0 %v7097, 80
        %v7132 = vpop.permute.xlu0 %7131
        %7133 = vrot.lane.b32.xlu0 %v7098, 80
        %v7134 = vpop.permute.xlu0 %7133
        %v7151 = vadd.f32 %v7079, %v7104
        %v7152 = vadd.f32 %v7080, %v7106
        %v7153 = vadd.f32 %v7081, %v7108
        %v7154 = vadd.f32 %v7082, %v7110
        %v7155 = vadd.f32 %v7083, %v7112
        %v7156 = vadd.f32 %v7084, %v7114
        %v7157 = vadd.f32 %v7085, %v7116
        %v7158 = vadd.f32 %v7086, %v7118
        %v7159 = vadd.f32 %v7087, %v7120
        %v7160 = vadd.f32 %v7088, %v7122
        %v7161 = vadd.f32 %v7089, %v7124
        %v7162 = vadd.f32 %v7090, %v7126
        %v7163 = vadd.f32 %v7091, %v7128
        %v7164 = vadd.f32 %v7092, %v7130
        %v7165 = vadd.f32 %v7093, %v7132
        %v7166 = vadd.f32 %v7094, %v7134
        %v7167 = vld [vmem:[#allocation7 + $0x60] sm:$0xfc]
        %v7168 = vld [vmem:[#allocation7 + $0x1e0] sm:$0x3]
        %v7171 = vrot.slane %v7167, 2
        %v7172 = vsel %vm1454, %v7171, %v6905
        %v7173 = vrot.slane %v7095, 2
        %v7174 = vsel %vm1454, %v6925, %v7173
        %v7175 = vrot.slane %v7096, 2
        %v7176 = vsel %vm1454, %v7173, %v7175
        %v7177 = vrot.slane %v7097, 2
        %v7178 = vsel %vm1454, %v7175, %v7177
        %v7179 = vrot.slane %v7098, 2
        %v7180 = vsel %vm1454, %v7177, %v7179
        %v7181 = vrot.slane %v7168, 2
        %v7182 = vsel %vm1454, %v7179, %v7181
        %7183 = vrot.lane.b32.xlu0 %v7172, 64
        %v7184 = vpop.permute.xlu0 %7183
        %7185 = vrot.lane.b32.xlu0 %v6908, 64
        %v7186 = vpop.permute.xlu0 %7185
        %7187 = vrot.lane.b32.xlu0 %v6910, 64
        %v7188 = vpop.permute.xlu0 %7187
        %7189 = vrot.lane.b32.xlu0 %v6912, 64
        %v7190 = vpop.permute.xlu0 %7189
        %7191 = vrot.lane.b32.xlu0 %v6914, 64
        %v7192 = vpop.permute.xlu0 %7191
        %7193 = vrot.lane.b32.xlu0 %v6916, 64
        %v7194 = vpop.permute.xlu0 %7193
        %7195 = vrot.lane.b32.xlu0 %v6918, 64
        %v7196 = vpop.permute.xlu0 %7195
        %7197 = vrot.lane.b32.xlu0 %v6920, 64
        %v7198 = vpop.permute.xlu0 %7197
        %7199 = vrot.lane.b32.xlu0 %v6922, 64
        %v7200 = vpop.permute.xlu0 %7199
        %7201 = vrot.lane.b32.xlu0 %v6924, 64
        %v7202 = vpop.permute.xlu0 %7201
        %7203 = vrot.lane.b32.xlu0 %v6926, 64
        %v7204 = vpop.permute.xlu0 %7203
        %7205 = vrot.lane.b32.xlu0 %v7174, 64
        %v7206 = vpop.permute.xlu0 %7205
        %7207 = vrot.lane.b32.xlu0 %v7176, 64
        %v7208 = vpop.permute.xlu0 %7207
        %7209 = vrot.lane.b32.xlu0 %v7178, 64
        %v7210 = vpop.permute.xlu0 %7209
        %7211 = vrot.lane.b32.xlu0 %v7180, 64
        %v7212 = vpop.permute.xlu0 %7211
        %7213 = vrot.lane.b32.xlu0 %v7182, 64
        %v7214 = vpop.permute.xlu0 %7213
        %v7231 = vadd.f32 %v7151, %v7184
        %v7232 = vadd.f32 %v7152, %v7186
        %v7233 = vadd.f32 %v7153, %v7188
        %v7234 = vadd.f32 %v7154, %v7190
        %v7235 = vadd.f32 %v7155, %v7192
        %v7236 = vadd.f32 %v7156, %v7194
        %v7237 = vadd.f32 %v7157, %v7196
        %v7238 = vadd.f32 %v7158, %v7198
        %v7239 = vadd.f32 %v7159, %v7200
        %v7240 = vadd.f32 %v7160, %v7202
        %v7241 = vadd.f32 %v7161, %v7204
        %v7242 = vadd.f32 %v7162, %v7206
        %v7243 = vadd.f32 %v7163, %v7208
        %v7244 = vadd.f32 %v7164, %v7210
        %v7245 = vadd.f32 %v7165, %v7212
        %v7246 = vadd.f32 %v7166, %v7214
        %v7247 = vld [vmem:[#allocation7 + $0x60] sm:$0xf0]
        %v7248 = vld [vmem:[#allocation7 + $0x1e0] sm:$0xf]
        %v7251 = vrot.slane %v7247, 4
        %v7252 = vsel %vm6997, %v7251, %v7007
        %v7253 = vrot.slane %v7095, 4
        %v7254 = vsel %vm6997, %v7027, %v7253
        %v7255 = vrot.slane %v7096, 4
        %v7256 = vsel %vm6997, %v7253, %v7255
        %v7257 = vrot.slane %v7097, 4
        %v7258 = vsel %vm6997, %v7255, %v7257
        %v7259 = vrot.slane %v7098, 4
        %v7260 = vsel %vm6997, %v7257, %v7259
        %v7261 = vrot.slane %v7248, 4
        %v7262 = vsel %vm6997, %v7259, %v7261
        %7263 = vrot.lane.b32.xlu0 %v7252, 48
        %v7264 = vpop.permute.xlu0 %7263
        %7265 = vrot.lane.b32.xlu0 %v7010, 48
        %v7266 = vpop.permute.xlu0 %7265
        %7267 = vrot.lane.b32.xlu0 %v7012, 48
        %v7268 = vpop.permute.xlu0 %7267
        %7269 = vrot.lane.b32.xlu0 %v7014, 48
        %v7270 = vpop.permute.xlu0 %7269
        %7271 = vrot.lane.b32.xlu0 %v7016, 48
        %v7272 = vpop.permute.xlu0 %7271
        %7273 = vrot.lane.b32.xlu0 %v7018, 48
        %v7274 = vpop.permute.xlu0 %7273
        %7275 = vrot.lane.b32.xlu0 %v7020, 48
        %v7276 = vpop.permute.xlu0 %7275
        %7277 = vrot.lane.b32.xlu0 %v7022, 48
        %v7278 = vpop.permute.xlu0 %7277
        %7279 = vrot.lane.b32.xlu0 %v7024, 48
        %v7280 = vpop.permute.xlu0 %7279
        %7281 = vrot.lane.b32.xlu0 %v7026, 48
        %v7282 = vpop.permute.xlu0 %7281
        %7283 = vrot.lane.b32.xlu0 %v7028, 48
        %v7284 = vpop.permute.xlu0 %7283
        %7285 = vrot.lane.b32.xlu0 %v7254, 48
        %v7286 = vpop.permute.xlu0 %7285
        %7287 = vrot.lane.b32.xlu0 %v7256, 48
        %v7288 = vpop.permute.xlu0 %7287
        %7289 = vrot.lane.b32.xlu0 %v7258, 48
        %v7290 = vpop.permute.xlu0 %7289
        %7291 = vrot.lane.b32.xlu0 %v7260, 48
        %v7292 = vpop.permute.xlu0 %7291
        %7293 = vrot.lane.b32.xlu0 %v7262, 48
        %v7294 = vpop.permute.xlu0 %7293
        %v7311 = vadd.f32 %v7231, %v7264
        %v7312 = vadd.f32 %v7232, %v7266
        %v7313 = vadd.f32 %v7233, %v7268
        %v7314 = vadd.f32 %v7234, %v7270
        %v7315 = vadd.f32 %v7235, %v7272
        %v7316 = vadd.f32 %v7236, %v7274
        %v7317 = vadd.f32 %v7237, %v7276
        %v7318 = vadd.f32 %v7238, %v7278
        %v7319 = vadd.f32 %v7239, %v7280
        %v7320 = vadd.f32 %v7240, %v7282
        %v7321 = vadd.f32 %v7241, %v7284
        %v7322 = vadd.f32 %v7242, %v7286
        %v7323 = vadd.f32 %v7243, %v7288
        %v7324 = vadd.f32 %v7244, %v7290
        %v7325 = vadd.f32 %v7245, %v7292
        %v7326 = vadd.f32 %v7246, %v7294
        %v7327 = vld [vmem:[#allocation7 + $0x1e0] sm:$0xff]
        %v7328 = vld [vmem:[#allocation7 + $0x1f8] sm:$0xff]
        %v7329 = vld [vmem:[#allocation7 + $0x210] sm:$0xff]
        %v7330 = vld [vmem:[#allocation7 + $0x228] sm:$0xff]
        %7335 = vrot.lane.b32.xlu0 %v6853, 32
        %v7336 = vpop.permute.xlu0 %7335
        %7337 = vrot.lane.b32.xlu0 %v6854, 32
        %v7338 = vpop.permute.xlu0 %7337
        %7339 = vrot.lane.b32.xlu0 %v6855, 32
        %v7340 = vpop.permute.xlu0 %7339
        %7341 = vrot.lane.b32.xlu0 %v6856, 32
        %v7342 = vpop.permute.xlu0 %7341
        %7343 = vrot.lane.b32.xlu0 %v6857, 32
        %v7344 = vpop.permute.xlu0 %7343
        %7345 = vrot.lane.b32.xlu0 %v6858, 32
        %v7346 = vpop.permute.xlu0 %7345
        %7347 = vrot.lane.b32.xlu0 %v6859, 32
        %v7348 = vpop.permute.xlu0 %7347
        %7349 = vrot.lane.b32.xlu0 %v6860, 32
        %v7350 = vpop.permute.xlu0 %7349
        %7351 = vrot.lane.b32.xlu0 %v7095, 32
        %v7352 = vpop.permute.xlu0 %7351
        %7353 = vrot.lane.b32.xlu0 %v7096, 32
        %v7354 = vpop.permute.xlu0 %7353
        %7355 = vrot.lane.b32.xlu0 %v7097, 32
        %v7356 = vpop.permute.xlu0 %7355
        %7357 = vrot.lane.b32.xlu0 %v7098, 32
        %v7358 = vpop.permute.xlu0 %7357
        %7359 = vrot.lane.b32.xlu0 %v7327, 32
        %v7360 = vpop.permute.xlu0 %7359
        %7361 = vrot.lane.b32.xlu0 %v7328, 32
        %v7362 = vpop.permute.xlu0 %7361
        %7363 = vrot.lane.b32.xlu0 %v7329, 32
        %v7364 = vpop.permute.xlu0 %7363
        %7365 = vrot.lane.b32.xlu0 %v7330, 32
        %v7366 = vpop.permute.xlu0 %7365
        %v7383 = vadd.f32 %v7311, %v7336
        %v7384 = vadd.f32 %v7312, %v7338
        %v7385 = vadd.f32 %v7313, %v7340
        %v7386 = vadd.f32 %v7314, %v7342
        %v7387 = vadd.f32 %v7315, %v7344
        %v7388 = vadd.f32 %v7316, %v7346
        %v7389 = vadd.f32 %v7317, %v7348
        %v7390 = vadd.f32 %v7318, %v7350
        %v7391 = vadd.f32 %v7319, %v7352
        %v7392 = vadd.f32 %v7320, %v7354
        %v7393 = vadd.f32 %v7321, %v7356
        %v7394 = vadd.f32 %v7322, %v7358
        %v7395 = vadd.f32 %v7323, %v7360
        %v7396 = vadd.f32 %v7324, %v7362
        %v7397 = vadd.f32 %v7325, %v7364
        %v7398 = vadd.f32 %v7326, %v7366
        %v7399 = vld [vmem:[#allocation7 + $0xc0] sm:$0xfc]
        %v7400 = vld [vmem:[#allocation7 + $0x240] sm:$0x3]
        %v7403 = vrot.slane %v7399, 2
        %v7404 = vsel %vm1454, %v7403, %v6913
        %v7405 = vrot.slane %v7327, 2
        %v7406 = vsel %vm1454, %v7179, %v7405
        %v7407 = vrot.slane %v7328, 2
        %v7408 = vsel %vm1454, %v7405, %v7407
        %v7409 = vrot.slane %v7329, 2
        %v7410 = vsel %vm1454, %v7407, %v7409
        %v7411 = vrot.slane %v7330, 2
        %v7412 = vsel %vm1454, %v7409, %v7411
        %v7413 = vrot.slane %v7400, 2
        %v7414 = vsel %vm1454, %v7411, %v7413
        %7415 = vrot.lane.b32.xlu0 %v7404, 16
        %v7416 = vpop.permute.xlu0 %7415
        %7417 = vrot.lane.b32.xlu0 %v6916, 16
        %v7418 = vpop.permute.xlu0 %7417
        %7419 = vrot.lane.b32.xlu0 %v6918, 16
        %v7420 = vpop.permute.xlu0 %7419
        %7421 = vrot.lane.b32.xlu0 %v6920, 16
        %v7422 = vpop.permute.xlu0 %7421
        %7423 = vrot.lane.b32.xlu0 %v6922, 16
        %v7424 = vpop.permute.xlu0 %7423
        %7425 = vrot.lane.b32.xlu0 %v6924, 16
        %v7426 = vpop.permute.xlu0 %7425
        %7427 = vrot.lane.b32.xlu0 %v6926, 16
        %v7428 = vpop.permute.xlu0 %7427
        %7429 = vrot.lane.b32.xlu0 %v7174, 16
        %v7430 = vpop.permute.xlu0 %7429
        %7431 = vrot.lane.b32.xlu0 %v7176, 16
        %v7432 = vpop.permute.xlu0 %7431
        %7433 = vrot.lane.b32.xlu0 %v7178, 16
        %v7434 = vpop.permute.xlu0 %7433
        %7435 = vrot.lane.b32.xlu0 %v7180, 16
        %v7436 = vpop.permute.xlu0 %7435
        %7437 = vrot.lane.b32.xlu0 %v7406, 16
        %v7438 = vpop.permute.xlu0 %7437
        %7439 = vrot.lane.b32.xlu0 %v7408, 16
        %v7440 = vpop.permute.xlu0 %7439
        %7441 = vrot.lane.b32.xlu0 %v7410, 16
        %v7442 = vpop.permute.xlu0 %7441
        %7443 = vrot.lane.b32.xlu0 %v7412, 16
        %v7444 = vpop.permute.xlu0 %7443
        %7445 = vrot.lane.b32.xlu0 %v7414, 16
        %v7446 = vpop.permute.xlu0 %7445
        %v7463 = vadd.f32 %v7383, %v7416
        %v7464 = vadd.f32 %v7384, %v7418
        %v7465 = vadd.f32 %v7385, %v7420
        %v7466 = vadd.f32 %v7386, %v7422
        %v7467 = vadd.f32 %v7387, %v7424
        %v7468 = vadd.f32 %v7388, %v7426
        %v7469 = vadd.f32 %v7389, %v7428
        %v7470 = vadd.f32 %v7390, %v7430
        %v7471 = vadd.f32 %v7391, %v7432
        %v7472 = vadd.f32 %v7392, %v7434
        %v7473 = vadd.f32 %v7393, %v7436
        %v7474 = vadd.f32 %v7394, %v7438
        %v7475 = vadd.f32 %v7395, %v7440
        %v7476 = vadd.f32 %v7396, %v7442
        %v7477 = vadd.f32 %v7397, %v7444
        %v7478 = vadd.f32 %v7398, %v7446
        %v7479 = vld [vmem:[#allocation7 + $0xc8] sm:$0xf0]
        %v7480 = vld [vmem:[#allocation7 + $0xe0] sm:$0xff]
        %v7481 = vld [vmem:[#allocation7 + $0xf8] sm:$0xff]
        %v7482 = vld [vmem:[#allocation7 + $0x110] sm:$0xff]
        %v7483 = vld [vmem:[#allocation7 + $0x128] sm:$0xff]
        %v7484 = vld [vmem:[#allocation7 + $0x140] sm:$0xff]
        %v7485 = vld [vmem:[#allocation7 + $0x158] sm:$0xff]
        %v7486 = vld [vmem:[#allocation7 + $0x170] sm:$0xff]
        %v7487 = vld [vmem:[#allocation7 + $0x188] sm:$0xff]
        %v7488 = vld [vmem:[#allocation7 + $0x1a0] sm:$0xff]
        %v7489 = vld [vmem:[#allocation7 + $0x1b8] sm:$0xff]
        %v7490 = vld [vmem:[#allocation7 + $0x1d0] sm:$0xff]
        %v7491 = vld [vmem:[#allocation7 + $0x1e8] sm:$0xff]
        %v7492 = vld [vmem:[#allocation7 + $0x200] sm:$0xff]
        %v7493 = vld [vmem:[#allocation7 + $0x218] sm:$0xff]
        %v7494 = vld [vmem:[#allocation7 + $0x230] sm:$0xff]
        %v7495 = vld [vmem:[#allocation7 + $0x248] sm:$0xf]
        %v7513 = vrot.slane %v7479, 4
        %v7514 = vrot.slane %v7480, 4
        %v7515 = vsel %vm6997, %v7513, %v7514
        %v7516 = vrot.slane %v7481, 4
        %v7517 = vsel %vm6997, %v7514, %v7516
        %v7518 = vrot.slane %v7482, 4
        %v7519 = vsel %vm6997, %v7516, %v7518
        %v7520 = vrot.slane %v7483, 4
        %v7521 = vsel %vm6997, %v7518, %v7520
        %v7522 = vrot.slane %v7484, 4
        %v7523 = vsel %vm6997, %v7520, %v7522
        %v7524 = vrot.slane %v7485, 4
        %v7525 = vsel %vm6997, %v7522, %v7524
        %v7526 = vrot.slane %v7486, 4
        %v7527 = vsel %vm6997, %v7524, %v7526
        %v7528 = vrot.slane %v7487, 4
        %v7529 = vsel %vm6997, %v7526, %v7528
        %v7530 = vrot.slane %v7488, 4
        %v7531 = vsel %vm6997, %v7528, %v7530
        %v7532 = vrot.slane %v7489, 4
        %v7533 = vsel %vm6997, %v7530, %v7532
        %v7534 = vrot.slane %v7490, 4
        %v7535 = vsel %vm6997, %v7532, %v7534
        %v7536 = vrot.slane %v7491, 4
        %v7537 = vsel %vm6997, %v7534, %v7536
        %v7538 = vrot.slane %v7492, 4
        %v7539 = vsel %vm6997, %v7536, %v7538
        %v7540 = vrot.slane %v7493, 4
        %v7541 = vsel %vm6997, %v7538, %v7540
        %v7542 = vrot.slane %v7494, 4
        %v7543 = vsel %vm6997, %v7540, %v7542
        %v7544 = vrot.slane %v7495, 4
        %v7545 = vsel %vm6997, %v7542, %v7544
        %v7562 = vadd.f32 %v7463, %v7515
        %v7563 = vadd.f32 %v7464, %v7517
        %v7564 = vadd.f32 %v7465, %v7519
        %v7565 = vadd.f32 %v7466, %v7521
        %v7566 = vadd.f32 %v7467, %v7523
        %v7567 = vadd.f32 %v7468, %v7525
        %v7568 = vadd.f32 %v7469, %v7527
        %v7569 = vadd.f32 %v7470, %v7529
        %v7570 = vadd.f32 %v7471, %v7531
        %v7571 = vadd.f32 %v7472, %v7533
        %v7572 = vadd.f32 %v7473, %v7535
        %v7573 = vadd.f32 %v7474, %v7537
        %v7574 = vadd.f32 %v7475, %v7539
        %v7575 = vadd.f32 %v7476, %v7541
        %v7576 = vadd.f32 %v7477, %v7543
        %v7577 = vadd.f32 %v7478, %v7545
        %v7578 = vmax.f32 %v7562, 0.0
        %v7579 = vmax.f32 %v7563, 0.0
        %v7580 = vmax.f32 %v7564, 0.0
        %v7581 = vmax.f32 %v7565, 0.0
        %v7582 = vmax.f32 %v7566, 0.0
        %v7583 = vmax.f32 %v7567, 0.0
        %v7584 = vmax.f32 %v7568, 0.0
        %v7585 = vmax.f32 %v7569, 0.0
        %v7586 = vmax.f32 %v7570, 0.0
        %v7587 = vmax.f32 %v7571, 0.0
        %v7588 = vmax.f32 %v7572, 0.0
        %v7589 = vmax.f32 %v7573, 0.0
        %v7590 = vmax.f32 %v7574, 0.0
        %v7591 = vmax.f32 %v7575, 0.0
        %v7592 = vmax.f32 %v7576, 0.0
        %v7593 = vmax.f32 %v7577, 0.0
        %v7594 = vpack.c.bf16 %v7579, %v7578
        %v7595 = vpack.c.bf16 %v7581, %v7580
        %v7596 = vpack.c.bf16 %v7583, %v7582
        %v7597 = vpack.c.bf16 %v7585, %v7584
        %v7598 = vpack.c.bf16 %v7587, %v7586
        %v7599 = vpack.c.bf16 %v7589, %v7588
        %v7600 = vpack.c.bf16 %v7591, %v7590
        %v7601 = vpack.c.bf16 %v7593, %v7592
        %v7610 = vunpack.c.l.b16 %v7594
        %v7611 = vunpack.c.h.b16 %v7594
        %v7612 = vunpack.c.l.b16 %v7595
        %v7613 = vunpack.c.h.b16 %v7595
        %v7614 = vunpack.c.l.b16 %v7596
        %v7615 = vunpack.c.h.b16 %v7596
        %v7616 = vunpack.c.l.b16 %v7597
        %v7617 = vunpack.c.h.b16 %v7597
        %v7618 = vunpack.c.l.b16 %v7598
        %v7619 = vunpack.c.h.b16 %v7598
        %v7620 = vunpack.c.l.b16 %v7599
        %v7621 = vunpack.c.h.b16 %v7599
        %v7622 = vunpack.c.l.b16 %v7600
        %v7623 = vunpack.c.h.b16 %v7600
        %v7624 = vunpack.c.l.b16 %v7601
        %v7625 = vunpack.c.h.b16 %v7601
        %v7626 = vpack.c.b16 %v7610, %v7610
        %v7627 = vpack.c.b16 %v7611, %v7611
        %v7628 = vpack.c.b16 %v7612, %v7612
        %v7629 = vpack.c.b16 %v7613, %v7613
        %v7630 = vpack.c.b16 %v7614, %v7614
        %v7631 = vpack.c.b16 %v7615, %v7615
        %v7632 = vpack.c.b16 %v7616, %v7616
        %v7633 = vpack.c.b16 %v7617, %v7617
        %v7634 = vpack.c.b16 %v7618, %v7618
        %v7635 = vpack.c.b16 %v7619, %v7619
        %v7636 = vpack.c.b16 %v7620, %v7620
        %v7637 = vpack.c.b16 %v7621, %v7621
        %v7638 = vpack.c.b16 %v7622, %v7622
        %v7639 = vpack.c.b16 %v7623, %v7623
        %v7640 = vpack.c.b16 %v7624, %v7624
        %v7641 = vpack.c.b16 %v7625, %v7625
        %vm7658 = vcmask 125952
        %7659 = vst.msk [vmem:[#allocation5] sm:$0xf] %vm7658, %v7626
        %7660 = vst.msk [vmem:[#allocation5 + $0x4] sm:$0xf] %vm7658, %v7627
        %7661 = vst.msk [vmem:[#allocation5 + $0x8] sm:$0xf] %vm7658, %v7628
        %7662 = vst.msk [vmem:[#allocation5 + $0xc] sm:$0xf] %vm7658, %v7629
        %7663 = vst.msk [vmem:[#allocation5 + $0x10] sm:$0xf] %vm7658, %v7630
        %7664 = vst.msk [vmem:[#allocation5 + $0x14] sm:$0xf] %vm7658, %v7631
        %7665 = vst.msk [vmem:[#allocation5 + $0x18] sm:$0xf] %vm7658, %v7632
        %7666 = vst.msk [vmem:[#allocation5 + $0x1c] sm:$0xf] %vm7658, %v7633
        %7667 = vst.msk [vmem:[#allocation5 + $0x20] sm:$0xf] %vm7658, %v7634
        %7668 = vst.msk [vmem:[#allocation5 + $0x24] sm:$0xf] %vm7658, %v7635
        %7669 = vst.msk [vmem:[#allocation5 + $0x28] sm:$0xf] %vm7658, %v7636
        %7670 = vst.msk [vmem:[#allocation5 + $0x2c] sm:$0xf] %vm7658, %v7637
        %7671 = vst.msk [vmem:[#allocation5 + $0x30] sm:$0xf] %vm7658, %v7638
        %7672 = vst.msk [vmem:[#allocation5 + $0x34] sm:$0xf] %vm7658, %v7639
        %7673 = vst.msk [vmem:[#allocation5 + $0x38] sm:$0xf] %vm7658, %v7640
        %7674 = vst.msk [vmem:[#allocation5 + $0x3c] sm:$0xf] %vm7658, %v7641
        %v7675 = vld [vmem:[#allocation7 + $0x180] sm:$0xff]
        %v7676 = vld [vmem:[#allocation7 + $0x198] sm:$0xff]
        %v7677 = vld [vmem:[#allocation7 + $0x1b0] sm:$0xff]
        %v7678 = vld [vmem:[#allocation7 + $0x1c8] sm:$0xff]
        %v7679 = vld [vmem:[#allocation7 + $0x1e0] sm:$0xff]
        %v7680 = vld [vmem:[#allocation7 + $0x1f8] sm:$0xff]
        %v7681 = vld [vmem:[#allocation7 + $0x210] sm:$0xff]
        %v7682 = vld [vmem:[#allocation7 + $0x228] sm:$0xff]
        %v7683 = vld [vmem:[#allocation7 + $0x240] sm:$0xff]
        %v7684 = vld [vmem:[#allocation7 + $0x258] sm:$0xff]
        %v7685 = vld [vmem:[#allocation7 + $0x270] sm:$0xff]
        %v7686 = vld [vmem:[#allocation7 + $0x288] sm:$0xff]
        %v7687 = vld [vmem:[#allocation7 + $0x2a0] sm:$0xff]
        %v7688 = vld [vmem:[#allocation7 + $0x2b8] sm:$0xff]
        %v7689 = vld [vmem:[#allocation7 + $0x2d0] sm:$0xff]
        %v7690 = vld [vmem:[#allocation7 + $0x2e8] sm:$0xff]
        %v7691 = vadd.f32 %v6843, %v7675
        %v7692 = vadd.f32 %v6843, %v7676
        %v7693 = vadd.f32 %v6843, %v7677
        %v7694 = vadd.f32 %v6843, %v7678
        %v7695 = vadd.f32 %v6843, %v7679
        %v7696 = vadd.f32 %v6843, %v7680
        %v7697 = vadd.f32 %v6843, %v7681
        %v7698 = vadd.f32 %v6843, %v7682
        %v7699 = vadd.f32 %v6843, %v7683
        %v7700 = vadd.f32 %v6843, %v7684
        %v7701 = vadd.f32 %v6843, %v7685
        %v7702 = vadd.f32 %v6843, %v7686
        %v7703 = vadd.f32 %v6843, %v7687
        %v7704 = vadd.f32 %v6843, %v7688
        %v7705 = vadd.f32 %v6843, %v7689
        %v7706 = vadd.f32 %v6843, %v7690
        %v7707 = vld [vmem:[#allocation7 + $0x180] sm:$0xfc]
        %v7708 = vld [vmem:[#allocation7 + $0x300] sm:$0x3]
        %v7726 = vrot.slane %v7707, 2
        %v7727 = vrot.slane %v7676, 2
        %v7728 = vsel %vm1454, %v7726, %v7727
        %v7729 = vrot.slane %v7677, 2
        %v7730 = vsel %vm1454, %v7727, %v7729
        %v7731 = vrot.slane %v7678, 2
        %v7732 = vsel %vm1454, %v7729, %v7731
        %v7733 = vrot.slane %v7679, 2
        %v7734 = vsel %vm1454, %v7731, %v7733
        %v7735 = vrot.slane %v7680, 2
        %v7736 = vsel %vm1454, %v7733, %v7735
        %v7737 = vrot.slane %v7681, 2
        %v7738 = vsel %vm1454, %v7735, %v7737
        %v7739 = vrot.slane %v7682, 2
        %v7740 = vsel %vm1454, %v7737, %v7739
        %v7741 = vrot.slane %v7683, 2
        %v7742 = vsel %vm1454, %v7739, %v7741
        %v7743 = vrot.slane %v7684, 2
        %v7744 = vsel %vm1454, %v7741, %v7743
        %v7745 = vrot.slane %v7685, 2
        %v7746 = vsel %vm1454, %v7743, %v7745
        %v7747 = vrot.slane %v7686, 2
        %v7748 = vsel %vm1454, %v7745, %v7747
        %v7749 = vrot.slane %v7687, 2
        %v7750 = vsel %vm1454, %v7747, %v7749
        %v7751 = vrot.slane %v7688, 2
        %v7752 = vsel %vm1454, %v7749, %v7751
        %v7753 = vrot.slane %v7689, 2
        %v7754 = vsel %vm1454, %v7751, %v7753
        %v7755 = vrot.slane %v7690, 2
        %v7756 = vsel %vm1454, %v7753, %v7755
        %v7757 = vrot.slane %v7708, 2
        %v7758 = vsel %vm1454, %v7755, %v7757
        %7759 = vrot.lane.b32.xlu0 %v7728, 112
        %v7760 = vpop.permute.xlu0 %7759
        %7761 = vrot.lane.b32.xlu0 %v7730, 112
        %v7762 = vpop.permute.xlu0 %7761
        %7763 = vrot.lane.b32.xlu0 %v7732, 112
        %v7764 = vpop.permute.xlu0 %7763
        %7765 = vrot.lane.b32.xlu0 %v7734, 112
        %v7766 = vpop.permute.xlu0 %7765
        %7767 = vrot.lane.b32.xlu0 %v7736, 112
        %v7768 = vpop.permute.xlu0 %7767
        %7769 = vrot.lane.b32.xlu0 %v7738, 112
        %v7770 = vpop.permute.xlu0 %7769
        %7771 = vrot.lane.b32.xlu0 %v7740, 112
        %v7772 = vpop.permute.xlu0 %7771
        %7773 = vrot.lane.b32.xlu0 %v7742, 112
        %v7774 = vpop.permute.xlu0 %7773
        %7775 = vrot.lane.b32.xlu0 %v7744, 112
        %v7776 = vpop.permute.xlu0 %7775
        %7777 = vrot.lane.b32.xlu0 %v7746, 112
        %v7778 = vpop.permute.xlu0 %7777
        %7779 = vrot.lane.b32.xlu0 %v7748, 112
        %v7780 = vpop.permute.xlu0 %7779
        %7781 = vrot.lane.b32.xlu0 %v7750, 112
        %v7782 = vpop.permute.xlu0 %7781
        %7783 = vrot.lane.b32.xlu0 %v7752, 112
        %v7784 = vpop.permute.xlu0 %7783
        %7785 = vrot.lane.b32.xlu0 %v7754, 112
        %v7786 = vpop.permute.xlu0 %7785
        %7787 = vrot.lane.b32.xlu0 %v7756, 112
        %v7788 = vpop.permute.xlu0 %7787
        %7789 = vrot.lane.b32.xlu0 %v7758, 112
        %v7790 = vpop.permute.xlu0 %7789
        %v7807 = vadd.f32 %v7691, %v7760
        %v7808 = vadd.f32 %v7692, %v7762
        %v7809 = vadd.f32 %v7693, %v7764
        %v7810 = vadd.f32 %v7694, %v7766
        %v7811 = vadd.f32 %v7695, %v7768
        %v7812 = vadd.f32 %v7696, %v7770
        %v7813 = vadd.f32 %v7697, %v7772
        %v7814 = vadd.f32 %v7698, %v7774
        %v7815 = vadd.f32 %v7699, %v7776
        %v7816 = vadd.f32 %v7700, %v7778
        %v7817 = vadd.f32 %v7701, %v7780
        %v7818 = vadd.f32 %v7702, %v7782
        %v7819 = vadd.f32 %v7703, %v7784
        %v7820 = vadd.f32 %v7704, %v7786
        %v7821 = vadd.f32 %v7705, %v7788
        %v7822 = vadd.f32 %v7706, %v7790
        %v7823 = vld [vmem:[#allocation7 + $0x180] sm:$0xf0]
        %v7824 = vld [vmem:[#allocation7 + $0x300] sm:$0xf]
        %v7827 = vrot.slane %v7823, 4
        %v7828 = vrot.slane %v7676, 4
        %v7829 = vsel %vm6997, %v7827, %v7828
        %v7830 = vrot.slane %v7677, 4
        %v7831 = vsel %vm6997, %v7828, %v7830
        %v7832 = vrot.slane %v7678, 4
        %v7833 = vsel %vm6997, %v7830, %v7832
        %v7834 = vrot.slane %v7679, 4
        %v7835 = vsel %vm6997, %v7832, %v7834
        %v7836 = vrot.slane %v7680, 4
        %v7837 = vsel %vm6997, %v7834, %v7836
        %v7838 = vrot.slane %v7681, 4
        %v7839 = vsel %vm6997, %v7836, %v7838
        %v7840 = vrot.slane %v7682, 4
        %v7841 = vsel %vm6997, %v7838, %v7840
        %v7842 = vrot.slane %v7683, 4
        %v7843 = vsel %vm6997, %v7840, %v7842
        %v7844 = vrot.slane %v7684, 4
        %v7845 = vsel %vm6997, %v7842, %v7844
        %v7846 = vrot.slane %v7685, 4
        %v7847 = vsel %vm6997, %v7844, %v7846
        %v7848 = vrot.slane %v7686, 4
        %v7849 = vsel %vm6997, %v7846, %v7848
        %v7850 = vrot.slane %v7687, 4
        %v7851 = vsel %vm6997, %v7848, %v7850
        %v7852 = vrot.slane %v7688, 4
        %v7853 = vsel %vm6997, %v7850, %v7852
        %v7854 = vrot.slane %v7689, 4
        %v7855 = vsel %vm6997, %v7852, %v7854
        %v7856 = vrot.slane %v7690, 4
        %v7857 = vsel %vm6997, %v7854, %v7856
        %v7858 = vrot.slane %v7824, 4
        %v7859 = vsel %vm6997, %v7856, %v7858
        %7860 = vrot.lane.b32.xlu0 %v7829, 96
        %v7861 = vpop.permute.xlu0 %7860
        %7862 = vrot.lane.b32.xlu0 %v7831, 96
        %v7863 = vpop.permute.xlu0 %7862
        %7864 = vrot.lane.b32.xlu0 %v7833, 96
        %v7865 = vpop.permute.xlu0 %7864
        %7866 = vrot.lane.b32.xlu0 %v7835, 96
        %v7867 = vpop.permute.xlu0 %7866
        %7868 = vrot.lane.b32.xlu0 %v7837, 96
        %v7869 = vpop.permute.xlu0 %7868
        %7870 = vrot.lane.b32.xlu0 %v7839, 96
        %v7871 = vpop.permute.xlu0 %7870
        %7872 = vrot.lane.b32.xlu0 %v7841, 96
        %v7873 = vpop.permute.xlu0 %7872
        %7874 = vrot.lane.b32.xlu0 %v7843, 96
        %v7875 = vpop.permute.xlu0 %7874
        %7876 = vrot.lane.b32.xlu0 %v7845, 96
        %v7877 = vpop.permute.xlu0 %7876
        %7878 = vrot.lane.b32.xlu0 %v7847, 96
        %v7879 = vpop.permute.xlu0 %7878
        %7880 = vrot.lane.b32.xlu0 %v7849, 96
        %v7881 = vpop.permute.xlu0 %7880
        %7882 = vrot.lane.b32.xlu0 %v7851, 96
        %v7883 = vpop.permute.xlu0 %7882
        %7884 = vrot.lane.b32.xlu0 %v7853, 96
        %v7885 = vpop.permute.xlu0 %7884
        %7886 = vrot.lane.b32.xlu0 %v7855, 96
        %v7887 = vpop.permute.xlu0 %7886
        %7888 = vrot.lane.b32.xlu0 %v7857, 96
        %v7889 = vpop.permute.xlu0 %7888
        %7890 = vrot.lane.b32.xlu0 %v7859, 96
        %v7891 = vpop.permute.xlu0 %7890
        %v7908 = vadd.f32 %v7807, %v7861
        %v7909 = vadd.f32 %v7808, %v7863
        %v7910 = vadd.f32 %v7809, %v7865
        %v7911 = vadd.f32 %v7810, %v7867
        %v7912 = vadd.f32 %v7811, %v7869
        %v7913 = vadd.f32 %v7812, %v7871
        %v7914 = vadd.f32 %v7813, %v7873
        %v7915 = vadd.f32 %v7814, %v7875
        %v7916 = vadd.f32 %v7815, %v7877
        %v7917 = vadd.f32 %v7816, %v7879
        %v7918 = vadd.f32 %v7817, %v7881
        %v7919 = vadd.f32 %v7818, %v7883
        %v7920 = vadd.f32 %v7819, %v7885
        %v7921 = vadd.f32 %v7820, %v7887
        %v7922 = vadd.f32 %v7821, %v7889
        %v7923 = vadd.f32 %v7822, %v7891
        %v7924 = vld [vmem:[#allocation7 + $0x300] sm:$0xff]
        %v7925 = vld [vmem:[#allocation7 + $0x318] sm:$0xff]
        %v7926 = vld [vmem:[#allocation7 + $0x330] sm:$0xff]
        %v7927 = vld [vmem:[#allocation7 + $0x348] sm:$0xff]
        %7932 = vrot.lane.b32.xlu0 %v7679, 80
        %v7933 = vpop.permute.xlu0 %7932
        %7934 = vrot.lane.b32.xlu0 %v7680, 80
        %v7935 = vpop.permute.xlu0 %7934
        %7936 = vrot.lane.b32.xlu0 %v7681, 80
        %v7937 = vpop.permute.xlu0 %7936
        %7938 = vrot.lane.b32.xlu0 %v7682, 80
        %v7939 = vpop.permute.xlu0 %7938
        %7940 = vrot.lane.b32.xlu0 %v7683, 80
        %v7941 = vpop.permute.xlu0 %7940
        %7942 = vrot.lane.b32.xlu0 %v7684, 80
        %v7943 = vpop.permute.xlu0 %7942
        %7944 = vrot.lane.b32.xlu0 %v7685, 80
        %v7945 = vpop.permute.xlu0 %7944
        %7946 = vrot.lane.b32.xlu0 %v7686, 80
        %v7947 = vpop.permute.xlu0 %7946
        %7948 = vrot.lane.b32.xlu0 %v7687, 80
        %v7949 = vpop.permute.xlu0 %7948
        %7950 = vrot.lane.b32.xlu0 %v7688, 80
        %v7951 = vpop.permute.xlu0 %7950
        %7952 = vrot.lane.b32.xlu0 %v7689, 80
        %v7953 = vpop.permute.xlu0 %7952
        %7954 = vrot.lane.b32.xlu0 %v7690, 80
        %v7955 = vpop.permute.xlu0 %7954
        %7956 = vrot.lane.b32.xlu0 %v7924, 80
        %v7957 = vpop.permute.xlu0 %7956
        %7958 = vrot.lane.b32.xlu0 %v7925, 80
        %v7959 = vpop.permute.xlu0 %7958
        %7960 = vrot.lane.b32.xlu0 %v7926, 80
        %v7961 = vpop.permute.xlu0 %7960
        %7962 = vrot.lane.b32.xlu0 %v7927, 80
        %v7963 = vpop.permute.xlu0 %7962
        %v7980 = vadd.f32 %v7908, %v7933
        %v7981 = vadd.f32 %v7909, %v7935
        %v7982 = vadd.f32 %v7910, %v7937
        %v7983 = vadd.f32 %v7911, %v7939
        %v7984 = vadd.f32 %v7912, %v7941
        %v7985 = vadd.f32 %v7913, %v7943
        %v7986 = vadd.f32 %v7914, %v7945
        %v7987 = vadd.f32 %v7915, %v7947
        %v7988 = vadd.f32 %v7916, %v7949
        %v7989 = vadd.f32 %v7917, %v7951
        %v7990 = vadd.f32 %v7918, %v7953
        %v7991 = vadd.f32 %v7919, %v7955
        %v7992 = vadd.f32 %v7920, %v7957
        %v7993 = vadd.f32 %v7921, %v7959
        %v7994 = vadd.f32 %v7922, %v7961
        %v7995 = vadd.f32 %v7923, %v7963
        %v7996 = vld [vmem:[#allocation7 + $0x1e0] sm:$0xfc]
        %v7997 = vld [vmem:[#allocation7 + $0x360] sm:$0x3]
        %v8000 = vrot.slane %v7996, 2
        %v8001 = vsel %vm1454, %v8000, %v7735
        %v8002 = vrot.slane %v7924, 2
        %v8003 = vsel %vm1454, %v7755, %v8002
        %v8004 = vrot.slane %v7925, 2
        %v8005 = vsel %vm1454, %v8002, %v8004
        %v8006 = vrot.slane %v7926, 2
        %v8007 = vsel %vm1454, %v8004, %v8006
        %v8008 = vrot.slane %v7927, 2
        %v8009 = vsel %vm1454, %v8006, %v8008
        %v8010 = vrot.slane %v7997, 2
        %v8011 = vsel %vm1454, %v8008, %v8010
        %8012 = vrot.lane.b32.xlu0 %v8001, 64
        %v8013 = vpop.permute.xlu0 %8012
        %8014 = vrot.lane.b32.xlu0 %v7738, 64
        %v8015 = vpop.permute.xlu0 %8014
        %8016 = vrot.lane.b32.xlu0 %v7740, 64
        %v8017 = vpop.permute.xlu0 %8016
        %8018 = vrot.lane.b32.xlu0 %v7742, 64
        %v8019 = vpop.permute.xlu0 %8018
        %8020 = vrot.lane.b32.xlu0 %v7744, 64
        %v8021 = vpop.permute.xlu0 %8020
        %8022 = vrot.lane.b32.xlu0 %v7746, 64
        %v8023 = vpop.permute.xlu0 %8022
        %8024 = vrot.lane.b32.xlu0 %v7748, 64
        %v8025 = vpop.permute.xlu0 %8024
        %8026 = vrot.lane.b32.xlu0 %v7750, 64
        %v8027 = vpop.permute.xlu0 %8026
        %8028 = vrot.lane.b32.xlu0 %v7752, 64
        %v8029 = vpop.permute.xlu0 %8028
        %8030 = vrot.lane.b32.xlu0 %v7754, 64
        %v8031 = vpop.permute.xlu0 %8030
        %8032 = vrot.lane.b32.xlu0 %v7756, 64
        %v8033 = vpop.permute.xlu0 %8032
        %8034 = vrot.lane.b32.xlu0 %v8003, 64
        %v8035 = vpop.permute.xlu0 %8034
        %8036 = vrot.lane.b32.xlu0 %v8005, 64
        %v8037 = vpop.permute.xlu0 %8036
        %8038 = vrot.lane.b32.xlu0 %v8007, 64
        %v8039 = vpop.permute.xlu0 %8038
        %8040 = vrot.lane.b32.xlu0 %v8009, 64
        %v8041 = vpop.permute.xlu0 %8040
        %8042 = vrot.lane.b32.xlu0 %v8011, 64
        %v8043 = vpop.permute.xlu0 %8042
        %v8060 = vadd.f32 %v7980, %v8013
        %v8061 = vadd.f32 %v7981, %v8015
        %v8062 = vadd.f32 %v7982, %v8017
        %v8063 = vadd.f32 %v7983, %v8019
        %v8064 = vadd.f32 %v7984, %v8021
        %v8065 = vadd.f32 %v7985, %v8023
        %v8066 = vadd.f32 %v7986, %v8025
        %v8067 = vadd.f32 %v7987, %v8027
        %v8068 = vadd.f32 %v7988, %v8029
        %v8069 = vadd.f32 %v7989, %v8031
        %v8070 = vadd.f32 %v7990, %v8033
        %v8071 = vadd.f32 %v7991, %v8035
        %v8072 = vadd.f32 %v7992, %v8037
        %v8073 = vadd.f32 %v7993, %v8039
        %v8074 = vadd.f32 %v7994, %v8041
        %v8075 = vadd.f32 %v7995, %v8043
        %v8076 = vld [vmem:[#allocation7 + $0x1e0] sm:$0xf0]
        %v8077 = vld [vmem:[#allocation7 + $0x360] sm:$0xf]
        %v8080 = vrot.slane %v8076, 4
        %v8081 = vsel %vm6997, %v8080, %v7836
        %v8082 = vrot.slane %v7924, 4
        %v8083 = vsel %vm6997, %v7856, %v8082
        %v8084 = vrot.slane %v7925, 4
        %v8085 = vsel %vm6997, %v8082, %v8084
        %v8086 = vrot.slane %v7926, 4
        %v8087 = vsel %vm6997, %v8084, %v8086
        %v8088 = vrot.slane %v7927, 4
        %v8089 = vsel %vm6997, %v8086, %v8088
        %v8090 = vrot.slane %v8077, 4
        %v8091 = vsel %vm6997, %v8088, %v8090
        %8092 = vrot.lane.b32.xlu0 %v8081, 48
        %v8093 = vpop.permute.xlu0 %8092
        %8094 = vrot.lane.b32.xlu0 %v7839, 48
        %v8095 = vpop.permute.xlu0 %8094
        %8096 = vrot.lane.b32.xlu0 %v7841, 48
        %v8097 = vpop.permute.xlu0 %8096
        %8098 = vrot.lane.b32.xlu0 %v7843, 48
        %v8099 = vpop.permute.xlu0 %8098
        %8100 = vrot.lane.b32.xlu0 %v7845, 48
        %v8101 = vpop.permute.xlu0 %8100
        %8102 = vrot.lane.b32.xlu0 %v7847, 48
        %v8103 = vpop.permute.xlu0 %8102
        %8104 = vrot.lane.b32.xlu0 %v7849, 48
        %v8105 = vpop.permute.xlu0 %8104
        %8106 = vrot.lane.b32.xlu0 %v7851, 48
        %v8107 = vpop.permute.xlu0 %8106
        %8108 = vrot.lane.b32.xlu0 %v7853, 48
        %v8109 = vpop.permute.xlu0 %8108
        %8110 = vrot.lane.b32.xlu0 %v7855, 48
        %v8111 = vpop.permute.xlu0 %8110
        %8112 = vrot.lane.b32.xlu0 %v7857, 48
        %v8113 = vpop.permute.xlu0 %8112
        %8114 = vrot.lane.b32.xlu0 %v8083, 48
        %v8115 = vpop.permute.xlu0 %8114
        %8116 = vrot.lane.b32.xlu0 %v8085, 48
        %v8117 = vpop.permute.xlu0 %8116
        %8118 = vrot.lane.b32.xlu0 %v8087, 48
        %v8119 = vpop.permute.xlu0 %8118
        %8120 = vrot.lane.b32.xlu0 %v8089, 48
        %v8121 = vpop.permute.xlu0 %8120
        %8122 = vrot.lane.b32.xlu0 %v8091, 48
        %v8123 = vpop.permute.xlu0 %8122
        %v8140 = vadd.f32 %v8060, %v8093
        %v8141 = vadd.f32 %v8061, %v8095
        %v8142 = vadd.f32 %v8062, %v8097
        %v8143 = vadd.f32 %v8063, %v8099
        %v8144 = vadd.f32 %v8064, %v8101
        %v8145 = vadd.f32 %v8065, %v8103
        %v8146 = vadd.f32 %v8066, %v8105
        %v8147 = vadd.f32 %v8067, %v8107
        %v8148 = vadd.f32 %v8068, %v8109
        %v8149 = vadd.f32 %v8069, %v8111
        %v8150 = vadd.f32 %v8070, %v8113
        %v8151 = vadd.f32 %v8071, %v8115
        %v8152 = vadd.f32 %v8072, %v8117
        %v8153 = vadd.f32 %v8073, %v8119
        %v8154 = vadd.f32 %v8074, %v8121
        %v8155 = vadd.f32 %v8075, %v8123
        %v8156 = vld [vmem:[#allocation7 + $0x360] sm:$0xff]
        %v8157 = vld [vmem:[#allocation7 + $0x378] sm:$0xff]
        %v8158 = vld [vmem:[#allocation7 + $0x390] sm:$0xff]
        %v8159 = vld [vmem:[#allocation7 + $0x3a8] sm:$0xff]
        %8164 = vrot.lane.b32.xlu0 %v7683, 32
        %v8165 = vpop.permute.xlu0 %8164
        %8166 = vrot.lane.b32.xlu0 %v7684, 32
        %v8167 = vpop.permute.xlu0 %8166
        %8168 = vrot.lane.b32.xlu0 %v7685, 32
        %v8169 = vpop.permute.xlu0 %8168
        %8170 = vrot.lane.b32.xlu0 %v7686, 32
        %v8171 = vpop.permute.xlu0 %8170
        %8172 = vrot.lane.b32.xlu0 %v7687, 32
        %v8173 = vpop.permute.xlu0 %8172
        %8174 = vrot.lane.b32.xlu0 %v7688, 32
        %v8175 = vpop.permute.xlu0 %8174
        %8176 = vrot.lane.b32.xlu0 %v7689, 32
        %v8177 = vpop.permute.xlu0 %8176
        %8178 = vrot.lane.b32.xlu0 %v7690, 32
        %v8179 = vpop.permute.xlu0 %8178
        %8180 = vrot.lane.b32.xlu0 %v7924, 32
        %v8181 = vpop.permute.xlu0 %8180
        %8182 = vrot.lane.b32.xlu0 %v7925, 32
        %v8183 = vpop.permute.xlu0 %8182
        %8184 = vrot.lane.b32.xlu0 %v7926, 32
        %v8185 = vpop.permute.xlu0 %8184
        %8186 = vrot.lane.b32.xlu0 %v7927, 32
        %v8187 = vpop.permute.xlu0 %8186
        %8188 = vrot.lane.b32.xlu0 %v8156, 32
        %v8189 = vpop.permute.xlu0 %8188
        %8190 = vrot.lane.b32.xlu0 %v8157, 32
        %v8191 = vpop.permute.xlu0 %8190
        %8192 = vrot.lane.b32.xlu0 %v8158, 32
        %v8193 = vpop.permute.xlu0 %8192
        %8194 = vrot.lane.b32.xlu0 %v8159, 32
        %v8195 = vpop.permute.xlu0 %8194
        %v8212 = vadd.f32 %v8140, %v8165
        %v8213 = vadd.f32 %v8141, %v8167
        %v8214 = vadd.f32 %v8142, %v8169
        %v8215 = vadd.f32 %v8143, %v8171
        %v8216 = vadd.f32 %v8144, %v8173
        %v8217 = vadd.f32 %v8145, %v8175
        %v8218 = vadd.f32 %v8146, %v8177
        %v8219 = vadd.f32 %v8147, %v8179
        %v8220 = vadd.f32 %v8148, %v8181
        %v8221 = vadd.f32 %v8149, %v8183
        %v8222 = vadd.f32 %v8150, %v8185
        %v8223 = vadd.f32 %v8151, %v8187
        %v8224 = vadd.f32 %v8152, %v8189
        %v8225 = vadd.f32 %v8153, %v8191
        %v8226 = vadd.f32 %v8154, %v8193
        %v8227 = vadd.f32 %v8155, %v8195
        %v8228 = vld [vmem:[#allocation7 + $0x240] sm:$0xfc]
        %v8229 = vld [vmem:[#allocation7 + $0x3c0] sm:$0x3]
        %v8232 = vrot.slane %v8228, 2
        %v8233 = vsel %vm1454, %v8232, %v7743
        %v8234 = vrot.slane %v8156, 2
        %v8235 = vsel %vm1454, %v8008, %v8234
        %v8236 = vrot.slane %v8157, 2
        %v8237 = vsel %vm1454, %v8234, %v8236
        %v8238 = vrot.slane %v8158, 2
        %v8239 = vsel %vm1454, %v8236, %v8238
        %v8240 = vrot.slane %v8159, 2
        %v8241 = vsel %vm1454, %v8238, %v8240
        %v8242 = vrot.slane %v8229, 2
        %v8243 = vsel %vm1454, %v8240, %v8242
        %8244 = vrot.lane.b32.xlu0 %v8233, 16
        %v8245 = vpop.permute.xlu0 %8244
        %8246 = vrot.lane.b32.xlu0 %v7746, 16
        %v8247 = vpop.permute.xlu0 %8246
        %8248 = vrot.lane.b32.xlu0 %v7748, 16
        %v8249 = vpop.permute.xlu0 %8248
        %8250 = vrot.lane.b32.xlu0 %v7750, 16
        %v8251 = vpop.permute.xlu0 %8250
        %8252 = vrot.lane.b32.xlu0 %v7752, 16
        %v8253 = vpop.permute.xlu0 %8252
        %8254 = vrot.lane.b32.xlu0 %v7754, 16
        %v8255 = vpop.permute.xlu0 %8254
        %8256 = vrot.lane.b32.xlu0 %v7756, 16
        %v8257 = vpop.permute.xlu0 %8256
        %8258 = vrot.lane.b32.xlu0 %v8003, 16
        %v8259 = vpop.permute.xlu0 %8258
        %8260 = vrot.lane.b32.xlu0 %v8005, 16
        %v8261 = vpop.permute.xlu0 %8260
        %8262 = vrot.lane.b32.xlu0 %v8007, 16
        %v8263 = vpop.permute.xlu0 %8262
        %8264 = vrot.lane.b32.xlu0 %v8009, 16
        %v8265 = vpop.permute.xlu0 %8264
        %8266 = vrot.lane.b32.xlu0 %v8235, 16
        %v8267 = vpop.permute.xlu0 %8266
        %8268 = vrot.lane.b32.xlu0 %v8237, 16
        %v8269 = vpop.permute.xlu0 %8268
        %8270 = vrot.lane.b32.xlu0 %v8239, 16
        %v8271 = vpop.permute.xlu0 %8270
        %8272 = vrot.lane.b32.xlu0 %v8241, 16
        %v8273 = vpop.permute.xlu0 %8272
        %8274 = vrot.lane.b32.xlu0 %v8243, 16
        %v8275 = vpop.permute.xlu0 %8274
        %v8292 = vadd.f32 %v8212, %v8245
        %v8293 = vadd.f32 %v8213, %v8247
        %v8294 = vadd.f32 %v8214, %v8249
        %v8295 = vadd.f32 %v8215, %v8251
        %v8296 = vadd.f32 %v8216, %v8253
        %v8297 = vadd.f32 %v8217, %v8255
        %v8298 = vadd.f32 %v8218, %v8257
        %v8299 = vadd.f32 %v8219, %v8259
        %v8300 = vadd.f32 %v8220, %v8261
        %v8301 = vadd.f32 %v8221, %v8263
        %v8302 = vadd.f32 %v8222, %v8265
        %v8303 = vadd.f32 %v8223, %v8267
        %v8304 = vadd.f32 %v8224, %v8269
        %v8305 = vadd.f32 %v8225, %v8271
        %v8306 = vadd.f32 %v8226, %v8273
        %v8307 = vadd.f32 %v8227, %v8275
        %v8308 = vld [vmem:[#allocation7 + $0x248] sm:$0xf0]
        %v8309 = vld [vmem:[#allocation7 + $0x260] sm:$0xff]
        %v8310 = vld [vmem:[#allocation7 + $0x278] sm:$0xff]
        %v8311 = vld [vmem:[#allocation7 + $0x290] sm:$0xff]
        %v8312 = vld [vmem:[#allocation7 + $0x2a8] sm:$0xff]
        %v8313 = vld [vmem:[#allocation7 + $0x2c0] sm:$0xff]
        %v8314 = vld [vmem:[#allocation7 + $0x2d8] sm:$0xff]
        %v8315 = vld [vmem:[#allocation7 + $0x2f0] sm:$0xff]
        %v8316 = vld [vmem:[#allocation7 + $0x308] sm:$0xff]
        %v8317 = vld [vmem:[#allocation7 + $0x320] sm:$0xff]
        %v8318 = vld [vmem:[#allocation7 + $0x338] sm:$0xff]
        %v8319 = vld [vmem:[#allocation7 + $0x350] sm:$0xff]
        %v8320 = vld [vmem:[#allocation7 + $0x368] sm:$0xff]
        %v8321 = vld [vmem:[#allocation7 + $0x380] sm:$0xff]
        %v8322 = vld [vmem:[#allocation7 + $0x398] sm:$0xff]
        %v8323 = vld [vmem:[#allocation7 + $0x3b0] sm:$0xff]
        %v8324 = vld [vmem:[#allocation7 + $0x3c8] sm:$0xf]
        %v8342 = vrot.slane %v8308, 4
        %v8343 = vrot.slane %v8309, 4
        %v8344 = vsel %vm6997, %v8342, %v8343
        %v8345 = vrot.slane %v8310, 4
        %v8346 = vsel %vm6997, %v8343, %v8345
        %v8347 = vrot.slane %v8311, 4
        %v8348 = vsel %vm6997, %v8345, %v8347
        %v8349 = vrot.slane %v8312, 4
        %v8350 = vsel %vm6997, %v8347, %v8349
        %v8351 = vrot.slane %v8313, 4
        %v8352 = vsel %vm6997, %v8349, %v8351
        %v8353 = vrot.slane %v8314, 4
        %v8354 = vsel %vm6997, %v8351, %v8353
        %v8355 = vrot.slane %v8315, 4
        %v8356 = vsel %vm6997, %v8353, %v8355
        %v8357 = vrot.slane %v8316, 4
        %v8358 = vsel %vm6997, %v8355, %v8357
        %v8359 = vrot.slane %v8317, 4
        %v8360 = vsel %vm6997, %v8357, %v8359
        %v8361 = vrot.slane %v8318, 4
        %v8362 = vsel %vm6997, %v8359, %v8361
        %v8363 = vrot.slane %v8319, 4
        %v8364 = vsel %vm6997, %v8361, %v8363
        %v8365 = vrot.slane %v8320, 4
        %v8366 = vsel %vm6997, %v8363, %v8365
        %v8367 = vrot.slane %v8321, 4
        %v8368 = vsel %vm6997, %v8365, %v8367
        %v8369 = vrot.slane %v8322, 4
        %v8370 = vsel %vm6997, %v8367, %v8369
        %v8371 = vrot.slane %v8323, 4
        %v8372 = vsel %vm6997, %v8369, %v8371
        %v8373 = vrot.slane %v8324, 4
        %v8374 = vsel %vm6997, %v8371, %v8373
        %v8391 = vadd.f32 %v8292, %v8344
        %v8392 = vadd.f32 %v8293, %v8346
        %v8393 = vadd.f32 %v8294, %v8348
        %v8394 = vadd.f32 %v8295, %v8350
        %v8395 = vadd.f32 %v8296, %v8352
        %v8396 = vadd.f32 %v8297, %v8354
        %v8397 = vadd.f32 %v8298, %v8356
        %v8398 = vadd.f32 %v8299, %v8358
        %v8399 = vadd.f32 %v8300, %v8360
        %v8400 = vadd.f32 %v8301, %v8362
        %v8401 = vadd.f32 %v8302, %v8364
        %v8402 = vadd.f32 %v8303, %v8366
        %v8403 = vadd.f32 %v8304, %v8368
        %v8404 = vadd.f32 %v8305, %v8370
        %v8405 = vadd.f32 %v8306, %v8372
        %v8406 = vadd.f32 %v8307, %v8374
        %v8407 = vmax.f32 %v8391, 0.0
        %v8408 = vmax.f32 %v8392, 0.0
        %v8409 = vmax.f32 %v8393, 0.0
        %v8410 = vmax.f32 %v8394, 0.0
        %v8411 = vmax.f32 %v8395, 0.0
        %v8412 = vmax.f32 %v8396, 0.0
        %v8413 = vmax.f32 %v8397, 0.0
        %v8414 = vmax.f32 %v8398, 0.0
        %v8415 = vmax.f32 %v8399, 0.0
        %v8416 = vmax.f32 %v8400, 0.0
        %v8417 = vmax.f32 %v8401, 0.0
        %v8418 = vmax.f32 %v8402, 0.0
        %v8419 = vmax.f32 %v8403, 0.0
        %v8420 = vmax.f32 %v8404, 0.0
        %v8421 = vmax.f32 %v8405, 0.0
        %v8422 = vmax.f32 %v8406, 0.0
        %v8423 = vpack.c.bf16 %v8408, %v8407
        %v8424 = vpack.c.bf16 %v8410, %v8409
        %v8425 = vpack.c.bf16 %v8412, %v8411
        %v8426 = vpack.c.bf16 %v8414, %v8413
        %v8427 = vpack.c.bf16 %v8416, %v8415
        %v8428 = vpack.c.bf16 %v8418, %v8417
        %v8429 = vpack.c.bf16 %v8420, %v8419
        %v8430 = vpack.c.bf16 %v8422, %v8421
        %v8439 = vunpack.c.l.b16 %v8423
        %v8440 = vunpack.c.h.b16 %v8423
        %v8441 = vunpack.c.l.b16 %v8424
        %v8442 = vunpack.c.h.b16 %v8424
        %v8443 = vunpack.c.l.b16 %v8425
        %v8444 = vunpack.c.h.b16 %v8425
        %v8445 = vunpack.c.l.b16 %v8426
        %v8446 = vunpack.c.h.b16 %v8426
        %v8447 = vunpack.c.l.b16 %v8427
        %v8448 = vunpack.c.h.b16 %v8427
        %v8449 = vunpack.c.l.b16 %v8428
        %v8450 = vunpack.c.h.b16 %v8428
        %v8451 = vunpack.c.l.b16 %v8429
        %v8452 = vunpack.c.h.b16 %v8429
        %v8453 = vunpack.c.l.b16 %v8430
        %v8454 = vunpack.c.h.b16 %v8430
        %v8455 = vpack.c.b16 %v8439, %v8439
        %v8456 = vpack.c.b16 %v8440, %v8440
        %v8457 = vpack.c.b16 %v8441, %v8441
        %v8458 = vpack.c.b16 %v8442, %v8442
        %v8459 = vpack.c.b16 %v8443, %v8443
        %v8460 = vpack.c.b16 %v8444, %v8444
        %v8461 = vpack.c.b16 %v8445, %v8445
        %v8462 = vpack.c.b16 %v8446, %v8446
        %v8463 = vpack.c.b16 %v8447, %v8447
        %v8464 = vpack.c.b16 %v8448, %v8448
        %v8465 = vpack.c.b16 %v8449, %v8449
        %v8466 = vpack.c.b16 %v8450, %v8450
        %v8467 = vpack.c.b16 %v8451, %v8451
        %v8468 = vpack.c.b16 %v8452, %v8452
        %v8469 = vpack.c.b16 %v8453, %v8453
        %v8470 = vpack.c.b16 %v8454, %v8454
        %8487 = vst.msk [vmem:[#allocation5 + $0x40] sm:$0xf] %vm7658, %v8455
        %8488 = vst.msk [vmem:[#allocation5 + $0x44] sm:$0xf] %vm7658, %v8456
        %8489 = vst.msk [vmem:[#allocation5 + $0x48] sm:$0xf] %vm7658, %v8457
        %8490 = vst.msk [vmem:[#allocation5 + $0x4c] sm:$0xf] %vm7658, %v8458
        %8491 = vst.msk [vmem:[#allocation5 + $0x50] sm:$0xf] %vm7658, %v8459
        %8492 = vst.msk [vmem:[#allocation5 + $0x54] sm:$0xf] %vm7658, %v8460
        %8493 = vst.msk [vmem:[#allocation5 + $0x58] sm:$0xf] %vm7658, %v8461
        %8494 = vst.msk [vmem:[#allocation5 + $0x5c] sm:$0xf] %vm7658, %v8462
        %8495 = vst.msk [vmem:[#allocation5 + $0x60] sm:$0xf] %vm7658, %v8463
        %8496 = vst.msk [vmem:[#allocation5 + $0x64] sm:$0xf] %vm7658, %v8464
        %8497 = vst.msk [vmem:[#allocation5 + $0x68] sm:$0xf] %vm7658, %v8465
        %8498 = vst.msk [vmem:[#allocation5 + $0x6c] sm:$0xf] %vm7658, %v8466
        %8499 = vst.msk [vmem:[#allocation5 + $0x70] sm:$0xf] %vm7658, %v8467
        %8500 = vst.msk [vmem:[#allocation5 + $0x74] sm:$0xf] %vm7658, %v8468
        %8501 = vst.msk [vmem:[#allocation5 + $0x78] sm:$0xf] %vm7658, %v8469
        %8502 = vst.msk [vmem:[#allocation5 + $0x7c] sm:$0xf] %vm7658, %v8470
        %v8503 = vld [vmem:[#allocation5] sm:$0xf]
        %v8504 = vld [vmem:[#allocation5 + $0x4] sm:$0xf]
        %v8505 = vld [vmem:[#allocation5 + $0x8] sm:$0xf]
        %v8506 = vld [vmem:[#allocation5 + $0xc] sm:$0xf]
        %v8507 = vld [vmem:[#allocation5 + $0x10] sm:$0xf]
        %v8508 = vld [vmem:[#allocation5 + $0x14] sm:$0xf]
        %v8509 = vld [vmem:[#allocation5 + $0x18] sm:$0xf]
        %v8510 = vld [vmem:[#allocation5 + $0x1c] sm:$0xf]
        %v8511 = vld [vmem:[#allocation5 + $0x20] sm:$0xf]
        %v8512 = vld [vmem:[#allocation5 + $0x24] sm:$0xf]
        %v8513 = vld [vmem:[#allocation5 + $0x28] sm:$0xf]
        %v8514 = vld [vmem:[#allocation5 + $0x2c] sm:$0xf]
        %v8515 = vld [vmem:[#allocation5 + $0x30] sm:$0xf]
        %v8516 = vld [vmem:[#allocation5 + $0x34] sm:$0xf]
        %v8517 = vld [vmem:[#allocation5 + $0x38] sm:$0xf]
        %v8518 = vld [vmem:[#allocation5 + $0x3c] sm:$0xf]
        %v8519 = vld [vmem:[#allocation5 + $0x40] sm:$0xf]
        %v8520 = vld [vmem:[#allocation5 + $0x44] sm:$0xf]
        %v8521 = vld [vmem:[#allocation5 + $0x48] sm:$0xf]
        %v8522 = vld [vmem:[#allocation5 + $0x4c] sm:$0xf]
        %v8523 = vld [vmem:[#allocation5 + $0x50] sm:$0xf]
        %v8524 = vld [vmem:[#allocation5 + $0x54] sm:$0xf]
        %v8525 = vld [vmem:[#allocation5 + $0x58] sm:$0xf]
        %v8526 = vld [vmem:[#allocation5 + $0x5c] sm:$0xf]
        %v8527 = vld [vmem:[#allocation5 + $0x60] sm:$0xf]
        %v8528 = vld [vmem:[#allocation5 + $0x64] sm:$0xf]
        %v8529 = vld [vmem:[#allocation5 + $0x68] sm:$0xf]
        %v8530 = vld [vmem:[#allocation5 + $0x6c] sm:$0xf]
        %v8531 = vld [vmem:[#allocation5 + $0x70] sm:$0xf]
        %v8532 = vld [vmem:[#allocation5 + $0x74] sm:$0xf]
        %v8533 = vld [vmem:[#allocation5 + $0x78] sm:$0xf]
        %v8534 = vld [vmem:[#allocation5 + $0x7c] sm:$0xf]
        %v8535 = vld [vmem:[#allocation5] sm:$0xe]
        %v8536 = vld [vmem:[#allocation5 + $0x80] sm:$0x1]
        %vm8570 = vcmask 1042432
        %vm8571 = vcmask 1046532
        %vm8572 = vmor %vm8570, %vm8571
        %v8573 = vrot.slane %v8535, 5
        %v8574 = vrot.slane %v8573, 4
        %v8575 = vrot.slane %v8504, 5
        %v8576 = vsel %vm8572, %v8574, %v8575
        %v8577 = vrot.slane %v8575, 4
        %v8578 = vrot.slane %v8505, 5
        %v8579 = vsel %vm8572, %v8577, %v8578
        %v8580 = vrot.slane %v8578, 4
        %v8581 = vrot.slane %v8506, 5
        %v8582 = vsel %vm8572, %v8580, %v8581
        %v8583 = vrot.slane %v8581, 4
        %v8584 = vrot.slane %v8507, 5
        %v8585 = vsel %vm8572, %v8583, %v8584
        %v8586 = vrot.slane %v8584, 4
        %v8587 = vrot.slane %v8508, 5
        %v8588 = vsel %vm8572, %v8586, %v8587
        %v8589 = vrot.slane %v8587, 4
        %v8590 = vrot.slane %v8509, 5
        %v8591 = vsel %vm8572, %v8589, %v8590
        %v8592 = vrot.slane %v8590, 4
        %v8593 = vrot.slane %v8510, 5
        %v8594 = vsel %vm8572, %v8592, %v8593
        %v8595 = vrot.slane %v8593, 4
        %v8596 = vrot.slane %v8511, 5
        %v8597 = vsel %vm8572, %v8595, %v8596
        %v8598 = vrot.slane %v8596, 4
        %v8599 = vrot.slane %v8512, 5
        %v8600 = vsel %vm8572, %v8598, %v8599
        %v8601 = vrot.slane %v8599, 4
        %v8602 = vrot.slane %v8513, 5
        %v8603 = vsel %vm8572, %v8601, %v8602
        %v8604 = vrot.slane %v8602, 4
        %v8605 = vrot.slane %v8514, 5
        %v8606 = vsel %vm8572, %v8604, %v8605
        %v8607 = vrot.slane %v8605, 4
        %v8608 = vrot.slane %v8515, 5
        %v8609 = vsel %vm8572, %v8607, %v8608
        %v8610 = vrot.slane %v8608, 4
        %v8611 = vrot.slane %v8516, 5
        %v8612 = vsel %vm8572, %v8610, %v8611
        %v8613 = vrot.slane %v8611, 4
        %v8614 = vrot.slane %v8517, 5
        %v8615 = vsel %vm8572, %v8613, %v8614
        %v8616 = vrot.slane %v8614, 4
        %v8617 = vrot.slane %v8518, 5
        %v8618 = vsel %vm8572, %v8616, %v8617
        %v8619 = vrot.slane %v8617, 4
        %v8620 = vrot.slane %v8519, 5
        %v8621 = vsel %vm8572, %v8619, %v8620
        %v8622 = vrot.slane %v8620, 4
        %v8623 = vrot.slane %v8520, 5
        %v8624 = vsel %vm8572, %v8622, %v8623
        %v8625 = vrot.slane %v8623, 4
        %v8626 = vrot.slane %v8521, 5
        %v8627 = vsel %vm8572, %v8625, %v8626
        %v8628 = vrot.slane %v8626, 4
        %v8629 = vrot.slane %v8522, 5
        %v8630 = vsel %vm8572, %v8628, %v8629
        %v8631 = vrot.slane %v8629, 4
        %v8632 = vrot.slane %v8523, 5
        %v8633 = vsel %vm8572, %v8631, %v8632
        %v8634 = vrot.slane %v8632, 4
        %v8635 = vrot.slane %v8524, 5
        %v8636 = vsel %vm8572, %v8634, %v8635
        %v8637 = vrot.slane %v8635, 4
        %v8638 = vrot.slane %v8525, 5
        %v8639 = vsel %vm8572, %v8637, %v8638
        %v8640 = vrot.slane %v8638, 4
        %v8641 = vrot.slane %v8526, 5
        %v8642 = vsel %vm8572, %v8640, %v8641
        %v8643 = vrot.slane %v8641, 4
        %v8644 = vrot.slane %v8527, 5
        %v8645 = vsel %vm8572, %v8643, %v8644
        %v8646 = vrot.slane %v8644, 4
        %v8647 = vrot.slane %v8528, 5
        %v8648 = vsel %vm8572, %v8646, %v8647
        %v8649 = vrot.slane %v8647, 4
        %v8650 = vrot.slane %v8529, 5
        %v8651 = vsel %vm8572, %v8649, %v8650
        %v8652 = vrot.slane %v8650, 4
        %v8653 = vrot.slane %v8530, 5
        %v8654 = vsel %vm8572, %v8652, %v8653
        %v8655 = vrot.slane %v8653, 4
        %v8656 = vrot.slane %v8531, 5
        %v8657 = vsel %vm8572, %v8655, %v8656
        %v8658 = vrot.slane %v8656, 4
        %v8659 = vrot.slane %v8532, 5
        %v8660 = vsel %vm8572, %v8658, %v8659
        %v8661 = vrot.slane %v8659, 4
        %v8662 = vrot.slane %v8533, 5
        %v8663 = vsel %vm8572, %v8661, %v8662
        %v8664 = vrot.slane %v8662, 4
        %v8665 = vrot.slane %v8534, 5
        %v8666 = vsel %vm8572, %v8664, %v8665
        %v8667 = vrot.slane %v8665, 4
        %v8668 = vrot.slane %v8536, 5
        %v8669 = vsel %vm8572, %v8667, %v8668
        %v8702 = vmax.bf16 %v8503, %v8576
        %v8703 = vmax.bf16 %v8504, %v8579
        %v8704 = vmax.bf16 %v8505, %v8582
        %v8705 = vmax.bf16 %v8506, %v8585
        %v8706 = vmax.bf16 %v8507, %v8588
        %v8707 = vmax.bf16 %v8508, %v8591
        %v8708 = vmax.bf16 %v8509, %v8594
        %v8709 = vmax.bf16 %v8510, %v8597
        %v8710 = vmax.bf16 %v8511, %v8600
        %v8711 = vmax.bf16 %v8512, %v8603
        %v8712 = vmax.bf16 %v8513, %v8606
        %v8713 = vmax.bf16 %v8514, %v8609
        %v8714 = vmax.bf16 %v8515, %v8612
        %v8715 = vmax.bf16 %v8516, %v8615
        %v8716 = vmax.bf16 %v8517, %v8618
        %v8717 = vmax.bf16 %v8518, %v8621
        %v8718 = vmax.bf16 %v8519, %v8624
        %v8719 = vmax.bf16 %v8520, %v8627
        %v8720 = vmax.bf16 %v8521, %v8630
        %v8721 = vmax.bf16 %v8522, %v8633
        %v8722 = vmax.bf16 %v8523, %v8636
        %v8723 = vmax.bf16 %v8524, %v8639
        %v8724 = vmax.bf16 %v8525, %v8642
        %v8725 = vmax.bf16 %v8526, %v8645
        %v8726 = vmax.bf16 %v8527, %v8648
        %v8727 = vmax.bf16 %v8528, %v8651
        %v8728 = vmax.bf16 %v8529, %v8654
        %v8729 = vmax.bf16 %v8530, %v8657
        %v8730 = vmax.bf16 %v8531, %v8660
        %v8731 = vmax.bf16 %v8532, %v8663
        %v8732 = vmax.bf16 %v8533, %v8666
        %v8733 = vmax.bf16 %v8534, %v8669
        %v8734 = vld [vmem:[#allocation5 + $0x80] sm:$0xf]
        %v8735 = vld [vmem:[#allocation5 + $0x84] sm:$0xf]
        %v8736 = vld [vmem:[#allocation5 + $0x88] sm:$0xf]
        %v8737 = vld [vmem:[#allocation5 + $0x8c] sm:$0xf]
        %v8738 = vld [vmem:[#allocation5 + $0x10] sm:$0xe]
        %v8739 = vld [vmem:[#allocation5 + $0x90] sm:$0x1]
        %v8746 = vrot.slane %v8738, 5
        %v8747 = vrot.slane %v8746, 4
        %v8748 = vsel %vm8572, %v8747, %v8587
        %v8749 = vrot.slane %v8734, 5
        %v8750 = vsel %vm8572, %v8667, %v8749
        %v8751 = vrot.slane %v8749, 4
        %v8752 = vrot.slane %v8735, 5
        %v8753 = vsel %vm8572, %v8751, %v8752
        %v8754 = vrot.slane %v8752, 4
        %v8755 = vrot.slane %v8736, 5
        %v8756 = vsel %vm8572, %v8754, %v8755
        %v8757 = vrot.slane %v8755, 4
        %v8758 = vrot.slane %v8737, 5
        %v8759 = vsel %vm8572, %v8757, %v8758
        %v8760 = vrot.slane %v8758, 4
        %v8761 = vrot.slane %v8739, 5
        %v8762 = vsel %vm8572, %v8760, %v8761
        %v8769 = vmax.bf16 %v8507, %v8748
        %v8770 = vmax.bf16 %v8534, %v8750
        %v8771 = vmax.bf16 %v8734, %v8753
        %v8772 = vmax.bf16 %v8735, %v8756
        %v8773 = vmax.bf16 %v8736, %v8759
        %v8774 = vmax.bf16 %v8737, %v8762
        %v8775 = vmax.bf16 %v8702, %v8769
        %v8776 = vmax.bf16 %v8703, %v8707
        %v8777 = vmax.bf16 %v8704, %v8708
        %v8778 = vmax.bf16 %v8705, %v8709
        %v8779 = vmax.bf16 %v8706, %v8710
        %v8780 = vmax.bf16 %v8707, %v8711
        %v8781 = vmax.bf16 %v8708, %v8712
        %v8782 = vmax.bf16 %v8709, %v8713
        %v8783 = vmax.bf16 %v8710, %v8714
        %v8784 = vmax.bf16 %v8711, %v8715
        %v8785 = vmax.bf16 %v8712, %v8716
        %v8786 = vmax.bf16 %v8713, %v8717
        %v8787 = vmax.bf16 %v8714, %v8718
        %v8788 = vmax.bf16 %v8715, %v8719
        %v8789 = vmax.bf16 %v8716, %v8720
        %v8790 = vmax.bf16 %v8717, %v8721
        %v8791 = vmax.bf16 %v8718, %v8722
        %v8792 = vmax.bf16 %v8719, %v8723
        %v8793 = vmax.bf16 %v8720, %v8724
        %v8794 = vmax.bf16 %v8721, %v8725
        %v8795 = vmax.bf16 %v8722, %v8726
        %v8796 = vmax.bf16 %v8723, %v8727
        %v8797 = vmax.bf16 %v8724, %v8728
        %v8798 = vmax.bf16 %v8725, %v8729
        %v8799 = vmax.bf16 %v8726, %v8730
        %v8800 = vmax.bf16 %v8727, %v8731
        %v8801 = vmax.bf16 %v8728, %v8732
        %v8802 = vmax.bf16 %v8729, %v8770
        %v8803 = vmax.bf16 %v8730, %v8771
        %v8804 = vmax.bf16 %v8731, %v8772
        %v8805 = vmax.bf16 %v8732, %v8773
        %v8806 = vmax.bf16 %v8733, %v8774
        %8807 = vst.msk [vmem:[#allocation6] sm:$0xf] %vm7658, %v8775
        %8808 = vst.msk [vmem:[#allocation6 + $0x4] sm:$0xf] %vm7658, %v8776
        %8809 = vst.msk [vmem:[#allocation6 + $0x8] sm:$0xf] %vm7658, %v8777
        %8810 = vst.msk [vmem:[#allocation6 + $0xc] sm:$0xf] %vm7658, %v8778
        %8811 = vst.msk [vmem:[#allocation6 + $0x10] sm:$0xf] %vm7658, %v8779
        %8812 = vst.msk [vmem:[#allocation6 + $0x14] sm:$0xf] %vm7658, %v8780
        %8813 = vst.msk [vmem:[#allocation6 + $0x18] sm:$0xf] %vm7658, %v8781
        %8814 = vst.msk [vmem:[#allocation6 + $0x1c] sm:$0xf] %vm7658, %v8782
        %8815 = vst.msk [vmem:[#allocation6 + $0x20] sm:$0xf] %vm7658, %v8783
        %8816 = vst.msk [vmem:[#allocation6 + $0x24] sm:$0xf] %vm7658, %v8784
        %8817 = vst.msk [vmem:[#allocation6 + $0x28] sm:$0xf] %vm7658, %v8785
        %8818 = vst.msk [vmem:[#allocation6 + $0x2c] sm:$0xf] %vm7658, %v8786
        %8819 = vst.msk [vmem:[#allocation6 + $0x30] sm:$0xf] %vm7658, %v8787
        %8820 = vst.msk [vmem:[#allocation6 + $0x34] sm:$0xf] %vm7658, %v8788
        %8821 = vst.msk [vmem:[#allocation6 + $0x38] sm:$0xf] %vm7658, %v8789
        %8822 = vst.msk [vmem:[#allocation6 + $0x3c] sm:$0xf] %vm7658, %v8790
        %8823 = vst.msk [vmem:[#allocation6 + $0x40] sm:$0xf] %vm7658, %v8791
        %8824 = vst.msk [vmem:[#allocation6 + $0x44] sm:$0xf] %vm7658, %v8792
        %8825 = vst.msk [vmem:[#allocation6 + $0x48] sm:$0xf] %vm7658, %v8793
        %8826 = vst.msk [vmem:[#allocation6 + $0x4c] sm:$0xf] %vm7658, %v8794
        %8827 = vst.msk [vmem:[#allocation6 + $0x50] sm:$0xf] %vm7658, %v8795
        %8828 = vst.msk [vmem:[#allocation6 + $0x54] sm:$0xf] %vm7658, %v8796
        %8829 = vst.msk [vmem:[#allocation6 + $0x58] sm:$0xf] %vm7658, %v8797
        %8830 = vst.msk [vmem:[#allocation6 + $0x5c] sm:$0xf] %vm7658, %v8798
        %8831 = vst.msk [vmem:[#allocation6 + $0x60] sm:$0xf] %vm7658, %v8799
        %8832 = vst.msk [vmem:[#allocation6 + $0x64] sm:$0xf] %vm7658, %v8800
        %8833 = vst.msk [vmem:[#allocation6 + $0x68] sm:$0xf] %vm7658, %v8801
        %8834 = vst.msk [vmem:[#allocation6 + $0x6c] sm:$0xf] %vm7658, %v8802
        %8835 = vst.msk [vmem:[#allocation6 + $0x70] sm:$0xf] %vm7658, %v8803
        %8836 = vst.msk [vmem:[#allocation6 + $0x74] sm:$0xf] %vm7658, %v8804
        %8837 = vst.msk [vmem:[#allocation6 + $0x78] sm:$0xf] %vm7658, %v8805
        %8838 = vst.msk [vmem:[#allocation6 + $0x7c] sm:$0xf] %vm7658, %v8806
        %v8839 = vld [vmem:[#allocation6] sm:$0x1]
        %vm8840 = vcmask 122880
        %vm8841 = vsmask.f32 256
        %vm8842 = vmand %vm8840, %vm8841
        %v8843 = vld [vmem:[#allocation8] sm:$0x1]
        %v8844 = vsel %vm8842, %v8839, %v8843
        %8845 = vst [vmem:[#allocation8] sm:$0x1] %v8844
        %v8846 = vld [vmem:[#allocation6] sm:$0x4]
        %v8849 = vunpack.c.l.s4 1966171168
        %v8850 = vunpack.c.0.s8 %v8849
        %v8851 = vlaneseq
        %v8852 = vshrl.u32 %v8851, 7
        %v8853 = vsub.s32 %v8850, %v8852
        %v8854 = vrot.slane %v8846, %v8853
        %v8856 = vunpack.c.l.s4 1966171168
        %v8857 = vunpack.c.0.s8 %v8856
        %v8858 = vlaneseq
        %v8859 = vshrl.u32 %v8858, 7
        %v8860 = vsub.s32 %v8857, %v8859
        %v8861 = vrot.slane %v8854, %v8860
        %v8862 = vcombine.high %v8861, %v8861
        %8863 = vrot.lane.b32.xlu0 %v8862, 16
        %v8864 = vpop.permute.xlu0 %8863
        %vm8866 = vcmask 254080
        %vm8867 = vmand %vm8866, %vm8841
        %v8868 = vld [vmem:[#allocation8] sm:$0x1]
        %v8869 = vsel %vm8867, %v8864, %v8868
        %8870 = vst [vmem:[#allocation8] sm:$0x1] %v8869
        %v8871 = vld [vmem:[#allocation6 + $0x20] sm:$0x1]
        %v8874 = vunpack.c.l.s4 1966171168
        %v8875 = vunpack.c.0.s8 %v8874
        %v8876 = vlaneseq
        %v8877 = vshrl.u32 %v8876, 7
        %v8878 = vsub.s32 %v8875, %v8877
        %v8879 = vrot.slane %v8871, %v8878
        %v8881 = vunpack.c.l.s4 1966171168
        %v8882 = vunpack.c.0.s8 %v8881
        %v8883 = vlaneseq
        %v8884 = vshrl.u32 %v8883, 7
        %v8885 = vsub.s32 %v8882, %v8884
        %v8886 = vrot.slane %v8879, %v8885
        %8887 = vrot.lane.b32.xlu0 %v8886, 32
        %v8888 = vpop.permute.xlu0 %8887
        %vm8890 = vcmask 385280
        %vm8891 = vmand %vm8890, %vm8841
        %v8892 = vld [vmem:[#allocation8] sm:$0x1]
        %v8893 = vsel %vm8891, %v8888, %v8892
        %8894 = vst [vmem:[#allocation8] sm:$0x1] %v8893
        %v8895 = vld [vmem:[#allocation6 + $0x20] sm:$0x4]
        %v8898 = vunpack.c.l.s4 1966171168
        %v8899 = vunpack.c.0.s8 %v8898
        %v8900 = vlaneseq
        %v8901 = vshrl.u32 %v8900, 7
        %v8902 = vsub.s32 %v8899, %v8901
        %v8903 = vrot.slane %v8895, %v8902
        %v8905 = vunpack.c.l.s4 1966171168
        %v8906 = vunpack.c.0.s8 %v8905
        %v8907 = vlaneseq
        %v8908 = vshrl.u32 %v8907, 7
        %v8909 = vsub.s32 %v8906, %v8908
        %v8910 = vrot.slane %v8903, %v8909
        %v8911 = vcombine.high %v8910, %v8910
        %8912 = vrot.lane.b32.xlu0 %v8911, 48
        %v8913 = vpop.permute.xlu0 %8912
        %vm8915 = vcmask 516480
        %vm8916 = vmand %vm8915, %vm8841
        %v8917 = vld [vmem:[#allocation8] sm:$0x1]
        %v8918 = vsel %vm8916, %v8913, %v8917
        %8919 = vst [vmem:[#allocation8] sm:$0x1] %v8918
        %v8920 = vld [vmem:[#allocation8] sm:$0x1]
        %v8921 = vld [vmem:[%s7] sm:$0xf]
        %v8922 = vld [vmem:[%s7 + $0x4] sm:$0xf]
        %v8923 = vld [vmem:[%s7 + $0x8] sm:$0xf]
        %v8924 = vld [vmem:[%s7 + $0xc] sm:$0xf]
        %v8925 = vld [vmem:[%s7 + $0x10] sm:$0xf]
        %v8926 = vld [vmem:[%s7 + $0x14] sm:$0xf]
        %v8927 = vld [vmem:[%s7 + $0x18] sm:$0xf]
        %v8928 = vld [vmem:[%s7 + $0x1c] sm:$0xf]
        %v8929 = vld [vmem:[%s8] sm:$0x1]
        %v8938 = vunpack.c.l.b16 %v8921
        %v8939 = vunpack.c.l.b16 %v8922
        %v8940 = vunpack.c.l.b16 %v8923
        %v8941 = vunpack.c.l.b16 %v8924
        %v8942 = vunpack.c.l.b16 %v8925
        %v8943 = vunpack.c.l.b16 %v8926
        %v8944 = vunpack.c.l.b16 %v8927
        %v8945 = vunpack.c.l.b16 %v8928
        %v8946 = vpack.c.b16 %v8939, %v8938
        %v8947 = vpack.c.b16 %v8941, %v8940
        %v8948 = vpack.c.b16 %v8943, %v8942
        %v8949 = vpack.c.b16 %v8945, %v8944
        %vm8954 = vcmask 523264
        %v8956 = vsel %vm8954, %v8920, 0
        %8958 = vmatprep.subr.bf16.mxu0 0
        %8959 = vmatpush1.bf16.msra.mxu0 0
        %8960 = vmatprep.subr.bf16.mxu0 0
        %8961 = vmatpush1.bf16.msra.mxu0 0
        %8962 = vmatprep.subr.bf16.mxu0 0
        %8963 = vmatpush1.bf16.msra.mxu0 0
        %8964 = vmatprep.subr.bf16.mxu0 0
        %8965 = vmatpush1.bf16.msra.mxu0 0
        %8966 = vmatprep.subr.bf16.mxu0 0
        %8967 = vmatpush1.bf16.msra.mxu0 %v8949
        %8968 = vmatprep.subr.bf16.mxu0 0
        %8969 = vmatpush1.bf16.msra.mxu0 %v8948
        %8970 = vmatprep.subr.bf16.mxu0 0
        %8971 = vmatpush1.bf16.msra.mxu0 %v8947
        %8972 = vmatprep.subr.bf16.mxu0 0
        %8973 = vmatpush1.bf16.msra.mxu0 %v8946
        %8974 = vmatprep.subr.bf16.mxu0 0
        %8975 = vmatpush2.bf16.msra.mxu0 0
        %8976 = vmatprep.subr.bf16.mxu0 0
        %8977 = vmatpush2.bf16.msra.mxu0 0
        %8978 = vmatprep.subr.bf16.mxu0 0
        %8979 = vmatpush2.bf16.msra.mxu0 0
        %8980 = vmatprep.subr.bf16.mxu0 0
        %8981 = vmatpush2.bf16.msra.mxu0 0
        %8982 = vmatprep.subr.bf16.mxu0 0
        %8983 = vmatpush2.bf16.msra.mxu0 0
        %8984 = vmatprep.subr.bf16.mxu0 0
        %8985 = vmatpush2.bf16.msra.mxu0 0
        %8986 = vmatprep.subr.bf16.mxu0 0
        %8987 = vmatpush2.bf16.msra.mxu0 0
        %8988 = vmatprep.subr.bf16.mxu0 0
        %8989 = vmatpush2.bf16.msra.mxu0 0
        %8990 = vmatprep.mubr.bf16.mxu0 0
        %8991 = vmatmul.mubr.bf16.gmra.mxu0 %v8956
        %v8992 = vpop.f32.mrf.mxu0
        %v8993 = vadd.f32 %v8929, %v8992
        %v8994 = vpop.f32.mrf.mxu0
        %v8995 = vpop.f32.mrf.mxu0
        %v8996 = vpop.f32.mrf.mxu0
        %8997 = vdwg.mxu0
        %v8998 = vmax.f32 %v8993, 0.0
        %v8999 = vpack.c.bf16 %v8998, %v8998
        %v9000 = vld [vmem:[%s9] sm:$0xf]
        %v9001 = vld [vmem:[%s9 + $0x4] sm:$0xf]
        %v9002 = vld [vmem:[%s9 + $0x8] sm:$0xf]
        %v9003 = vld [vmem:[%s9 + $0xc] sm:$0xf]
        %v9004 = vld [vmem:[%s9 + $0x10] sm:$0xf]
        %v9005 = vld [vmem:[%s9 + $0x14] sm:$0xf]
        %v9006 = vld [vmem:[%s9 + $0x18] sm:$0xf]
        %v9007 = vld [vmem:[%s9 + $0x1c] sm:$0xf]
        %v9008 = vld [vmem:[%s9 + $0x20] sm:$0xf]
        %v9009 = vld [vmem:[%s9 + $0x24] sm:$0xf]
        %v9010 = vld [vmem:[%s9 + $0x28] sm:$0xf]
        %v9011 = vld [vmem:[%s9 + $0x2c] sm:$0xf]
        %v9012 = vld [vmem:[%s9 + $0x30] sm:$0xf]
        %v9013 = vld [vmem:[%s9 + $0x34] sm:$0xf]
        %v9014 = vld [vmem:[%s9 + $0x38] sm:$0xf]
        %v9015 = vld [vmem:[%s9 + $0x3c] sm:$0xf]
        %v9016 = vld [vmem:[%s10] sm:$0x1]
        %v9033 = vunpack.c.l.b16 %v9000
        %v9034 = vunpack.c.l.b16 %v9001
        %v9035 = vunpack.c.l.b16 %v9002
        %v9036 = vunpack.c.l.b16 %v9003
        %v9037 = vunpack.c.l.b16 %v9004
        %v9038 = vunpack.c.l.b16 %v9005
        %v9039 = vunpack.c.l.b16 %v9006
        %v9040 = vunpack.c.l.b16 %v9007
        %v9041 = vunpack.c.l.b16 %v9008
        %v9042 = vunpack.c.l.b16 %v9009
        %v9043 = vunpack.c.l.b16 %v9010
        %v9044 = vunpack.c.l.b16 %v9011
        %v9045 = vunpack.c.l.b16 %v9012
        %v9046 = vunpack.c.l.b16 %v9013
        %v9047 = vunpack.c.l.b16 %v9014
        %v9048 = vunpack.c.l.b16 %v9015
        %v9049 = vpack.c.b16 %v9034, %v9033
        %v9050 = vpack.c.b16 %v9036, %v9035
        %v9051 = vpack.c.b16 %v9038, %v9037
        %v9052 = vpack.c.b16 %v9040, %v9039
        %v9053 = vpack.c.b16 %v9042, %v9041
        %v9054 = vpack.c.b16 %v9044, %v9043
        %v9055 = vpack.c.b16 %v9046, %v9045
        %v9056 = vpack.c.b16 %v9048, %v9047
        %9065 = vmatprep.subr.bf16.mxu0 0
        %9066 = vmatpush1.bf16.msra.mxu0 %v9056
        %9067 = vmatprep.subr.bf16.mxu0 0
        %9068 = vmatpush1.bf16.msra.mxu0 %v9055
        %9069 = vmatprep.subr.bf16.mxu0 0
        %9070 = vmatpush1.bf16.msra.mxu0 %v9054
        %9071 = vmatprep.subr.bf16.mxu0 0
        %9072 = vmatpush1.bf16.msra.mxu0 %v9053
        %9073 = vmatprep.subr.bf16.mxu0 0
        %9074 = vmatpush1.bf16.msra.mxu0 %v9052
        %9075 = vmatprep.subr.bf16.mxu0 0
        %9076 = vmatpush1.bf16.msra.mxu0 %v9051
        %9077 = vmatprep.subr.bf16.mxu0 0
        %9078 = vmatpush1.bf16.msra.mxu0 %v9050
        %9079 = vmatprep.subr.bf16.mxu0 0
        %9080 = vmatpush1.bf16.msra.mxu0 %v9049
        %9081 = vmatprep.subr.bf16.mxu0 0
        %9082 = vmatpush2.bf16.msra.mxu0 0
        %9083 = vmatprep.subr.bf16.mxu0 0
        %9084 = vmatpush2.bf16.msra.mxu0 0
        %9085 = vmatprep.subr.bf16.mxu0 0
        %9086 = vmatpush2.bf16.msra.mxu0 0
        %9087 = vmatprep.subr.bf16.mxu0 0
        %9088 = vmatpush2.bf16.msra.mxu0 0
        %9089 = vmatprep.subr.bf16.mxu0 0
        %9090 = vmatpush2.bf16.msra.mxu0 0
        %9091 = vmatprep.subr.bf16.mxu0 0
        %9092 = vmatpush2.bf16.msra.mxu0 0
        %9093 = vmatprep.subr.bf16.mxu0 0
        %9094 = vmatpush2.bf16.msra.mxu0 0
        %9095 = vmatprep.subr.bf16.mxu0 0
        %9096 = vmatpush2.bf16.msra.mxu0 0
        %9097 = vmatprep.mubr.bf16.mxu0 0
        %9098 = vmatmul.mubr.bf16.gmra.mxu0 %v8999
        %v9099 = vpop.f32.mrf.mxu0
        %v9100 = vadd.f32 %v9016, %v9099
        %v9101 = vpop.f32.mrf.mxu0
        %v9102 = vpop.f32.mrf.mxu0
        %v9103 = vpop.f32.mrf.mxu0
        %9104 = vdwg.mxu0
        %v9105 = vmax.f32 %v9100, 0.0
        %v9106 = vpack.c.bf16 %v9105, %v9105
        %v9107 = vld [vmem:[%s11] sm:$0xf]
        %v9108 = vld [vmem:[%s11 + $0x4] sm:$0xf]
        %v9109 = vld [vmem:[%s11 + $0x8] sm:$0xf]
        %v9110 = vld [vmem:[%s11 + $0xc] sm:$0xf]
        %v9111 = vld [vmem:[%s11 + $0x10] sm:$0xf]
        %v9112 = vld [vmem:[%s11 + $0x14] sm:$0xf]
        %v9113 = vld [vmem:[%s11 + $0x18] sm:$0xf]
        %v9114 = vld [vmem:[%s11 + $0x1c] sm:$0xf]
        %v9115 = vld [vmem:[%s12] sm:$0x1]
        %v9124 = vunpack.c.l.b16 %v9107
        %v9125 = vunpack.c.l.b16 %v9108
        %v9126 = vunpack.c.l.b16 %v9109
        %v9127 = vunpack.c.l.b16 %v9110
        %v9128 = vunpack.c.l.b16 %v9111
        %v9129 = vunpack.c.l.b16 %v9112
        %v9130 = vunpack.c.l.b16 %v9113
        %v9131 = vunpack.c.l.b16 %v9114
        %v9132 = vpack.c.b16 %v9125, %v9124
        %v9133 = vpack.c.b16 %v9127, %v9126
        %v9134 = vpack.c.b16 %v9129, %v9128
        %v9135 = vpack.c.b16 %v9131, %v9130
        %v9141 = vsel %vm8954, %v9106, 0
        %9143 = vmatprep.subr.bf16.mxu0 0
        %9144 = vmatpush1.bf16.msra.mxu0 0
        %9145 = vmatprep.subr.bf16.mxu0 0
        %9146 = vmatpush1.bf16.msra.mxu0 0
        %9147 = vmatprep.subr.bf16.mxu0 0
        %9148 = vmatpush1.bf16.msra.mxu0 0
        %9149 = vmatprep.subr.bf16.mxu0 0
        %9150 = vmatpush1.bf16.msra.mxu0 0
        %9151 = vmatprep.subr.bf16.mxu0 0
        %9152 = vmatpush1.bf16.msra.mxu0 %v9135
        %9153 = vmatprep.subr.bf16.mxu0 0
        %9154 = vmatpush1.bf16.msra.mxu0 %v9134
        %9155 = vmatprep.subr.bf16.mxu0 0
        %9156 = vmatpush1.bf16.msra.mxu0 %v9133
        %9157 = vmatprep.subr.bf16.mxu0 0
        %9158 = vmatpush1.bf16.msra.mxu0 %v9132
        %9159 = vmatprep.subr.bf16.mxu0 0
        %9160 = vmatpush2.bf16.msra.mxu0 0
        %9161 = vmatprep.subr.bf16.mxu0 0
        %9162 = vmatpush2.bf16.msra.mxu0 0
        %9163 = vmatprep.subr.bf16.mxu0 0
        %9164 = vmatpush2.bf16.msra.mxu0 0
        %9165 = vmatprep.subr.bf16.mxu0 0
        %9166 = vmatpush2.bf16.msra.mxu0 0
        %9167 = vmatprep.subr.bf16.mxu0 0
        %9168 = vmatpush2.bf16.msra.mxu0 0
        %9169 = vmatprep.subr.bf16.mxu0 0
        %9170 = vmatpush2.bf16.msra.mxu0 0
        %9171 = vmatprep.subr.bf16.mxu0 0
        %9172 = vmatpush2.bf16.msra.mxu0 0
        %9173 = vmatprep.subr.bf16.mxu0 0
        %9174 = vmatpush2.bf16.msra.mxu0 0
        %9175 = vmatprep.mubr.bf16.mxu0 0
        %9176 = vmatmul.mubr.bf16.gmra.mxu0 %v9141
        %v9177 = vpop.f32.mrf.mxu0
        %v9178 = vadd.f32 %v9115, %v9177
        %v9179 = vpop.f32.mrf.mxu0
        %v9180 = vpop.f32.mrf.mxu0
        %v9181 = vpop.f32.mrf.mxu0
        %9182 = vdwg.mxu0
        %9183 = vst [vmem:[%s432] sm:$0x1] %v9178
        %s9184 = sand.u32 %s313, 1
        %s9185 = scalar_lea.sflag [#allocation10], %s9184
        %s9186 = sand.u32 %s313, 1
        %s9187 = scalar_lea.vmem [#allocation9], %s9186
        // Predicated region
        $region73: #{qnetwork_forward.1} parent=71 // pred_check
          %p9188 = pneg %p323
        $region74: #{qnetwork_forward.1} parent=71 // pred_check_branch
          %9190 = sbr.rel (%p9188) target = $region76
        $region75: #{qnetwork_forward.1} parent=71 // pred_region
          %s9192 = ssub.s32 16, 16
          %9193 = vsyncadd %s9185, %s9192
          %s9194 = smul.addr %s27, 16
          %s9195 = scalar_lea.hbm %s13, %s9194
          %s9197 = sshll.u32 %s9187, 4
          %s9198 = int_to_ptr.vmem [resolvable:$true] %s9197
          %9200 = dma.vmem_to_hbm [thread:$0]  %s9198, 16, %s9195, %s9185
        $region76: #{qnetwork_forward.1} parent=71 // pred_fallthru
          _
      $region72: #{qnetwork_forward.1} parent=5 // pred_fallthru
        _
      %p9201 = scmp.le.s32.totalorder 2, %s22
      // Predicated region
      $region77: #{qnetwork_forward.1} parent=5 // pred_check
        %p9202 = pneg %p9201
      $region78: #{qnetwork_forward.1} parent=5 // pred_check_branch
        %9204 = sbr.rel (%p9202) target = $region80
      $region79: #{qnetwork_forward.1} parent=5 // pred_region
        %s9205 = ssub.s32 %s22, 2
        // Predicated region
        $region81: #{qnetwork_forward.1} parent=79 // pred_check
          %p9206 = pneg %p329
        $region82: #{qnetwork_forward.1} parent=79 // pred_check_branch
          %9208 = sbr.rel (%p9206) target = $region84
        $region83: #{qnetwork_forward.1} parent=79 // pred_region
          %s9209 = sand.u32 %s314, 1
          %s9210 = scalar_lea.sflag [#allocation10], %s9209
          %s9211 = sand.u32 %s314, 1
          %s9212 = scalar_lea.vmem [#allocation9], %s9211
          %9213 = dma.done %s9210, 16
        $region84: #{qnetwork_forward.1} parent=79 // pred_fallthru
          _
      $region80: #{qnetwork_forward.1} parent=5 // pred_fallthru
        _
    $region6: #{qnetwork_forward.1} parent=1 // loop_footer
      %s26 = sadd.s32 1, %s22
    $region7: #{qnetwork_forward.1} parent=1 // loop_footer_branch
      %21 = sbr.rel target = $region3
    $region8: #{qnetwork_forward.1} parent=1 // loop_exit
      _
    %9214 = vsyncpa [#allocation10], 1
    %s9215 = scalar_lea.sflag [#allocation10], 1
    %9216 = vsyncpa %s9215, 1

</llo_original>
